<compile_context>
chip_gen: v6e
topology: v6e:2x2x1
jax: 0.10.0
libtpu: 0.0.40
codegen_flags: <defaults>
</compile_context>

<pallas_src>
import functools
from dataclasses import dataclass

import jax
import jax.numpy as jnp
from jax import lax
from jax.experimental import pallas as pl
from jax.experimental.pallas import tpu as pltpu


# =============================================================================
# Static planning (Python ints only - never traced)
# =============================================================================
@dataclass(frozen=True)
class ConvSpec:
    cin: int
    cout: int
    k: int
    stride: int
    pad: int          # torch padding
    out_pad: int      # torch output_padding (ConvTranspose only)
    hin: int
    win: int
    ho: int
    wo: int
    transposed: bool


def plan_model(in_channels, kernels, layers, height, width):
    assert kernels[0][0] == in_channels
    enc = []
    H, W, cin = height, width, in_channels
    for i in range(1, len(kernels)):
        cout, k, s = kernels[i]
        assert s in (1, 2), "only stride-1/2 convs are planned"
        p = (k - 1) // 2
        ho = (H + 2 * p - k) // s + 1
        wo = (W + 2 * p - k) // s + 1
        if s == 2:
            assert 2 * ho + 2 - H - p >= 0 and 2 * wo + 2 - W - p >= 0
        enc.append(ConvSpec(cin=cin, cout=cout, k=k, stride=s, pad=p, out_pad=0,
                            hin=H, win=W, ho=ho, wo=wo, transposed=False))
        H, W, cin = ho, wo, cout
    enc_chw = (cin, H, W)
    assert cin * H * W == layers[0], "layers[0] must match flattened encoder output"

    fc_dims = list(layers) + list(reversed(layers))[1:]

    dec = []
    for i in range(len(kernels) - 1, 0, -1):
        cin_d, cout = kernels[i][0], kernels[i - 1][0]
        k, s = kernels[i][1], kernels[i][2]
        assert s in (1, 2)
        p = (k - 1) // 2
        op = 0 if s == 1 else 1                       # matches the PyTorch module
        ho = (H - 1) * s - 2 * p + k + op
        wo = (W - 1) * s - 2 * p + k + op
        if s == 2:
            assert (k - 1 - p) + op - 1 >= 0
        dec.append(ConvSpec(cin=cin_d, cout=cout, k=k, stride=s, pad=p, out_pad=op,
                            hin=H, win=W, ho=ho, wo=wo, transposed=True))
        H, W = ho, wo
    assert (H, W) == (height, width)
    return dict(enc=tuple(enc), dec=tuple(dec), enc_chw=enc_chw, fc_dims=fc_dims)


# =============================================================================
# Parameters: PyTorch-layout init + one-time GEMM-layout repack
# =============================================================================
def init_raw_params(key, in_channels, kernels, layers):
    raw = {"enc_conv": [], "enc_fc": [], "dec_fc": [], "dec_conv": []}

    def nrm(k_, shape, fan_in):
        return jax.random.normal(k_, shape, jnp.float32) / jnp.sqrt(fan_in)

    keys = iter(jax.random.split(key, 64))
    for i in range(1, len(kernels)):
        cin, cout, k = kernels[i - 1][0], kernels[i][0], kernels[i][1]
        raw["enc_conv"].append((nrm(next(keys), (cout, cin, k, k), cin * k * k),
                                nrm(next(keys), (cout,), cin * k * k)))
    for i in range(len(layers) - 1):
        raw["enc_fc"].append((nrm(next(keys), (layers[i + 1], layers[i]), layers[i]),
                              nrm(next(keys), (layers[i + 1],), layers[i])))
    rl = list(reversed(layers))
    for i in range(len(rl) - 1):
        raw["dec_fc"].append((nrm(next(keys), (rl[i + 1], rl[i]), rl[i]),
                              nrm(next(keys), (rl[i + 1],), rl[i])))
    for i in range(len(kernels) - 1, 0, -1):
        cin, cout, k = kernels[i][0], kernels[i - 1][0], kernels[i][1]
        raw["dec_conv"].append((nrm(next(keys), (cin, cout, k, k), cin * k * k),
                                nrm(next(keys), (cout,), cin * k * k)))
    return raw


def _conv_weight_to_gemm(w_oihw):
    cout, cin, kh, kw = w_oihw.shape
    return jnp.transpose(w_oihw, (2, 3, 1, 0)).reshape(kh * kw * cin, cout).astype(jnp.float32)


def _bias_row(b):
    return b.reshape(1, -1).astype(jnp.float32)


def preprocess_params(raw, plan):
    enc_c, enc_h, enc_w = plan["enc_chw"]
    hw = enc_h * enc_w
    dev = {"enc_conv": [], "dec_conv": [], "fc_w": [], "fc_b": []}

    for (w, b) in raw["enc_conv"]:
        dev["enc_conv"].append((_conv_weight_to_gemm(w), _bias_row(b)))
    for (w, b) in raw["dec_conv"]:
        # ConvTranspose -> equivalent conv weight: flip spatial, swap in/out.
        wc = jnp.transpose(w[:, :, ::-1, ::-1], (1, 0, 2, 3))
        dev["dec_conv"].append((_conv_weight_to_gemm(wc), _bias_row(b)))

    # FC weights: (K, N) once.  The kernel flattens activations in (h, w, c) order;
    # torch.flatten on NCHW is (c, h, w), so permute first-FC rows / last-FC cols.
    fc_raw = raw["enc_fc"] + raw["dec_fc"]
    n_fc = len(fc_raw)
    fk = jnp.arange(hw * enc_c)
    m, c = fk // enc_c, fk % enc_c
    torch_idx = c * hw + m
    for l, (w, b) in enumerate(fc_raw):
        wt = jnp.transpose(w).astype(jnp.float32)
        bb = _bias_row(b)
        if l == 0:
            wt = wt[torch_idx, :]
        if l == n_fc - 1:
            wt = wt[:, torch_idx]
            bb = bb[:, torch_idx]
        dev["fc_w"].append(wt)
        dev["fc_b"].append(bb)
    return dev


# =============================================================================
# In-kernel helpers (pure value-domain math on VMEM-resident data)
# =============================================================================
def _pad_hw(v, plo_h, phi_h, plo_w, phi_w):
    H, W, C = v.shape
    if plo_w or phi_w:
        parts = []
        if plo_w:
            parts.append(jnp.zeros((H, plo_w, C), v.dtype))
        parts.append(v)
        if phi_w:
            parts.append(jnp.zeros((H, phi_w, C), v.dtype))
        v = jnp.concatenate(parts, axis=1)
        W = v.shape[1]
    if plo_h or phi_h:
        parts = []
        if plo_h:
            parts.append(jnp.zeros((plo_h, W, C), v.dtype))
        parts.append(v)
        if phi_h:
            parts.append(jnp.zeros((phi_h, W, C), v.dtype))
        v = jnp.concatenate(parts, axis=0)
    return v


def _im2col(P, k, stride, ho, wo):
    """P: (Hp, Wp, C) padded input.  Returns (ho*wo, k*k*C); rows h-major, columns
       ordered (kh, kw, cin) to match the packed GEMM weights."""
    Hp, Wp, C = P.shape
    taps = []
    if stride == 1:
        for i in range(k):
            for j in range(k):
                taps.append(P[i:i + ho, j:j + wo, :].reshape(ho * wo, C))
    else:  # stride == 2: even/odd parity planes -> only contiguous slices needed
        rows = P.reshape(Hp // 2, 2, Wp, C)
        planes = {}
        for r in range(2):
            q = rows[:, r, :, :].reshape(Hp // 2, Wp // 2, 2, C)
            for cpar in range(2):
                planes[(r, cpar)] = q[:, :, cpar, :]          # (Hp//2, Wp//2, C)
        for i in range(k):
            for j in range(k):
                qi, ri = divmod(i, 2)
                qj, rj = divmod(j, 2)
                t = planes[(ri, rj)][qi:qi + ho, qj:qj + wo, :]
                taps.append(t.reshape(ho * wo, C))
    return jnp.concatenate(taps, axis=-1)


def _conv_block(v, w_ref, b_ref, spec):
    """One Conv2d / ConvTranspose2d layer as a single MXU GEMM + fused bias/ReLU."""
    k, s = spec.k, spec.stride
    if not spec.transposed:
        if s == 1:
            P = _pad_hw(v, spec.pad, spec.pad, spec.pad, spec.pad)
            col = _im2col(P, k, 1, spec.ho, spec.wo)
        else:
            phi_h = 2 * spec.ho + 2 - spec.hin - spec.pad
            phi_w = 2 * spec.wo + 2 - spec.win - spec.pad
            P = _pad_hw(v, spec.pad, phi_h, spec.pad, phi_w)
            col = _im2col(P, k, 2, spec.ho, spec.wo)
    else:
        p0 = k - 1 - spec.pad
        if s == 1:
            P = _pad_hw(v, p0, p0 + spec.out_pad, p0, p0 + spec.out_pad)
        else:
            # interior dilation: place v at even (row, col) positions of a 2x grid
            Hin, Win, C = v.shape
            d = v[:, :, None, :]                                  # (Hin, Win, 1, C)
            d = jnp.concatenate([d, jnp.zeros_like(d)], axis=2)   # (Hin, Win, 2, C)
            d = d.reshape(Hin, 2 * Win, C)                        # W-interleaved
            d = d[:, None, :, :]                                  # (Hin, 1, 2Win, C)
            d = jnp.concatenate([d, jnp.zeros_like(d)], axis=1)   # (Hin, 2, 2Win, C)
            d = d.reshape(2 * Hin, 2 * Win, C)                    # H-interleaved
            hi = p0 + spec.out_pad - 1      # one trailing zero row/col already present
            P = _pad_hw(d, p0, hi, p0, hi)
        col = _im2col(P, k, 1, spec.ho, spec.wo)
    y = jnp.dot(col, w_ref[...], preferred_element_type=jnp.float32)
    y = jnp.maximum(y + b_ref[...], 0.0)
    return y.reshape(spec.ho, spec.wo, spec.cout)


# =============================================================================
# The single fused kernel: whole autoencoder forward for one sample
# =============================================================================
def _autoencoder_kernel(*refs, enc, dec, n_fc, enc_chw):
    x_ref, o_ref = refs[0], refs[-1]
    mid = list(refs[1:-1])
    enc_p = [(mid[2 * i], mid[2 * i + 1]) for i in range(len(enc))]
    off = 2 * len(enc)
    fc_p = [(mid[off + 2 * i], mid[off + 2 * i + 1]) for i in range(n_fc)]
    off += 2 * n_fc
    dec_p = [(mid[off + 2 * i], mid[off + 2 * i + 1]) for i in range(len(dec))]

    enc_c, enc_h, enc_w = enc_chw
    hw = enc_h * enc_w

    # ---- encoder convs ------------------------------------------------------
    v = x_ref[0].astype(jnp.float32)                               # (H, W, Cin)
    for spec, (w_ref, b_ref) in zip(enc, enc_p):
        v = _conv_block(v, w_ref, b_ref, spec)

    # ---- flatten to (1, hw*C) in (h, w, c) order, then FC stack -------------
    v2 = v.reshape(hw, enc_c)
    h = jnp.concatenate([v2[m:m + 1, :] for m in range(hw)], axis=1)
    for (w_ref, b_ref) in fc_p:
        h = jnp.maximum(
            jnp.dot(h, w_ref[...], preferred_element_type=jnp.float32) + b_ref[...],
            0.0)

    # ---- unflatten back to (h, w, c) ----------------------------------------
    v = jnp.concatenate([h[:, m * enc_c:(m + 1) * enc_c] for m in range(hw)], axis=0)
    v = v.reshape(enc_h, enc_w, enc_c)

    # ---- decoder transposed convs -------------------------------------------
    for spec, (w_ref, b_ref) in zip(dec, dec_p):
        v = _conv_block(v, w_ref, b_ref, spec)

    o_ref[...] = v.reshape((1,) + v.shape).astype(o_ref.dtype)


def make_pallas_forward(plan):
    enc, dec = plan["enc"], plan["dec"]
    fc_dims = plan["fc_dims"]
    n_fc = len(fc_dims) - 1
    enc_chw = plan["enc_chw"]

    kern = functools.partial(_autoencoder_kernel, enc=enc, dec=dec,
                             n_fc=n_fc, enc_chw=enc_chw)

    def fwd(x_nchw, params):
        B, Cin, H, W = x_nchw.shape
        x = jnp.transpose(x_nchw, (0, 2, 3, 1)).astype(jnp.float32)   # NHWC

        flat = []
        for w, b in params["enc_conv"]:
            flat += [w, b]
        for w, b in zip(params["fc_w"], params["fc_b"]):
            flat += [w, b]
        for w, b in params["dec_conv"]:
            flat += [w, b]

        def full_spec(a):
            return pl.BlockSpec(a.shape, lambda b_, nd=a.ndim: (0,) * nd)

        in_specs = [pl.BlockSpec((1, H, W, Cin), lambda b_: (b_, 0, 0, 0))]
        in_specs += [full_spec(a) for a in flat]
        out_specs = pl.BlockSpec((1, H, W, Cin), lambda b_: (b_, 0, 0, 0))

        flops = 0
        for spec in list(enc) + list(dec):
            flops += 2 * spec.ho * spec.wo * (spec.k * spec.k * spec.cin) * spec.cout
        for i in range(n_fc):
            flops += 2 * fc_dims[i] * fc_dims[i + 1]
        flops *= B
        byts = 4 * (x.size + sum(a.size for a in flat) + B * H * W * Cin)

        y = pl.pallas_call(
            kern,
            out_shape=jax.ShapeDtypeStruct((B, H, W, Cin), jnp.float32),
            grid_spec=pltpu.PrefetchScalarGridSpec(
                num_scalar_prefetch=0,
                grid=(B,),
                in_specs=in_specs,
                out_specs=out_specs,
            ),
            compiler_params=pltpu.CompilerParams(
                dimension_semantics=("parallel",)),
            cost_estimate=pl.CostEstimate(flops=flops, transcendentals=0,
                                          bytes_accessed=byts),
        )(x, *flat)
        return jnp.transpose(y, (0, 3, 1, 2))                         # NCHW out
    return fwd


# =============================================================================
# Independent pure-JAX (XLA conv) reference of CNNAutoEncoder.forward
# =============================================================================
def reference_forward(x_nchw, raw, kernels, layers):
    dn = ("NCHW", "OIHW", "NCHW")
    x = x_nchw
    for li, i in enumerate(range(1, len(kernels))):
        w, b = raw["enc_conv"][li]
        k, s = kernels[i][1], kernels[i][2]
        p = (k - 1) // 2
        x = lax.conv_general_dilated(x, w, (s, s), [(p, p), (p, p)],
                                     dimension_numbers=dn)
        x = jnp.maximum(x + b[None, :, None, None], 0.0)
    enc_shape = x.shape
    h = x.reshape(x.shape[0], -1)
    for (w, b) in raw["enc_fc"] + raw["dec_fc"]:
        h = jnp.maximum(h @ w.T + b[None, :], 0.0)
    x = h.reshape(enc_shape)
    for li, i in enumerate(range(len(kernels) - 1, 0, -1)):
        w, b = raw["dec_conv"][li]
        k, s = kernels[i][1], kernels[i][2]
        p = (k - 1) // 2
        op = 0 if s == 1 else 1
        wc = jnp.transpose(w[:, :, ::-1, ::-1], (1, 0, 2, 3))
        x = lax.conv_general_dilated(
            x, wc, (1, 1),
            [(k - 1 - p, k - 1 - p + op), (k - 1 - p, k - 1 - p + op)],
            lhs_dilation=(s, s), dimension_numbers=dn)
        x = jnp.maximum(x + b[None, :, None, None], 0.0)
    return x


# =============================================================================
if __name__ == "__main__":
    in_channels = 4
    kernels = [(4, 3, 1), (8, 3, 2), (16, 3, 2)]     # (channels, kernel, stride)
    layers = [16 * 4 * 4, 64, 32]                    # flattened 16x4x4 -> 64 -> 32
    B, H, W = 2, 16, 16

    key = jax.random.PRNGKey(0)
    kx, kp = jax.random.split(key)
    x = jax.random.normal(kx, (B, in_channels, H, W), jnp.float32)

    plan = plan_model(in_channels, kernels, layers, H, W)
    raw = init_raw_params(kp, in_channels, kernels, layers)
    params = preprocess_params(raw, plan)

    fwd = jax.jit(make_pallas_forward(plan))
    out = fwd(x, params)
    jax.block_until_ready(out)

    ref = reference_forward(x, raw, kernels, layers)
    jax.block_until_ready(ref)

    assert out.shape == x.shape, (out.shape, x.shape)
    err = float(jnp.max(jnp.abs(out - ref)))
    assert jnp.allclose(out, ref, atol=2e-4, rtol=2e-4), f"max abs err {err}"
    print("KERNEL_OK")
</pallas_src>

<mosaic_0001>
module attributes {stable_mosaic.version = 11 : i64} {
  func.func @_autoencoder_kernel(%arg0: i32, %arg1: memref<1x16x16x4xf32, #tpu.memory_space<vmem>>, %arg2: memref<36x8xf32, #tpu.memory_space<vmem>>, %arg3: memref<1x8xf32, #tpu.memory_space<vmem>>, %arg4: memref<72x16xf32, #tpu.memory_space<vmem>>, %arg5: memref<1x16xf32, #tpu.memory_space<vmem>>, %arg6: memref<256x64xf32, #tpu.memory_space<vmem>>, %arg7: memref<1x64xf32, #tpu.memory_space<vmem>>, %arg8: memref<64x32xf32, #tpu.memory_space<vmem>>, %arg9: memref<1x32xf32, #tpu.memory_space<vmem>>, %arg10: memref<32x64xf32, #tpu.memory_space<vmem>>, %arg11: memref<1x64xf32, #tpu.memory_space<vmem>>, %arg12: memref<64x256xf32, #tpu.memory_space<vmem>>, %arg13: memref<1x256xf32, #tpu.memory_space<vmem>>, %arg14: memref<144x8xf32, #tpu.memory_space<vmem>>, %arg15: memref<1x8xf32, #tpu.memory_space<vmem>>, %arg16: memref<72x4xf32, #tpu.memory_space<vmem>>, %arg17: memref<1x4xf32, #tpu.memory_space<vmem>>, %arg18: memref<1x16x16x4xf32, #tpu.memory_space<vmem>>) attributes {dimension_semantics = [#tpu.dimension_semantics<parallel>], iteration_bounds = array<i64: 2>, scalar_prefetch = 0 : i64, scratch_operands = 0 : i64, tpu.core_type = #tpu.core_type<tc>, window_params = [{transform_indices = @transform_0, window_bounds = array<i64: 1, 16, 16, 4>}, {pipeline_mode = #tpu.pipeline_mode<synchronous>, transform_indices = @transform_1, window_bounds = array<i64: 36, 8>}, {pipeline_mode = #tpu.pipeline_mode<synchronous>, transform_indices = @transform_2, window_bounds = array<i64: 1, 8>}, {pipeline_mode = #tpu.pipeline_mode<synchronous>, transform_indices = @transform_3, window_bounds = array<i64: 72, 16>}, {pipeline_mode = #tpu.pipeline_mode<synchronous>, transform_indices = @transform_4, window_bounds = array<i64: 1, 16>}, {pipeline_mode = #tpu.pipeline_mode<synchronous>, transform_indices = @transform_5, window_bounds = array<i64: 256, 64>}, {pipeline_mode = #tpu.pipeline_mode<synchronous>, transform_indices = @transform_6, window_bounds = array<i64: 1, 64>}, {pipeline_mode = #tpu.pipeline_mode<synchronous>, transform_indices = @transform_7, window_bounds = array<i64: 64, 32>}, {pipeline_mode = #tpu.pipeline_mode<synchronous>, transform_indices = @transform_8, window_bounds = array<i64: 1, 32>}, {pipeline_mode = #tpu.pipeline_mode<synchronous>, transform_indices = @transform_9, window_bounds = array<i64: 32, 64>}, {pipeline_mode = #tpu.pipeline_mode<synchronous>, transform_indices = @transform_10, window_bounds = array<i64: 1, 64>}, {pipeline_mode = #tpu.pipeline_mode<synchronous>, transform_indices = @transform_11, window_bounds = array<i64: 64, 256>}, {pipeline_mode = #tpu.pipeline_mode<synchronous>, transform_indices = @transform_12, window_bounds = array<i64: 1, 256>}, {pipeline_mode = #tpu.pipeline_mode<synchronous>, transform_indices = @transform_13, window_bounds = array<i64: 144, 8>}, {pipeline_mode = #tpu.pipeline_mode<synchronous>, transform_indices = @transform_14, window_bounds = array<i64: 1, 8>}, {pipeline_mode = #tpu.pipeline_mode<synchronous>, transform_indices = @transform_15, window_bounds = array<i64: 72, 4>}, {pipeline_mode = #tpu.pipeline_mode<synchronous>, transform_indices = @transform_16, window_bounds = array<i64: 1, 4>}, {transform_indices = @transform_17, window_bounds = array<i64: 1, 16, 16, 4>}]} {
    %c0 = arith.constant 0 : index
    %c0_0 = arith.constant 0 : index
    %c0_1 = arith.constant 0 : index
    %c0_2 = arith.constant 0 : index
    %0 = vector.load %arg1[%c0, %c0_0, %c0_1, %c0_2] : memref<1x16x16x4xf32, #tpu.memory_space<vmem>>, vector<1x16x16x4xf32>
    %1 = vector.shape_cast %0 : vector<1x16x16x4xf32> to vector<16x16x4xf32>
    %cst = arith.constant 0.000000e+00 : f32
    %2 = vector.broadcast %cst : f32 to vector<16x1x4xf32>
    %cst_3 = arith.constant 0.000000e+00 : f32
    %3 = vector.broadcast %cst_3 : f32 to vector<16x1x4xf32>
    %4 = tpu.concatenate %2, %1, %3 in 1 : vector<16x1x4xf32>, vector<16x16x4xf32>, vector<16x1x4xf32> -> vector<16x18x4xf32>
    %cst_4 = arith.constant 0.000000e+00 : f32
    %5 = vector.broadcast %cst_4 : f32 to vector<1x18x4xf32>
    %cst_5 = arith.constant 0.000000e+00 : f32
    %6 = vector.broadcast %cst_5 : f32 to vector<1x18x4xf32>
    %7 = tpu.concatenate %5, %4, %6 in 0 : vector<1x18x4xf32>, vector<16x18x4xf32>, vector<1x18x4xf32> -> vector<18x18x4xf32>
    %8 = vector.shape_cast %7 : vector<18x18x4xf32> to vector<9x2x18x4xf32>
    %9 = vector.extract_strided_slice %8 {offsets = [0, 0, 0, 0], sizes = [9, 1, 18, 4], strides = [1, 1, 1, 1]} : vector<9x2x18x4xf32> to vector<9x1x18x4xf32>
    %10 = vector.shape_cast %9 : vector<9x1x18x4xf32> to vector<9x18x4xf32>
    %11 = vector.shape_cast %10 : vector<9x18x4xf32> to vector<9x9x2x4xf32>
    %12 = vector.extract_strided_slice %11 {offsets = [0, 0, 0, 0], sizes = [9, 9, 1, 4], strides = [1, 1, 1, 1]} : vector<9x9x2x4xf32> to vector<9x9x1x4xf32>
    %13 = vector.shape_cast %12 : vector<9x9x1x4xf32> to vector<9x9x4xf32>
    %14 = vector.extract_strided_slice %11 {offsets = [0, 0, 1, 0], sizes = [9, 9, 1, 4], strides = [1, 1, 1, 1]} : vector<9x9x2x4xf32> to vector<9x9x1x4xf32>
    %15 = vector.shape_cast %14 : vector<9x9x1x4xf32> to vector<9x9x4xf32>
    %16 = vector.extract_strided_slice %8 {offsets = [0, 1, 0, 0], sizes = [9, 1, 18, 4], strides = [1, 1, 1, 1]} : vector<9x2x18x4xf32> to vector<9x1x18x4xf32>
    %17 = vector.shape_cast %16 : vector<9x1x18x4xf32> to vector<9x18x4xf32>
    %18 = vector.shape_cast %17 : vector<9x18x4xf32> to vector<9x9x2x4xf32>
    %19 = vector.extract_strided_slice %18 {offsets = [0, 0, 0, 0], sizes = [9, 9, 1, 4], strides = [1, 1, 1, 1]} : vector<9x9x2x4xf32> to vector<9x9x1x4xf32>
    %20 = vector.shape_cast %19 : vector<9x9x1x4xf32> to vector<9x9x4xf32>
    %21 = vector.extract_strided_slice %18 {offsets = [0, 0, 1, 0], sizes = [9, 9, 1, 4], strides = [1, 1, 1, 1]} : vector<9x9x2x4xf32> to vector<9x9x1x4xf32>
    %22 = vector.shape_cast %21 : vector<9x9x1x4xf32> to vector<9x9x4xf32>
    %23 = vector.extract_strided_slice %13 {offsets = [0, 0, 0], sizes = [8, 8, 4], strides = [1, 1, 1]} : vector<9x9x4xf32> to vector<8x8x4xf32>
    %24 = vector.shape_cast %23 : vector<8x8x4xf32> to vector<64x4xf32>
    %25 = vector.extract_strided_slice %15 {offsets = [0, 0, 0], sizes = [8, 8, 4], strides = [1, 1, 1]} : vector<9x9x4xf32> to vector<8x8x4xf32>
    %26 = vector.shape_cast %25 : vector<8x8x4xf32> to vector<64x4xf32>
    %27 = vector.extract_strided_slice %13 {offsets = [0, 1, 0], sizes = [8, 8, 4], strides = [1, 1, 1]} : vector<9x9x4xf32> to vector<8x8x4xf32>
    %28 = vector.shape_cast %27 : vector<8x8x4xf32> to vector<64x4xf32>
    %29 = vector.extract_strided_slice %20 {offsets = [0, 0, 0], sizes = [8, 8, 4], strides = [1, 1, 1]} : vector<9x9x4xf32> to vector<8x8x4xf32>
    %30 = vector.shape_cast %29 : vector<8x8x4xf32> to vector<64x4xf32>
    %31 = vector.extract_strided_slice %22 {offsets = [0, 0, 0], sizes = [8, 8, 4], strides = [1, 1, 1]} : vector<9x9x4xf32> to vector<8x8x4xf32>
    %32 = vector.shape_cast %31 : vector<8x8x4xf32> to vector<64x4xf32>
    %33 = vector.extract_strided_slice %20 {offsets = [0, 1, 0], sizes = [8, 8, 4], strides = [1, 1, 1]} : vector<9x9x4xf32> to vector<8x8x4xf32>
    %34 = vector.shape_cast %33 : vector<8x8x4xf32> to vector<64x4xf32>
    %35 = vector.extract_strided_slice %13 {offsets = [1, 0, 0], sizes = [8, 8, 4], strides = [1, 1, 1]} : vector<9x9x4xf32> to vector<8x8x4xf32>
    %36 = vector.shape_cast %35 : vector<8x8x4xf32> to vector<64x4xf32>
    %37 = vector.extract_strided_slice %15 {offsets = [1, 0, 0], sizes = [8, 8, 4], strides = [1, 1, 1]} : vector<9x9x4xf32> to vector<8x8x4xf32>
    %38 = vector.shape_cast %37 : vector<8x8x4xf32> to vector<64x4xf32>
    %39 = vector.extract_strided_slice %13 {offsets = [1, 1, 0], sizes = [8, 8, 4], strides = [1, 1, 1]} : vector<9x9x4xf32> to vector<8x8x4xf32>
    %40 = vector.shape_cast %39 : vector<8x8x4xf32> to vector<64x4xf32>
    %41 = tpu.concatenate %24, %26, %28, %30, %32, %34, %36, %38, %40 in 1 : vector<64x4xf32>, vector<64x4xf32>, vector<64x4xf32>, vector<64x4xf32>, vector<64x4xf32>, vector<64x4xf32>, vector<64x4xf32>, vector<64x4xf32>, vector<64x4xf32> -> vector<64x36xf32>
    %c0_6 = arith.constant 0 : index
    %c0_7 = arith.constant 0 : index
    %42 = vector.load %arg2[%c0_6, %c0_7] : memref<36x8xf32, #tpu.memory_space<vmem>>, vector<36x8xf32>
    %cst_8 = arith.constant dense<0.000000e+00> : vector<64x8xf32>
    %43 = tpu.matmul %41, %42, %cst_8 {dimension_numbers = #tpu.dot_dimension_numbers<[1], [0], [0], [1], [0, 0, 1, 1], [], []>} : vector<64x36xf32>, vector<36x8xf32>, vector<64x8xf32> -> vector<64x8xf32>
    %c0_9 = arith.constant 0 : index
    %c0_10 = arith.constant 0 : index
    %44 = vector.load %arg3[%c0_9, %c0_10] : memref<1x8xf32, #tpu.memory_space<vmem>>, vector<1x8xf32>
    %45 = vector.broadcast %44 : vector<1x8xf32> to vector<64x8xf32>
    %46 = arith.addf %43, %45 : vector<64x8xf32>
    %cst_11 = arith.constant 0.000000e+00 : f32
    %47 = vector.broadcast %cst_11 : f32 to vector<64x8xf32>
    %48 = arith.maximumf %46, %47 : vector<64x8xf32>
    %49 = vector.shape_cast %48 : vector<64x8xf32> to vector<8x8x8xf32>
    %cst_12 = arith.constant 0.000000e+00 : f32
    %50 = vector.broadcast %cst_12 : f32 to vector<8x1x8xf32>
    %cst_13 = arith.constant 0.000000e+00 : f32
    %51 = vector.broadcast %cst_13 : f32 to vector<8x1x8xf32>
    %52 = tpu.concatenate %50, %49, %51 in 1 : vector<8x1x8xf32>, vector<8x8x8xf32>, vector<8x1x8xf32> -> vector<8x10x8xf32>
    %cst_14 = arith.constant 0.000000e+00 : f32
    %53 = vector.broadcast %cst_14 : f32 to vector<1x10x8xf32>
    %cst_15 = arith.constant 0.000000e+00 : f32
    %54 = vector.broadcast %cst_15 : f32 to vector<1x10x8xf32>
    %55 = tpu.concatenate %53, %52, %54 in 0 : vector<1x10x8xf32>, vector<8x10x8xf32>, vector<1x10x8xf32> -> vector<10x10x8xf32>
    %56 = vector.shape_cast %55 : vector<10x10x8xf32> to vector<5x2x10x8xf32>
    %57 = vector.extract_strided_slice %56 {offsets = [0, 0, 0, 0], sizes = [5, 1, 10, 8], strides = [1, 1, 1, 1]} : vector<5x2x10x8xf32> to vector<5x1x10x8xf32>
    %58 = vector.shape_cast %57 : vector<5x1x10x8xf32> to vector<5x10x8xf32>
    %59 = vector.shape_cast %58 : vector<5x10x8xf32> to vector<5x5x2x8xf32>
    %60 = vector.extract_strided_slice %59 {offsets = [0, 0, 0, 0], sizes = [5, 5, 1, 8], strides = [1, 1, 1, 1]} : vector<5x5x2x8xf32> to vector<5x5x1x8xf32>
    %61 = vector.shape_cast %60 : vector<5x5x1x8xf32> to vector<5x5x8xf32>
    %62 = vector.extract_strided_slice %59 {offsets = [0, 0, 1, 0], sizes = [5, 5, 1, 8], strides = [1, 1, 1, 1]} : vector<5x5x2x8xf32> to vector<5x5x1x8xf32>
    %63 = vector.shape_cast %62 : vector<5x5x1x8xf32> to vector<5x5x8xf32>
    %64 = vector.extract_strided_slice %56 {offsets = [0, 1, 0, 0], sizes = [5, 1, 10, 8], strides = [1, 1, 1, 1]} : vector<5x2x10x8xf32> to vector<5x1x10x8xf32>
    %65 = vector.shape_cast %64 : vector<5x1x10x8xf32> to vector<5x10x8xf32>
    %66 = vector.shape_cast %65 : vector<5x10x8xf32> to vector<5x5x2x8xf32>
    %67 = vector.extract_strided_slice %66 {offsets = [0, 0, 0, 0], sizes = [5, 5, 1, 8], strides = [1, 1, 1, 1]} : vector<5x5x2x8xf32> to vector<5x5x1x8xf32>
    %68 = vector.shape_cast %67 : vector<5x5x1x8xf32> to vector<5x5x8xf32>
    %69 = vector.extract_strided_slice %66 {offsets = [0, 0, 1, 0], sizes = [5, 5, 1, 8], strides = [1, 1, 1, 1]} : vector<5x5x2x8xf32> to vector<5x5x1x8xf32>
    %70 = vector.shape_cast %69 : vector<5x5x1x8xf32> to vector<5x5x8xf32>
    %71 = vector.extract_strided_slice %61 {offsets = [0, 0, 0], sizes = [4, 4, 8], strides = [1, 1, 1]} : vector<5x5x8xf32> to vector<4x4x8xf32>
    %72 = vector.shape_cast %71 : vector<4x4x8xf32> to vector<16x8xf32>
    %73 = vector.extract_strided_slice %63 {offsets = [0, 0, 0], sizes = [4, 4, 8], strides = [1, 1, 1]} : vector<5x5x8xf32> to vector<4x4x8xf32>
    %74 = vector.shape_cast %73 : vector<4x4x8xf32> to vector<16x8xf32>
    %75 = vector.extract_strided_slice %61 {offsets = [0, 1, 0], sizes = [4, 4, 8], strides = [1, 1, 1]} : vector<5x5x8xf32> to vector<4x4x8xf32>
    %76 = vector.shape_cast %75 : vector<4x4x8xf32> to vector<16x8xf32>
    %77 = vector.extract_strided_slice %68 {offsets = [0, 0, 0], sizes = [4, 4, 8], strides = [1, 1, 1]} : vector<5x5x8xf32> to vector<4x4x8xf32>
    %78 = vector.shape_cast %77 : vector<4x4x8xf32> to vector<16x8xf32>
    %79 = vector.extract_strided_slice %70 {offsets = [0, 0, 0], sizes = [4, 4, 8], strides = [1, 1, 1]} : vector<5x5x8xf32> to vector<4x4x8xf32>
    %80 = vector.shape_cast %79 : vector<4x4x8xf32> to vector<16x8xf32>
    %81 = vector.extract_strided_slice %68 {offsets = [0, 1, 0], sizes = [4, 4, 8], strides = [1, 1, 1]} : vector<5x5x8xf32> to vector<4x4x8xf32>
    %82 = vector.shape_cast %81 : vector<4x4x8xf32> to vector<16x8xf32>
    %83 = vector.extract_strided_slice %61 {offsets = [1, 0, 0], sizes = [4, 4, 8], strides = [1, 1, 1]} : vector<5x5x8xf32> to vector<4x4x8xf32>
    %84 = vector.shape_cast %83 : vector<4x4x8xf32> to vector<16x8xf32>
    %85 = vector.extract_strided_slice %63 {offsets = [1, 0, 0], sizes = [4, 4, 8], strides = [1, 1, 1]} : vector<5x5x8xf32> to vector<4x4x8xf32>
    %86 = vector.shape_cast %85 : vector<4x4x8xf32> to vector<16x8xf32>
    %87 = vector.extract_strided_slice %61 {offsets = [1, 1, 0], sizes = [4, 4, 8], strides = [1, 1, 1]} : vector<5x5x8xf32> to vector<4x4x8xf32>
    %88 = vector.shape_cast %87 : vector<4x4x8xf32> to vector<16x8xf32>
    %89 = tpu.concatenate %72, %74, %76, %78, %80, %82, %84, %86, %88 in 1 : vector<16x8xf32>, vector<16x8xf32>, vector<16x8xf32>, vector<16x8xf32>, vector<16x8xf32>, vector<16x8xf32>, vector<16x8xf32>, vector<16x8xf32>, vector<16x8xf32> -> vector<16x72xf32>
    %c0_16 = arith.constant 0 : index
    %c0_17 = arith.constant 0 : index
    %90 = vector.load %arg4[%c0_16, %c0_17] : memref<72x16xf32, #tpu.memory_space<vmem>>, vector<72x16xf32>
    %cst_18 = arith.constant dense<0.000000e+00> : vector<16x16xf32>
    %91 = tpu.matmul %89, %90, %cst_18 {dimension_numbers = #tpu.dot_dimension_numbers<[1], [0], [0], [1], [0, 0, 1, 1], [], []>} : vector<16x72xf32>, vector<72x16xf32>, vector<16x16xf32> -> vector<16x16xf32>
    %c0_19 = arith.constant 0 : index
    %c0_20 = arith.constant 0 : index
    %92 = vector.load %arg5[%c0_19, %c0_20] : memref<1x16xf32, #tpu.memory_space<vmem>>, vector<1x16xf32>
    %93 = vector.broadcast %92 : vector<1x16xf32> to vector<16x16xf32>
    %94 = arith.addf %91, %93 : vector<16x16xf32>
    %cst_21 = arith.constant 0.000000e+00 : f32
    %95 = vector.broadcast %cst_21 : f32 to vector<16x16xf32>
    %96 = arith.maximumf %94, %95 : vector<16x16xf32>
    %97 = vector.shape_cast %96 : vector<16x16xf32> to vector<4x4x16xf32>
    %98 = vector.shape_cast %97 : vector<4x4x16xf32> to vector<16x16xf32>
    %99 = vector.extract_strided_slice %98 {offsets = [0, 0], sizes = [1, 16], strides = [1, 1]} : vector<16x16xf32> to vector<1x16xf32>
    %100 = vector.extract_strided_slice %98 {offsets = [1, 0], sizes = [1, 16], strides = [1, 1]} : vector<16x16xf32> to vector<1x16xf32>
    %101 = vector.extract_strided_slice %98 {offsets = [2, 0], sizes = [1, 16], strides = [1, 1]} : vector<16x16xf32> to vector<1x16xf32>
    %102 = vector.extract_strided_slice %98 {offsets = [3, 0], sizes = [1, 16], strides = [1, 1]} : vector<16x16xf32> to vector<1x16xf32>
    %103 = vector.extract_strided_slice %98 {offsets = [4, 0], sizes = [1, 16], strides = [1, 1]} : vector<16x16xf32> to vector<1x16xf32>
    %104 = vector.extract_strided_slice %98 {offsets = [5, 0], sizes = [1, 16], strides = [1, 1]} : vector<16x16xf32> to vector<1x16xf32>
    %105 = vector.extract_strided_slice %98 {offsets = [6, 0], sizes = [1, 16], strides = [1, 1]} : vector<16x16xf32> to vector<1x16xf32>
    %106 = vector.extract_strided_slice %98 {offsets = [7, 0], sizes = [1, 16], strides = [1, 1]} : vector<16x16xf32> to vector<1x16xf32>
    %107 = vector.extract_strided_slice %98 {offsets = [8, 0], sizes = [1, 16], strides = [1, 1]} : vector<16x16xf32> to vector<1x16xf32>
    %108 = vector.extract_strided_slice %98 {offsets = [9, 0], sizes = [1, 16], strides = [1, 1]} : vector<16x16xf32> to vector<1x16xf32>
    %109 = vector.extract_strided_slice %98 {offsets = [10, 0], sizes = [1, 16], strides = [1, 1]} : vector<16x16xf32> to vector<1x16xf32>
    %110 = vector.extract_strided_slice %98 {offsets = [11, 0], sizes = [1, 16], strides = [1, 1]} : vector<16x16xf32> to vector<1x16xf32>
    %111 = vector.extract_strided_slice %98 {offsets = [12, 0], sizes = [1, 16], strides = [1, 1]} : vector<16x16xf32> to vector<1x16xf32>
    %112 = vector.extract_strided_slice %98 {offsets = [13, 0], sizes = [1, 16], strides = [1, 1]} : vector<16x16xf32> to vector<1x16xf32>
    %113 = vector.extract_strided_slice %98 {offsets = [14, 0], sizes = [1, 16], strides = [1, 1]} : vector<16x16xf32> to vector<1x16xf32>
    %114 = vector.extract_strided_slice %98 {offsets = [15, 0], sizes = [1, 16], strides = [1, 1]} : vector<16x16xf32> to vector<1x16xf32>
    %115 = tpu.concatenate %99, %100, %101, %102, %103, %104, %105, %106, %107, %108, %109, %110, %111, %112, %113, %114 in 1 : vector<1x16xf32>, vector<1x16xf32>, vector<1x16xf32>, vector<1x16xf32>, vector<1x16xf32>, vector<1x16xf32>, vector<1x16xf32>, vector<1x16xf32>, vector<1x16xf32>, vector<1x16xf32>, vector<1x16xf32>, vector<1x16xf32>, vector<1x16xf32>, vector<1x16xf32>, vector<1x16xf32>, vector<1x16xf32> -> vector<1x256xf32>
    %c0_22 = arith.constant 0 : index
    %c0_23 = arith.constant 0 : index
    %116 = vector.load %arg6[%c0_22, %c0_23] : memref<256x64xf32, #tpu.memory_space<vmem>>, vector<256x64xf32>
    %cst_24 = arith.constant dense<0.000000e+00> : vector<1x64xf32>
    %117 = tpu.matmul %115, %116, %cst_24 {dimension_numbers = #tpu.dot_dimension_numbers<[1], [0], [0], [1], [0, 0, 1, 1], [], []>} : vector<1x256xf32>, vector<256x64xf32>, vector<1x64xf32> -> vector<1x64xf32>
    %c0_25 = arith.constant 0 : index
    %c0_26 = arith.constant 0 : index
    %118 = vector.load %arg7[%c0_25, %c0_26] : memref<1x64xf32, #tpu.memory_space<vmem>>, vector<1x64xf32>
    %119 = arith.addf %117, %118 : vector<1x64xf32>
    %cst_27 = arith.constant 0.000000e+00 : f32
    %120 = vector.broadcast %cst_27 : f32 to vector<1x64xf32>
    %121 = arith.maximumf %119, %120 : vector<1x64xf32>
    %c0_28 = arith.constant 0 : index
    %c0_29 = arith.constant 0 : index
    %122 = vector.load %arg8[%c0_28, %c0_29] : memref<64x32xf32, #tpu.memory_space<vmem>>, vector<64x32xf32>
    %cst_30 = arith.constant dense<0.000000e+00> : vector<1x32xf32>
    %123 = tpu.matmul %121, %122, %cst_30 {dimension_numbers = #tpu.dot_dimension_numbers<[1], [0], [0], [1], [0, 0, 1, 1], [], []>} : vector<1x64xf32>, vector<64x32xf32>, vector<1x32xf32> -> vector<1x32xf32>
    %c0_31 = arith.constant 0 : index
    %c0_32 = arith.constant 0 : index
    %124 = vector.load %arg9[%c0_31, %c0_32] : memref<1x32xf32, #tpu.memory_space<vmem>>, vector<1x32xf32>
    %125 = arith.addf %123, %124 : vector<1x32xf32>
    %cst_33 = arith.constant 0.000000e+00 : f32
    %126 = vector.broadcast %cst_33 : f32 to vector<1x32xf32>
    %127 = arith.maximumf %125, %126 : vector<1x32xf32>
    %c0_34 = arith.constant 0 : index
    %c0_35 = arith.constant 0 : index
    %128 = vector.load %arg10[%c0_34, %c0_35] : memref<32x64xf32, #tpu.memory_space<vmem>>, vector<32x64xf32>
    %cst_36 = arith.constant dense<0.000000e+00> : vector<1x64xf32>
    %129 = tpu.matmul %127, %128, %cst_36 {dimension_numbers = #tpu.dot_dimension_numbers<[1], [0], [0], [1], [0, 0, 1, 1], [], []>} : vector<1x32xf32>, vector<32x64xf32>, vector<1x64xf32> -> vector<1x64xf32>
    %c0_37 = arith.constant 0 : index
    %c0_38 = arith.constant 0 : index
    %130 = vector.load %arg11[%c0_37, %c0_38] : memref<1x64xf32, #tpu.memory_space<vmem>>, vector<1x64xf32>
    %131 = arith.addf %129, %130 : vector<1x64xf32>
    %cst_39 = arith.constant 0.000000e+00 : f32
    %132 = vector.broadcast %cst_39 : f32 to vector<1x64xf32>
    %133 = arith.maximumf %131, %132 : vector<1x64xf32>
    %c0_40 = arith.constant 0 : index
    %c0_41 = arith.constant 0 : index
    %134 = vector.load %arg12[%c0_40, %c0_41] : memref<64x256xf32, #tpu.memory_space<vmem>>, vector<64x256xf32>
    %cst_42 = arith.constant dense<0.000000e+00> : vector<1x256xf32>
    %135 = tpu.matmul %133, %134, %cst_42 {dimension_numbers = #tpu.dot_dimension_numbers<[1], [0], [0], [1], [0, 0, 1, 1], [], []>} : vector<1x64xf32>, vector<64x256xf32>, vector<1x256xf32> -> vector<1x256xf32>
    %c0_43 = arith.constant 0 : index
    %c0_44 = arith.constant 0 : index
    %136 = vector.load %arg13[%c0_43, %c0_44] : memref<1x256xf32, #tpu.memory_space<vmem>>, vector<1x256xf32>
    %137 = arith.addf %135, %136 : vector<1x256xf32>
    %cst_45 = arith.constant 0.000000e+00 : f32
    %138 = vector.broadcast %cst_45 : f32 to vector<1x256xf32>
    %139 = arith.maximumf %137, %138 : vector<1x256xf32>
    %140 = vector.extract_strided_slice %139 {offsets = [0, 0], sizes = [1, 16], strides = [1, 1]} : vector<1x256xf32> to vector<1x16xf32>
    %141 = vector.extract_strided_slice %139 {offsets = [0, 16], sizes = [1, 16], strides = [1, 1]} : vector<1x256xf32> to vector<1x16xf32>
    %142 = vector.extract_strided_slice %139 {offsets = [0, 32], sizes = [1, 16], strides = [1, 1]} : vector<1x256xf32> to vector<1x16xf32>
    %143 = vector.extract_strided_slice %139 {offsets = [0, 48], sizes = [1, 16], strides = [1, 1]} : vector<1x256xf32> to vector<1x16xf32>
    %144 = vector.extract_strided_slice %139 {offsets = [0, 64], sizes = [1, 16], strides = [1, 1]} : vector<1x256xf32> to vector<1x16xf32>
    %145 = vector.extract_strided_slice %139 {offsets = [0, 80], sizes = [1, 16], strides = [1, 1]} : vector<1x256xf32> to vector<1x16xf32>
    %146 = vector.extract_strided_slice %139 {offsets = [0, 96], sizes = [1, 16], strides = [1, 1]} : vector<1x256xf32> to vector<1x16xf32>
    %147 = vector.extract_strided_slice %139 {offsets = [0, 112], sizes = [1, 16], strides = [1, 1]} : vector<1x256xf32> to vector<1x16xf32>
    %148 = vector.extract_strided_slice %139 {offsets = [0, 128], sizes = [1, 16], strides = [1, 1]} : vector<1x256xf32> to vector<1x16xf32>
    %149 = vector.extract_strided_slice %139 {offsets = [0, 144], sizes = [1, 16], strides = [1, 1]} : vector<1x256xf32> to vector<1x16xf32>
    %150 = vector.extract_strided_slice %139 {offsets = [0, 160], sizes = [1, 16], strides = [1, 1]} : vector<1x256xf32> to vector<1x16xf32>
    %151 = vector.extract_strided_slice %139 {offsets = [0, 176], sizes = [1, 16], strides = [1, 1]} : vector<1x256xf32> to vector<1x16xf32>
    %152 = vector.extract_strided_slice %139 {offsets = [0, 192], sizes = [1, 16], strides = [1, 1]} : vector<1x256xf32> to vector<1x16xf32>
    %153 = vector.extract_strided_slice %139 {offsets = [0, 208], sizes = [1, 16], strides = [1, 1]} : vector<1x256xf32> to vector<1x16xf32>
    %154 = vector.extract_strided_slice %139 {offsets = [0, 224], sizes = [1, 16], strides = [1, 1]} : vector<1x256xf32> to vector<1x16xf32>
    %155 = vector.extract_strided_slice %139 {offsets = [0, 240], sizes = [1, 16], strides = [1, 1]} : vector<1x256xf32> to vector<1x16xf32>
    %156 = tpu.concatenate %140, %141, %142, %143, %144, %145, %146, %147, %148, %149, %150, %151, %152, %153, %154, %155 in 0 : vector<1x16xf32>, vector<1x16xf32>, vector<1x16xf32>, vector<1x16xf32>, vector<1x16xf32>, vector<1x16xf32>, vector<1x16xf32>, vector<1x16xf32>, vector<1x16xf32>, vector<1x16xf32>, vector<1x16xf32>, vector<1x16xf32>, vector<1x16xf32>, vector<1x16xf32>, vector<1x16xf32>, vector<1x16xf32> -> vector<16x16xf32>
    %157 = vector.shape_cast %156 : vector<16x16xf32> to vector<4x4x16xf32>
    %158 = vector.shape_cast %157 : vector<4x4x16xf32> to vector<4x4x1x16xf32>
    %cst_46 = arith.constant 0.000000e+00 : f32
    %159 = vector.broadcast %cst_46 : f32 to vector<4x4x1x16xf32>
    %160 = tpu.concatenate %158, %159 in 2 : vector<4x4x1x16xf32>, vector<4x4x1x16xf32> -> vector<4x4x2x16xf32>
    %161 = vector.shape_cast %160 : vector<4x4x2x16xf32> to vector<4x8x16xf32>
    %162 = vector.shape_cast %161 : vector<4x8x16xf32> to vector<4x1x8x16xf32>
    %cst_47 = arith.constant 0.000000e+00 : f32
    %163 = vector.broadcast %cst_47 : f32 to vector<4x1x8x16xf32>
    %164 = tpu.concatenate %162, %163 in 1 : vector<4x1x8x16xf32>, vector<4x1x8x16xf32> -> vector<4x2x8x16xf32>
    %165 = vector.shape_cast %164 : vector<4x2x8x16xf32> to vector<8x8x16xf32>
    %cst_48 = arith.constant 0.000000e+00 : f32
    %166 = vector.broadcast %cst_48 : f32 to vector<8x1x16xf32>
    %cst_49 = arith.constant 0.000000e+00 : f32
    %167 = vector.broadcast %cst_49 : f32 to vector<8x1x16xf32>
    %168 = tpu.concatenate %166, %165, %167 in 1 : vector<8x1x16xf32>, vector<8x8x16xf32>, vector<8x1x16xf32> -> vector<8x10x16xf32>
    %cst_50 = arith.constant 0.000000e+00 : f32
    %169 = vector.broadcast %cst_50 : f32 to vector<1x10x16xf32>
    %cst_51 = arith.constant 0.000000e+00 : f32
    %170 = vector.broadcast %cst_51 : f32 to vector<1x10x16xf32>
    %171 = tpu.concatenate %169, %168, %170 in 0 : vector<1x10x16xf32>, vector<8x10x16xf32>, vector<1x10x16xf32> -> vector<10x10x16xf32>
    %172 = vector.extract_strided_slice %171 {offsets = [0, 0, 0], sizes = [8, 8, 16], strides = [1, 1, 1]} : vector<10x10x16xf32> to vector<8x8x16xf32>
    %173 = vector.shape_cast %172 : vector<8x8x16xf32> to vector<64x16xf32>
    %174 = vector.extract_strided_slice %171 {offsets = [0, 1, 0], sizes = [8, 8, 16], strides = [1, 1, 1]} : vector<10x10x16xf32> to vector<8x8x16xf32>
    %175 = vector.shape_cast %174 : vector<8x8x16xf32> to vector<64x16xf32>
    %176 = vector.extract_strided_slice %171 {offsets = [0, 2, 0], sizes = [8, 8, 16], strides = [1, 1, 1]} : vector<10x10x16xf32> to vector<8x8x16xf32>
    %177 = vector.shape_cast %176 : vector<8x8x16xf32> to vector<64x16xf32>
    %178 = vector.extract_strided_slice %171 {offsets = [1, 0, 0], sizes = [8, 8, 16], strides = [1, 1, 1]} : vector<10x10x16xf32> to vector<8x8x16xf32>
    %179 = vector.shape_cast %178 : vector<8x8x16xf32> to vector<64x16xf32>
    %180 = vector.extract_strided_slice %171 {offsets = [1, 1, 0], sizes = [8, 8, 16], strides = [1, 1, 1]} : vector<10x10x16xf32> to vector<8x8x16xf32>
    %181 = vector.shape_cast %180 : vector<8x8x16xf32> to vector<64x16xf32>
    %182 = vector.extract_strided_slice %171 {offsets = [1, 2, 0], sizes = [8, 8, 16], strides = [1, 1, 1]} : vector<10x10x16xf32> to vector<8x8x16xf32>
    %183 = vector.shape_cast %182 : vector<8x8x16xf32> to vector<64x16xf32>
    %184 = vector.extract_strided_slice %171 {offsets = [2, 0, 0], sizes = [8, 8, 16], strides = [1, 1, 1]} : vector<10x10x16xf32> to vector<8x8x16xf32>
    %185 = vector.shape_cast %184 : vector<8x8x16xf32> to vector<64x16xf32>
    %186 = vector.extract_strided_slice %171 {offsets = [2, 1, 0], sizes = [8, 8, 16], strides = [1, 1, 1]} : vector<10x10x16xf32> to vector<8x8x16xf32>
    %187 = vector.shape_cast %186 : vector<8x8x16xf32> to vector<64x16xf32>
    %188 = vector.extract_strided_slice %171 {offsets = [2, 2, 0], sizes = [8, 8, 16], strides = [1, 1, 1]} : vector<10x10x16xf32> to vector<8x8x16xf32>
    %189 = vector.shape_cast %188 : vector<8x8x16xf32> to vector<64x16xf32>
    %190 = tpu.concatenate %173, %175, %177, %179, %181, %183, %185, %187, %189 in 1 : vector<64x16xf32>, vector<64x16xf32>, vector<64x16xf32>, vector<64x16xf32>, vector<64x16xf32>, vector<64x16xf32>, vector<64x16xf32>, vector<64x16xf32>, vector<64x16xf32> -> vector<64x144xf32>
    %c0_52 = arith.constant 0 : index
    %c0_53 = arith.constant 0 : index
    %191 = vector.load %arg14[%c0_52, %c0_53] : memref<144x8xf32, #tpu.memory_space<vmem>>, vector<144x8xf32>
    %cst_54 = arith.constant dense<0.000000e+00> : vector<64x8xf32>
    %192 = tpu.matmul %190, %191, %cst_54 {dimension_numbers = #tpu.dot_dimension_numbers<[1], [0], [0], [1], [0, 0, 1, 1], [], []>} : vector<64x144xf32>, vector<144x8xf32>, vector<64x8xf32> -> vector<64x8xf32>
    %c0_55 = arith.constant 0 : index
    %c0_56 = arith.constant 0 : index
    %193 = vector.load %arg15[%c0_55, %c0_56] : memref<1x8xf32, #tpu.memory_space<vmem>>, vector<1x8xf32>
    %194 = vector.broadcast %193 : vector<1x8xf32> to vector<64x8xf32>
    %195 = arith.addf %192, %194 : vector<64x8xf32>
    %cst_57 = arith.constant 0.000000e+00 : f32
    %196 = vector.broadcast %cst_57 : f32 to vector<64x8xf32>
    %197 = arith.maximumf %195, %196 : vector<64x8xf32>
    %198 = vector.shape_cast %197 : vector<64x8xf32> to vector<8x8x8xf32>
    %199 = vector.shape_cast %198 : vector<8x8x8xf32> to vector<8x8x1x8xf32>
    %cst_58 = arith.constant 0.000000e+00 : f32
    %200 = vector.broadcast %cst_58 : f32 to vector<8x8x1x8xf32>
    %201 = tpu.concatenate %199, %200 in 2 : vector<8x8x1x8xf32>, vector<8x8x1x8xf32> -> vector<8x8x2x8xf32>
    %202 = vector.shape_cast %201 : vector<8x8x2x8xf32> to vector<8x16x8xf32>
    %203 = vector.shape_cast %202 : vector<8x16x8xf32> to vector<8x1x16x8xf32>
    %cst_59 = arith.constant 0.000000e+00 : f32
    %204 = vector.broadcast %cst_59 : f32 to vector<8x1x16x8xf32>
    %205 = tpu.concatenate %203, %204 in 1 : vector<8x1x16x8xf32>, vector<8x1x16x8xf32> -> vector<8x2x16x8xf32>
    %206 = vector.shape_cast %205 : vector<8x2x16x8xf32> to vector<16x16x8xf32>
    %cst_60 = arith.constant 0.000000e+00 : f32
    %207 = vector.broadcast %cst_60 : f32 to vector<16x1x8xf32>
    %cst_61 = arith.constant 0.000000e+00 : f32
    %208 = vector.broadcast %cst_61 : f32 to vector<16x1x8xf32>
    %209 = tpu.concatenate %207, %206, %208 in 1 : vector<16x1x8xf32>, vector<16x16x8xf32>, vector<16x1x8xf32> -> vector<16x18x8xf32>
    %cst_62 = arith.constant 0.000000e+00 : f32
    %210 = vector.broadcast %cst_62 : f32 to vector<1x18x8xf32>
    %cst_63 = arith.constant 0.000000e+00 : f32
    %211 = vector.broadcast %cst_63 : f32 to vector<1x18x8xf32>
    %212 = tpu.concatenate %210, %209, %211 in 0 : vector<1x18x8xf32>, vector<16x18x8xf32>, vector<1x18x8xf32> -> vector<18x18x8xf32>
    %213 = vector.extract_strided_slice %212 {offsets = [0, 0, 0], sizes = [16, 16, 8], strides = [1, 1, 1]} : vector<18x18x8xf32> to vector<16x16x8xf32>
    %214 = vector.shape_cast %213 : vector<16x16x8xf32> to vector<256x8xf32>
    %215 = vector.extract_strided_slice %212 {offsets = [0, 1, 0], sizes = [16, 16, 8], strides = [1, 1, 1]} : vector<18x18x8xf32> to vector<16x16x8xf32>
    %216 = vector.shape_cast %215 : vector<16x16x8xf32> to vector<256x8xf32>
    %217 = vector.extract_strided_slice %212 {offsets = [0, 2, 0], sizes = [16, 16, 8], strides = [1, 1, 1]} : vector<18x18x8xf32> to vector<16x16x8xf32>
    %218 = vector.shape_cast %217 : vector<16x16x8xf32> to vector<256x8xf32>
    %219 = vector.extract_strided_slice %212 {offsets = [1, 0, 0], sizes = [16, 16, 8], strides = [1, 1, 1]} : vector<18x18x8xf32> to vector<16x16x8xf32>
    %220 = vector.shape_cast %219 : vector<16x16x8xf32> to vector<256x8xf32>
    %221 = vector.extract_strided_slice %212 {offsets = [1, 1, 0], sizes = [16, 16, 8], strides = [1, 1, 1]} : vector<18x18x8xf32> to vector<16x16x8xf32>
    %222 = vector.shape_cast %221 : vector<16x16x8xf32> to vector<256x8xf32>
    %223 = vector.extract_strided_slice %212 {offsets = [1, 2, 0], sizes = [16, 16, 8], strides = [1, 1, 1]} : vector<18x18x8xf32> to vector<16x16x8xf32>
    %224 = vector.shape_cast %223 : vector<16x16x8xf32> to vector<256x8xf32>
    %225 = vector.extract_strided_slice %212 {offsets = [2, 0, 0], sizes = [16, 16, 8], strides = [1, 1, 1]} : vector<18x18x8xf32> to vector<16x16x8xf32>
    %226 = vector.shape_cast %225 : vector<16x16x8xf32> to vector<256x8xf32>
    %227 = vector.extract_strided_slice %212 {offsets = [2, 1, 0], sizes = [16, 16, 8], strides = [1, 1, 1]} : vector<18x18x8xf32> to vector<16x16x8xf32>
    %228 = vector.shape_cast %227 : vector<16x16x8xf32> to vector<256x8xf32>
    %229 = vector.extract_strided_slice %212 {offsets = [2, 2, 0], sizes = [16, 16, 8], strides = [1, 1, 1]} : vector<18x18x8xf32> to vector<16x16x8xf32>
    %230 = vector.shape_cast %229 : vector<16x16x8xf32> to vector<256x8xf32>
    %231 = tpu.concatenate %214, %216, %218, %220, %222, %224, %226, %228, %230 in 1 : vector<256x8xf32>, vector<256x8xf32>, vector<256x8xf32>, vector<256x8xf32>, vector<256x8xf32>, vector<256x8xf32>, vector<256x8xf32>, vector<256x8xf32>, vector<256x8xf32> -> vector<256x72xf32>
    %c0_64 = arith.constant 0 : index
    %c0_65 = arith.constant 0 : index
    %232 = vector.load %arg16[%c0_64, %c0_65] : memref<72x4xf32, #tpu.memory_space<vmem>>, vector<72x4xf32>
    %cst_66 = arith.constant dense<0.000000e+00> : vector<256x4xf32>
    %233 = tpu.matmul %231, %232, %cst_66 {dimension_numbers = #tpu.dot_dimension_numbers<[1], [0], [0], [1], [0, 0, 1, 1], [], []>} : vector<256x72xf32>, vector<72x4xf32>, vector<256x4xf32> -> vector<256x4xf32>
    %c0_67 = arith.constant 0 : index
    %c0_68 = arith.constant 0 : index
    %234 = vector.load %arg17[%c0_67, %c0_68] : memref<1x4xf32, #tpu.memory_space<vmem>>, vector<1x4xf32>
    %235 = vector.broadcast %234 : vector<1x4xf32> to vector<256x4xf32>
    %236 = arith.addf %233, %235 : vector<256x4xf32>
    %cst_69 = arith.constant 0.000000e+00 : f32
    %237 = vector.broadcast %cst_69 : f32 to vector<256x4xf32>
    %238 = arith.maximumf %236, %237 : vector<256x4xf32>
    %239 = vector.shape_cast %238 : vector<256x4xf32> to vector<16x16x4xf32>
    %240 = vector.shape_cast %239 : vector<16x16x4xf32> to vector<1x16x16x4xf32>
    %c0_70 = arith.constant 0 : index
    %c0_71 = arith.constant 0 : index
    %c0_72 = arith.constant 0 : index
    %c0_73 = arith.constant 0 : index
    %241 = vector.load %arg18[%c0_70, %c0_71, %c0_72, %c0_73] : memref<1x16x16x4xf32, #tpu.memory_space<vmem>>, vector<1x16x16x4xf32>
    tpu.vector_store %arg18[%c0_70, %c0_71, %c0_72, %c0_73], %240 {strides = array<i32>} : memref<1x16x16x4xf32, #tpu.memory_space<vmem>>, vector<1x16x16x4xf32>,
    return
  }
  func.func @transform_0(%arg0: i32) -> (i32, i32, i32, i32) {
    %c0_i32 = arith.constant 0 : i32
    %c0_i32_0 = arith.constant 0 : i32
    %c0_i32_1 = arith.constant 0 : i32
    %c0_i32_2 = arith.constant 0 : i32
    return %arg0, %c0_i32, %c0_i32_0, %c0_i32_1 : i32, i32, i32, i32
  }
  func.func @transform_1(%arg0: i32) -> (i32, i32) {
    %c0_i32 = arith.constant 0 : i32
    %c0_i32_0 = arith.constant 0 : i32
    %c0_i32_1 = arith.constant 0 : i32
    return %c0_i32, %c0_i32_0 : i32, i32
  }
  func.func @transform_2(%arg0: i32) -> (i32, i32) {
    %c0_i32 = arith.constant 0 : i32
    %c0_i32_0 = arith.constant 0 : i32
    %c0_i32_1 = arith.constant 0 : i32
    return %c0_i32, %c0_i32_0 : i32, i32
  }
  func.func @transform_3(%arg0: i32) -> (i32, i32) {
    %c0_i32 = arith.constant 0 : i32
    %c0_i32_0 = arith.constant 0 : i32
    %c0_i32_1 = arith.constant 0 : i32
    return %c0_i32, %c0_i32_0 : i32, i32
  }
  func.func @transform_4(%arg0: i32) -> (i32, i32) {
    %c0_i32 = arith.constant 0 : i32
    %c0_i32_0 = arith.constant 0 : i32
    %c0_i32_1 = arith.constant 0 : i32
    return %c0_i32, %c0_i32_0 : i32, i32
  }
  func.func @transform_5(%arg0: i32) -> (i32, i32) {
    %c0_i32 = arith.constant 0 : i32
    %c0_i32_0 = arith.constant 0 : i32
    %c0_i32_1 = arith.constant 0 : i32
    return %c0_i32, %c0_i32_0 : i32, i32
  }
  func.func @transform_6(%arg0: i32) -> (i32, i32) {
    %c0_i32 = arith.constant 0 : i32
    %c0_i32_0 = arith.constant 0 : i32
    %c0_i32_1 = arith.constant 0 : i32
    return %c0_i32, %c0_i32_0 : i32, i32
  }
  func.func @transform_7(%arg0: i32) -> (i32, i32) {
    %c0_i32 = arith.constant 0 : i32
    %c0_i32_0 = arith.constant 0 : i32
    %c0_i32_1 = arith.constant 0 : i32
    return %c0_i32, %c0_i32_0 : i32, i32
  }
  func.func @transform_8(%arg0: i32) -> (i32, i32) {
    %c0_i32 = arith.constant 0 : i32
    %c0_i32_0 = arith.constant 0 : i32
    %c0_i32_1 = arith.constant 0 : i32
    return %c0_i32, %c0_i32_0 : i32, i32
  }
  func.func @transform_9(%arg0: i32) -> (i32, i32) {
    %c0_i32 = arith.constant 0 : i32
    %c0_i32_0 = arith.constant 0 : i32
    %c0_i32_1 = arith.constant 0 : i32
    return %c0_i32, %c0_i32_0 : i32, i32
  }
  func.func @transform_10(%arg0: i32) -> (i32, i32) {
    %c0_i32 = arith.constant 0 : i32
    %c0_i32_0 = arith.constant 0 : i32
    %c0_i32_1 = arith.constant 0 : i32
    return %c0_i32, %c0_i32_0 : i32, i32
  }
  func.func @transform_11(%arg0: i32) -> (i32, i32) {
    %c0_i32 = arith.constant 0 : i32
    %c0_i32_0 = arith.constant 0 : i32
    %c0_i32_1 = arith.constant 0 : i32
    return %c0_i32, %c0_i32_0 : i32, i32
  }
  func.func @transform_12(%arg0: i32) -> (i32, i32) {
    %c0_i32 = arith.constant 0 : i32
    %c0_i32_0 = arith.constant 0 : i32
    %c0_i32_1 = arith.constant 0 : i32
    return %c0_i32, %c0_i32_0 : i32, i32
  }
  func.func @transform_13(%arg0: i32) -> (i32, i32) {
    %c0_i32 = arith.constant 0 : i32
    %c0_i32_0 = arith.constant 0 : i32
    %c0_i32_1 = arith.constant 0 : i32
    return %c0_i32, %c0_i32_0 : i32, i32
  }
  func.func @transform_14(%arg0: i32) -> (i32, i32) {
    %c0_i32 = arith.constant 0 : i32
    %c0_i32_0 = arith.constant 0 : i32
    %c0_i32_1 = arith.constant 0 : i32
    return %c0_i32, %c0_i32_0 : i32, i32
  }
  func.func @transform_15(%arg0: i32) -> (i32, i32) {
    %c0_i32 = arith.constant 0 : i32
    %c0_i32_0 = arith.constant 0 : i32
    %c0_i32_1 = arith.constant 0 : i32
    return %c0_i32, %c0_i32_0 : i32, i32
  }
  func.func @transform_16(%arg0: i32) -> (i32, i32) {
    %c0_i32 = arith.constant 0 : i32
    %c0_i32_0 = arith.constant 0 : i32
    %c0_i32_1 = arith.constant 0 : i32
    return %c0_i32, %c0_i32_0 : i32, i32
  }
  func.func @transform_17(%arg0: i32) -> (i32, i32, i32, i32) {
    %c0_i32 = arith.constant 0 : i32
    %c0_i32_0 = arith.constant 0 : i32
    %c0_i32_1 = arith.constant 0 : i32
    %c0_i32_2 = arith.constant 0 : i32
    return %arg0, %c0_i32, %c0_i32_0, %c0_i32_1 : i32, i32, i32, i32
  }
}

</mosaic_0001>

<llo_original>
// kernel: fwd.1
$region0: #{fwd.1}
  #allocation0 [shape = 'u32[]', space=smem, size = 0x4, offset = 0x4, fixed_abs, tag = 'smem constant byte address 0x4 - core index']
  #allocation1 [shape = 'u32[144,128]{1,0:T(1,128)}', space=vmem, size = 0x12000, scoped, tag = 'internal scratch']
  %s0 = inlined_call_operand.vmem [shape: f32[2,16,16,4], index: 0, kind: input, shape index: {}]
  %s1 = inlined_call_operand.vmem [shape: f32[36,8], index: 1, kind: input, shape index: {}]
  %s2 = inlined_call_operand.vmem [shape: f32[1,8], index: 2, kind: input, shape index: {}]
  %s3 = inlined_call_operand.vmem [shape: f32[72,16], index: 3, kind: input, shape index: {}]
  %s4 = inlined_call_operand.vmem [shape: f32[1,16], index: 4, kind: input, shape index: {}]
  %s5 = inlined_call_operand.vmem [shape: f32[256,64], index: 5, kind: input, shape index: {}]
  %s6 = inlined_call_operand.vmem [shape: f32[1,64], index: 6, kind: input, shape index: {}]
  %s7 = inlined_call_operand.vmem [shape: f32[64,32], index: 7, kind: input, shape index: {}]
  %s8 = inlined_call_operand.vmem [shape: f32[1,32], index: 8, kind: input, shape index: {}]
  %s9 = inlined_call_operand.vmem [shape: f32[32,64], index: 9, kind: input, shape index: {}]
  %s10 = inlined_call_operand.vmem [shape: f32[1,64], index: 10, kind: input, shape index: {}]
  %s11 = inlined_call_operand.vmem [shape: f32[64,256], index: 11, kind: input, shape index: {}]
  %s12 = inlined_call_operand.vmem [shape: f32[1,256], index: 12, kind: input, shape index: {}]
  %s13 = inlined_call_operand.vmem [shape: f32[144,8], index: 13, kind: input, shape index: {}]
  %s14 = inlined_call_operand.vmem [shape: f32[1,8], index: 14, kind: input, shape index: {}]
  %s15 = inlined_call_operand.vmem [shape: f32[72,4], index: 15, kind: input, shape index: {}]
  %s16 = inlined_call_operand.vmem [shape: f32[1,4], index: 16, kind: input, shape index: {}]
  %s17 = inlined_call_operand.vmem [shape: f32[2,16,16,4], index: 17, kind: output, shape index: {}]
  %s18 = sld [smem:[#allocation0]]
  $region101: #{fwd.1} parent=0
    _
  %s20 = ssub.s32 1, %s18
  %s21 = scalar_select 0, %s20, %s18
  loop: start=0, step=1, limit=4
  $region2: #{fwd.1} parent=0 // loop_pre_header
    _
  $region3: #{fwd.1} parent=0 // loop_header
    %s23 = sphi 0, %s27
    %p24 = scmp.ge.s32.totalorder %s23, 4
    %s33 = sphi 0, %s35
    %s36 = sphi 0, %s33
    %s37 = sphi 0, %s36
    %s53 = sphi 0, %s37
    %s57 = sphi 0, %s57
    %s59 = sphi 0, %s57
    %s60 = sphi 0, %s59
    %s74 = sphi 0, %s60
    %s78 = sphi 0, %s78
    %s80 = sphi 0, %s78
    %s81 = sphi 0, %s80
    %s95 = sphi 0, %s81
    %s99 = sphi 0, %s99
    %s101 = sphi 0, %s99
    %s102 = sphi 0, %s101
    %s116 = sphi 0, %s102
    %s120 = sphi 0, %s120
    %s122 = sphi 0, %s120
    %s123 = sphi 0, %s122
    %s137 = sphi 0, %s123
    %s141 = sphi 0, %s141
    %s143 = sphi 0, %s141
    %s144 = sphi 0, %s143
    %s158 = sphi 0, %s144
    %s162 = sphi 0, %s162
    %s164 = sphi 0, %s162
    %s165 = sphi 0, %s164
    %s179 = sphi 0, %s165
    %s183 = sphi 0, %s183
    %s185 = sphi 0, %s183
    %s186 = sphi 0, %s185
    %s200 = sphi 0, %s186
    %s204 = sphi 0, %s204
    %s206 = sphi 0, %s204
    %s207 = sphi 0, %s206
    %s221 = sphi 0, %s207
    %s225 = sphi 0, %s225
    %s227 = sphi 0, %s225
    %s228 = sphi 0, %s227
    %s242 = sphi 0, %s228
    %s246 = sphi 0, %s246
    %s248 = sphi 0, %s246
    %s249 = sphi 0, %s248
    %s263 = sphi 0, %s249
    %s267 = sphi 0, %s267
    %s269 = sphi 0, %s267
    %s270 = sphi 0, %s269
    %s284 = sphi 0, %s270
    %s288 = sphi 0, %s288
    %s290 = sphi 0, %s288
    %s291 = sphi 0, %s290
    %s305 = sphi 0, %s291
    %s309 = sphi 0, %s309
    %s311 = sphi 0, %s309
    %s312 = sphi 0, %s311
    %s326 = sphi 0, %s312
    %s330 = sphi 0, %s330
    %s332 = sphi 0, %s330
    %s333 = sphi 0, %s332
    %s347 = sphi 0, %s333
    %s351 = sphi 0, %s351
    %s353 = sphi 0, %s351
    %s354 = sphi 0, %s353
    %s368 = sphi 0, %s354
    %s372 = sphi 0, %s372
    %s374 = sphi 0, %s372
    %s375 = sphi 0, %s374
    %s389 = sphi 0, %s375
    %s395 = sphi 0, %s397
    %s398 = sphi 0, %s395
    %s399 = sphi 0, %s398
    %s415 = sphi 0, %s399
  $region4: #{fwd.1} parent=0 // loop_header_branch
    %26 = sbr.rel (%p24) target = $region8
  $region5: #{fwd.1} parent=0 // loop_body
    %s28 = ssub.s32 %s23, 1
    %s29 = ssub.s32 %s23, 2
    %s30 = sadd.s32 %s23, 1
    %s31 = ssub.s32 %s23, %s30
    %p32 = scmp.eq.s32.totalorder %s31, 0
    %s34 = sadd.s32 %s33, 1
    %s35 = scalar_select %p32, %s33, %s34
    %p38 = pneg %p32
    %p39 = scmp.eq.s32.totalorder %s23, 1
    %p40 = por %p38, %p39
    %p41 = scmp.ne.s32.totalorder %s33, %s36
    %p42 = scmp.eq.s32.totalorder %s23, 0
    %p43 = por %p41, %p42
    %p44 = scmp.ne.s32.totalorder %s33, %s36
    %p45 = scmp.eq.s32.totalorder %s28, 1
    %p46 = por %p44, %p45
    %p47 = scmp.ne.s32.totalorder %s36, %s37
    %p48 = scmp.eq.s32.totalorder %s28, 0
    %p49 = por %p47, %p48
    %p50 = scmp.ne.s32.totalorder %s36, %s37
    %p51 = scmp.eq.s32.totalorder %s29, 1
    %p52 = por %p50, %p51
    %p54 = scmp.ne.s32.totalorder %s37, %s53
    %p55 = scmp.eq.s32.totalorder %s29, 0
    %p56 = por %p54, %p55
    %s58 = sadd.s32 %s57, 1
    %p61 = scmp.eq.s32.totalorder %s23, 1
    %p62 = scmp.ne.s32.totalorder %s57, %s59
    %p63 = scmp.eq.s32.totalorder %s23, 0
    %p64 = por %p62, %p63
    %p65 = scmp.ne.s32.totalorder %s57, %s59
    %p66 = scmp.eq.s32.totalorder %s28, 1
    %p67 = por %p65, %p66
    %p68 = scmp.ne.s32.totalorder %s59, %s60
    %p69 = scmp.eq.s32.totalorder %s28, 0
    %p70 = por %p68, %p69
    %p71 = scmp.ne.s32.totalorder %s59, %s60
    %p72 = scmp.eq.s32.totalorder %s29, 1
    %p73 = por %p71, %p72
    %p75 = scmp.ne.s32.totalorder %s60, %s74
    %p76 = scmp.eq.s32.totalorder %s29, 0
    %p77 = por %p75, %p76
    %s79 = sadd.s32 %s78, 1
    %p82 = scmp.eq.s32.totalorder %s23, 1
    %p83 = scmp.ne.s32.totalorder %s78, %s80
    %p84 = scmp.eq.s32.totalorder %s23, 0
    %p85 = por %p83, %p84
    %p86 = scmp.ne.s32.totalorder %s78, %s80
    %p87 = scmp.eq.s32.totalorder %s28, 1
    %p88 = por %p86, %p87
    %p89 = scmp.ne.s32.totalorder %s80, %s81
    %p90 = scmp.eq.s32.totalorder %s28, 0
    %p91 = por %p89, %p90
    %p92 = scmp.ne.s32.totalorder %s80, %s81
    %p93 = scmp.eq.s32.totalorder %s29, 1
    %p94 = por %p92, %p93
    %p96 = scmp.ne.s32.totalorder %s81, %s95
    %p97 = scmp.eq.s32.totalorder %s29, 0
    %p98 = por %p96, %p97
    %s100 = sadd.s32 %s99, 1
    %p103 = scmp.eq.s32.totalorder %s23, 1
    %p104 = scmp.ne.s32.totalorder %s99, %s101
    %p105 = scmp.eq.s32.totalorder %s23, 0
    %p106 = por %p104, %p105
    %p107 = scmp.ne.s32.totalorder %s99, %s101
    %p108 = scmp.eq.s32.totalorder %s28, 1
    %p109 = por %p107, %p108
    %p110 = scmp.ne.s32.totalorder %s101, %s102
    %p111 = scmp.eq.s32.totalorder %s28, 0
    %p112 = por %p110, %p111
    %p113 = scmp.ne.s32.totalorder %s101, %s102
    %p114 = scmp.eq.s32.totalorder %s29, 1
    %p115 = por %p113, %p114
    %p117 = scmp.ne.s32.totalorder %s102, %s116
    %p118 = scmp.eq.s32.totalorder %s29, 0
    %p119 = por %p117, %p118
    %s121 = sadd.s32 %s120, 1
    %p124 = scmp.eq.s32.totalorder %s23, 1
    %p125 = scmp.ne.s32.totalorder %s120, %s122
    %p126 = scmp.eq.s32.totalorder %s23, 0
    %p127 = por %p125, %p126
    %p128 = scmp.ne.s32.totalorder %s120, %s122
    %p129 = scmp.eq.s32.totalorder %s28, 1
    %p130 = por %p128, %p129
    %p131 = scmp.ne.s32.totalorder %s122, %s123
    %p132 = scmp.eq.s32.totalorder %s28, 0
    %p133 = por %p131, %p132
    %p134 = scmp.ne.s32.totalorder %s122, %s123
    %p135 = scmp.eq.s32.totalorder %s29, 1
    %p136 = por %p134, %p135
    %p138 = scmp.ne.s32.totalorder %s123, %s137
    %p139 = scmp.eq.s32.totalorder %s29, 0
    %p140 = por %p138, %p139
    %s142 = sadd.s32 %s141, 1
    %p145 = scmp.eq.s32.totalorder %s23, 1
    %p146 = scmp.ne.s32.totalorder %s141, %s143
    %p147 = scmp.eq.s32.totalorder %s23, 0
    %p148 = por %p146, %p147
    %p149 = scmp.ne.s32.totalorder %s141, %s143
    %p150 = scmp.eq.s32.totalorder %s28, 1
    %p151 = por %p149, %p150
    %p152 = scmp.ne.s32.totalorder %s143, %s144
    %p153 = scmp.eq.s32.totalorder %s28, 0
    %p154 = por %p152, %p153
    %p155 = scmp.ne.s32.totalorder %s143, %s144
    %p156 = scmp.eq.s32.totalorder %s29, 1
    %p157 = por %p155, %p156
    %p159 = scmp.ne.s32.totalorder %s144, %s158
    %p160 = scmp.eq.s32.totalorder %s29, 0
    %p161 = por %p159, %p160
    %s163 = sadd.s32 %s162, 1
    %p166 = scmp.eq.s32.totalorder %s23, 1
    %p167 = scmp.ne.s32.totalorder %s162, %s164
    %p168 = scmp.eq.s32.totalorder %s23, 0
    %p169 = por %p167, %p168
    %p170 = scmp.ne.s32.totalorder %s162, %s164
    %p171 = scmp.eq.s32.totalorder %s28, 1
    %p172 = por %p170, %p171
    %p173 = scmp.ne.s32.totalorder %s164, %s165
    %p174 = scmp.eq.s32.totalorder %s28, 0
    %p175 = por %p173, %p174
    %p176 = scmp.ne.s32.totalorder %s164, %s165
    %p177 = scmp.eq.s32.totalorder %s29, 1
    %p178 = por %p176, %p177
    %p180 = scmp.ne.s32.totalorder %s165, %s179
    %p181 = scmp.eq.s32.totalorder %s29, 0
    %p182 = por %p180, %p181
    %s184 = sadd.s32 %s183, 1
    %p187 = scmp.eq.s32.totalorder %s23, 1
    %p188 = scmp.ne.s32.totalorder %s183, %s185
    %p189 = scmp.eq.s32.totalorder %s23, 0
    %p190 = por %p188, %p189
    %p191 = scmp.ne.s32.totalorder %s183, %s185
    %p192 = scmp.eq.s32.totalorder %s28, 1
    %p193 = por %p191, %p192
    %p194 = scmp.ne.s32.totalorder %s185, %s186
    %p195 = scmp.eq.s32.totalorder %s28, 0
    %p196 = por %p194, %p195
    %p197 = scmp.ne.s32.totalorder %s185, %s186
    %p198 = scmp.eq.s32.totalorder %s29, 1
    %p199 = por %p197, %p198
    %p201 = scmp.ne.s32.totalorder %s186, %s200
    %p202 = scmp.eq.s32.totalorder %s29, 0
    %p203 = por %p201, %p202
    %s205 = sadd.s32 %s204, 1
    %p208 = scmp.eq.s32.totalorder %s23, 1
    %p209 = scmp.ne.s32.totalorder %s204, %s206
    %p210 = scmp.eq.s32.totalorder %s23, 0
    %p211 = por %p209, %p210
    %p212 = scmp.ne.s32.totalorder %s204, %s206
    %p213 = scmp.eq.s32.totalorder %s28, 1
    %p214 = por %p212, %p213
    %p215 = scmp.ne.s32.totalorder %s206, %s207
    %p216 = scmp.eq.s32.totalorder %s28, 0
    %p217 = por %p215, %p216
    %p218 = scmp.ne.s32.totalorder %s206, %s207
    %p219 = scmp.eq.s32.totalorder %s29, 1
    %p220 = por %p218, %p219
    %p222 = scmp.ne.s32.totalorder %s207, %s221
    %p223 = scmp.eq.s32.totalorder %s29, 0
    %p224 = por %p222, %p223
    %s226 = sadd.s32 %s225, 1
    %p229 = scmp.eq.s32.totalorder %s23, 1
    %p230 = scmp.ne.s32.totalorder %s225, %s227
    %p231 = scmp.eq.s32.totalorder %s23, 0
    %p232 = por %p230, %p231
    %p233 = scmp.ne.s32.totalorder %s225, %s227
    %p234 = scmp.eq.s32.totalorder %s28, 1
    %p235 = por %p233, %p234
    %p236 = scmp.ne.s32.totalorder %s227, %s228
    %p237 = scmp.eq.s32.totalorder %s28, 0
    %p238 = por %p236, %p237
    %p239 = scmp.ne.s32.totalorder %s227, %s228
    %p240 = scmp.eq.s32.totalorder %s29, 1
    %p241 = por %p239, %p240
    %p243 = scmp.ne.s32.totalorder %s228, %s242
    %p244 = scmp.eq.s32.totalorder %s29, 0
    %p245 = por %p243, %p244
    %s247 = sadd.s32 %s246, 1
    %p250 = scmp.eq.s32.totalorder %s23, 1
    %p251 = scmp.ne.s32.totalorder %s246, %s248
    %p252 = scmp.eq.s32.totalorder %s23, 0
    %p253 = por %p251, %p252
    %p254 = scmp.ne.s32.totalorder %s246, %s248
    %p255 = scmp.eq.s32.totalorder %s28, 1
    %p256 = por %p254, %p255
    %p257 = scmp.ne.s32.totalorder %s248, %s249
    %p258 = scmp.eq.s32.totalorder %s28, 0
    %p259 = por %p257, %p258
    %p260 = scmp.ne.s32.totalorder %s248, %s249
    %p261 = scmp.eq.s32.totalorder %s29, 1
    %p262 = por %p260, %p261
    %p264 = scmp.ne.s32.totalorder %s249, %s263
    %p265 = scmp.eq.s32.totalorder %s29, 0
    %p266 = por %p264, %p265
    %s268 = sadd.s32 %s267, 1
    %p271 = scmp.eq.s32.totalorder %s23, 1
    %p272 = scmp.ne.s32.totalorder %s267, %s269
    %p273 = scmp.eq.s32.totalorder %s23, 0
    %p274 = por %p272, %p273
    %p275 = scmp.ne.s32.totalorder %s267, %s269
    %p276 = scmp.eq.s32.totalorder %s28, 1
    %p277 = por %p275, %p276
    %p278 = scmp.ne.s32.totalorder %s269, %s270
    %p279 = scmp.eq.s32.totalorder %s28, 0
    %p280 = por %p278, %p279
    %p281 = scmp.ne.s32.totalorder %s269, %s270
    %p282 = scmp.eq.s32.totalorder %s29, 1
    %p283 = por %p281, %p282
    %p285 = scmp.ne.s32.totalorder %s270, %s284
    %p286 = scmp.eq.s32.totalorder %s29, 0
    %p287 = por %p285, %p286
    %s289 = sadd.s32 %s288, 1
    %p292 = scmp.eq.s32.totalorder %s23, 1
    %p293 = scmp.ne.s32.totalorder %s288, %s290
    %p294 = scmp.eq.s32.totalorder %s23, 0
    %p295 = por %p293, %p294
    %p296 = scmp.ne.s32.totalorder %s288, %s290
    %p297 = scmp.eq.s32.totalorder %s28, 1
    %p298 = por %p296, %p297
    %p299 = scmp.ne.s32.totalorder %s290, %s291
    %p300 = scmp.eq.s32.totalorder %s28, 0
    %p301 = por %p299, %p300
    %p302 = scmp.ne.s32.totalorder %s290, %s291
    %p303 = scmp.eq.s32.totalorder %s29, 1
    %p304 = por %p302, %p303
    %p306 = scmp.ne.s32.totalorder %s291, %s305
    %p307 = scmp.eq.s32.totalorder %s29, 0
    %p308 = por %p306, %p307
    %s310 = sadd.s32 %s309, 1
    %p313 = scmp.eq.s32.totalorder %s23, 1
    %p314 = scmp.ne.s32.totalorder %s309, %s311
    %p315 = scmp.eq.s32.totalorder %s23, 0
    %p316 = por %p314, %p315
    %p317 = scmp.ne.s32.totalorder %s309, %s311
    %p318 = scmp.eq.s32.totalorder %s28, 1
    %p319 = por %p317, %p318
    %p320 = scmp.ne.s32.totalorder %s311, %s312
    %p321 = scmp.eq.s32.totalorder %s28, 0
    %p322 = por %p320, %p321
    %p323 = scmp.ne.s32.totalorder %s311, %s312
    %p324 = scmp.eq.s32.totalorder %s29, 1
    %p325 = por %p323, %p324
    %p327 = scmp.ne.s32.totalorder %s312, %s326
    %p328 = scmp.eq.s32.totalorder %s29, 0
    %p329 = por %p327, %p328
    %s331 = sadd.s32 %s330, 1
    %p334 = scmp.eq.s32.totalorder %s23, 1
    %p335 = scmp.ne.s32.totalorder %s330, %s332
    %p336 = scmp.eq.s32.totalorder %s23, 0
    %p337 = por %p335, %p336
    %p338 = scmp.ne.s32.totalorder %s330, %s332
    %p339 = scmp.eq.s32.totalorder %s28, 1
    %p340 = por %p338, %p339
    %p341 = scmp.ne.s32.totalorder %s332, %s333
    %p342 = scmp.eq.s32.totalorder %s28, 0
    %p343 = por %p341, %p342
    %p344 = scmp.ne.s32.totalorder %s332, %s333
    %p345 = scmp.eq.s32.totalorder %s29, 1
    %p346 = por %p344, %p345
    %p348 = scmp.ne.s32.totalorder %s333, %s347
    %p349 = scmp.eq.s32.totalorder %s29, 0
    %p350 = por %p348, %p349
    %s352 = sadd.s32 %s351, 1
    %p355 = scmp.eq.s32.totalorder %s23, 1
    %p356 = scmp.ne.s32.totalorder %s351, %s353
    %p357 = scmp.eq.s32.totalorder %s23, 0
    %p358 = por %p356, %p357
    %p359 = scmp.ne.s32.totalorder %s351, %s353
    %p360 = scmp.eq.s32.totalorder %s28, 1
    %p361 = por %p359, %p360
    %p362 = scmp.ne.s32.totalorder %s353, %s354
    %p363 = scmp.eq.s32.totalorder %s28, 0
    %p364 = por %p362, %p363
    %p365 = scmp.ne.s32.totalorder %s353, %s354
    %p366 = scmp.eq.s32.totalorder %s29, 1
    %p367 = por %p365, %p366
    %p369 = scmp.ne.s32.totalorder %s354, %s368
    %p370 = scmp.eq.s32.totalorder %s29, 0
    %p371 = por %p369, %p370
    %s373 = sadd.s32 %s372, 1
    %p376 = scmp.eq.s32.totalorder %s23, 1
    %p377 = scmp.ne.s32.totalorder %s372, %s374
    %p378 = scmp.eq.s32.totalorder %s23, 0
    %p379 = por %p377, %p378
    %p380 = scmp.ne.s32.totalorder %s372, %s374
    %p381 = scmp.eq.s32.totalorder %s28, 1
    %p382 = por %p380, %p381
    %p383 = scmp.ne.s32.totalorder %s374, %s375
    %p384 = scmp.eq.s32.totalorder %s28, 0
    %p385 = por %p383, %p384
    %p386 = scmp.ne.s32.totalorder %s374, %s375
    %p387 = scmp.eq.s32.totalorder %s29, 1
    %p388 = por %p386, %p387
    %p390 = scmp.ne.s32.totalorder %s375, %s389
    %p391 = scmp.eq.s32.totalorder %s29, 0
    %p392 = por %p390, %p391
    %s393 = ssub.s32 %s23, %s30
    %p394 = scmp.eq.s32.totalorder %s393, 0
    %s396 = sadd.s32 %s395, 1
    %s397 = scalar_select %p394, %s395, %s396
    %p400 = pneg %p394
    %p401 = scmp.eq.s32.totalorder %s23, 1
    %p402 = por %p400, %p401
    %p403 = scmp.ne.s32.totalorder %s395, %s398
    %p404 = scmp.eq.s32.totalorder %s23, 0
    %p405 = por %p403, %p404
    %p406 = scmp.ne.s32.totalorder %s395, %s398
    %p407 = scmp.eq.s32.totalorder %s28, 1
    %p408 = por %p406, %p407
    %p409 = scmp.ne.s32.totalorder %s398, %s399
    %p410 = scmp.eq.s32.totalorder %s28, 0
    %p411 = por %p409, %p410
    %p412 = scmp.ne.s32.totalorder %s398, %s399
    %p413 = scmp.eq.s32.totalorder %s29, 1
    %p414 = por %p412, %p413
    %p416 = scmp.ne.s32.totalorder %s399, %s415
    %p417 = scmp.eq.s32.totalorder %s29, 0
    %p418 = por %p416, %p417
    %p419 = scmp.le.s32.totalorder 1, %s23
    %p420 = scmp.lt.s32.totalorder %s23, 3
    %p421 = pnand %p419, %p420
    %p422 = pneg %p421
    // Predicated region
    $region9: #{fwd.1} parent=5 // pred_check
      _
    $region10: #{fwd.1} parent=5 // pred_check_branch
      %424 = sbr.rel (%p421) target = $region12
    $region11: #{fwd.1} parent=5 // pred_region
      %s425 = ssub.s32 %s23, 1
      // Predicated region
      $region13: #{fwd.1} parent=11 // pred_check
        %p426 = pneg %p70
      $region14: #{fwd.1} parent=11 // pred_check_branch
        %428 = sbr.rel (%p426) target = $region16
      $region15: #{fwd.1} parent=11 // pred_region
        _
      $region16: #{fwd.1} parent=11 // pred_fallthru
        _
      // Predicated region
      $region17: #{fwd.1} parent=11 // pred_check
        %p429 = pneg %p91
      $region18: #{fwd.1} parent=11 // pred_check_branch
        %431 = sbr.rel (%p429) target = $region20
      $region19: #{fwd.1} parent=11 // pred_region
        _
      $region20: #{fwd.1} parent=11 // pred_fallthru
        _
      // Predicated region
      $region21: #{fwd.1} parent=11 // pred_check
        %p432 = pneg %p112
      $region22: #{fwd.1} parent=11 // pred_check_branch
        %434 = sbr.rel (%p432) target = $region24
      $region23: #{fwd.1} parent=11 // pred_region
        _
      $region24: #{fwd.1} parent=11 // pred_fallthru
        _
      // Predicated region
      $region25: #{fwd.1} parent=11 // pred_check
        %p435 = pneg %p133
      $region26: #{fwd.1} parent=11 // pred_check_branch
        %437 = sbr.rel (%p435) target = $region28
      $region27: #{fwd.1} parent=11 // pred_region
        _
      $region28: #{fwd.1} parent=11 // pred_fallthru
        _
      // Predicated region
      $region29: #{fwd.1} parent=11 // pred_check
        %p438 = pneg %p154
      $region30: #{fwd.1} parent=11 // pred_check_branch
        %440 = sbr.rel (%p438) target = $region32
      $region31: #{fwd.1} parent=11 // pred_region
        _
      $region32: #{fwd.1} parent=11 // pred_fallthru
        _
      // Predicated region
      $region33: #{fwd.1} parent=11 // pred_check
        %p441 = pneg %p175
      $region34: #{fwd.1} parent=11 // pred_check_branch
        %443 = sbr.rel (%p441) target = $region36
      $region35: #{fwd.1} parent=11 // pred_region
        _
      $region36: #{fwd.1} parent=11 // pred_fallthru
        _
      // Predicated region
      $region37: #{fwd.1} parent=11 // pred_check
        %p444 = pneg %p196
      $region38: #{fwd.1} parent=11 // pred_check_branch
        %446 = sbr.rel (%p444) target = $region40
      $region39: #{fwd.1} parent=11 // pred_region
        _
      $region40: #{fwd.1} parent=11 // pred_fallthru
        _
      // Predicated region
      $region41: #{fwd.1} parent=11 // pred_check
        %p447 = pneg %p217
      $region42: #{fwd.1} parent=11 // pred_check_branch
        %449 = sbr.rel (%p447) target = $region44
      $region43: #{fwd.1} parent=11 // pred_region
        _
      $region44: #{fwd.1} parent=11 // pred_fallthru
        _
      // Predicated region
      $region45: #{fwd.1} parent=11 // pred_check
        %p450 = pneg %p238
      $region46: #{fwd.1} parent=11 // pred_check_branch
        %452 = sbr.rel (%p450) target = $region48
      $region47: #{fwd.1} parent=11 // pred_region
        _
      $region48: #{fwd.1} parent=11 // pred_fallthru
        _
      // Predicated region
      $region49: #{fwd.1} parent=11 // pred_check
        %p453 = pneg %p259
      $region50: #{fwd.1} parent=11 // pred_check_branch
        %455 = sbr.rel (%p453) target = $region52
      $region51: #{fwd.1} parent=11 // pred_region
        _
      $region52: #{fwd.1} parent=11 // pred_fallthru
        _
      // Predicated region
      $region53: #{fwd.1} parent=11 // pred_check
        %p456 = pneg %p280
      $region54: #{fwd.1} parent=11 // pred_check_branch
        %458 = sbr.rel (%p456) target = $region56
      $region55: #{fwd.1} parent=11 // pred_region
        _
      $region56: #{fwd.1} parent=11 // pred_fallthru
        _
      // Predicated region
      $region57: #{fwd.1} parent=11 // pred_check
        %p459 = pneg %p301
      $region58: #{fwd.1} parent=11 // pred_check_branch
        %461 = sbr.rel (%p459) target = $region60
      $region59: #{fwd.1} parent=11 // pred_region
        _
      $region60: #{fwd.1} parent=11 // pred_fallthru
        _
      // Predicated region
      $region61: #{fwd.1} parent=11 // pred_check
        %p462 = pneg %p322
      $region62: #{fwd.1} parent=11 // pred_check_branch
        %464 = sbr.rel (%p462) target = $region64
      $region63: #{fwd.1} parent=11 // pred_region
        _
      $region64: #{fwd.1} parent=11 // pred_fallthru
        _
      // Predicated region
      $region65: #{fwd.1} parent=11 // pred_check
        %p465 = pneg %p343
      $region66: #{fwd.1} parent=11 // pred_check_branch
        %467 = sbr.rel (%p465) target = $region68
      $region67: #{fwd.1} parent=11 // pred_region
        _
      $region68: #{fwd.1} parent=11 // pred_fallthru
        _
      // Predicated region
      $region69: #{fwd.1} parent=11 // pred_check
        %p468 = pneg %p364
      $region70: #{fwd.1} parent=11 // pred_check_branch
        %470 = sbr.rel (%p468) target = $region72
      $region71: #{fwd.1} parent=11 // pred_region
        _
      $region72: #{fwd.1} parent=11 // pred_fallthru
        _
      // Predicated region
      $region73: #{fwd.1} parent=11 // pred_check
        %p471 = pneg %p385
      $region74: #{fwd.1} parent=11 // pred_check_branch
        %473 = sbr.rel (%p471) target = $region76
      $region75: #{fwd.1} parent=11 // pred_region
        _
      $region76: #{fwd.1} parent=11 // pred_fallthru
        _
    $region12: #{fwd.1} parent=5 // pred_fallthru
      _
    %p474 = scmp.lt.s32.totalorder %s23, 2
    // Predicated region
    $region77: #{fwd.1} parent=5 // pred_check
      %p475 = pneg %p474
    $region78: #{fwd.1} parent=5 // pred_check_branch
      %477 = sbr.rel (%p475) target = $region80
    $region79: #{fwd.1} parent=5 // pred_region
      // Predicated region
      $region81: #{fwd.1} parent=79 // pred_check
        %p478 = pneg %p43
      $region82: #{fwd.1} parent=79 // pred_check_branch
        %480 = sbr.rel (%p478) target = $region84
      $region83: #{fwd.1} parent=79 // pred_region
        %p481 = scmp.lt.s32.totalorder %s23, 1
        %s482 = scalar_select %p481, %s23, 1
        %s483 = smul.addr %s482, 32
        %s484 = smul.addr %s483, 8
        %s485 = scalar_lea.vmem %s0, %s484
      $region84: #{fwd.1} parent=79 // pred_fallthru
        _
    $region80: #{fwd.1} parent=5 // pred_fallthru
      _
    %p486 = scmp.le.s32.totalorder 1, %s23
    %p487 = scmp.lt.s32.totalorder %s23, 3
    %p488 = pnand %p486, %p487
    %p489 = pneg %p488
    // Predicated region
    $region85: #{fwd.1} parent=5 // pred_check
      _
    $region86: #{fwd.1} parent=5 // pred_check_branch
      %491 = sbr.rel (%p488) target = $region88
    $region87: #{fwd.1} parent=5 // pred_region
      %s492 = ssub.s32 %s23, 1
      %p493 = scmp.lt.s32.totalorder %s28, 1
      %s494 = scalar_select %p493, %s28, 1
      %s495 = smul.addr %s494, 32
      %s496 = smul.addr %s495, 8
      %s497 = scalar_lea.vmem %s0, %s496
      %p498 = pneg %p49
      %p499 = pneg %p46
      %p500 = pneg %p70
      %p501 = pneg %p67
      %p502 = pneg %p91
      %p503 = pneg %p88
      %p504 = pneg %p112
      %p505 = pneg %p109
      %p506 = pneg %p133
      %p507 = pneg %p130
      %p508 = pneg %p154
      %p509 = pneg %p151
      %p510 = pneg %p175
      %p511 = pneg %p172
      %p512 = pneg %p196
      %p513 = pneg %p193
      %p514 = pneg %p217
      %p515 = pneg %p214
      %p516 = pneg %p238
      %p517 = pneg %p235
      %p518 = pneg %p259
      %p519 = pneg %p256
      %p520 = pneg %p280
      %p521 = pneg %p277
      %p522 = pneg %p301
      %p523 = pneg %p298
      %p524 = pneg %p322
      %p525 = pneg %p319
      %p526 = pneg %p343
      %p527 = pneg %p340
      %p528 = pneg %p364
      %p529 = pneg %p361
      %p530 = pneg %p385
      %p531 = pneg %p382
      %p532 = pneg %p411
      %p533 = pneg %p408
      %p534 = scmp.lt.s32.totalorder %s28, 1
      %s535 = scalar_select %p534, %s28, 1
      %s536 = smul.addr %s535, 32
      %s537 = smul.addr %s536, 8
      %s538 = scalar_lea.vmem %s17, %s537
      %p539 = scmp.lt.s32.totalorder %s28, 1
      %s540 = scalar_select %p539, %s28, 1
      %s541 = smul.addr %s540, 32
      %s542 = smul.addr %s541, 8
      %s543 = scalar_lea.vmem %s0, %s542
      %p544 = scmp.lt.s32.totalorder %s28, 1
      %s545 = scalar_select %p544, %s28, 1
      %s546 = smul.addr %s545, 32
      %s547 = smul.addr %s546, 8
      %s548 = scalar_lea.vmem %s17, %s547
      %v549 = vld [vmem:[%s543] sm:$0xff]
      %v550 = vld [vmem:[%s543 + $0x8] sm:$0xff]
      %v551 = vld [vmem:[%s543 + $0x10] sm:$0xff]
      %v552 = vld [vmem:[%s543 + $0x18] sm:$0xff]
      %v553 = vld [vmem:[%s543 + $0x20] sm:$0xff]
      %v554 = vld [vmem:[%s543 + $0x28] sm:$0xff]
      %v555 = vld [vmem:[%s543 + $0x30] sm:$0xff]
      %v556 = vld [vmem:[%s543 + $0x38] sm:$0xff]
      %v557 = vld [vmem:[%s543 + $0x40] sm:$0xff]
      %v558 = vld [vmem:[%s543 + $0x48] sm:$0xff]
      %v559 = vld [vmem:[%s543 + $0x50] sm:$0xff]
      %v560 = vld [vmem:[%s543 + $0x58] sm:$0xff]
      %v561 = vld [vmem:[%s543 + $0x60] sm:$0xff]
      %v562 = vld [vmem:[%s543 + $0x68] sm:$0xff]
      %v563 = vld [vmem:[%s543 + $0x70] sm:$0xff]
      %v564 = vld [vmem:[%s543 + $0x78] sm:$0xff]
      %v565 = vld [vmem:[%s543 + $0x80] sm:$0xff]
      %v566 = vld [vmem:[%s543 + $0x88] sm:$0xff]
      %v567 = vld [vmem:[%s543 + $0x90] sm:$0xff]
      %v568 = vld [vmem:[%s543 + $0x98] sm:$0xff]
      %v569 = vld [vmem:[%s543 + $0xa0] sm:$0xff]
      %v570 = vld [vmem:[%s543 + $0xa8] sm:$0xff]
      %v571 = vld [vmem:[%s543 + $0xb0] sm:$0xff]
      %v572 = vld [vmem:[%s543 + $0xb8] sm:$0xff]
      %v573 = vld [vmem:[%s543 + $0xc0] sm:$0xff]
      %v574 = vld [vmem:[%s543 + $0xc8] sm:$0xff]
      %v575 = vld [vmem:[%s543 + $0xd0] sm:$0xff]
      %v576 = vld [vmem:[%s543 + $0xd8] sm:$0xff]
      %v577 = vld [vmem:[%s543 + $0xe0] sm:$0xff]
      %v578 = vld [vmem:[%s543 + $0xe8] sm:$0xff]
      %v579 = vld [vmem:[%s543 + $0xf0] sm:$0xff]
      %v580 = vld [vmem:[%s543 + $0xf8] sm:$0xff]
      %vm613 = vcmask 1040384
      %v614 = vrot.slane %v549, 7
      %v615 = vrot.slane %v550, 7
      %v616 = vsel %vm613, %v614, %v615
      %v617 = vrot.slane %v551, 7
      %v618 = vrot.slane %v552, 7
      %v619 = vsel %vm613, %v617, %v618
      %v620 = vrot.slane %v553, 7
      %v621 = vrot.slane %v554, 7
      %v622 = vsel %vm613, %v620, %v621
      %v623 = vrot.slane %v555, 7
      %v624 = vrot.slane %v556, 7
      %v625 = vsel %vm613, %v623, %v624
      %v626 = vrot.slane %v557, 7
      %v627 = vrot.slane %v558, 7
      %v628 = vsel %vm613, %v626, %v627
      %v629 = vrot.slane %v559, 7
      %v630 = vrot.slane %v560, 7
      %v631 = vsel %vm613, %v629, %v630
      %v632 = vrot.slane %v561, 7
      %v633 = vrot.slane %v562, 7
      %v634 = vsel %vm613, %v632, %v633
      %v635 = vrot.slane %v563, 7
      %v636 = vrot.slane %v564, 7
      %v637 = vsel %vm613, %v635, %v636
      %v638 = vrot.slane %v565, 7
      %v639 = vrot.slane %v566, 7
      %v640 = vsel %vm613, %v638, %v639
      %v641 = vrot.slane %v567, 7
      %v642 = vrot.slane %v568, 7
      %v643 = vsel %vm613, %v641, %v642
      %v644 = vrot.slane %v569, 7
      %v645 = vrot.slane %v570, 7
      %v646 = vsel %vm613, %v644, %v645
      %v647 = vrot.slane %v571, 7
      %v648 = vrot.slane %v572, 7
      %v649 = vsel %vm613, %v647, %v648
      %v650 = vrot.slane %v573, 7
      %v651 = vrot.slane %v574, 7
      %v652 = vsel %vm613, %v650, %v651
      %v653 = vrot.slane %v575, 7
      %v654 = vrot.slane %v576, 7
      %v655 = vsel %vm613, %v653, %v654
      %v656 = vrot.slane %v577, 7
      %v657 = vrot.slane %v578, 7
      %v658 = vsel %vm613, %v656, %v657
      %v659 = vrot.slane %v579, 7
      %v660 = vrot.slane %v580, 7
      %v661 = vsel %vm613, %v659, %v660
      %v694 = vsel %vm613, 0.0, %v614
      %v695 = vsel %vm613, 0.0, %v617
      %v696 = vsel %vm613, 0.0, %v620
      %v697 = vsel %vm613, 0.0, %v623
      %v698 = vsel %vm613, 0.0, %v626
      %v699 = vsel %vm613, 0.0, %v629
      %v700 = vsel %vm613, 0.0, %v632
      %v701 = vsel %vm613, 0.0, %v635
      %v702 = vsel %vm613, 0.0, %v638
      %v703 = vsel %vm613, 0.0, %v641
      %v704 = vsel %vm613, 0.0, %v644
      %v705 = vsel %vm613, 0.0, %v647
      %v706 = vsel %vm613, 0.0, %v650
      %v707 = vsel %vm613, 0.0, %v653
      %v708 = vsel %vm613, 0.0, %v656
      %v709 = vsel %vm613, 0.0, %v659
      %v710 = vsel %vm613, %v615, 0.0
      %v711 = vsel %vm613, %v618, 0.0
      %v712 = vsel %vm613, %v621, 0.0
      %v713 = vsel %vm613, %v624, 0.0
      %v714 = vsel %vm613, %v627, 0.0
      %v715 = vsel %vm613, %v630, 0.0
      %v716 = vsel %vm613, %v633, 0.0
      %v717 = vsel %vm613, %v636, 0.0
      %v718 = vsel %vm613, %v639, 0.0
      %v719 = vsel %vm613, %v642, 0.0
      %v720 = vsel %vm613, %v645, 0.0
      %v721 = vsel %vm613, %v648, 0.0
      %v722 = vsel %vm613, %v651, 0.0
      %v723 = vsel %vm613, %v654, 0.0
      %v724 = vsel %vm613, %v657, 0.0
      %v725 = vsel %vm613, %v660, 0.0
      %v743 = vcombine.high 0.0, 0.0
      %v745 = vunpack.c.l.s4 1983009808
      %v746 = vunpack.c.0.s8 %v745
      %v747 = vlaneseq
      %v748 = vshrl.u32 %v747, 7
      %v749 = vsub.s32 %v746, %v748
      %v750 = vrot.slane 0.0, %v749
      %v752 = vunpack.c.l.s4 1983009808
      %v753 = vunpack.c.0.s8 %v752
      %v754 = vlaneseq
      %v755 = vshrl.u32 %v754, 7
      %v756 = vsub.s32 %v753, %v755
      %v757 = vrot.slane %v743, %v756
      %v758 = vcombine.high %v750, %v750
      %v759 = vcombine.high %v757, %v757
      %v760 = vcombine.high %v695, %v695
      %v762 = vunpack.c.l.s4 1983009808
      %v763 = vunpack.c.0.s8 %v762
      %v764 = vlaneseq
      %v765 = vshrl.u32 %v764, 7
      %v766 = vsub.s32 %v763, %v765
      %v767 = vrot.slane %v695, %v766
      %v769 = vunpack.c.l.s4 1983009808
      %v770 = vunpack.c.0.s8 %v769
      %v771 = vlaneseq
      %v772 = vshrl.u32 %v771, 7
      %v773 = vsub.s32 %v770, %v772
      %v774 = vrot.slane %v760, %v773
      %v775 = vcombine.high %v767, %v767
      %v776 = vcombine.high %v774, %v774
      %v777 = vcombine.high %v619, %v619
      %v779 = vunpack.c.l.s4 1983009808
      %v780 = vunpack.c.0.s8 %v779
      %v781 = vlaneseq
      %v782 = vshrl.u32 %v781, 7
      %v783 = vsub.s32 %v780, %v782
      %v784 = vrot.slane %v619, %v783
      %v786 = vunpack.c.l.s4 1983009808
      %v787 = vunpack.c.0.s8 %v786
      %v788 = vlaneseq
      %v789 = vshrl.u32 %v788, 7
      %v790 = vsub.s32 %v787, %v789
      %v791 = vrot.slane %v777, %v790
      %v792 = vcombine.high %v784, %v784
      %v793 = vcombine.high %v791, %v791
      %v795 = vunpack.c.l.s4 1983009808
      %v796 = vunpack.c.0.s8 %v795
      %v797 = vlaneseq
      %v798 = vshrl.u32 %v797, 7
      %v799 = vsub.s32 %v796, %v798
      %v800 = vrot.slane %v711, %v799
      %v801 = vcombine.high %v697, %v697
      %v803 = vunpack.c.l.s4 1983009808
      %v804 = vunpack.c.0.s8 %v803
      %v805 = vlaneseq
      %v806 = vshrl.u32 %v805, 7
      %v807 = vsub.s32 %v804, %v806
      %v808 = vrot.slane %v697, %v807
      %v810 = vunpack.c.l.s4 1983009808
      %v811 = vunpack.c.0.s8 %v810
      %v812 = vlaneseq
      %v813 = vshrl.u32 %v812, 7
      %v814 = vsub.s32 %v811, %v813
      %v815 = vrot.slane %v801, %v814
      %v816 = vcombine.high %v808, %v808
      %v817 = vcombine.high %v815, %v815
      %v818 = vcombine.high %v625, %v625
      %v820 = vunpack.c.l.s4 1983009808
      %v821 = vunpack.c.0.s8 %v820
      %v822 = vlaneseq
      %v823 = vshrl.u32 %v822, 7
      %v824 = vsub.s32 %v821, %v823
      %v825 = vrot.slane %v625, %v824
      %v827 = vunpack.c.l.s4 1983009808
      %v828 = vunpack.c.0.s8 %v827
      %v829 = vlaneseq
      %v830 = vshrl.u32 %v829, 7
      %v831 = vsub.s32 %v828, %v830
      %v832 = vrot.slane %v818, %v831
      %v833 = vcombine.high %v825, %v825
      %v834 = vcombine.high %v832, %v832
      %v836 = vunpack.c.l.s4 1983009808
      %v837 = vunpack.c.0.s8 %v836
      %v838 = vlaneseq
      %v839 = vshrl.u32 %v838, 7
      %v840 = vsub.s32 %v837, %v839
      %v841 = vrot.slane %v713, %v840
      %v842 = vcombine.high %v699, %v699
      %v844 = vunpack.c.l.s4 1983009808
      %v845 = vunpack.c.0.s8 %v844
      %v846 = vlaneseq
      %v847 = vshrl.u32 %v846, 7
      %v848 = vsub.s32 %v845, %v847
      %v849 = vrot.slane %v699, %v848
      %v851 = vunpack.c.l.s4 1983009808
      %v852 = vunpack.c.0.s8 %v851
      %v853 = vlaneseq
      %v854 = vshrl.u32 %v853, 7
      %v855 = vsub.s32 %v852, %v854
      %v856 = vrot.slane %v842, %v855
      %v857 = vcombine.high %v849, %v849
      %v858 = vcombine.high %v856, %v856
      %v859 = vcombine.high %v631, %v631
      %v861 = vunpack.c.l.s4 1983009808
      %v862 = vunpack.c.0.s8 %v861
      %v863 = vlaneseq
      %v864 = vshrl.u32 %v863, 7
      %v865 = vsub.s32 %v862, %v864
      %v866 = vrot.slane %v631, %v865
      %v868 = vunpack.c.l.s4 1983009808
      %v869 = vunpack.c.0.s8 %v868
      %v870 = vlaneseq
      %v871 = vshrl.u32 %v870, 7
      %v872 = vsub.s32 %v869, %v871
      %v873 = vrot.slane %v859, %v872
      %v874 = vcombine.high %v866, %v866
      %v875 = vcombine.high %v873, %v873
      %v877 = vunpack.c.l.s4 1983009808
      %v878 = vunpack.c.0.s8 %v877
      %v879 = vlaneseq
      %v880 = vshrl.u32 %v879, 7
      %v881 = vsub.s32 %v878, %v880
      %v882 = vrot.slane %v715, %v881
      %v883 = vcombine.high %v701, %v701
      %v885 = vunpack.c.l.s4 1983009808
      %v886 = vunpack.c.0.s8 %v885
      %v887 = vlaneseq
      %v888 = vshrl.u32 %v887, 7
      %v889 = vsub.s32 %v886, %v888
      %v890 = vrot.slane %v701, %v889
      %v892 = vunpack.c.l.s4 1983009808
      %v893 = vunpack.c.0.s8 %v892
      %v894 = vlaneseq
      %v895 = vshrl.u32 %v894, 7
      %v896 = vsub.s32 %v893, %v895
      %v897 = vrot.slane %v883, %v896
      %v898 = vcombine.high %v890, %v890
      %v899 = vcombine.high %v897, %v897
      %v900 = vcombine.high %v637, %v637
      %v902 = vunpack.c.l.s4 1983009808
      %v903 = vunpack.c.0.s8 %v902
      %v904 = vlaneseq
      %v905 = vshrl.u32 %v904, 7
      %v906 = vsub.s32 %v903, %v905
      %v907 = vrot.slane %v637, %v906
      %v909 = vunpack.c.l.s4 1983009808
      %v910 = vunpack.c.0.s8 %v909
      %v911 = vlaneseq
      %v912 = vshrl.u32 %v911, 7
      %v913 = vsub.s32 %v910, %v912
      %v914 = vrot.slane %v900, %v913
      %v915 = vcombine.high %v907, %v907
      %v916 = vcombine.high %v914, %v914
      %v918 = vunpack.c.l.s4 1983009808
      %v919 = vunpack.c.0.s8 %v918
      %v920 = vlaneseq
      %v921 = vshrl.u32 %v920, 7
      %v922 = vsub.s32 %v919, %v921
      %v923 = vrot.slane %v717, %v922
      %v924 = vcombine.high %v703, %v703
      %v926 = vunpack.c.l.s4 1983009808
      %v927 = vunpack.c.0.s8 %v926
      %v928 = vlaneseq
      %v929 = vshrl.u32 %v928, 7
      %v930 = vsub.s32 %v927, %v929
      %v931 = vrot.slane %v703, %v930
      %v933 = vunpack.c.l.s4 1983009808
      %v934 = vunpack.c.0.s8 %v933
      %v935 = vlaneseq
      %v936 = vshrl.u32 %v935, 7
      %v937 = vsub.s32 %v934, %v936
      %v938 = vrot.slane %v924, %v937
      %v939 = vcombine.high %v931, %v931
      %v940 = vcombine.high %v938, %v938
      %v941 = vcombine.high %v643, %v643
      %v943 = vunpack.c.l.s4 1983009808
      %v944 = vunpack.c.0.s8 %v943
      %v945 = vlaneseq
      %v946 = vshrl.u32 %v945, 7
      %v947 = vsub.s32 %v944, %v946
      %v948 = vrot.slane %v643, %v947
      %v950 = vunpack.c.l.s4 1983009808
      %v951 = vunpack.c.0.s8 %v950
      %v952 = vlaneseq
      %v953 = vshrl.u32 %v952, 7
      %v954 = vsub.s32 %v951, %v953
      %v955 = vrot.slane %v941, %v954
      %v956 = vcombine.high %v948, %v948
      %v957 = vcombine.high %v955, %v955
      %v959 = vunpack.c.l.s4 1983009808
      %v960 = vunpack.c.0.s8 %v959
      %v961 = vlaneseq
      %v962 = vshrl.u32 %v961, 7
      %v963 = vsub.s32 %v960, %v962
      %v964 = vrot.slane %v719, %v963
      %v965 = vcombine.high %v705, %v705
      %v967 = vunpack.c.l.s4 1983009808
      %v968 = vunpack.c.0.s8 %v967
      %v969 = vlaneseq
      %v970 = vshrl.u32 %v969, 7
      %v971 = vsub.s32 %v968, %v970
      %v972 = vrot.slane %v705, %v971
      %v974 = vunpack.c.l.s4 1983009808
      %v975 = vunpack.c.0.s8 %v974
      %v976 = vlaneseq
      %v977 = vshrl.u32 %v976, 7
      %v978 = vsub.s32 %v975, %v977
      %v979 = vrot.slane %v965, %v978
      %v980 = vcombine.high %v972, %v972
      %v981 = vcombine.high %v979, %v979
      %v982 = vcombine.high %v649, %v649
      %v984 = vunpack.c.l.s4 1983009808
      %v985 = vunpack.c.0.s8 %v984
      %v986 = vlaneseq
      %v987 = vshrl.u32 %v986, 7
      %v988 = vsub.s32 %v985, %v987
      %v989 = vrot.slane %v649, %v988
      %v991 = vunpack.c.l.s4 1983009808
      %v992 = vunpack.c.0.s8 %v991
      %v993 = vlaneseq
      %v994 = vshrl.u32 %v993, 7
      %v995 = vsub.s32 %v992, %v994
      %v996 = vrot.slane %v982, %v995
      %v997 = vcombine.high %v989, %v989
      %v998 = vcombine.high %v996, %v996
      %v1000 = vunpack.c.l.s4 1983009808
      %v1001 = vunpack.c.0.s8 %v1000
      %v1002 = vlaneseq
      %v1003 = vshrl.u32 %v1002, 7
      %v1004 = vsub.s32 %v1001, %v1003
      %v1005 = vrot.slane %v721, %v1004
      %v1006 = vcombine.high %v707, %v707
      %v1008 = vunpack.c.l.s4 1983009808
      %v1009 = vunpack.c.0.s8 %v1008
      %v1010 = vlaneseq
      %v1011 = vshrl.u32 %v1010, 7
      %v1012 = vsub.s32 %v1009, %v1011
      %v1013 = vrot.slane %v707, %v1012
      %v1015 = vunpack.c.l.s4 1983009808
      %v1016 = vunpack.c.0.s8 %v1015
      %v1017 = vlaneseq
      %v1018 = vshrl.u32 %v1017, 7
      %v1019 = vsub.s32 %v1016, %v1018
      %v1020 = vrot.slane %v1006, %v1019
      %v1021 = vcombine.high %v1013, %v1013
      %v1022 = vcombine.high %v1020, %v1020
      %v1023 = vcombine.high %v655, %v655
      %v1025 = vunpack.c.l.s4 1983009808
      %v1026 = vunpack.c.0.s8 %v1025
      %v1027 = vlaneseq
      %v1028 = vshrl.u32 %v1027, 7
      %v1029 = vsub.s32 %v1026, %v1028
      %v1030 = vrot.slane %v655, %v1029
      %v1032 = vunpack.c.l.s4 1983009808
      %v1033 = vunpack.c.0.s8 %v1032
      %v1034 = vlaneseq
      %v1035 = vshrl.u32 %v1034, 7
      %v1036 = vsub.s32 %v1033, %v1035
      %v1037 = vrot.slane %v1023, %v1036
      %v1038 = vcombine.high %v1030, %v1030
      %v1039 = vcombine.high %v1037, %v1037
      %v1041 = vunpack.c.l.s4 1983009808
      %v1042 = vunpack.c.0.s8 %v1041
      %v1043 = vlaneseq
      %v1044 = vshrl.u32 %v1043, 7
      %v1045 = vsub.s32 %v1042, %v1044
      %v1046 = vrot.slane %v723, %v1045
      %v1047 = vcombine.high %v709, %v709
      %v1049 = vunpack.c.l.s4 1983009808
      %v1050 = vunpack.c.0.s8 %v1049
      %v1051 = vlaneseq
      %v1052 = vshrl.u32 %v1051, 7
      %v1053 = vsub.s32 %v1050, %v1052
      %v1054 = vrot.slane %v709, %v1053
      %v1056 = vunpack.c.l.s4 1983009808
      %v1057 = vunpack.c.0.s8 %v1056
      %v1058 = vlaneseq
      %v1059 = vshrl.u32 %v1058, 7
      %v1060 = vsub.s32 %v1057, %v1059
      %v1061 = vrot.slane %v1047, %v1060
      %v1062 = vcombine.high %v1054, %v1054
      %v1063 = vcombine.high %v1061, %v1061
      %v1064 = vcombine.high %v661, %v661
      %v1066 = vunpack.c.l.s4 1983009808
      %v1067 = vunpack.c.0.s8 %v1066
      %v1068 = vlaneseq
      %v1069 = vshrl.u32 %v1068, 7
      %v1070 = vsub.s32 %v1067, %v1069
      %v1071 = vrot.slane %v661, %v1070
      %v1073 = vunpack.c.l.s4 1983009808
      %v1074 = vunpack.c.0.s8 %v1073
      %v1075 = vlaneseq
      %v1076 = vshrl.u32 %v1075, 7
      %v1077 = vsub.s32 %v1074, %v1076
      %v1078 = vrot.slane %v1064, %v1077
      %v1079 = vcombine.high %v1071, %v1071
      %v1080 = vcombine.high %v1078, %v1078
      %v1082 = vunpack.c.l.s4 1983009808
      %v1083 = vunpack.c.0.s8 %v1082
      %v1084 = vlaneseq
      %v1085 = vshrl.u32 %v1084, 7
      %v1086 = vsub.s32 %v1083, %v1085
      %v1087 = vrot.slane %v725, %v1086
      %v1104 = vcombine.high %v694, %v694
      %v1106 = vunpack.c.l.s4 1983009808
      %v1107 = vunpack.c.0.s8 %v1106
      %v1108 = vlaneseq
      %v1109 = vshrl.u32 %v1108, 7
      %v1110 = vsub.s32 %v1107, %v1109
      %v1111 = vrot.slane %v694, %v1110
      %v1113 = vunpack.c.l.s4 1983009808
      %v1114 = vunpack.c.0.s8 %v1113
      %v1115 = vlaneseq
      %v1116 = vshrl.u32 %v1115, 7
      %v1117 = vsub.s32 %v1114, %v1116
      %v1118 = vrot.slane %v1104, %v1117
      %v1119 = vcombine.high %v1111, %v1111
      %v1120 = vcombine.high %v1118, %v1118
      %v1121 = vcombine.high %v616, %v616
      %v1123 = vunpack.c.l.s4 1983009808
      %v1124 = vunpack.c.0.s8 %v1123
      %v1125 = vlaneseq
      %v1126 = vshrl.u32 %v1125, 7
      %v1127 = vsub.s32 %v1124, %v1126
      %v1128 = vrot.slane %v616, %v1127
      %v1130 = vunpack.c.l.s4 1983009808
      %v1131 = vunpack.c.0.s8 %v1130
      %v1132 = vlaneseq
      %v1133 = vshrl.u32 %v1132, 7
      %v1134 = vsub.s32 %v1131, %v1133
      %v1135 = vrot.slane %v1121, %v1134
      %v1136 = vcombine.high %v1128, %v1128
      %v1137 = vcombine.high %v1135, %v1135
      %v1139 = vunpack.c.l.s4 1983009808
      %v1140 = vunpack.c.0.s8 %v1139
      %v1141 = vlaneseq
      %v1142 = vshrl.u32 %v1141, 7
      %v1143 = vsub.s32 %v1140, %v1142
      %v1144 = vrot.slane %v710, %v1143
      %v1145 = vcombine.high %v696, %v696
      %v1147 = vunpack.c.l.s4 1983009808
      %v1148 = vunpack.c.0.s8 %v1147
      %v1149 = vlaneseq
      %v1150 = vshrl.u32 %v1149, 7
      %v1151 = vsub.s32 %v1148, %v1150
      %v1152 = vrot.slane %v696, %v1151
      %v1154 = vunpack.c.l.s4 1983009808
      %v1155 = vunpack.c.0.s8 %v1154
      %v1156 = vlaneseq
      %v1157 = vshrl.u32 %v1156, 7
      %v1158 = vsub.s32 %v1155, %v1157
      %v1159 = vrot.slane %v1145, %v1158
      %v1160 = vcombine.high %v1152, %v1152
      %v1161 = vcombine.high %v1159, %v1159
      %v1162 = vcombine.high %v622, %v622
      %v1164 = vunpack.c.l.s4 1983009808
      %v1165 = vunpack.c.0.s8 %v1164
      %v1166 = vlaneseq
      %v1167 = vshrl.u32 %v1166, 7
      %v1168 = vsub.s32 %v1165, %v1167
      %v1169 = vrot.slane %v622, %v1168
      %v1171 = vunpack.c.l.s4 1983009808
      %v1172 = vunpack.c.0.s8 %v1171
      %v1173 = vlaneseq
      %v1174 = vshrl.u32 %v1173, 7
      %v1175 = vsub.s32 %v1172, %v1174
      %v1176 = vrot.slane %v1162, %v1175
      %v1177 = vcombine.high %v1169, %v1169
      %v1178 = vcombine.high %v1176, %v1176
      %v1180 = vunpack.c.l.s4 1983009808
      %v1181 = vunpack.c.0.s8 %v1180
      %v1182 = vlaneseq
      %v1183 = vshrl.u32 %v1182, 7
      %v1184 = vsub.s32 %v1181, %v1183
      %v1185 = vrot.slane %v712, %v1184
      %v1186 = vcombine.high %v698, %v698
      %v1188 = vunpack.c.l.s4 1983009808
      %v1189 = vunpack.c.0.s8 %v1188
      %v1190 = vlaneseq
      %v1191 = vshrl.u32 %v1190, 7
      %v1192 = vsub.s32 %v1189, %v1191
      %v1193 = vrot.slane %v698, %v1192
      %v1195 = vunpack.c.l.s4 1983009808
      %v1196 = vunpack.c.0.s8 %v1195
      %v1197 = vlaneseq
      %v1198 = vshrl.u32 %v1197, 7
      %v1199 = vsub.s32 %v1196, %v1198
      %v1200 = vrot.slane %v1186, %v1199
      %v1201 = vcombine.high %v1193, %v1193
      %v1202 = vcombine.high %v1200, %v1200
      %v1203 = vcombine.high %v628, %v628
      %v1205 = vunpack.c.l.s4 1983009808
      %v1206 = vunpack.c.0.s8 %v1205
      %v1207 = vlaneseq
      %v1208 = vshrl.u32 %v1207, 7
      %v1209 = vsub.s32 %v1206, %v1208
      %v1210 = vrot.slane %v628, %v1209
      %v1212 = vunpack.c.l.s4 1983009808
      %v1213 = vunpack.c.0.s8 %v1212
      %v1214 = vlaneseq
      %v1215 = vshrl.u32 %v1214, 7
      %v1216 = vsub.s32 %v1213, %v1215
      %v1217 = vrot.slane %v1203, %v1216
      %v1218 = vcombine.high %v1210, %v1210
      %v1219 = vcombine.high %v1217, %v1217
      %v1221 = vunpack.c.l.s4 1983009808
      %v1222 = vunpack.c.0.s8 %v1221
      %v1223 = vlaneseq
      %v1224 = vshrl.u32 %v1223, 7
      %v1225 = vsub.s32 %v1222, %v1224
      %v1226 = vrot.slane %v714, %v1225
      %v1227 = vcombine.high %v700, %v700
      %v1229 = vunpack.c.l.s4 1983009808
      %v1230 = vunpack.c.0.s8 %v1229
      %v1231 = vlaneseq
      %v1232 = vshrl.u32 %v1231, 7
      %v1233 = vsub.s32 %v1230, %v1232
      %v1234 = vrot.slane %v700, %v1233
      %v1236 = vunpack.c.l.s4 1983009808
      %v1237 = vunpack.c.0.s8 %v1236
      %v1238 = vlaneseq
      %v1239 = vshrl.u32 %v1238, 7
      %v1240 = vsub.s32 %v1237, %v1239
      %v1241 = vrot.slane %v1227, %v1240
      %v1242 = vcombine.high %v1234, %v1234
      %v1243 = vcombine.high %v1241, %v1241
      %v1244 = vcombine.high %v634, %v634
      %v1246 = vunpack.c.l.s4 1983009808
      %v1247 = vunpack.c.0.s8 %v1246
      %v1248 = vlaneseq
      %v1249 = vshrl.u32 %v1248, 7
      %v1250 = vsub.s32 %v1247, %v1249
      %v1251 = vrot.slane %v634, %v1250
      %v1253 = vunpack.c.l.s4 1983009808
      %v1254 = vunpack.c.0.s8 %v1253
      %v1255 = vlaneseq
      %v1256 = vshrl.u32 %v1255, 7
      %v1257 = vsub.s32 %v1254, %v1256
      %v1258 = vrot.slane %v1244, %v1257
      %v1259 = vcombine.high %v1251, %v1251
      %v1260 = vcombine.high %v1258, %v1258
      %v1262 = vunpack.c.l.s4 1983009808
      %v1263 = vunpack.c.0.s8 %v1262
      %v1264 = vlaneseq
      %v1265 = vshrl.u32 %v1264, 7
      %v1266 = vsub.s32 %v1263, %v1265
      %v1267 = vrot.slane %v716, %v1266
      %v1268 = vcombine.high %v702, %v702
      %v1270 = vunpack.c.l.s4 1983009808
      %v1271 = vunpack.c.0.s8 %v1270
      %v1272 = vlaneseq
      %v1273 = vshrl.u32 %v1272, 7
      %v1274 = vsub.s32 %v1271, %v1273
      %v1275 = vrot.slane %v702, %v1274
      %v1277 = vunpack.c.l.s4 1983009808
      %v1278 = vunpack.c.0.s8 %v1277
      %v1279 = vlaneseq
      %v1280 = vshrl.u32 %v1279, 7
      %v1281 = vsub.s32 %v1278, %v1280
      %v1282 = vrot.slane %v1268, %v1281
      %v1283 = vcombine.high %v1275, %v1275
      %v1284 = vcombine.high %v1282, %v1282
      %v1285 = vcombine.high %v640, %v640
      %v1287 = vunpack.c.l.s4 1983009808
      %v1288 = vunpack.c.0.s8 %v1287
      %v1289 = vlaneseq
      %v1290 = vshrl.u32 %v1289, 7
      %v1291 = vsub.s32 %v1288, %v1290
      %v1292 = vrot.slane %v640, %v1291
      %v1294 = vunpack.c.l.s4 1983009808
      %v1295 = vunpack.c.0.s8 %v1294
      %v1296 = vlaneseq
      %v1297 = vshrl.u32 %v1296, 7
      %v1298 = vsub.s32 %v1295, %v1297
      %v1299 = vrot.slane %v1285, %v1298
      %v1300 = vcombine.high %v1292, %v1292
      %v1301 = vcombine.high %v1299, %v1299
      %v1303 = vunpack.c.l.s4 1983009808
      %v1304 = vunpack.c.0.s8 %v1303
      %v1305 = vlaneseq
      %v1306 = vshrl.u32 %v1305, 7
      %v1307 = vsub.s32 %v1304, %v1306
      %v1308 = vrot.slane %v718, %v1307
      %v1309 = vcombine.high %v704, %v704
      %v1311 = vunpack.c.l.s4 1983009808
      %v1312 = vunpack.c.0.s8 %v1311
      %v1313 = vlaneseq
      %v1314 = vshrl.u32 %v1313, 7
      %v1315 = vsub.s32 %v1312, %v1314
      %v1316 = vrot.slane %v704, %v1315
      %v1318 = vunpack.c.l.s4 1983009808
      %v1319 = vunpack.c.0.s8 %v1318
      %v1320 = vlaneseq
      %v1321 = vshrl.u32 %v1320, 7
      %v1322 = vsub.s32 %v1319, %v1321
      %v1323 = vrot.slane %v1309, %v1322
      %v1324 = vcombine.high %v1316, %v1316
      %v1325 = vcombine.high %v1323, %v1323
      %v1326 = vcombine.high %v646, %v646
      %v1328 = vunpack.c.l.s4 1983009808
      %v1329 = vunpack.c.0.s8 %v1328
      %v1330 = vlaneseq
      %v1331 = vshrl.u32 %v1330, 7
      %v1332 = vsub.s32 %v1329, %v1331
      %v1333 = vrot.slane %v646, %v1332
      %v1335 = vunpack.c.l.s4 1983009808
      %v1336 = vunpack.c.0.s8 %v1335
      %v1337 = vlaneseq
      %v1338 = vshrl.u32 %v1337, 7
      %v1339 = vsub.s32 %v1336, %v1338
      %v1340 = vrot.slane %v1326, %v1339
      %v1341 = vcombine.high %v1333, %v1333
      %v1342 = vcombine.high %v1340, %v1340
      %v1344 = vunpack.c.l.s4 1983009808
      %v1345 = vunpack.c.0.s8 %v1344
      %v1346 = vlaneseq
      %v1347 = vshrl.u32 %v1346, 7
      %v1348 = vsub.s32 %v1345, %v1347
      %v1349 = vrot.slane %v720, %v1348
      %v1350 = vcombine.high %v706, %v706
      %v1352 = vunpack.c.l.s4 1983009808
      %v1353 = vunpack.c.0.s8 %v1352
      %v1354 = vlaneseq
      %v1355 = vshrl.u32 %v1354, 7
      %v1356 = vsub.s32 %v1353, %v1355
      %v1357 = vrot.slane %v706, %v1356
      %v1359 = vunpack.c.l.s4 1983009808
      %v1360 = vunpack.c.0.s8 %v1359
      %v1361 = vlaneseq
      %v1362 = vshrl.u32 %v1361, 7
      %v1363 = vsub.s32 %v1360, %v1362
      %v1364 = vrot.slane %v1350, %v1363
      %v1365 = vcombine.high %v1357, %v1357
      %v1366 = vcombine.high %v1364, %v1364
      %v1367 = vcombine.high %v652, %v652
      %v1369 = vunpack.c.l.s4 1983009808
      %v1370 = vunpack.c.0.s8 %v1369
      %v1371 = vlaneseq
      %v1372 = vshrl.u32 %v1371, 7
      %v1373 = vsub.s32 %v1370, %v1372
      %v1374 = vrot.slane %v652, %v1373
      %v1376 = vunpack.c.l.s4 1983009808
      %v1377 = vunpack.c.0.s8 %v1376
      %v1378 = vlaneseq
      %v1379 = vshrl.u32 %v1378, 7
      %v1380 = vsub.s32 %v1377, %v1379
      %v1381 = vrot.slane %v1367, %v1380
      %v1382 = vcombine.high %v1374, %v1374
      %v1383 = vcombine.high %v1381, %v1381
      %v1385 = vunpack.c.l.s4 1983009808
      %v1386 = vunpack.c.0.s8 %v1385
      %v1387 = vlaneseq
      %v1388 = vshrl.u32 %v1387, 7
      %v1389 = vsub.s32 %v1386, %v1388
      %v1390 = vrot.slane %v722, %v1389
      %v1391 = vcombine.high %v708, %v708
      %v1393 = vunpack.c.l.s4 1983009808
      %v1394 = vunpack.c.0.s8 %v1393
      %v1395 = vlaneseq
      %v1396 = vshrl.u32 %v1395, 7
      %v1397 = vsub.s32 %v1394, %v1396
      %v1398 = vrot.slane %v708, %v1397
      %v1400 = vunpack.c.l.s4 1983009808
      %v1401 = vunpack.c.0.s8 %v1400
      %v1402 = vlaneseq
      %v1403 = vshrl.u32 %v1402, 7
      %v1404 = vsub.s32 %v1401, %v1403
      %v1405 = vrot.slane %v1391, %v1404
      %v1406 = vcombine.high %v1398, %v1398
      %v1407 = vcombine.high %v1405, %v1405
      %v1408 = vcombine.high %v658, %v658
      %v1410 = vunpack.c.l.s4 1983009808
      %v1411 = vunpack.c.0.s8 %v1410
      %v1412 = vlaneseq
      %v1413 = vshrl.u32 %v1412, 7
      %v1414 = vsub.s32 %v1411, %v1413
      %v1415 = vrot.slane %v658, %v1414
      %v1417 = vunpack.c.l.s4 1983009808
      %v1418 = vunpack.c.0.s8 %v1417
      %v1419 = vlaneseq
      %v1420 = vshrl.u32 %v1419, 7
      %v1421 = vsub.s32 %v1418, %v1420
      %v1422 = vrot.slane %v1408, %v1421
      %v1423 = vcombine.high %v1415, %v1415
      %v1424 = vcombine.high %v1422, %v1422
      %v1426 = vunpack.c.l.s4 1983009808
      %v1427 = vunpack.c.0.s8 %v1426
      %v1428 = vlaneseq
      %v1429 = vshrl.u32 %v1428, 7
      %v1430 = vsub.s32 %v1427, %v1429
      %v1431 = vrot.slane %v724, %v1430
      %v1432 = vlaneseq
      %v1433 = vshrl.u32 %v1432, 7
      %v1434 = vsub.s32 0, %v1433
      %v1435 = vrot.slane %v750, %v1434
      %v1436 = vlaneseq
      %v1437 = vshrl.u32 %v1436, 7
      %v1438 = vsub.s32 0, %v1437
      %v1439 = vrot.slane %v758, %v1438
      %v1440 = vlaneseq
      %v1441 = vshrl.u32 %v1440, 7
      %v1442 = vsub.s32 0, %v1441
      %v1443 = vrot.slane %v757, %v1442
      %v1444 = vlaneseq
      %v1445 = vshrl.u32 %v1444, 7
      %v1446 = vsub.s32 0, %v1445
      %v1447 = vrot.slane %v759, %v1446
      %v1448 = vlaneseq
      %v1449 = vshrl.u32 %v1448, 7
      %v1450 = vsub.s32 0, %v1449
      %v1451 = vrot.slane %v767, %v1450
      %v1452 = vlaneseq
      %v1453 = vshrl.u32 %v1452, 7
      %v1454 = vsub.s32 0, %v1453
      %v1455 = vrot.slane %v775, %v1454
      %v1456 = vlaneseq
      %v1457 = vshrl.u32 %v1456, 7
      %v1458 = vsub.s32 0, %v1457
      %v1459 = vrot.slane %v774, %v1458
      %v1460 = vlaneseq
      %v1461 = vshrl.u32 %v1460, 7
      %v1462 = vsub.s32 0, %v1461
      %v1463 = vrot.slane %v776, %v1462
      %v1464 = vlaneseq
      %v1465 = vshrl.u32 %v1464, 7
      %v1466 = vsub.s32 0, %v1465
      %v1467 = vrot.slane %v784, %v1466
      %v1468 = vlaneseq
      %v1469 = vshrl.u32 %v1468, 7
      %v1470 = vsub.s32 0, %v1469
      %v1471 = vrot.slane %v792, %v1470
      %v1472 = vlaneseq
      %v1473 = vshrl.u32 %v1472, 7
      %v1474 = vsub.s32 0, %v1473
      %v1475 = vrot.slane %v791, %v1474
      %v1476 = vlaneseq
      %v1477 = vshrl.u32 %v1476, 7
      %v1478 = vsub.s32 0, %v1477
      %v1479 = vrot.slane %v793, %v1478
      %v1480 = vlaneseq
      %v1481 = vshrl.u32 %v1480, 7
      %v1482 = vsub.s32 0, %v1481
      %v1483 = vrot.slane %v808, %v1482
      %v1484 = vlaneseq
      %v1485 = vshrl.u32 %v1484, 7
      %v1486 = vsub.s32 0, %v1485
      %v1487 = vrot.slane %v816, %v1486
      %v1488 = vlaneseq
      %v1489 = vshrl.u32 %v1488, 7
      %v1490 = vsub.s32 0, %v1489
      %v1491 = vrot.slane %v815, %v1490
      %v1492 = vlaneseq
      %v1493 = vshrl.u32 %v1492, 7
      %v1494 = vsub.s32 0, %v1493
      %v1495 = vrot.slane %v817, %v1494
      %v1496 = vlaneseq
      %v1497 = vshrl.u32 %v1496, 7
      %v1498 = vsub.s32 0, %v1497
      %v1499 = vrot.slane %v825, %v1498
      %v1500 = vlaneseq
      %v1501 = vshrl.u32 %v1500, 7
      %v1502 = vsub.s32 0, %v1501
      %v1503 = vrot.slane %v833, %v1502
      %v1504 = vlaneseq
      %v1505 = vshrl.u32 %v1504, 7
      %v1506 = vsub.s32 0, %v1505
      %v1507 = vrot.slane %v832, %v1506
      %v1508 = vlaneseq
      %v1509 = vshrl.u32 %v1508, 7
      %v1510 = vsub.s32 0, %v1509
      %v1511 = vrot.slane %v834, %v1510
      %v1512 = vlaneseq
      %v1513 = vshrl.u32 %v1512, 7
      %v1514 = vsub.s32 0, %v1513
      %v1515 = vrot.slane %v849, %v1514
      %v1516 = vlaneseq
      %v1517 = vshrl.u32 %v1516, 7
      %v1518 = vsub.s32 0, %v1517
      %v1519 = vrot.slane %v857, %v1518
      %v1520 = vlaneseq
      %v1521 = vshrl.u32 %v1520, 7
      %v1522 = vsub.s32 0, %v1521
      %v1523 = vrot.slane %v856, %v1522
      %v1524 = vlaneseq
      %v1525 = vshrl.u32 %v1524, 7
      %v1526 = vsub.s32 0, %v1525
      %v1527 = vrot.slane %v858, %v1526
      %v1528 = vlaneseq
      %v1529 = vshrl.u32 %v1528, 7
      %v1530 = vsub.s32 0, %v1529
      %v1531 = vrot.slane %v866, %v1530
      %v1532 = vlaneseq
      %v1533 = vshrl.u32 %v1532, 7
      %v1534 = vsub.s32 0, %v1533
      %v1535 = vrot.slane %v874, %v1534
      %v1536 = vlaneseq
      %v1537 = vshrl.u32 %v1536, 7
      %v1538 = vsub.s32 0, %v1537
      %v1539 = vrot.slane %v873, %v1538
      %v1540 = vlaneseq
      %v1541 = vshrl.u32 %v1540, 7
      %v1542 = vsub.s32 0, %v1541
      %v1543 = vrot.slane %v875, %v1542
      %v1544 = vlaneseq
      %v1545 = vshrl.u32 %v1544, 7
      %v1546 = vsub.s32 0, %v1545
      %v1547 = vrot.slane %v890, %v1546
      %v1548 = vlaneseq
      %v1549 = vshrl.u32 %v1548, 7
      %v1550 = vsub.s32 0, %v1549
      %v1551 = vrot.slane %v898, %v1550
      %v1552 = vlaneseq
      %v1553 = vshrl.u32 %v1552, 7
      %v1554 = vsub.s32 0, %v1553
      %v1555 = vrot.slane %v897, %v1554
      %v1556 = vlaneseq
      %v1557 = vshrl.u32 %v1556, 7
      %v1558 = vsub.s32 0, %v1557
      %v1559 = vrot.slane %v899, %v1558
      %v1560 = vlaneseq
      %v1561 = vshrl.u32 %v1560, 7
      %v1562 = vsub.s32 0, %v1561
      %v1563 = vrot.slane %v907, %v1562
      %v1564 = vlaneseq
      %v1565 = vshrl.u32 %v1564, 7
      %v1566 = vsub.s32 0, %v1565
      %v1567 = vrot.slane %v915, %v1566
      %v1568 = vlaneseq
      %v1569 = vshrl.u32 %v1568, 7
      %v1570 = vsub.s32 0, %v1569
      %v1571 = vrot.slane %v914, %v1570
      %v1572 = vlaneseq
      %v1573 = vshrl.u32 %v1572, 7
      %v1574 = vsub.s32 0, %v1573
      %v1575 = vrot.slane %v916, %v1574
      %v1576 = vlaneseq
      %v1577 = vshrl.u32 %v1576, 7
      %v1578 = vsub.s32 0, %v1577
      %v1579 = vrot.slane %v931, %v1578
      %v1580 = vlaneseq
      %v1581 = vshrl.u32 %v1580, 7
      %v1582 = vsub.s32 0, %v1581
      %v1583 = vrot.slane %v939, %v1582
      %v1584 = vlaneseq
      %v1585 = vshrl.u32 %v1584, 7
      %v1586 = vsub.s32 0, %v1585
      %v1587 = vrot.slane %v938, %v1586
      %v1588 = vlaneseq
      %v1589 = vshrl.u32 %v1588, 7
      %v1590 = vsub.s32 0, %v1589
      %v1591 = vrot.slane %v940, %v1590
      %v1592 = vlaneseq
      %v1593 = vshrl.u32 %v1592, 7
      %v1594 = vsub.s32 0, %v1593
      %v1595 = vrot.slane %v948, %v1594
      %v1596 = vlaneseq
      %v1597 = vshrl.u32 %v1596, 7
      %v1598 = vsub.s32 0, %v1597
      %v1599 = vrot.slane %v956, %v1598
      %v1600 = vlaneseq
      %v1601 = vshrl.u32 %v1600, 7
      %v1602 = vsub.s32 0, %v1601
      %v1603 = vrot.slane %v955, %v1602
      %v1604 = vlaneseq
      %v1605 = vshrl.u32 %v1604, 7
      %v1606 = vsub.s32 0, %v1605
      %v1607 = vrot.slane %v957, %v1606
      %v1608 = vlaneseq
      %v1609 = vshrl.u32 %v1608, 7
      %v1610 = vsub.s32 0, %v1609
      %v1611 = vrot.slane %v972, %v1610
      %v1612 = vlaneseq
      %v1613 = vshrl.u32 %v1612, 7
      %v1614 = vsub.s32 0, %v1613
      %v1615 = vrot.slane %v980, %v1614
      %v1616 = vlaneseq
      %v1617 = vshrl.u32 %v1616, 7
      %v1618 = vsub.s32 0, %v1617
      %v1619 = vrot.slane %v979, %v1618
      %v1620 = vlaneseq
      %v1621 = vshrl.u32 %v1620, 7
      %v1622 = vsub.s32 0, %v1621
      %v1623 = vrot.slane %v981, %v1622
      %v1624 = vlaneseq
      %v1625 = vshrl.u32 %v1624, 7
      %v1626 = vsub.s32 0, %v1625
      %v1627 = vrot.slane %v989, %v1626
      %v1628 = vlaneseq
      %v1629 = vshrl.u32 %v1628, 7
      %v1630 = vsub.s32 0, %v1629
      %v1631 = vrot.slane %v997, %v1630
      %v1632 = vlaneseq
      %v1633 = vshrl.u32 %v1632, 7
      %v1634 = vsub.s32 0, %v1633
      %v1635 = vrot.slane %v996, %v1634
      %v1636 = vlaneseq
      %v1637 = vshrl.u32 %v1636, 7
      %v1638 = vsub.s32 0, %v1637
      %v1639 = vrot.slane %v998, %v1638
      %v1640 = vlaneseq
      %v1641 = vshrl.u32 %v1640, 7
      %v1642 = vsub.s32 0, %v1641
      %v1643 = vrot.slane %v1013, %v1642
      %v1644 = vlaneseq
      %v1645 = vshrl.u32 %v1644, 7
      %v1646 = vsub.s32 0, %v1645
      %v1647 = vrot.slane %v1021, %v1646
      %v1648 = vlaneseq
      %v1649 = vshrl.u32 %v1648, 7
      %v1650 = vsub.s32 0, %v1649
      %v1651 = vrot.slane %v1020, %v1650
      %v1652 = vlaneseq
      %v1653 = vshrl.u32 %v1652, 7
      %v1654 = vsub.s32 0, %v1653
      %v1655 = vrot.slane %v1022, %v1654
      %v1656 = vlaneseq
      %v1657 = vshrl.u32 %v1656, 7
      %v1658 = vsub.s32 0, %v1657
      %v1659 = vrot.slane %v1030, %v1658
      %v1660 = vlaneseq
      %v1661 = vshrl.u32 %v1660, 7
      %v1662 = vsub.s32 0, %v1661
      %v1663 = vrot.slane %v1038, %v1662
      %v1664 = vlaneseq
      %v1665 = vshrl.u32 %v1664, 7
      %v1666 = vsub.s32 0, %v1665
      %v1667 = vrot.slane %v1037, %v1666
      %v1668 = vlaneseq
      %v1669 = vshrl.u32 %v1668, 7
      %v1670 = vsub.s32 0, %v1669
      %v1671 = vrot.slane %v1039, %v1670
      %vm1672 = vcmask 1041409
      %v1673 = vsel %vm1672, %v1439, %v1435
      %vm1674 = vcmask 1042434
      %v1675 = vsel %vm1674, %v1443, %v1673
      %vm1676 = vcmask 1043459
      %v1677 = vsel %vm1676, %v1447, %v1675
      %vm1678 = vcmask 1044484
      %v1679 = vsel %vm1678, %v1435, %v1677
      %vm1680 = vcmask 1045509
      %v1681 = vsel %vm1680, %v1439, %v1679
      %vm1682 = vcmask 1046534
      %v1683 = vsel %vm1682, %v1443, %v1681
      %vm1684 = vcmask 1047559
      %v1685 = vsel %vm1684, %v1447, %v1683
      %v1686 = vsel %vm1672, %v1455, %v1451
      %v1687 = vsel %vm1674, %v1459, %v1686
      %v1688 = vsel %vm1676, %v1463, %v1687
      %v1689 = vsel %vm1678, %v1467, %v1688
      %v1690 = vsel %vm1680, %v1471, %v1689
      %v1691 = vsel %vm1682, %v1475, %v1690
      %v1692 = vsel %vm1684, %v1479, %v1691
      %v1693 = vsel %vm1672, %v1487, %v1483
      %v1694 = vsel %vm1674, %v1491, %v1693
      %v1695 = vsel %vm1676, %v1495, %v1694
      %v1696 = vsel %vm1678, %v1499, %v1695
      %v1697 = vsel %vm1680, %v1503, %v1696
      %v1698 = vsel %vm1682, %v1507, %v1697
      %v1699 = vsel %vm1684, %v1511, %v1698
      %v1700 = vsel %vm1672, %v1519, %v1515
      %v1701 = vsel %vm1674, %v1523, %v1700
      %v1702 = vsel %vm1676, %v1527, %v1701
      %v1703 = vsel %vm1678, %v1531, %v1702
      %v1704 = vsel %vm1680, %v1535, %v1703
      %v1705 = vsel %vm1682, %v1539, %v1704
      %v1706 = vsel %vm1684, %v1543, %v1705
      %v1707 = vsel %vm1672, %v1551, %v1547
      %v1708 = vsel %vm1674, %v1555, %v1707
      %v1709 = vsel %vm1676, %v1559, %v1708
      %v1710 = vsel %vm1678, %v1563, %v1709
      %v1711 = vsel %vm1680, %v1567, %v1710
      %v1712 = vsel %vm1682, %v1571, %v1711
      %v1713 = vsel %vm1684, %v1575, %v1712
      %v1714 = vsel %vm1672, %v1583, %v1579
      %v1715 = vsel %vm1674, %v1587, %v1714
      %v1716 = vsel %vm1676, %v1591, %v1715
      %v1717 = vsel %vm1678, %v1595, %v1716
      %v1718 = vsel %vm1680, %v1599, %v1717
      %v1719 = vsel %vm1682, %v1603, %v1718
      %v1720 = vsel %vm1684, %v1607, %v1719
      %v1721 = vsel %vm1672, %v1615, %v1611
      %v1722 = vsel %vm1674, %v1619, %v1721
      %v1723 = vsel %vm1676, %v1623, %v1722
      %v1724 = vsel %vm1678, %v1627, %v1723
      %v1725 = vsel %vm1680, %v1631, %v1724
      %v1726 = vsel %vm1682, %v1635, %v1725
      %v1727 = vsel %vm1684, %v1639, %v1726
      %v1728 = vsel %vm1672, %v1647, %v1643
      %v1729 = vsel %vm1674, %v1651, %v1728
      %v1730 = vsel %vm1676, %v1655, %v1729
      %v1731 = vsel %vm1678, %v1659, %v1730
      %v1732 = vsel %vm1680, %v1663, %v1731
      %v1733 = vsel %vm1682, %v1667, %v1732
      %v1734 = vsel %vm1684, %v1671, %v1733
      %v1743 = vlaneseq
      %v1744 = vshrl.u32 %v1743, 7
      %v1745 = vsub.s32 1, %v1744
      %v1746 = vrot.slane %v750, %v1745
      %v1747 = vlaneseq
      %v1748 = vshrl.u32 %v1747, 7
      %v1749 = vsub.s32 1, %v1748
      %v1750 = vrot.slane %v758, %v1749
      %v1751 = vlaneseq
      %v1752 = vshrl.u32 %v1751, 7
      %v1753 = vsub.s32 1, %v1752
      %v1754 = vrot.slane %v757, %v1753
      %v1755 = vlaneseq
      %v1756 = vshrl.u32 %v1755, 7
      %v1757 = vsub.s32 1, %v1756
      %v1758 = vrot.slane %v759, %v1757
      %v1759 = vlaneseq
      %v1760 = vshrl.u32 %v1759, 7
      %v1761 = vsub.s32 1, %v1760
      %v1762 = vrot.slane %v767, %v1761
      %v1763 = vlaneseq
      %v1764 = vshrl.u32 %v1763, 7
      %v1765 = vsub.s32 1, %v1764
      %v1766 = vrot.slane %v775, %v1765
      %v1767 = vlaneseq
      %v1768 = vshrl.u32 %v1767, 7
      %v1769 = vsub.s32 1, %v1768
      %v1770 = vrot.slane %v774, %v1769
      %v1771 = vlaneseq
      %v1772 = vshrl.u32 %v1771, 7
      %v1773 = vsub.s32 1, %v1772
      %v1774 = vrot.slane %v776, %v1773
      %v1775 = vlaneseq
      %v1776 = vshrl.u32 %v1775, 7
      %v1777 = vsub.s32 1, %v1776
      %v1778 = vrot.slane %v784, %v1777
      %v1779 = vlaneseq
      %v1780 = vshrl.u32 %v1779, 7
      %v1781 = vsub.s32 1, %v1780
      %v1782 = vrot.slane %v792, %v1781
      %v1783 = vlaneseq
      %v1784 = vshrl.u32 %v1783, 7
      %v1785 = vsub.s32 1, %v1784
      %v1786 = vrot.slane %v791, %v1785
      %v1787 = vlaneseq
      %v1788 = vshrl.u32 %v1787, 7
      %v1789 = vsub.s32 1, %v1788
      %v1790 = vrot.slane %v793, %v1789
      %v1791 = vlaneseq
      %v1792 = vshrl.u32 %v1791, 7
      %v1793 = vsub.s32 1, %v1792
      %v1794 = vrot.slane %v808, %v1793
      %v1795 = vlaneseq
      %v1796 = vshrl.u32 %v1795, 7
      %v1797 = vsub.s32 1, %v1796
      %v1798 = vrot.slane %v816, %v1797
      %v1799 = vlaneseq
      %v1800 = vshrl.u32 %v1799, 7
      %v1801 = vsub.s32 1, %v1800
      %v1802 = vrot.slane %v815, %v1801
      %v1803 = vlaneseq
      %v1804 = vshrl.u32 %v1803, 7
      %v1805 = vsub.s32 1, %v1804
      %v1806 = vrot.slane %v817, %v1805
      %v1807 = vlaneseq
      %v1808 = vshrl.u32 %v1807, 7
      %v1809 = vsub.s32 1, %v1808
      %v1810 = vrot.slane %v825, %v1809
      %v1811 = vlaneseq
      %v1812 = vshrl.u32 %v1811, 7
      %v1813 = vsub.s32 1, %v1812
      %v1814 = vrot.slane %v833, %v1813
      %v1815 = vlaneseq
      %v1816 = vshrl.u32 %v1815, 7
      %v1817 = vsub.s32 1, %v1816
      %v1818 = vrot.slane %v832, %v1817
      %v1819 = vlaneseq
      %v1820 = vshrl.u32 %v1819, 7
      %v1821 = vsub.s32 1, %v1820
      %v1822 = vrot.slane %v834, %v1821
      %v1823 = vlaneseq
      %v1824 = vshrl.u32 %v1823, 7
      %v1825 = vsub.s32 1, %v1824
      %v1826 = vrot.slane %v849, %v1825
      %v1827 = vlaneseq
      %v1828 = vshrl.u32 %v1827, 7
      %v1829 = vsub.s32 1, %v1828
      %v1830 = vrot.slane %v857, %v1829
      %v1831 = vlaneseq
      %v1832 = vshrl.u32 %v1831, 7
      %v1833 = vsub.s32 1, %v1832
      %v1834 = vrot.slane %v856, %v1833
      %v1835 = vlaneseq
      %v1836 = vshrl.u32 %v1835, 7
      %v1837 = vsub.s32 1, %v1836
      %v1838 = vrot.slane %v858, %v1837
      %v1839 = vlaneseq
      %v1840 = vshrl.u32 %v1839, 7
      %v1841 = vsub.s32 1, %v1840
      %v1842 = vrot.slane %v866, %v1841
      %v1843 = vlaneseq
      %v1844 = vshrl.u32 %v1843, 7
      %v1845 = vsub.s32 1, %v1844
      %v1846 = vrot.slane %v874, %v1845
      %v1847 = vlaneseq
      %v1848 = vshrl.u32 %v1847, 7
      %v1849 = vsub.s32 1, %v1848
      %v1850 = vrot.slane %v873, %v1849
      %v1851 = vlaneseq
      %v1852 = vshrl.u32 %v1851, 7
      %v1853 = vsub.s32 1, %v1852
      %v1854 = vrot.slane %v875, %v1853
      %v1855 = vlaneseq
      %v1856 = vshrl.u32 %v1855, 7
      %v1857 = vsub.s32 1, %v1856
      %v1858 = vrot.slane %v890, %v1857
      %v1859 = vlaneseq
      %v1860 = vshrl.u32 %v1859, 7
      %v1861 = vsub.s32 1, %v1860
      %v1862 = vrot.slane %v898, %v1861
      %v1863 = vlaneseq
      %v1864 = vshrl.u32 %v1863, 7
      %v1865 = vsub.s32 1, %v1864
      %v1866 = vrot.slane %v897, %v1865
      %v1867 = vlaneseq
      %v1868 = vshrl.u32 %v1867, 7
      %v1869 = vsub.s32 1, %v1868
      %v1870 = vrot.slane %v899, %v1869
      %v1871 = vlaneseq
      %v1872 = vshrl.u32 %v1871, 7
      %v1873 = vsub.s32 1, %v1872
      %v1874 = vrot.slane %v907, %v1873
      %v1875 = vlaneseq
      %v1876 = vshrl.u32 %v1875, 7
      %v1877 = vsub.s32 1, %v1876
      %v1878 = vrot.slane %v915, %v1877
      %v1879 = vlaneseq
      %v1880 = vshrl.u32 %v1879, 7
      %v1881 = vsub.s32 1, %v1880
      %v1882 = vrot.slane %v914, %v1881
      %v1883 = vlaneseq
      %v1884 = vshrl.u32 %v1883, 7
      %v1885 = vsub.s32 1, %v1884
      %v1886 = vrot.slane %v916, %v1885
      %v1887 = vlaneseq
      %v1888 = vshrl.u32 %v1887, 7
      %v1889 = vsub.s32 1, %v1888
      %v1890 = vrot.slane %v931, %v1889
      %v1891 = vlaneseq
      %v1892 = vshrl.u32 %v1891, 7
      %v1893 = vsub.s32 1, %v1892
      %v1894 = vrot.slane %v939, %v1893
      %v1895 = vlaneseq
      %v1896 = vshrl.u32 %v1895, 7
      %v1897 = vsub.s32 1, %v1896
      %v1898 = vrot.slane %v938, %v1897
      %v1899 = vlaneseq
      %v1900 = vshrl.u32 %v1899, 7
      %v1901 = vsub.s32 1, %v1900
      %v1902 = vrot.slane %v940, %v1901
      %v1903 = vlaneseq
      %v1904 = vshrl.u32 %v1903, 7
      %v1905 = vsub.s32 1, %v1904
      %v1906 = vrot.slane %v948, %v1905
      %v1907 = vlaneseq
      %v1908 = vshrl.u32 %v1907, 7
      %v1909 = vsub.s32 1, %v1908
      %v1910 = vrot.slane %v956, %v1909
      %v1911 = vlaneseq
      %v1912 = vshrl.u32 %v1911, 7
      %v1913 = vsub.s32 1, %v1912
      %v1914 = vrot.slane %v955, %v1913
      %v1915 = vlaneseq
      %v1916 = vshrl.u32 %v1915, 7
      %v1917 = vsub.s32 1, %v1916
      %v1918 = vrot.slane %v957, %v1917
      %v1919 = vlaneseq
      %v1920 = vshrl.u32 %v1919, 7
      %v1921 = vsub.s32 1, %v1920
      %v1922 = vrot.slane %v972, %v1921
      %v1923 = vlaneseq
      %v1924 = vshrl.u32 %v1923, 7
      %v1925 = vsub.s32 1, %v1924
      %v1926 = vrot.slane %v980, %v1925
      %v1927 = vlaneseq
      %v1928 = vshrl.u32 %v1927, 7
      %v1929 = vsub.s32 1, %v1928
      %v1930 = vrot.slane %v979, %v1929
      %v1931 = vlaneseq
      %v1932 = vshrl.u32 %v1931, 7
      %v1933 = vsub.s32 1, %v1932
      %v1934 = vrot.slane %v981, %v1933
      %v1935 = vlaneseq
      %v1936 = vshrl.u32 %v1935, 7
      %v1937 = vsub.s32 1, %v1936
      %v1938 = vrot.slane %v989, %v1937
      %v1939 = vlaneseq
      %v1940 = vshrl.u32 %v1939, 7
      %v1941 = vsub.s32 1, %v1940
      %v1942 = vrot.slane %v997, %v1941
      %v1943 = vlaneseq
      %v1944 = vshrl.u32 %v1943, 7
      %v1945 = vsub.s32 1, %v1944
      %v1946 = vrot.slane %v996, %v1945
      %v1947 = vlaneseq
      %v1948 = vshrl.u32 %v1947, 7
      %v1949 = vsub.s32 1, %v1948
      %v1950 = vrot.slane %v998, %v1949
      %v1951 = vlaneseq
      %v1952 = vshrl.u32 %v1951, 7
      %v1953 = vsub.s32 1, %v1952
      %v1954 = vrot.slane %v1013, %v1953
      %v1955 = vlaneseq
      %v1956 = vshrl.u32 %v1955, 7
      %v1957 = vsub.s32 1, %v1956
      %v1958 = vrot.slane %v1021, %v1957
      %v1959 = vlaneseq
      %v1960 = vshrl.u32 %v1959, 7
      %v1961 = vsub.s32 1, %v1960
      %v1962 = vrot.slane %v1020, %v1961
      %v1963 = vlaneseq
      %v1964 = vshrl.u32 %v1963, 7
      %v1965 = vsub.s32 1, %v1964
      %v1966 = vrot.slane %v1022, %v1965
      %v1967 = vlaneseq
      %v1968 = vshrl.u32 %v1967, 7
      %v1969 = vsub.s32 1, %v1968
      %v1970 = vrot.slane %v1030, %v1969
      %v1971 = vlaneseq
      %v1972 = vshrl.u32 %v1971, 7
      %v1973 = vsub.s32 1, %v1972
      %v1974 = vrot.slane %v1038, %v1973
      %v1975 = vlaneseq
      %v1976 = vshrl.u32 %v1975, 7
      %v1977 = vsub.s32 1, %v1976
      %v1978 = vrot.slane %v1037, %v1977
      %v1979 = vlaneseq
      %v1980 = vshrl.u32 %v1979, 7
      %v1981 = vsub.s32 1, %v1980
      %v1982 = vrot.slane %v1039, %v1981
      %v1983 = vsel %vm1672, %v1750, %v1746
      %v1984 = vsel %vm1674, %v1754, %v1983
      %v1985 = vsel %vm1676, %v1758, %v1984
      %v1986 = vsel %vm1678, %v1746, %v1985
      %v1987 = vsel %vm1680, %v1750, %v1986
      %v1988 = vsel %vm1682, %v1754, %v1987
      %v1989 = vsel %vm1684, %v1758, %v1988
      %v1990 = vsel %vm1672, %v1766, %v1762
      %v1991 = vsel %vm1674, %v1770, %v1990
      %v1992 = vsel %vm1676, %v1774, %v1991
      %v1993 = vsel %vm1678, %v1778, %v1992
      %v1994 = vsel %vm1680, %v1782, %v1993
      %v1995 = vsel %vm1682, %v1786, %v1994
      %v1996 = vsel %vm1684, %v1790, %v1995
      %v1997 = vsel %vm1672, %v1798, %v1794
      %v1998 = vsel %vm1674, %v1802, %v1997
      %v1999 = vsel %vm1676, %v1806, %v1998
      %v2000 = vsel %vm1678, %v1810, %v1999
      %v2001 = vsel %vm1680, %v1814, %v2000
      %v2002 = vsel %vm1682, %v1818, %v2001
      %v2003 = vsel %vm1684, %v1822, %v2002
      %v2004 = vsel %vm1672, %v1830, %v1826
      %v2005 = vsel %vm1674, %v1834, %v2004
      %v2006 = vsel %vm1676, %v1838, %v2005
      %v2007 = vsel %vm1678, %v1842, %v2006
      %v2008 = vsel %vm1680, %v1846, %v2007
      %v2009 = vsel %vm1682, %v1850, %v2008
      %v2010 = vsel %vm1684, %v1854, %v2009
      %v2011 = vsel %vm1672, %v1862, %v1858
      %v2012 = vsel %vm1674, %v1866, %v2011
      %v2013 = vsel %vm1676, %v1870, %v2012
      %v2014 = vsel %vm1678, %v1874, %v2013
      %v2015 = vsel %vm1680, %v1878, %v2014
      %v2016 = vsel %vm1682, %v1882, %v2015
      %v2017 = vsel %vm1684, %v1886, %v2016
      %v2018 = vsel %vm1672, %v1894, %v1890
      %v2019 = vsel %vm1674, %v1898, %v2018
      %v2020 = vsel %vm1676, %v1902, %v2019
      %v2021 = vsel %vm1678, %v1906, %v2020
      %v2022 = vsel %vm1680, %v1910, %v2021
      %v2023 = vsel %vm1682, %v1914, %v2022
      %v2024 = vsel %vm1684, %v1918, %v2023
      %v2025 = vsel %vm1672, %v1926, %v1922
      %v2026 = vsel %vm1674, %v1930, %v2025
      %v2027 = vsel %vm1676, %v1934, %v2026
      %v2028 = vsel %vm1678, %v1938, %v2027
      %v2029 = vsel %vm1680, %v1942, %v2028
      %v2030 = vsel %vm1682, %v1946, %v2029
      %v2031 = vsel %vm1684, %v1950, %v2030
      %v2032 = vsel %vm1672, %v1958, %v1954
      %v2033 = vsel %vm1674, %v1962, %v2032
      %v2034 = vsel %vm1676, %v1966, %v2033
      %v2035 = vsel %vm1678, %v1970, %v2034
      %v2036 = vsel %vm1680, %v1974, %v2035
      %v2037 = vsel %vm1682, %v1978, %v2036
      %v2038 = vsel %vm1684, %v1982, %v2037
      %2039 = vrot.lane.b32.xlu0 %v1989, 4
      %v2040 = vpop.permute.xlu0 %2039
      %2041 = vrot.lane.b32.xlu0 %v1996, 4
      %v2042 = vpop.permute.xlu0 %2041
      %2043 = vrot.lane.b32.xlu0 %v2003, 4
      %v2044 = vpop.permute.xlu0 %2043
      %2045 = vrot.lane.b32.xlu0 %v2010, 4
      %v2046 = vpop.permute.xlu0 %2045
      %2047 = vrot.lane.b32.xlu0 %v2017, 4
      %v2048 = vpop.permute.xlu0 %2047
      %2049 = vrot.lane.b32.xlu0 %v2024, 4
      %v2050 = vpop.permute.xlu0 %2049
      %2051 = vrot.lane.b32.xlu0 %v2031, 4
      %v2052 = vpop.permute.xlu0 %2051
      %2053 = vrot.lane.b32.xlu0 %v2038, 4
      %v2054 = vpop.permute.xlu0 %2053
      %v2063 = vlaneseq
      %v2064 = vshrl.u32 %v2063, 7
      %v2065 = vsub.s32 0, %v2064
      %v2066 = vrot.slane %v800, %v2065
      %v2067 = vlaneseq
      %v2068 = vshrl.u32 %v2067, 7
      %v2069 = vsub.s32 0, %v2068
      %v2070 = vrot.slane %v841, %v2069
      %v2071 = vlaneseq
      %v2072 = vshrl.u32 %v2071, 7
      %v2073 = vsub.s32 0, %v2072
      %v2074 = vrot.slane %v882, %v2073
      %v2075 = vlaneseq
      %v2076 = vshrl.u32 %v2075, 7
      %v2077 = vsub.s32 0, %v2076
      %v2078 = vrot.slane %v923, %v2077
      %v2079 = vlaneseq
      %v2080 = vshrl.u32 %v2079, 7
      %v2081 = vsub.s32 0, %v2080
      %v2082 = vrot.slane %v964, %v2081
      %v2083 = vlaneseq
      %v2084 = vshrl.u32 %v2083, 7
      %v2085 = vsub.s32 0, %v2084
      %v2086 = vrot.slane %v1005, %v2085
      %v2087 = vlaneseq
      %v2088 = vshrl.u32 %v2087, 7
      %v2089 = vsub.s32 0, %v2088
      %v2090 = vrot.slane %v1046, %v2089
      %v2091 = vsel %vm1672, %v1443, %v1439
      %v2092 = vsel %vm1674, %v1447, %v2091
      %v2093 = vsel %vm1676, %v1435, %v2092
      %v2094 = vsel %vm1678, %v1439, %v2093
      %v2095 = vsel %vm1680, %v1443, %v2094
      %v2096 = vsel %vm1682, %v1447, %v2095
      %v2097 = vsel %vm1684, %v1435, %v2096
      %v2098 = vsel %vm1672, %v1459, %v1455
      %v2099 = vsel %vm1674, %v1463, %v2098
      %v2100 = vsel %vm1676, %v1467, %v2099
      %v2101 = vsel %vm1678, %v1471, %v2100
      %v2102 = vsel %vm1680, %v1475, %v2101
      %v2103 = vsel %vm1682, %v1479, %v2102
      %v2104 = vsel %vm1684, %v2066, %v2103
      %v2105 = vsel %vm1672, %v1491, %v1487
      %v2106 = vsel %vm1674, %v1495, %v2105
      %v2107 = vsel %vm1676, %v1499, %v2106
      %v2108 = vsel %vm1678, %v1503, %v2107
      %v2109 = vsel %vm1680, %v1507, %v2108
      %v2110 = vsel %vm1682, %v1511, %v2109
      %v2111 = vsel %vm1684, %v2070, %v2110
      %v2112 = vsel %vm1672, %v1523, %v1519
      %v2113 = vsel %vm1674, %v1527, %v2112
      %v2114 = vsel %vm1676, %v1531, %v2113
      %v2115 = vsel %vm1678, %v1535, %v2114
      %v2116 = vsel %vm1680, %v1539, %v2115
      %v2117 = vsel %vm1682, %v1543, %v2116
      %v2118 = vsel %vm1684, %v2074, %v2117
      %v2119 = vsel %vm1672, %v1555, %v1551
      %v2120 = vsel %vm1674, %v1559, %v2119
      %v2121 = vsel %vm1676, %v1563, %v2120
      %v2122 = vsel %vm1678, %v1567, %v2121
      %v2123 = vsel %vm1680, %v1571, %v2122
      %v2124 = vsel %vm1682, %v1575, %v2123
      %v2125 = vsel %vm1684, %v2078, %v2124
      %v2126 = vsel %vm1672, %v1587, %v1583
      %v2127 = vsel %vm1674, %v1591, %v2126
      %v2128 = vsel %vm1676, %v1595, %v2127
      %v2129 = vsel %vm1678, %v1599, %v2128
      %v2130 = vsel %vm1680, %v1603, %v2129
      %v2131 = vsel %vm1682, %v1607, %v2130
      %v2132 = vsel %vm1684, %v2082, %v2131
      %v2133 = vsel %vm1672, %v1619, %v1615
      %v2134 = vsel %vm1674, %v1623, %v2133
      %v2135 = vsel %vm1676, %v1627, %v2134
      %v2136 = vsel %vm1678, %v1631, %v2135
      %v2137 = vsel %vm1680, %v1635, %v2136
      %v2138 = vsel %vm1682, %v1639, %v2137
      %v2139 = vsel %vm1684, %v2086, %v2138
      %v2140 = vsel %vm1672, %v1651, %v1647
      %v2141 = vsel %vm1674, %v1655, %v2140
      %v2142 = vsel %vm1676, %v1659, %v2141
      %v2143 = vsel %vm1678, %v1663, %v2142
      %v2144 = vsel %vm1680, %v1667, %v2143
      %v2145 = vsel %vm1682, %v1671, %v2144
      %v2146 = vsel %vm1684, %v2090, %v2145
      %2147 = vrot.lane.b32.xlu0 %v2097, 8
      %v2148 = vpop.permute.xlu0 %2147
      %2149 = vrot.lane.b32.xlu0 %v2104, 8
      %v2150 = vpop.permute.xlu0 %2149
      %2151 = vrot.lane.b32.xlu0 %v2111, 8
      %v2152 = vpop.permute.xlu0 %2151
      %2153 = vrot.lane.b32.xlu0 %v2118, 8
      %v2154 = vpop.permute.xlu0 %2153
      %2155 = vrot.lane.b32.xlu0 %v2125, 8
      %v2156 = vpop.permute.xlu0 %2155
      %2157 = vrot.lane.b32.xlu0 %v2132, 8
      %v2158 = vpop.permute.xlu0 %2157
      %2159 = vrot.lane.b32.xlu0 %v2139, 8
      %v2160 = vpop.permute.xlu0 %2159
      %2161 = vrot.lane.b32.xlu0 %v2146, 8
      %v2162 = vpop.permute.xlu0 %2161
      %v2171 = vlaneseq
      %v2172 = vshrl.u32 %v2171, 7
      %v2173 = vsub.s32 0, %v2172
      %v2174 = vrot.slane %v1111, %v2173
      %v2175 = vlaneseq
      %v2176 = vshrl.u32 %v2175, 7
      %v2177 = vsub.s32 0, %v2176
      %v2178 = vrot.slane %v1119, %v2177
      %v2179 = vlaneseq
      %v2180 = vshrl.u32 %v2179, 7
      %v2181 = vsub.s32 0, %v2180
      %v2182 = vrot.slane %v1118, %v2181
      %v2183 = vlaneseq
      %v2184 = vshrl.u32 %v2183, 7
      %v2185 = vsub.s32 0, %v2184
      %v2186 = vrot.slane %v1120, %v2185
      %v2187 = vlaneseq
      %v2188 = vshrl.u32 %v2187, 7
      %v2189 = vsub.s32 0, %v2188
      %v2190 = vrot.slane %v1128, %v2189
      %v2191 = vlaneseq
      %v2192 = vshrl.u32 %v2191, 7
      %v2193 = vsub.s32 0, %v2192
      %v2194 = vrot.slane %v1136, %v2193
      %v2195 = vlaneseq
      %v2196 = vshrl.u32 %v2195, 7
      %v2197 = vsub.s32 0, %v2196
      %v2198 = vrot.slane %v1135, %v2197
      %v2199 = vlaneseq
      %v2200 = vshrl.u32 %v2199, 7
      %v2201 = vsub.s32 0, %v2200
      %v2202 = vrot.slane %v1137, %v2201
      %v2203 = vlaneseq
      %v2204 = vshrl.u32 %v2203, 7
      %v2205 = vsub.s32 0, %v2204
      %v2206 = vrot.slane %v1152, %v2205
      %v2207 = vlaneseq
      %v2208 = vshrl.u32 %v2207, 7
      %v2209 = vsub.s32 0, %v2208
      %v2210 = vrot.slane %v1160, %v2209
      %v2211 = vlaneseq
      %v2212 = vshrl.u32 %v2211, 7
      %v2213 = vsub.s32 0, %v2212
      %v2214 = vrot.slane %v1159, %v2213
      %v2215 = vlaneseq
      %v2216 = vshrl.u32 %v2215, 7
      %v2217 = vsub.s32 0, %v2216
      %v2218 = vrot.slane %v1161, %v2217
      %v2219 = vlaneseq
      %v2220 = vshrl.u32 %v2219, 7
      %v2221 = vsub.s32 0, %v2220
      %v2222 = vrot.slane %v1169, %v2221
      %v2223 = vlaneseq
      %v2224 = vshrl.u32 %v2223, 7
      %v2225 = vsub.s32 0, %v2224
      %v2226 = vrot.slane %v1177, %v2225
      %v2227 = vlaneseq
      %v2228 = vshrl.u32 %v2227, 7
      %v2229 = vsub.s32 0, %v2228
      %v2230 = vrot.slane %v1176, %v2229
      %v2231 = vlaneseq
      %v2232 = vshrl.u32 %v2231, 7
      %v2233 = vsub.s32 0, %v2232
      %v2234 = vrot.slane %v1178, %v2233
      %v2235 = vlaneseq
      %v2236 = vshrl.u32 %v2235, 7
      %v2237 = vsub.s32 0, %v2236
      %v2238 = vrot.slane %v1193, %v2237
      %v2239 = vlaneseq
      %v2240 = vshrl.u32 %v2239, 7
      %v2241 = vsub.s32 0, %v2240
      %v2242 = vrot.slane %v1201, %v2241
      %v2243 = vlaneseq
      %v2244 = vshrl.u32 %v2243, 7
      %v2245 = vsub.s32 0, %v2244
      %v2246 = vrot.slane %v1200, %v2245
      %v2247 = vlaneseq
      %v2248 = vshrl.u32 %v2247, 7
      %v2249 = vsub.s32 0, %v2248
      %v2250 = vrot.slane %v1202, %v2249
      %v2251 = vlaneseq
      %v2252 = vshrl.u32 %v2251, 7
      %v2253 = vsub.s32 0, %v2252
      %v2254 = vrot.slane %v1210, %v2253
      %v2255 = vlaneseq
      %v2256 = vshrl.u32 %v2255, 7
      %v2257 = vsub.s32 0, %v2256
      %v2258 = vrot.slane %v1218, %v2257
      %v2259 = vlaneseq
      %v2260 = vshrl.u32 %v2259, 7
      %v2261 = vsub.s32 0, %v2260
      %v2262 = vrot.slane %v1217, %v2261
      %v2263 = vlaneseq
      %v2264 = vshrl.u32 %v2263, 7
      %v2265 = vsub.s32 0, %v2264
      %v2266 = vrot.slane %v1219, %v2265
      %v2267 = vlaneseq
      %v2268 = vshrl.u32 %v2267, 7
      %v2269 = vsub.s32 0, %v2268
      %v2270 = vrot.slane %v1234, %v2269
      %v2271 = vlaneseq
      %v2272 = vshrl.u32 %v2271, 7
      %v2273 = vsub.s32 0, %v2272
      %v2274 = vrot.slane %v1242, %v2273
      %v2275 = vlaneseq
      %v2276 = vshrl.u32 %v2275, 7
      %v2277 = vsub.s32 0, %v2276
      %v2278 = vrot.slane %v1241, %v2277
      %v2279 = vlaneseq
      %v2280 = vshrl.u32 %v2279, 7
      %v2281 = vsub.s32 0, %v2280
      %v2282 = vrot.slane %v1243, %v2281
      %v2283 = vlaneseq
      %v2284 = vshrl.u32 %v2283, 7
      %v2285 = vsub.s32 0, %v2284
      %v2286 = vrot.slane %v1251, %v2285
      %v2287 = vlaneseq
      %v2288 = vshrl.u32 %v2287, 7
      %v2289 = vsub.s32 0, %v2288
      %v2290 = vrot.slane %v1259, %v2289
      %v2291 = vlaneseq
      %v2292 = vshrl.u32 %v2291, 7
      %v2293 = vsub.s32 0, %v2292
      %v2294 = vrot.slane %v1258, %v2293
      %v2295 = vlaneseq
      %v2296 = vshrl.u32 %v2295, 7
      %v2297 = vsub.s32 0, %v2296
      %v2298 = vrot.slane %v1260, %v2297
      %v2299 = vlaneseq
      %v2300 = vshrl.u32 %v2299, 7
      %v2301 = vsub.s32 0, %v2300
      %v2302 = vrot.slane %v1275, %v2301
      %v2303 = vlaneseq
      %v2304 = vshrl.u32 %v2303, 7
      %v2305 = vsub.s32 0, %v2304
      %v2306 = vrot.slane %v1283, %v2305
      %v2307 = vlaneseq
      %v2308 = vshrl.u32 %v2307, 7
      %v2309 = vsub.s32 0, %v2308
      %v2310 = vrot.slane %v1282, %v2309
      %v2311 = vlaneseq
      %v2312 = vshrl.u32 %v2311, 7
      %v2313 = vsub.s32 0, %v2312
      %v2314 = vrot.slane %v1284, %v2313
      %v2315 = vlaneseq
      %v2316 = vshrl.u32 %v2315, 7
      %v2317 = vsub.s32 0, %v2316
      %v2318 = vrot.slane %v1292, %v2317
      %v2319 = vlaneseq
      %v2320 = vshrl.u32 %v2319, 7
      %v2321 = vsub.s32 0, %v2320
      %v2322 = vrot.slane %v1300, %v2321
      %v2323 = vlaneseq
      %v2324 = vshrl.u32 %v2323, 7
      %v2325 = vsub.s32 0, %v2324
      %v2326 = vrot.slane %v1299, %v2325
      %v2327 = vlaneseq
      %v2328 = vshrl.u32 %v2327, 7
      %v2329 = vsub.s32 0, %v2328
      %v2330 = vrot.slane %v1301, %v2329
      %v2331 = vlaneseq
      %v2332 = vshrl.u32 %v2331, 7
      %v2333 = vsub.s32 0, %v2332
      %v2334 = vrot.slane %v1316, %v2333
      %v2335 = vlaneseq
      %v2336 = vshrl.u32 %v2335, 7
      %v2337 = vsub.s32 0, %v2336
      %v2338 = vrot.slane %v1324, %v2337
      %v2339 = vlaneseq
      %v2340 = vshrl.u32 %v2339, 7
      %v2341 = vsub.s32 0, %v2340
      %v2342 = vrot.slane %v1323, %v2341
      %v2343 = vlaneseq
      %v2344 = vshrl.u32 %v2343, 7
      %v2345 = vsub.s32 0, %v2344
      %v2346 = vrot.slane %v1325, %v2345
      %v2347 = vlaneseq
      %v2348 = vshrl.u32 %v2347, 7
      %v2349 = vsub.s32 0, %v2348
      %v2350 = vrot.slane %v1333, %v2349
      %v2351 = vlaneseq
      %v2352 = vshrl.u32 %v2351, 7
      %v2353 = vsub.s32 0, %v2352
      %v2354 = vrot.slane %v1341, %v2353
      %v2355 = vlaneseq
      %v2356 = vshrl.u32 %v2355, 7
      %v2357 = vsub.s32 0, %v2356
      %v2358 = vrot.slane %v1340, %v2357
      %v2359 = vlaneseq
      %v2360 = vshrl.u32 %v2359, 7
      %v2361 = vsub.s32 0, %v2360
      %v2362 = vrot.slane %v1342, %v2361
      %v2363 = vlaneseq
      %v2364 = vshrl.u32 %v2363, 7
      %v2365 = vsub.s32 0, %v2364
      %v2366 = vrot.slane %v1357, %v2365
      %v2367 = vlaneseq
      %v2368 = vshrl.u32 %v2367, 7
      %v2369 = vsub.s32 0, %v2368
      %v2370 = vrot.slane %v1365, %v2369
      %v2371 = vlaneseq
      %v2372 = vshrl.u32 %v2371, 7
      %v2373 = vsub.s32 0, %v2372
      %v2374 = vrot.slane %v1364, %v2373
      %v2375 = vlaneseq
      %v2376 = vshrl.u32 %v2375, 7
      %v2377 = vsub.s32 0, %v2376
      %v2378 = vrot.slane %v1366, %v2377
      %v2379 = vlaneseq
      %v2380 = vshrl.u32 %v2379, 7
      %v2381 = vsub.s32 0, %v2380
      %v2382 = vrot.slane %v1374, %v2381
      %v2383 = vlaneseq
      %v2384 = vshrl.u32 %v2383, 7
      %v2385 = vsub.s32 0, %v2384
      %v2386 = vrot.slane %v1382, %v2385
      %v2387 = vlaneseq
      %v2388 = vshrl.u32 %v2387, 7
      %v2389 = vsub.s32 0, %v2388
      %v2390 = vrot.slane %v1381, %v2389
      %v2391 = vlaneseq
      %v2392 = vshrl.u32 %v2391, 7
      %v2393 = vsub.s32 0, %v2392
      %v2394 = vrot.slane %v1383, %v2393
      %v2395 = vlaneseq
      %v2396 = vshrl.u32 %v2395, 7
      %v2397 = vsub.s32 0, %v2396
      %v2398 = vrot.slane %v1398, %v2397
      %v2399 = vlaneseq
      %v2400 = vshrl.u32 %v2399, 7
      %v2401 = vsub.s32 0, %v2400
      %v2402 = vrot.slane %v1406, %v2401
      %v2403 = vlaneseq
      %v2404 = vshrl.u32 %v2403, 7
      %v2405 = vsub.s32 0, %v2404
      %v2406 = vrot.slane %v1405, %v2405
      %v2407 = vlaneseq
      %v2408 = vshrl.u32 %v2407, 7
      %v2409 = vsub.s32 0, %v2408
      %v2410 = vrot.slane %v1407, %v2409
      %v2411 = vlaneseq
      %v2412 = vshrl.u32 %v2411, 7
      %v2413 = vsub.s32 0, %v2412
      %v2414 = vrot.slane %v1415, %v2413
      %v2415 = vlaneseq
      %v2416 = vshrl.u32 %v2415, 7
      %v2417 = vsub.s32 0, %v2416
      %v2418 = vrot.slane %v1423, %v2417
      %v2419 = vlaneseq
      %v2420 = vshrl.u32 %v2419, 7
      %v2421 = vsub.s32 0, %v2420
      %v2422 = vrot.slane %v1422, %v2421
      %v2423 = vlaneseq
      %v2424 = vshrl.u32 %v2423, 7
      %v2425 = vsub.s32 0, %v2424
      %v2426 = vrot.slane %v1424, %v2425
      %v2427 = vsel %vm1672, %v2178, %v2174
      %v2428 = vsel %vm1674, %v2182, %v2427
      %v2429 = vsel %vm1676, %v2186, %v2428
      %v2430 = vsel %vm1678, %v2190, %v2429
      %v2431 = vsel %vm1680, %v2194, %v2430
      %v2432 = vsel %vm1682, %v2198, %v2431
      %v2433 = vsel %vm1684, %v2202, %v2432
      %v2434 = vsel %vm1672, %v2210, %v2206
      %v2435 = vsel %vm1674, %v2214, %v2434
      %v2436 = vsel %vm1676, %v2218, %v2435
      %v2437 = vsel %vm1678, %v2222, %v2436
      %v2438 = vsel %vm1680, %v2226, %v2437
      %v2439 = vsel %vm1682, %v2230, %v2438
      %v2440 = vsel %vm1684, %v2234, %v2439
      %v2441 = vsel %vm1672, %v2242, %v2238
      %v2442 = vsel %vm1674, %v2246, %v2441
      %v2443 = vsel %vm1676, %v2250, %v2442
      %v2444 = vsel %vm1678, %v2254, %v2443
      %v2445 = vsel %vm1680, %v2258, %v2444
      %v2446 = vsel %vm1682, %v2262, %v2445
      %v2447 = vsel %vm1684, %v2266, %v2446
      %v2448 = vsel %vm1672, %v2274, %v2270
      %v2449 = vsel %vm1674, %v2278, %v2448
      %v2450 = vsel %vm1676, %v2282, %v2449
      %v2451 = vsel %vm1678, %v2286, %v2450
      %v2452 = vsel %vm1680, %v2290, %v2451
      %v2453 = vsel %vm1682, %v2294, %v2452
      %v2454 = vsel %vm1684, %v2298, %v2453
      %v2455 = vsel %vm1672, %v2306, %v2302
      %v2456 = vsel %vm1674, %v2310, %v2455
      %v2457 = vsel %vm1676, %v2314, %v2456
      %v2458 = vsel %vm1678, %v2318, %v2457
      %v2459 = vsel %vm1680, %v2322, %v2458
      %v2460 = vsel %vm1682, %v2326, %v2459
      %v2461 = vsel %vm1684, %v2330, %v2460
      %v2462 = vsel %vm1672, %v2338, %v2334
      %v2463 = vsel %vm1674, %v2342, %v2462
      %v2464 = vsel %vm1676, %v2346, %v2463
      %v2465 = vsel %vm1678, %v2350, %v2464
      %v2466 = vsel %vm1680, %v2354, %v2465
      %v2467 = vsel %vm1682, %v2358, %v2466
      %v2468 = vsel %vm1684, %v2362, %v2467
      %v2469 = vsel %vm1672, %v2370, %v2366
      %v2470 = vsel %vm1674, %v2374, %v2469
      %v2471 = vsel %vm1676, %v2378, %v2470
      %v2472 = vsel %vm1678, %v2382, %v2471
      %v2473 = vsel %vm1680, %v2386, %v2472
      %v2474 = vsel %vm1682, %v2390, %v2473
      %v2475 = vsel %vm1684, %v2394, %v2474
      %v2476 = vsel %vm1672, %v2402, %v2398
      %v2477 = vsel %vm1674, %v2406, %v2476
      %v2478 = vsel %vm1676, %v2410, %v2477
      %v2479 = vsel %vm1678, %v2414, %v2478
      %v2480 = vsel %vm1680, %v2418, %v2479
      %v2481 = vsel %vm1682, %v2422, %v2480
      %v2482 = vsel %vm1684, %v2426, %v2481
      %2483 = vrot.lane.b32.xlu0 %v2433, 12
      %v2484 = vpop.permute.xlu0 %2483
      %2485 = vrot.lane.b32.xlu0 %v2440, 12
      %v2486 = vpop.permute.xlu0 %2485
      %2487 = vrot.lane.b32.xlu0 %v2447, 12
      %v2488 = vpop.permute.xlu0 %2487
      %2489 = vrot.lane.b32.xlu0 %v2454, 12
      %v2490 = vpop.permute.xlu0 %2489
      %2491 = vrot.lane.b32.xlu0 %v2461, 12
      %v2492 = vpop.permute.xlu0 %2491
      %2493 = vrot.lane.b32.xlu0 %v2468, 12
      %v2494 = vpop.permute.xlu0 %2493
      %2495 = vrot.lane.b32.xlu0 %v2475, 12
      %v2496 = vpop.permute.xlu0 %2495
      %2497 = vrot.lane.b32.xlu0 %v2482, 12
      %v2498 = vpop.permute.xlu0 %2497
      %v2507 = vlaneseq
      %v2508 = vshrl.u32 %v2507, 7
      %v2509 = vsub.s32 1, %v2508
      %v2510 = vrot.slane %v1111, %v2509
      %v2511 = vlaneseq
      %v2512 = vshrl.u32 %v2511, 7
      %v2513 = vsub.s32 1, %v2512
      %v2514 = vrot.slane %v1119, %v2513
      %v2515 = vlaneseq
      %v2516 = vshrl.u32 %v2515, 7
      %v2517 = vsub.s32 1, %v2516
      %v2518 = vrot.slane %v1118, %v2517
      %v2519 = vlaneseq
      %v2520 = vshrl.u32 %v2519, 7
      %v2521 = vsub.s32 1, %v2520
      %v2522 = vrot.slane %v1120, %v2521
      %v2523 = vlaneseq
      %v2524 = vshrl.u32 %v2523, 7
      %v2525 = vsub.s32 1, %v2524
      %v2526 = vrot.slane %v1128, %v2525
      %v2527 = vlaneseq
      %v2528 = vshrl.u32 %v2527, 7
      %v2529 = vsub.s32 1, %v2528
      %v2530 = vrot.slane %v1136, %v2529
      %v2531 = vlaneseq
      %v2532 = vshrl.u32 %v2531, 7
      %v2533 = vsub.s32 1, %v2532
      %v2534 = vrot.slane %v1135, %v2533
      %v2535 = vlaneseq
      %v2536 = vshrl.u32 %v2535, 7
      %v2537 = vsub.s32 1, %v2536
      %v2538 = vrot.slane %v1137, %v2537
      %v2539 = vlaneseq
      %v2540 = vshrl.u32 %v2539, 7
      %v2541 = vsub.s32 1, %v2540
      %v2542 = vrot.slane %v1152, %v2541
      %v2543 = vlaneseq
      %v2544 = vshrl.u32 %v2543, 7
      %v2545 = vsub.s32 1, %v2544
      %v2546 = vrot.slane %v1160, %v2545
      %v2547 = vlaneseq
      %v2548 = vshrl.u32 %v2547, 7
      %v2549 = vsub.s32 1, %v2548
      %v2550 = vrot.slane %v1159, %v2549
      %v2551 = vlaneseq
      %v2552 = vshrl.u32 %v2551, 7
      %v2553 = vsub.s32 1, %v2552
      %v2554 = vrot.slane %v1161, %v2553
      %v2555 = vlaneseq
      %v2556 = vshrl.u32 %v2555, 7
      %v2557 = vsub.s32 1, %v2556
      %v2558 = vrot.slane %v1169, %v2557
      %v2559 = vlaneseq
      %v2560 = vshrl.u32 %v2559, 7
      %v2561 = vsub.s32 1, %v2560
      %v2562 = vrot.slane %v1177, %v2561
      %v2563 = vlaneseq
      %v2564 = vshrl.u32 %v2563, 7
      %v2565 = vsub.s32 1, %v2564
      %v2566 = vrot.slane %v1176, %v2565
      %v2567 = vlaneseq
      %v2568 = vshrl.u32 %v2567, 7
      %v2569 = vsub.s32 1, %v2568
      %v2570 = vrot.slane %v1178, %v2569
      %v2571 = vlaneseq
      %v2572 = vshrl.u32 %v2571, 7
      %v2573 = vsub.s32 1, %v2572
      %v2574 = vrot.slane %v1193, %v2573
      %v2575 = vlaneseq
      %v2576 = vshrl.u32 %v2575, 7
      %v2577 = vsub.s32 1, %v2576
      %v2578 = vrot.slane %v1201, %v2577
      %v2579 = vlaneseq
      %v2580 = vshrl.u32 %v2579, 7
      %v2581 = vsub.s32 1, %v2580
      %v2582 = vrot.slane %v1200, %v2581
      %v2583 = vlaneseq
      %v2584 = vshrl.u32 %v2583, 7
      %v2585 = vsub.s32 1, %v2584
      %v2586 = vrot.slane %v1202, %v2585
      %v2587 = vlaneseq
      %v2588 = vshrl.u32 %v2587, 7
      %v2589 = vsub.s32 1, %v2588
      %v2590 = vrot.slane %v1210, %v2589
      %v2591 = vlaneseq
      %v2592 = vshrl.u32 %v2591, 7
      %v2593 = vsub.s32 1, %v2592
      %v2594 = vrot.slane %v1218, %v2593
      %v2595 = vlaneseq
      %v2596 = vshrl.u32 %v2595, 7
      %v2597 = vsub.s32 1, %v2596
      %v2598 = vrot.slane %v1217, %v2597
      %v2599 = vlaneseq
      %v2600 = vshrl.u32 %v2599, 7
      %v2601 = vsub.s32 1, %v2600
      %v2602 = vrot.slane %v1219, %v2601
      %v2603 = vlaneseq
      %v2604 = vshrl.u32 %v2603, 7
      %v2605 = vsub.s32 1, %v2604
      %v2606 = vrot.slane %v1234, %v2605
      %v2607 = vlaneseq
      %v2608 = vshrl.u32 %v2607, 7
      %v2609 = vsub.s32 1, %v2608
      %v2610 = vrot.slane %v1242, %v2609
      %v2611 = vlaneseq
      %v2612 = vshrl.u32 %v2611, 7
      %v2613 = vsub.s32 1, %v2612
      %v2614 = vrot.slane %v1241, %v2613
      %v2615 = vlaneseq
      %v2616 = vshrl.u32 %v2615, 7
      %v2617 = vsub.s32 1, %v2616
      %v2618 = vrot.slane %v1243, %v2617
      %v2619 = vlaneseq
      %v2620 = vshrl.u32 %v2619, 7
      %v2621 = vsub.s32 1, %v2620
      %v2622 = vrot.slane %v1251, %v2621
      %v2623 = vlaneseq
      %v2624 = vshrl.u32 %v2623, 7
      %v2625 = vsub.s32 1, %v2624
      %v2626 = vrot.slane %v1259, %v2625
      %v2627 = vlaneseq
      %v2628 = vshrl.u32 %v2627, 7
      %v2629 = vsub.s32 1, %v2628
      %v2630 = vrot.slane %v1258, %v2629
      %v2631 = vlaneseq
      %v2632 = vshrl.u32 %v2631, 7
      %v2633 = vsub.s32 1, %v2632
      %v2634 = vrot.slane %v1260, %v2633
      %v2635 = vlaneseq
      %v2636 = vshrl.u32 %v2635, 7
      %v2637 = vsub.s32 1, %v2636
      %v2638 = vrot.slane %v1275, %v2637
      %v2639 = vlaneseq
      %v2640 = vshrl.u32 %v2639, 7
      %v2641 = vsub.s32 1, %v2640
      %v2642 = vrot.slane %v1283, %v2641
      %v2643 = vlaneseq
      %v2644 = vshrl.u32 %v2643, 7
      %v2645 = vsub.s32 1, %v2644
      %v2646 = vrot.slane %v1282, %v2645
      %v2647 = vlaneseq
      %v2648 = vshrl.u32 %v2647, 7
      %v2649 = vsub.s32 1, %v2648
      %v2650 = vrot.slane %v1284, %v2649
      %v2651 = vlaneseq
      %v2652 = vshrl.u32 %v2651, 7
      %v2653 = vsub.s32 1, %v2652
      %v2654 = vrot.slane %v1292, %v2653
      %v2655 = vlaneseq
      %v2656 = vshrl.u32 %v2655, 7
      %v2657 = vsub.s32 1, %v2656
      %v2658 = vrot.slane %v1300, %v2657
      %v2659 = vlaneseq
      %v2660 = vshrl.u32 %v2659, 7
      %v2661 = vsub.s32 1, %v2660
      %v2662 = vrot.slane %v1299, %v2661
      %v2663 = vlaneseq
      %v2664 = vshrl.u32 %v2663, 7
      %v2665 = vsub.s32 1, %v2664
      %v2666 = vrot.slane %v1301, %v2665
      %v2667 = vlaneseq
      %v2668 = vshrl.u32 %v2667, 7
      %v2669 = vsub.s32 1, %v2668
      %v2670 = vrot.slane %v1316, %v2669
      %v2671 = vlaneseq
      %v2672 = vshrl.u32 %v2671, 7
      %v2673 = vsub.s32 1, %v2672
      %v2674 = vrot.slane %v1324, %v2673
      %v2675 = vlaneseq
      %v2676 = vshrl.u32 %v2675, 7
      %v2677 = vsub.s32 1, %v2676
      %v2678 = vrot.slane %v1323, %v2677
      %v2679 = vlaneseq
      %v2680 = vshrl.u32 %v2679, 7
      %v2681 = vsub.s32 1, %v2680
      %v2682 = vrot.slane %v1325, %v2681
      %v2683 = vlaneseq
      %v2684 = vshrl.u32 %v2683, 7
      %v2685 = vsub.s32 1, %v2684
      %v2686 = vrot.slane %v1333, %v2685
      %v2687 = vlaneseq
      %v2688 = vshrl.u32 %v2687, 7
      %v2689 = vsub.s32 1, %v2688
      %v2690 = vrot.slane %v1341, %v2689
      %v2691 = vlaneseq
      %v2692 = vshrl.u32 %v2691, 7
      %v2693 = vsub.s32 1, %v2692
      %v2694 = vrot.slane %v1340, %v2693
      %v2695 = vlaneseq
      %v2696 = vshrl.u32 %v2695, 7
      %v2697 = vsub.s32 1, %v2696
      %v2698 = vrot.slane %v1342, %v2697
      %v2699 = vlaneseq
      %v2700 = vshrl.u32 %v2699, 7
      %v2701 = vsub.s32 1, %v2700
      %v2702 = vrot.slane %v1357, %v2701
      %v2703 = vlaneseq
      %v2704 = vshrl.u32 %v2703, 7
      %v2705 = vsub.s32 1, %v2704
      %v2706 = vrot.slane %v1365, %v2705
      %v2707 = vlaneseq
      %v2708 = vshrl.u32 %v2707, 7
      %v2709 = vsub.s32 1, %v2708
      %v2710 = vrot.slane %v1364, %v2709
      %v2711 = vlaneseq
      %v2712 = vshrl.u32 %v2711, 7
      %v2713 = vsub.s32 1, %v2712
      %v2714 = vrot.slane %v1366, %v2713
      %v2715 = vlaneseq
      %v2716 = vshrl.u32 %v2715, 7
      %v2717 = vsub.s32 1, %v2716
      %v2718 = vrot.slane %v1374, %v2717
      %v2719 = vlaneseq
      %v2720 = vshrl.u32 %v2719, 7
      %v2721 = vsub.s32 1, %v2720
      %v2722 = vrot.slane %v1382, %v2721
      %v2723 = vlaneseq
      %v2724 = vshrl.u32 %v2723, 7
      %v2725 = vsub.s32 1, %v2724
      %v2726 = vrot.slane %v1381, %v2725
      %v2727 = vlaneseq
      %v2728 = vshrl.u32 %v2727, 7
      %v2729 = vsub.s32 1, %v2728
      %v2730 = vrot.slane %v1383, %v2729
      %v2731 = vlaneseq
      %v2732 = vshrl.u32 %v2731, 7
      %v2733 = vsub.s32 1, %v2732
      %v2734 = vrot.slane %v1398, %v2733
      %v2735 = vlaneseq
      %v2736 = vshrl.u32 %v2735, 7
      %v2737 = vsub.s32 1, %v2736
      %v2738 = vrot.slane %v1406, %v2737
      %v2739 = vlaneseq
      %v2740 = vshrl.u32 %v2739, 7
      %v2741 = vsub.s32 1, %v2740
      %v2742 = vrot.slane %v1405, %v2741
      %v2743 = vlaneseq
      %v2744 = vshrl.u32 %v2743, 7
      %v2745 = vsub.s32 1, %v2744
      %v2746 = vrot.slane %v1407, %v2745
      %v2747 = vlaneseq
      %v2748 = vshrl.u32 %v2747, 7
      %v2749 = vsub.s32 1, %v2748
      %v2750 = vrot.slane %v1415, %v2749
      %v2751 = vlaneseq
      %v2752 = vshrl.u32 %v2751, 7
      %v2753 = vsub.s32 1, %v2752
      %v2754 = vrot.slane %v1423, %v2753
      %v2755 = vlaneseq
      %v2756 = vshrl.u32 %v2755, 7
      %v2757 = vsub.s32 1, %v2756
      %v2758 = vrot.slane %v1422, %v2757
      %v2759 = vlaneseq
      %v2760 = vshrl.u32 %v2759, 7
      %v2761 = vsub.s32 1, %v2760
      %v2762 = vrot.slane %v1424, %v2761
      %v2763 = vsel %vm1672, %v2514, %v2510
      %v2764 = vsel %vm1674, %v2518, %v2763
      %v2765 = vsel %vm1676, %v2522, %v2764
      %v2766 = vsel %vm1678, %v2526, %v2765
      %v2767 = vsel %vm1680, %v2530, %v2766
      %v2768 = vsel %vm1682, %v2534, %v2767
      %v2769 = vsel %vm1684, %v2538, %v2768
      %v2770 = vsel %vm1672, %v2546, %v2542
      %v2771 = vsel %vm1674, %v2550, %v2770
      %v2772 = vsel %vm1676, %v2554, %v2771
      %v2773 = vsel %vm1678, %v2558, %v2772
      %v2774 = vsel %vm1680, %v2562, %v2773
      %v2775 = vsel %vm1682, %v2566, %v2774
      %v2776 = vsel %vm1684, %v2570, %v2775
      %v2777 = vsel %vm1672, %v2578, %v2574
      %v2778 = vsel %vm1674, %v2582, %v2777
      %v2779 = vsel %vm1676, %v2586, %v2778
      %v2780 = vsel %vm1678, %v2590, %v2779
      %v2781 = vsel %vm1680, %v2594, %v2780
      %v2782 = vsel %vm1682, %v2598, %v2781
      %v2783 = vsel %vm1684, %v2602, %v2782
      %v2784 = vsel %vm1672, %v2610, %v2606
      %v2785 = vsel %vm1674, %v2614, %v2784
      %v2786 = vsel %vm1676, %v2618, %v2785
      %v2787 = vsel %vm1678, %v2622, %v2786
      %v2788 = vsel %vm1680, %v2626, %v2787
      %v2789 = vsel %vm1682, %v2630, %v2788
      %v2790 = vsel %vm1684, %v2634, %v2789
      %v2791 = vsel %vm1672, %v2642, %v2638
      %v2792 = vsel %vm1674, %v2646, %v2791
      %v2793 = vsel %vm1676, %v2650, %v2792
      %v2794 = vsel %vm1678, %v2654, %v2793
      %v2795 = vsel %vm1680, %v2658, %v2794
      %v2796 = vsel %vm1682, %v2662, %v2795
      %v2797 = vsel %vm1684, %v2666, %v2796
      %v2798 = vsel %vm1672, %v2674, %v2670
      %v2799 = vsel %vm1674, %v2678, %v2798
      %v2800 = vsel %vm1676, %v2682, %v2799
      %v2801 = vsel %vm1678, %v2686, %v2800
      %v2802 = vsel %vm1680, %v2690, %v2801
      %v2803 = vsel %vm1682, %v2694, %v2802
      %v2804 = vsel %vm1684, %v2698, %v2803
      %v2805 = vsel %vm1672, %v2706, %v2702
      %v2806 = vsel %vm1674, %v2710, %v2805
      %v2807 = vsel %vm1676, %v2714, %v2806
      %v2808 = vsel %vm1678, %v2718, %v2807
      %v2809 = vsel %vm1680, %v2722, %v2808
      %v2810 = vsel %vm1682, %v2726, %v2809
      %v2811 = vsel %vm1684, %v2730, %v2810
      %v2812 = vsel %vm1672, %v2738, %v2734
      %v2813 = vsel %vm1674, %v2742, %v2812
      %v2814 = vsel %vm1676, %v2746, %v2813
      %v2815 = vsel %vm1678, %v2750, %v2814
      %v2816 = vsel %vm1680, %v2754, %v2815
      %v2817 = vsel %vm1682, %v2758, %v2816
      %v2818 = vsel %vm1684, %v2762, %v2817
      %2819 = vrot.lane.b32.xlu0 %v2769, 16
      %v2820 = vpop.permute.xlu0 %2819
      %2821 = vrot.lane.b32.xlu0 %v2776, 16
      %v2822 = vpop.permute.xlu0 %2821
      %2823 = vrot.lane.b32.xlu0 %v2783, 16
      %v2824 = vpop.permute.xlu0 %2823
      %2825 = vrot.lane.b32.xlu0 %v2790, 16
      %v2826 = vpop.permute.xlu0 %2825
      %2827 = vrot.lane.b32.xlu0 %v2797, 16
      %v2828 = vpop.permute.xlu0 %2827
      %2829 = vrot.lane.b32.xlu0 %v2804, 16
      %v2830 = vpop.permute.xlu0 %2829
      %2831 = vrot.lane.b32.xlu0 %v2811, 16
      %v2832 = vpop.permute.xlu0 %2831
      %2833 = vrot.lane.b32.xlu0 %v2818, 16
      %v2834 = vpop.permute.xlu0 %2833
      %v2843 = vlaneseq
      %v2844 = vshrl.u32 %v2843, 7
      %v2845 = vsub.s32 0, %v2844
      %v2846 = vrot.slane %v1144, %v2845
      %v2847 = vlaneseq
      %v2848 = vshrl.u32 %v2847, 7
      %v2849 = vsub.s32 0, %v2848
      %v2850 = vrot.slane %v1185, %v2849
      %v2851 = vlaneseq
      %v2852 = vshrl.u32 %v2851, 7
      %v2853 = vsub.s32 0, %v2852
      %v2854 = vrot.slane %v1226, %v2853
      %v2855 = vlaneseq
      %v2856 = vshrl.u32 %v2855, 7
      %v2857 = vsub.s32 0, %v2856
      %v2858 = vrot.slane %v1267, %v2857
      %v2859 = vlaneseq
      %v2860 = vshrl.u32 %v2859, 7
      %v2861 = vsub.s32 0, %v2860
      %v2862 = vrot.slane %v1308, %v2861
      %v2863 = vlaneseq
      %v2864 = vshrl.u32 %v2863, 7
      %v2865 = vsub.s32 0, %v2864
      %v2866 = vrot.slane %v1349, %v2865
      %v2867 = vlaneseq
      %v2868 = vshrl.u32 %v2867, 7
      %v2869 = vsub.s32 0, %v2868
      %v2870 = vrot.slane %v1390, %v2869
      %v2871 = vlaneseq
      %v2872 = vshrl.u32 %v2871, 7
      %v2873 = vsub.s32 0, %v2872
      %v2874 = vrot.slane %v1431, %v2873
      %v2875 = vsel %vm1672, %v2182, %v2178
      %v2876 = vsel %vm1674, %v2186, %v2875
      %v2877 = vsel %vm1676, %v2190, %v2876
      %v2878 = vsel %vm1678, %v2194, %v2877
      %v2879 = vsel %vm1680, %v2198, %v2878
      %v2880 = vsel %vm1682, %v2202, %v2879
      %v2881 = vsel %vm1684, %v2846, %v2880
      %v2882 = vsel %vm1672, %v2214, %v2210
      %v2883 = vsel %vm1674, %v2218, %v2882
      %v2884 = vsel %vm1676, %v2222, %v2883
      %v2885 = vsel %vm1678, %v2226, %v2884
      %v2886 = vsel %vm1680, %v2230, %v2885
      %v2887 = vsel %vm1682, %v2234, %v2886
      %v2888 = vsel %vm1684, %v2850, %v2887
      %v2889 = vsel %vm1672, %v2246, %v2242
      %v2890 = vsel %vm1674, %v2250, %v2889
      %v2891 = vsel %vm1676, %v2254, %v2890
      %v2892 = vsel %vm1678, %v2258, %v2891
      %v2893 = vsel %vm1680, %v2262, %v2892
      %v2894 = vsel %vm1682, %v2266, %v2893
      %v2895 = vsel %vm1684, %v2854, %v2894
      %v2896 = vsel %vm1672, %v2278, %v2274
      %v2897 = vsel %vm1674, %v2282, %v2896
      %v2898 = vsel %vm1676, %v2286, %v2897
      %v2899 = vsel %vm1678, %v2290, %v2898
      %v2900 = vsel %vm1680, %v2294, %v2899
      %v2901 = vsel %vm1682, %v2298, %v2900
      %v2902 = vsel %vm1684, %v2858, %v2901
      %v2903 = vsel %vm1672, %v2310, %v2306
      %v2904 = vsel %vm1674, %v2314, %v2903
      %v2905 = vsel %vm1676, %v2318, %v2904
      %v2906 = vsel %vm1678, %v2322, %v2905
      %v2907 = vsel %vm1680, %v2326, %v2906
      %v2908 = vsel %vm1682, %v2330, %v2907
      %v2909 = vsel %vm1684, %v2862, %v2908
      %v2910 = vsel %vm1672, %v2342, %v2338
      %v2911 = vsel %vm1674, %v2346, %v2910
      %v2912 = vsel %vm1676, %v2350, %v2911
      %v2913 = vsel %vm1678, %v2354, %v2912
      %v2914 = vsel %vm1680, %v2358, %v2913
      %v2915 = vsel %vm1682, %v2362, %v2914
      %v2916 = vsel %vm1684, %v2866, %v2915
      %v2917 = vsel %vm1672, %v2374, %v2370
      %v2918 = vsel %vm1674, %v2378, %v2917
      %v2919 = vsel %vm1676, %v2382, %v2918
      %v2920 = vsel %vm1678, %v2386, %v2919
      %v2921 = vsel %vm1680, %v2390, %v2920
      %v2922 = vsel %vm1682, %v2394, %v2921
      %v2923 = vsel %vm1684, %v2870, %v2922
      %v2924 = vsel %vm1672, %v2406, %v2402
      %v2925 = vsel %vm1674, %v2410, %v2924
      %v2926 = vsel %vm1676, %v2414, %v2925
      %v2927 = vsel %vm1678, %v2418, %v2926
      %v2928 = vsel %vm1680, %v2422, %v2927
      %v2929 = vsel %vm1682, %v2426, %v2928
      %v2930 = vsel %vm1684, %v2874, %v2929
      %2931 = vrot.lane.b32.xlu0 %v2881, 20
      %v2932 = vpop.permute.xlu0 %2931
      %2933 = vrot.lane.b32.xlu0 %v2888, 20
      %v2934 = vpop.permute.xlu0 %2933
      %2935 = vrot.lane.b32.xlu0 %v2895, 20
      %v2936 = vpop.permute.xlu0 %2935
      %2937 = vrot.lane.b32.xlu0 %v2902, 20
      %v2938 = vpop.permute.xlu0 %2937
      %2939 = vrot.lane.b32.xlu0 %v2909, 20
      %v2940 = vpop.permute.xlu0 %2939
      %2941 = vrot.lane.b32.xlu0 %v2916, 20
      %v2942 = vpop.permute.xlu0 %2941
      %2943 = vrot.lane.b32.xlu0 %v2923, 20
      %v2944 = vpop.permute.xlu0 %2943
      %2945 = vrot.lane.b32.xlu0 %v2930, 20
      %v2946 = vpop.permute.xlu0 %2945
      %v2955 = vlaneseq
      %v2956 = vshrl.u32 %v2955, 7
      %v2957 = vsub.s32 0, %v2956
      %v2958 = vrot.slane %v1054, %v2957
      %v2959 = vlaneseq
      %v2960 = vshrl.u32 %v2959, 7
      %v2961 = vsub.s32 0, %v2960
      %v2962 = vrot.slane %v1062, %v2961
      %v2963 = vlaneseq
      %v2964 = vshrl.u32 %v2963, 7
      %v2965 = vsub.s32 0, %v2964
      %v2966 = vrot.slane %v1061, %v2965
      %v2967 = vlaneseq
      %v2968 = vshrl.u32 %v2967, 7
      %v2969 = vsub.s32 0, %v2968
      %v2970 = vrot.slane %v1063, %v2969
      %v2971 = vlaneseq
      %v2972 = vshrl.u32 %v2971, 7
      %v2973 = vsub.s32 0, %v2972
      %v2974 = vrot.slane %v1071, %v2973
      %v2975 = vlaneseq
      %v2976 = vshrl.u32 %v2975, 7
      %v2977 = vsub.s32 0, %v2976
      %v2978 = vrot.slane %v1079, %v2977
      %v2979 = vlaneseq
      %v2980 = vshrl.u32 %v2979, 7
      %v2981 = vsub.s32 0, %v2980
      %v2982 = vrot.slane %v1078, %v2981
      %v2983 = vlaneseq
      %v2984 = vshrl.u32 %v2983, 7
      %v2985 = vsub.s32 0, %v2984
      %v2986 = vrot.slane %v1080, %v2985
      %v2987 = vsel %vm1672, %v2962, %v2958
      %v2988 = vsel %vm1674, %v2966, %v2987
      %v2989 = vsel %vm1676, %v2970, %v2988
      %v2990 = vsel %vm1678, %v2974, %v2989
      %v2991 = vsel %vm1680, %v2978, %v2990
      %v2992 = vsel %vm1682, %v2982, %v2991
      %v2993 = vsel %vm1684, %v2986, %v2992
      %2994 = vrot.lane.b32.xlu0 %v1692, 24
      %v2995 = vpop.permute.xlu0 %2994
      %2996 = vrot.lane.b32.xlu0 %v1699, 24
      %v2997 = vpop.permute.xlu0 %2996
      %2998 = vrot.lane.b32.xlu0 %v1706, 24
      %v2999 = vpop.permute.xlu0 %2998
      %3000 = vrot.lane.b32.xlu0 %v1713, 24
      %v3001 = vpop.permute.xlu0 %3000
      %3002 = vrot.lane.b32.xlu0 %v1720, 24
      %v3003 = vpop.permute.xlu0 %3002
      %3004 = vrot.lane.b32.xlu0 %v1727, 24
      %v3005 = vpop.permute.xlu0 %3004
      %3006 = vrot.lane.b32.xlu0 %v1734, 24
      %v3007 = vpop.permute.xlu0 %3006
      %3008 = vrot.lane.b32.xlu0 %v2993, 24
      %v3009 = vpop.permute.xlu0 %3008
      %v3018 = vlaneseq
      %v3019 = vshrl.u32 %v3018, 7
      %v3020 = vsub.s32 1, %v3019
      %v3021 = vrot.slane %v1054, %v3020
      %v3022 = vlaneseq
      %v3023 = vshrl.u32 %v3022, 7
      %v3024 = vsub.s32 1, %v3023
      %v3025 = vrot.slane %v1062, %v3024
      %v3026 = vlaneseq
      %v3027 = vshrl.u32 %v3026, 7
      %v3028 = vsub.s32 1, %v3027
      %v3029 = vrot.slane %v1061, %v3028
      %v3030 = vlaneseq
      %v3031 = vshrl.u32 %v3030, 7
      %v3032 = vsub.s32 1, %v3031
      %v3033 = vrot.slane %v1063, %v3032
      %v3034 = vlaneseq
      %v3035 = vshrl.u32 %v3034, 7
      %v3036 = vsub.s32 1, %v3035
      %v3037 = vrot.slane %v1071, %v3036
      %v3038 = vlaneseq
      %v3039 = vshrl.u32 %v3038, 7
      %v3040 = vsub.s32 1, %v3039
      %v3041 = vrot.slane %v1079, %v3040
      %v3042 = vlaneseq
      %v3043 = vshrl.u32 %v3042, 7
      %v3044 = vsub.s32 1, %v3043
      %v3045 = vrot.slane %v1078, %v3044
      %v3046 = vlaneseq
      %v3047 = vshrl.u32 %v3046, 7
      %v3048 = vsub.s32 1, %v3047
      %v3049 = vrot.slane %v1080, %v3048
      %v3050 = vsel %vm1672, %v3025, %v3021
      %v3051 = vsel %vm1674, %v3029, %v3050
      %v3052 = vsel %vm1676, %v3033, %v3051
      %v3053 = vsel %vm1678, %v3037, %v3052
      %v3054 = vsel %vm1680, %v3041, %v3053
      %v3055 = vsel %vm1682, %v3045, %v3054
      %v3056 = vsel %vm1684, %v3049, %v3055
      %3057 = vrot.lane.b32.xlu0 %v1996, 28
      %v3058 = vpop.permute.xlu0 %3057
      %3059 = vrot.lane.b32.xlu0 %v2003, 28
      %v3060 = vpop.permute.xlu0 %3059
      %3061 = vrot.lane.b32.xlu0 %v2010, 28
      %v3062 = vpop.permute.xlu0 %3061
      %3063 = vrot.lane.b32.xlu0 %v2017, 28
      %v3064 = vpop.permute.xlu0 %3063
      %3065 = vrot.lane.b32.xlu0 %v2024, 28
      %v3066 = vpop.permute.xlu0 %3065
      %3067 = vrot.lane.b32.xlu0 %v2031, 28
      %v3068 = vpop.permute.xlu0 %3067
      %3069 = vrot.lane.b32.xlu0 %v2038, 28
      %v3070 = vpop.permute.xlu0 %3069
      %3071 = vrot.lane.b32.xlu0 %v3056, 28
      %v3072 = vpop.permute.xlu0 %3071
      %v3081 = vlaneseq
      %v3082 = vshrl.u32 %v3081, 7
      %v3083 = vsub.s32 0, %v3082
      %v3084 = vrot.slane %v1087, %v3083
      %v3085 = vsel %vm1672, %v2966, %v2962
      %v3086 = vsel %vm1674, %v2970, %v3085
      %v3087 = vsel %vm1676, %v2974, %v3086
      %v3088 = vsel %vm1678, %v2978, %v3087
      %v3089 = vsel %vm1680, %v2982, %v3088
      %v3090 = vsel %vm1682, %v2986, %v3089
      %v3091 = vsel %vm1684, %v3084, %v3090
      %3092 = vrot.lane.b32.xlu0 %v2104, 32
      %v3093 = vpop.permute.xlu0 %3092
      %3094 = vrot.lane.b32.xlu0 %v2111, 32
      %v3095 = vpop.permute.xlu0 %3094
      %3096 = vrot.lane.b32.xlu0 %v2118, 32
      %v3097 = vpop.permute.xlu0 %3096
      %3098 = vrot.lane.b32.xlu0 %v2125, 32
      %v3099 = vpop.permute.xlu0 %3098
      %3100 = vrot.lane.b32.xlu0 %v2132, 32
      %v3101 = vpop.permute.xlu0 %3100
      %3102 = vrot.lane.b32.xlu0 %v2139, 32
      %v3103 = vpop.permute.xlu0 %3102
      %3104 = vrot.lane.b32.xlu0 %v2146, 32
      %v3105 = vpop.permute.xlu0 %3104
      %3106 = vrot.lane.b32.xlu0 %v3091, 32
      %v3107 = vpop.permute.xlu0 %3106
      %vm3116 = vcmask 31744
      %v3117 = vsel %vm3116, %v1685, %v2040
      %v3118 = vsel %vm3116, %v1692, %v2042
      %v3119 = vsel %vm3116, %v1699, %v2044
      %v3120 = vsel %vm3116, %v1706, %v2046
      %v3121 = vsel %vm3116, %v1713, %v2048
      %v3122 = vsel %vm3116, %v1720, %v2050
      %v3123 = vsel %vm3116, %v1727, %v2052
      %v3124 = vsel %vm3116, %v1734, %v2054
      %vm3125 = vcmask 64512
      %v3126 = vsel %vm3125, %v3117, %v2148
      %v3127 = vsel %vm3125, %v3118, %v2150
      %v3128 = vsel %vm3125, %v3119, %v2152
      %v3129 = vsel %vm3125, %v3120, %v2154
      %v3130 = vsel %vm3125, %v3121, %v2156
      %v3131 = vsel %vm3125, %v3122, %v2158
      %v3132 = vsel %vm3125, %v3123, %v2160
      %v3133 = vsel %vm3125, %v3124, %v2162
      %vm3134 = vcmask 97280
      %v3135 = vsel %vm3134, %v3126, %v2484
      %v3136 = vsel %vm3134, %v3127, %v2486
      %v3137 = vsel %vm3134, %v3128, %v2488
      %v3138 = vsel %vm3134, %v3129, %v2490
      %v3139 = vsel %vm3134, %v3130, %v2492
      %v3140 = vsel %vm3134, %v3131, %v2494
      %v3141 = vsel %vm3134, %v3132, %v2496
      %v3142 = vsel %vm3134, %v3133, %v2498
      %vm3143 = vcmask 130048
      %v3144 = vsel %vm3143, %v3135, %v2820
      %v3145 = vsel %vm3143, %v3136, %v2822
      %v3146 = vsel %vm3143, %v3137, %v2824
      %v3147 = vsel %vm3143, %v3138, %v2826
      %v3148 = vsel %vm3143, %v3139, %v2828
      %v3149 = vsel %vm3143, %v3140, %v2830
      %v3150 = vsel %vm3143, %v3141, %v2832
      %v3151 = vsel %vm3143, %v3142, %v2834
      %vm3152 = vcmask 162816
      %v3153 = vsel %vm3152, %v3144, %v2932
      %v3154 = vsel %vm3152, %v3145, %v2934
      %v3155 = vsel %vm3152, %v3146, %v2936
      %v3156 = vsel %vm3152, %v3147, %v2938
      %v3157 = vsel %vm3152, %v3148, %v2940
      %v3158 = vsel %vm3152, %v3149, %v2942
      %v3159 = vsel %vm3152, %v3150, %v2944
      %v3160 = vsel %vm3152, %v3151, %v2946
      %vm3161 = vcmask 195584
      %v3162 = vsel %vm3161, %v3153, %v2995
      %v3163 = vsel %vm3161, %v3154, %v2997
      %v3164 = vsel %vm3161, %v3155, %v2999
      %v3165 = vsel %vm3161, %v3156, %v3001
      %v3166 = vsel %vm3161, %v3157, %v3003
      %v3167 = vsel %vm3161, %v3158, %v3005
      %v3168 = vsel %vm3161, %v3159, %v3007
      %v3169 = vsel %vm3161, %v3160, %v3009
      %vm3170 = vcmask 228352
      %v3171 = vsel %vm3170, %v3162, %v3058
      %v3172 = vsel %vm3170, %v3163, %v3060
      %v3173 = vsel %vm3170, %v3164, %v3062
      %v3174 = vsel %vm3170, %v3165, %v3064
      %v3175 = vsel %vm3170, %v3166, %v3066
      %v3176 = vsel %vm3170, %v3167, %v3068
      %v3177 = vsel %vm3170, %v3168, %v3070
      %v3178 = vsel %vm3170, %v3169, %v3072
      %vm3179 = vcmask 261120
      %v3180 = vsel %vm3179, %v3171, %v3093
      %v3181 = vsel %vm3179, %v3172, %v3095
      %v3182 = vsel %vm3179, %v3173, %v3097
      %v3183 = vsel %vm3179, %v3174, %v3099
      %v3184 = vsel %vm3179, %v3175, %v3101
      %v3185 = vsel %vm3179, %v3176, %v3103
      %v3186 = vsel %vm3179, %v3177, %v3105
      %v3187 = vsel %vm3179, %v3178, %v3107
      %v3188 = vld [vmem:[%s1] sm:$0xff]
      %v3189 = vld [vmem:[%s1 + $0x8] sm:$0xff]
      %v3190 = vld [vmem:[%s1 + $0x10] sm:$0xff]
      %v3191 = vld [vmem:[%s1 + $0x18] sm:$0xff]
      %v3192 = vld [vmem:[%s1 + $0x20] sm:$0xf]
      %v3193 = vld [vmem:[%s2] sm:$0x1]
      %v3195 = vlaneseq
      %v3196 = vshrl.u32 %v3195, 7
      %v3197 = vsub.s32 0, %v3196
      %v3198 = vrot.slane %v3193, %v3197
      %vm3200 = vcmask 293888
      %v3202 = vsel %vm3200, %v3180, 0
      %v3205 = vsel %vm3200, %v3181, 0
      %v3208 = vsel %vm3200, %v3182, 0
      %v3211 = vsel %vm3200, %v3183, 0
      %v3214 = vsel %vm3200, %v3184, 0
      %v3217 = vsel %vm3200, %v3185, 0
      %v3220 = vsel %vm3200, %v3186, 0
      %v3223 = vsel %vm3200, %v3187, 0
      %vm3225 = vcmask 1043456
      %v3227 = vsel %vm3225, %v3192, 0
      %3229 = vmatprep.subr.mxu0 0.0
      %3230 = vmatpush1.msra.mxu0 0.0
      %3231 = vmatprep.subr.mxu0 0.0
      %3232 = vmatpush1.msra.mxu0 0.0
      %3233 = vmatprep.subr.mxu0 0.0
      %3234 = vmatpush1.msra.mxu0 0.0
      %3235 = vmatprep.subr.mxu0 0.0
      %3236 = vmatpush1.msra.mxu0 0.0
      %3237 = vmatprep.subr.mxu0 0.0
      %3238 = vmatpush1.msra.mxu0 0.0
      %3239 = vmatprep.subr.mxu0 0.0
      %3240 = vmatpush1.msra.mxu0 0.0
      %3241 = vmatprep.subr.mxu0 0.0
      %3242 = vmatpush1.msra.mxu0 0.0
      %3243 = vmatprep.subr.mxu0 0.0
      %3244 = vmatpush1.msra.mxu0 0.0
      %3245 = vmatprep.subr.mxu0 0.0
      %3246 = vmatpush1.msra.mxu0 0.0
      %3247 = vmatprep.subr.mxu0 0.0
      %3248 = vmatpush1.msra.mxu0 0.0
      %3249 = vmatprep.subr.mxu0 0.0
      %3250 = vmatpush1.msra.mxu0 0.0
      %3251 = vmatprep.subr.mxu0 0.0
      %3252 = vmatpush1.msra.mxu0 %v3227
      %3253 = vmatprep.subr.mxu0 0.0
      %3254 = vmatpush1.msra.mxu0 %v3191
      %3255 = vmatprep.subr.mxu0 0.0
      %3256 = vmatpush1.msra.mxu0 %v3190
      %3257 = vmatprep.subr.mxu0 0.0
      %3258 = vmatpush1.msra.mxu0 %v3189
      %3259 = vmatprep.subr.mxu0 0.0
      %3260 = vmatpush1.msra.mxu0 %v3188
      %3261 = vmatprep.subr.mxu0 0.0
      %3262 = vmatpush2.msra.mxu0 0.0
      %3263 = vmatprep.subr.mxu0 0.0
      %3264 = vmatpush2.msra.mxu0 0.0
      %3265 = vmatprep.subr.mxu0 0.0
      %3266 = vmatpush2.msra.mxu0 0.0
      %3267 = vmatprep.subr.mxu0 0.0
      %3268 = vmatpush2.msra.mxu0 0.0
      %3269 = vmatprep.subr.mxu0 0.0
      %3270 = vmatpush2.msra.mxu0 0.0
      %3271 = vmatprep.subr.mxu0 0.0
      %3272 = vmatpush2.msra.mxu0 0.0
      %3273 = vmatprep.subr.mxu0 0.0
      %3274 = vmatpush2.msra.mxu0 0.0
      %3275 = vmatprep.subr.mxu0 0.0
      %3276 = vmatpush2.msra.mxu0 0.0
      %3277 = vmatprep.subr.mxu0 0.0
      %3278 = vmatpush2.msra.mxu0 0.0
      %3279 = vmatprep.subr.mxu0 0.0
      %3280 = vmatpush2.msra.mxu0 0.0
      %3281 = vmatprep.subr.mxu0 0.0
      %3282 = vmatpush2.msra.mxu0 0.0
      %3283 = vmatprep.subr.mxu0 0.0
      %3284 = vmatpush2.msra.mxu0 0.0
      %3285 = vmatprep.subr.mxu0 0.0
      %3286 = vmatpush2.msra.mxu0 0.0
      %3287 = vmatprep.subr.mxu0 0.0
      %3288 = vmatpush2.msra.mxu0 0.0
      %3289 = vmatprep.subr.mxu0 0.0
      %3290 = vmatpush2.msra.mxu0 0.0
      %3291 = vmatprep.subr.mxu0 0.0
      %3292 = vmatpush2.msra.mxu0 0.0
      %3293 = vmatprep.mubr.f32.mxu0 0.0
      %3294 = vmatmul.mubr.f32.gmra.mxu0 %v3202
      %v3295 = vpop.f32.mrf.mxu0
      %v3296 = vadd.f32 %v3198, %v3295
      %v3297 = vpop.f32.mrf.mxu0
      %3298 = vmatprep.mubr.f32.mxu0 0.0
      %3299 = vmatmul.mubr.f32.gmra.mxu0 %v3205
      %v3300 = vpop.f32.mrf.mxu0
      %v3301 = vadd.f32 %v3198, %v3300
      %v3302 = vpop.f32.mrf.mxu0
      %3303 = vmatprep.mubr.f32.mxu0 0.0
      %3304 = vmatmul.mubr.f32.gmra.mxu0 %v3208
      %v3305 = vpop.f32.mrf.mxu0
      %v3306 = vadd.f32 %v3198, %v3305
      %v3307 = vpop.f32.mrf.mxu0
      %3308 = vmatprep.mubr.f32.mxu0 0.0
      %3309 = vmatmul.mubr.f32.gmra.mxu0 %v3211
      %v3310 = vpop.f32.mrf.mxu0
      %v3311 = vadd.f32 %v3198, %v3310
      %v3312 = vpop.f32.mrf.mxu0
      %3313 = vmatprep.mubr.f32.mxu0 0.0
      %3314 = vmatmul.mubr.f32.gmra.mxu0 %v3214
      %v3315 = vpop.f32.mrf.mxu0
      %v3316 = vadd.f32 %v3198, %v3315
      %v3317 = vpop.f32.mrf.mxu0
      %3318 = vmatprep.mubr.f32.mxu0 0.0
      %3319 = vmatmul.mubr.f32.gmra.mxu0 %v3217
      %v3320 = vpop.f32.mrf.mxu0
      %v3321 = vadd.f32 %v3198, %v3320
      %v3322 = vpop.f32.mrf.mxu0
      %3323 = vmatprep.mubr.f32.mxu0 0.0
      %3324 = vmatmul.mubr.f32.gmra.mxu0 %v3220
      %v3325 = vpop.f32.mrf.mxu0
      %v3326 = vadd.f32 %v3198, %v3325
      %v3327 = vpop.f32.mrf.mxu0
      %3328 = vmatprep.mubr.f32.mxu0 0.0
      %3329 = vmatmul.mubr.f32.gmra.mxu0 %v3223
      %v3330 = vpop.f32.mrf.mxu0
      %v3331 = vadd.f32 %v3198, %v3330
      %v3332 = vpop.f32.mrf.mxu0
      %3333 = vdwg.mxu0
      %v3334 = vmax.f32 %v3296, 0.0
      %v3335 = vmax.f32 %v3301, 0.0
      %v3336 = vmax.f32 %v3306, 0.0
      %v3337 = vmax.f32 %v3311, 0.0
      %v3338 = vmax.f32 %v3316, 0.0
      %v3339 = vmax.f32 %v3321, 0.0
      %v3340 = vmax.f32 %v3326, 0.0
      %v3341 = vmax.f32 %v3331, 0.0
      %v3350 = vrot.slane %v3334, 7
      %v3351 = vrot.slane %v3335, 7
      %v3352 = vrot.slane %v3336, 7
      %v3353 = vrot.slane %v3337, 7
      %v3354 = vrot.slane %v3338, 7
      %v3355 = vrot.slane %v3339, 7
      %v3356 = vrot.slane %v3340, 7
      %v3357 = vrot.slane %v3341, 7
      %v3366 = vsel %vm613, 0.0, %v3350
      %v3367 = vsel %vm613, 0.0, %v3351
      %v3368 = vsel %vm613, 0.0, %v3352
      %v3369 = vsel %vm613, 0.0, %v3353
      %v3370 = vsel %vm613, 0.0, %v3354
      %v3371 = vsel %vm613, 0.0, %v3355
      %v3372 = vsel %vm613, 0.0, %v3356
      %v3373 = vsel %vm613, 0.0, %v3357
      %v3374 = vsel %vm613, %v3350, 0.0
      %v3375 = vsel %vm613, %v3351, 0.0
      %v3376 = vsel %vm613, %v3352, 0.0
      %v3377 = vsel %vm613, %v3353, 0.0
      %v3378 = vsel %vm613, %v3354, 0.0
      %v3379 = vsel %vm613, %v3355, 0.0
      %v3380 = vsel %vm613, %v3356, 0.0
      %v3381 = vsel %vm613, %v3357, 0.0
      %v3390 = vcombine.high %v3367, %v3367
      %v3392 = vunpack.c.l.s4 1983009808
      %v3393 = vunpack.c.0.s8 %v3392
      %v3394 = vlaneseq
      %v3395 = vshrl.u32 %v3394, 7
      %v3396 = vsub.s32 %v3393, %v3395
      %v3397 = vrot.slane %v3367, %v3396
      %v3399 = vunpack.c.l.s4 1983009808
      %v3400 = vunpack.c.0.s8 %v3399
      %v3401 = vlaneseq
      %v3402 = vshrl.u32 %v3401, 7
      %v3403 = vsub.s32 %v3400, %v3402
      %v3404 = vrot.slane %v3390, %v3403
      %v3405 = vcombine.high %v3397, %v3397
      %v3406 = vcombine.high %v3404, %v3404
      %v3408 = vunpack.c.l.s4 1983009808
      %v3409 = vunpack.c.0.s8 %v3408
      %v3410 = vlaneseq
      %v3411 = vshrl.u32 %v3410, 7
      %v3412 = vsub.s32 %v3409, %v3411
      %v3413 = vrot.slane %v3375, %v3412
      %v3414 = vcombine.high %v3369, %v3369
      %v3416 = vunpack.c.l.s4 1983009808
      %v3417 = vunpack.c.0.s8 %v3416
      %v3418 = vlaneseq
      %v3419 = vshrl.u32 %v3418, 7
      %v3420 = vsub.s32 %v3417, %v3419
      %v3421 = vrot.slane %v3369, %v3420
      %v3423 = vunpack.c.l.s4 1983009808
      %v3424 = vunpack.c.0.s8 %v3423
      %v3425 = vlaneseq
      %v3426 = vshrl.u32 %v3425, 7
      %v3427 = vsub.s32 %v3424, %v3426
      %v3428 = vrot.slane %v3414, %v3427
      %v3429 = vcombine.high %v3421, %v3421
      %v3430 = vcombine.high %v3428, %v3428
      %v3432 = vunpack.c.l.s4 1983009808
      %v3433 = vunpack.c.0.s8 %v3432
      %v3434 = vlaneseq
      %v3435 = vshrl.u32 %v3434, 7
      %v3436 = vsub.s32 %v3433, %v3435
      %v3437 = vrot.slane %v3377, %v3436
      %v3438 = vcombine.high %v3371, %v3371
      %v3440 = vunpack.c.l.s4 1983009808
      %v3441 = vunpack.c.0.s8 %v3440
      %v3442 = vlaneseq
      %v3443 = vshrl.u32 %v3442, 7
      %v3444 = vsub.s32 %v3441, %v3443
      %v3445 = vrot.slane %v3371, %v3444
      %v3447 = vunpack.c.l.s4 1983009808
      %v3448 = vunpack.c.0.s8 %v3447
      %v3449 = vlaneseq
      %v3450 = vshrl.u32 %v3449, 7
      %v3451 = vsub.s32 %v3448, %v3450
      %v3452 = vrot.slane %v3438, %v3451
      %v3453 = vcombine.high %v3445, %v3445
      %v3454 = vcombine.high %v3452, %v3452
      %v3456 = vunpack.c.l.s4 1983009808
      %v3457 = vunpack.c.0.s8 %v3456
      %v3458 = vlaneseq
      %v3459 = vshrl.u32 %v3458, 7
      %v3460 = vsub.s32 %v3457, %v3459
      %v3461 = vrot.slane %v3379, %v3460
      %v3462 = vcombine.high %v3373, %v3373
      %v3464 = vunpack.c.l.s4 1983009808
      %v3465 = vunpack.c.0.s8 %v3464
      %v3466 = vlaneseq
      %v3467 = vshrl.u32 %v3466, 7
      %v3468 = vsub.s32 %v3465, %v3467
      %v3469 = vrot.slane %v3373, %v3468
      %v3471 = vunpack.c.l.s4 1983009808
      %v3472 = vunpack.c.0.s8 %v3471
      %v3473 = vlaneseq
      %v3474 = vshrl.u32 %v3473, 7
      %v3475 = vsub.s32 %v3472, %v3474
      %v3476 = vrot.slane %v3462, %v3475
      %v3477 = vcombine.high %v3469, %v3469
      %v3478 = vcombine.high %v3476, %v3476
      %v3480 = vunpack.c.l.s4 1983009808
      %v3481 = vunpack.c.0.s8 %v3480
      %v3482 = vlaneseq
      %v3483 = vshrl.u32 %v3482, 7
      %v3484 = vsub.s32 %v3481, %v3483
      %v3485 = vrot.slane %v3381, %v3484
      %v3494 = vcombine.high %v3366, %v3366
      %v3496 = vunpack.c.l.s4 1983009808
      %v3497 = vunpack.c.0.s8 %v3496
      %v3498 = vlaneseq
      %v3499 = vshrl.u32 %v3498, 7
      %v3500 = vsub.s32 %v3497, %v3499
      %v3501 = vrot.slane %v3366, %v3500
      %v3503 = vunpack.c.l.s4 1983009808
      %v3504 = vunpack.c.0.s8 %v3503
      %v3505 = vlaneseq
      %v3506 = vshrl.u32 %v3505, 7
      %v3507 = vsub.s32 %v3504, %v3506
      %v3508 = vrot.slane %v3494, %v3507
      %v3509 = vcombine.high %v3501, %v3501
      %v3510 = vcombine.high %v3508, %v3508
      %v3512 = vunpack.c.l.s4 1983009808
      %v3513 = vunpack.c.0.s8 %v3512
      %v3514 = vlaneseq
      %v3515 = vshrl.u32 %v3514, 7
      %v3516 = vsub.s32 %v3513, %v3515
      %v3517 = vrot.slane %v3374, %v3516
      %v3518 = vcombine.high %v3368, %v3368
      %v3520 = vunpack.c.l.s4 1983009808
      %v3521 = vunpack.c.0.s8 %v3520
      %v3522 = vlaneseq
      %v3523 = vshrl.u32 %v3522, 7
      %v3524 = vsub.s32 %v3521, %v3523
      %v3525 = vrot.slane %v3368, %v3524
      %v3527 = vunpack.c.l.s4 1983009808
      %v3528 = vunpack.c.0.s8 %v3527
      %v3529 = vlaneseq
      %v3530 = vshrl.u32 %v3529, 7
      %v3531 = vsub.s32 %v3528, %v3530
      %v3532 = vrot.slane %v3518, %v3531
      %v3533 = vcombine.high %v3525, %v3525
      %v3534 = vcombine.high %v3532, %v3532
      %v3536 = vunpack.c.l.s4 1983009808
      %v3537 = vunpack.c.0.s8 %v3536
      %v3538 = vlaneseq
      %v3539 = vshrl.u32 %v3538, 7
      %v3540 = vsub.s32 %v3537, %v3539
      %v3541 = vrot.slane %v3376, %v3540
      %v3542 = vcombine.high %v3370, %v3370
      %v3544 = vunpack.c.l.s4 1983009808
      %v3545 = vunpack.c.0.s8 %v3544
      %v3546 = vlaneseq
      %v3547 = vshrl.u32 %v3546, 7
      %v3548 = vsub.s32 %v3545, %v3547
      %v3549 = vrot.slane %v3370, %v3548
      %v3551 = vunpack.c.l.s4 1983009808
      %v3552 = vunpack.c.0.s8 %v3551
      %v3553 = vlaneseq
      %v3554 = vshrl.u32 %v3553, 7
      %v3555 = vsub.s32 %v3552, %v3554
      %v3556 = vrot.slane %v3542, %v3555
      %v3557 = vcombine.high %v3549, %v3549
      %v3558 = vcombine.high %v3556, %v3556
      %v3560 = vunpack.c.l.s4 1983009808
      %v3561 = vunpack.c.0.s8 %v3560
      %v3562 = vlaneseq
      %v3563 = vshrl.u32 %v3562, 7
      %v3564 = vsub.s32 %v3561, %v3563
      %v3565 = vrot.slane %v3378, %v3564
      %v3566 = vcombine.high %v3372, %v3372
      %v3568 = vunpack.c.l.s4 1983009808
      %v3569 = vunpack.c.0.s8 %v3568
      %v3570 = vlaneseq
      %v3571 = vshrl.u32 %v3570, 7
      %v3572 = vsub.s32 %v3569, %v3571
      %v3573 = vrot.slane %v3372, %v3572
      %v3575 = vunpack.c.l.s4 1983009808
      %v3576 = vunpack.c.0.s8 %v3575
      %v3577 = vlaneseq
      %v3578 = vshrl.u32 %v3577, 7
      %v3579 = vsub.s32 %v3576, %v3578
      %v3580 = vrot.slane %v3566, %v3579
      %v3581 = vcombine.high %v3573, %v3573
      %v3582 = vcombine.high %v3580, %v3580
      %v3584 = vunpack.c.l.s4 1983009808
      %v3585 = vunpack.c.0.s8 %v3584
      %v3586 = vlaneseq
      %v3587 = vshrl.u32 %v3586, 7
      %v3588 = vsub.s32 %v3585, %v3587
      %v3589 = vrot.slane %v3380, %v3588
      %v3590 = vlaneseq
      %v3591 = vshrl.u32 %v3590, 7
      %v3592 = vsub.s32 0, %v3591
      %v3593 = vrot.slane %v3397, %v3592
      %v3594 = vlaneseq
      %v3595 = vshrl.u32 %v3594, 7
      %v3596 = vsub.s32 0, %v3595
      %v3597 = vrot.slane %v3405, %v3596
      %v3598 = vlaneseq
      %v3599 = vshrl.u32 %v3598, 7
      %v3600 = vsub.s32 0, %v3599
      %v3601 = vrot.slane %v3404, %v3600
      %v3602 = vlaneseq
      %v3603 = vshrl.u32 %v3602, 7
      %v3604 = vsub.s32 0, %v3603
      %v3605 = vrot.slane %v3406, %v3604
      %v3606 = vlaneseq
      %v3607 = vshrl.u32 %v3606, 7
      %v3608 = vsub.s32 0, %v3607
      %v3609 = vrot.slane %v3421, %v3608
      %v3610 = vlaneseq
      %v3611 = vshrl.u32 %v3610, 7
      %v3612 = vsub.s32 0, %v3611
      %v3613 = vrot.slane %v3429, %v3612
      %v3614 = vlaneseq
      %v3615 = vshrl.u32 %v3614, 7
      %v3616 = vsub.s32 0, %v3615
      %v3617 = vrot.slane %v3428, %v3616
      %v3618 = vlaneseq
      %v3619 = vshrl.u32 %v3618, 7
      %v3620 = vsub.s32 0, %v3619
      %v3621 = vrot.slane %v3430, %v3620
      %v3622 = vlaneseq
      %v3623 = vshrl.u32 %v3622, 7
      %v3624 = vsub.s32 0, %v3623
      %v3625 = vrot.slane %v3445, %v3624
      %v3626 = vlaneseq
      %v3627 = vshrl.u32 %v3626, 7
      %v3628 = vsub.s32 0, %v3627
      %v3629 = vrot.slane %v3453, %v3628
      %v3630 = vlaneseq
      %v3631 = vshrl.u32 %v3630, 7
      %v3632 = vsub.s32 0, %v3631
      %v3633 = vrot.slane %v3452, %v3632
      %v3634 = vlaneseq
      %v3635 = vshrl.u32 %v3634, 7
      %v3636 = vsub.s32 0, %v3635
      %v3637 = vrot.slane %v3454, %v3636
      %v3638 = vsel %vm1678, %v3593, %v1677
      %v3639 = vsel %vm1680, %v3597, %v3638
      %v3640 = vsel %vm1682, %v3601, %v3639
      %v3641 = vsel %vm1684, %v3605, %v3640
      %v3642 = vsel %vm1672, %v3613, %v3609
      %v3643 = vsel %vm1674, %v3617, %v3642
      %v3644 = vsel %vm1676, %v3621, %v3643
      %v3645 = vsel %vm1678, %v3625, %v3644
      %v3646 = vsel %vm1680, %v3629, %v3645
      %v3647 = vsel %vm1682, %v3633, %v3646
      %v3648 = vsel %vm1684, %v3637, %v3647
      %v3651 = vlaneseq
      %v3652 = vshrl.u32 %v3651, 7
      %v3653 = vsub.s32 1, %v3652
      %v3654 = vrot.slane %v3397, %v3653
      %v3655 = vlaneseq
      %v3656 = vshrl.u32 %v3655, 7
      %v3657 = vsub.s32 1, %v3656
      %v3658 = vrot.slane %v3405, %v3657
      %v3659 = vlaneseq
      %v3660 = vshrl.u32 %v3659, 7
      %v3661 = vsub.s32 1, %v3660
      %v3662 = vrot.slane %v3404, %v3661
      %v3663 = vlaneseq
      %v3664 = vshrl.u32 %v3663, 7
      %v3665 = vsub.s32 1, %v3664
      %v3666 = vrot.slane %v3406, %v3665
      %v3667 = vlaneseq
      %v3668 = vshrl.u32 %v3667, 7
      %v3669 = vsub.s32 1, %v3668
      %v3670 = vrot.slane %v3421, %v3669
      %v3671 = vlaneseq
      %v3672 = vshrl.u32 %v3671, 7
      %v3673 = vsub.s32 1, %v3672
      %v3674 = vrot.slane %v3429, %v3673
      %v3675 = vlaneseq
      %v3676 = vshrl.u32 %v3675, 7
      %v3677 = vsub.s32 1, %v3676
      %v3678 = vrot.slane %v3428, %v3677
      %v3679 = vlaneseq
      %v3680 = vshrl.u32 %v3679, 7
      %v3681 = vsub.s32 1, %v3680
      %v3682 = vrot.slane %v3430, %v3681
      %v3683 = vlaneseq
      %v3684 = vshrl.u32 %v3683, 7
      %v3685 = vsub.s32 1, %v3684
      %v3686 = vrot.slane %v3445, %v3685
      %v3687 = vlaneseq
      %v3688 = vshrl.u32 %v3687, 7
      %v3689 = vsub.s32 1, %v3688
      %v3690 = vrot.slane %v3453, %v3689
      %v3691 = vlaneseq
      %v3692 = vshrl.u32 %v3691, 7
      %v3693 = vsub.s32 1, %v3692
      %v3694 = vrot.slane %v3452, %v3693
      %v3695 = vlaneseq
      %v3696 = vshrl.u32 %v3695, 7
      %v3697 = vsub.s32 1, %v3696
      %v3698 = vrot.slane %v3454, %v3697
      %v3699 = vsel %vm1678, %v3654, %v1985
      %v3700 = vsel %vm1680, %v3658, %v3699
      %v3701 = vsel %vm1682, %v3662, %v3700
      %v3702 = vsel %vm1684, %v3666, %v3701
      %v3703 = vsel %vm1672, %v3674, %v3670
      %v3704 = vsel %vm1674, %v3678, %v3703
      %v3705 = vsel %vm1676, %v3682, %v3704
      %v3706 = vsel %vm1678, %v3686, %v3705
      %v3707 = vsel %vm1680, %v3690, %v3706
      %v3708 = vsel %vm1682, %v3694, %v3707
      %v3709 = vsel %vm1684, %v3698, %v3708
      %3710 = vrot.lane.b32.xlu0 %v3702, 8
      %v3711 = vpop.permute.xlu0 %3710
      %3712 = vrot.lane.b32.xlu0 %v3709, 8
      %v3713 = vpop.permute.xlu0 %3712
      %v3716 = vlaneseq
      %v3717 = vshrl.u32 %v3716, 7
      %v3718 = vsub.s32 0, %v3717
      %v3719 = vrot.slane %v3413, %v3718
      %v3720 = vlaneseq
      %v3721 = vshrl.u32 %v3720, 7
      %v3722 = vsub.s32 0, %v3721
      %v3723 = vrot.slane %v3437, %v3722
      %v3724 = vlaneseq
      %v3725 = vshrl.u32 %v3724, 7
      %v3726 = vsub.s32 0, %v3725
      %v3727 = vrot.slane %v3461, %v3726
      %v3728 = vsel %vm1678, %v3597, %v2093
      %v3729 = vsel %vm1680, %v3601, %v3728
      %v3730 = vsel %vm1682, %v3605, %v3729
      %v3731 = vsel %vm1684, %v3719, %v3730
      %v3732 = vsel %vm1672, %v3617, %v3613
      %v3733 = vsel %vm1674, %v3621, %v3732
      %v3734 = vsel %vm1676, %v3723, %v3733
      %v3735 = vsel %vm1678, %v3629, %v3734
      %v3736 = vsel %vm1680, %v3633, %v3735
      %v3737 = vsel %vm1682, %v3637, %v3736
      %v3738 = vsel %vm1684, %v3727, %v3737
      %3739 = vrot.lane.b32.xlu0 %v3731, 16
      %v3740 = vpop.permute.xlu0 %3739
      %3741 = vrot.lane.b32.xlu0 %v3738, 16
      %v3742 = vpop.permute.xlu0 %3741
      %v3745 = vlaneseq
      %v3746 = vshrl.u32 %v3745, 7
      %v3747 = vsub.s32 0, %v3746
      %v3748 = vrot.slane %v3501, %v3747
      %v3749 = vlaneseq
      %v3750 = vshrl.u32 %v3749, 7
      %v3751 = vsub.s32 0, %v3750
      %v3752 = vrot.slane %v3509, %v3751
      %v3753 = vlaneseq
      %v3754 = vshrl.u32 %v3753, 7
      %v3755 = vsub.s32 0, %v3754
      %v3756 = vrot.slane %v3508, %v3755
      %v3757 = vlaneseq
      %v3758 = vshrl.u32 %v3757, 7
      %v3759 = vsub.s32 0, %v3758
      %v3760 = vrot.slane %v3510, %v3759
      %v3761 = vlaneseq
      %v3762 = vshrl.u32 %v3761, 7
      %v3763 = vsub.s32 0, %v3762
      %v3764 = vrot.slane %v3525, %v3763
      %v3765 = vlaneseq
      %v3766 = vshrl.u32 %v3765, 7
      %v3767 = vsub.s32 0, %v3766
      %v3768 = vrot.slane %v3533, %v3767
      %v3769 = vlaneseq
      %v3770 = vshrl.u32 %v3769, 7
      %v3771 = vsub.s32 0, %v3770
      %v3772 = vrot.slane %v3532, %v3771
      %v3773 = vlaneseq
      %v3774 = vshrl.u32 %v3773, 7
      %v3775 = vsub.s32 0, %v3774
      %v3776 = vrot.slane %v3534, %v3775
      %v3777 = vlaneseq
      %v3778 = vshrl.u32 %v3777, 7
      %v3779 = vsub.s32 0, %v3778
      %v3780 = vrot.slane %v3549, %v3779
      %v3781 = vlaneseq
      %v3782 = vshrl.u32 %v3781, 7
      %v3783 = vsub.s32 0, %v3782
      %v3784 = vrot.slane %v3557, %v3783
      %v3785 = vlaneseq
      %v3786 = vshrl.u32 %v3785, 7
      %v3787 = vsub.s32 0, %v3786
      %v3788 = vrot.slane %v3556, %v3787
      %v3789 = vlaneseq
      %v3790 = vshrl.u32 %v3789, 7
      %v3791 = vsub.s32 0, %v3790
      %v3792 = vrot.slane %v3558, %v3791
      %v3793 = vlaneseq
      %v3794 = vshrl.u32 %v3793, 7
      %v3795 = vsub.s32 0, %v3794
      %v3796 = vrot.slane %v3573, %v3795
      %v3797 = vlaneseq
      %v3798 = vshrl.u32 %v3797, 7
      %v3799 = vsub.s32 0, %v3798
      %v3800 = vrot.slane %v3581, %v3799
      %v3801 = vlaneseq
      %v3802 = vshrl.u32 %v3801, 7
      %v3803 = vsub.s32 0, %v3802
      %v3804 = vrot.slane %v3580, %v3803
      %v3805 = vlaneseq
      %v3806 = vshrl.u32 %v3805, 7
      %v3807 = vsub.s32 0, %v3806
      %v3808 = vrot.slane %v3582, %v3807
      %v3809 = vsel %vm1672, %v3752, %v3748
      %v3810 = vsel %vm1674, %v3756, %v3809
      %v3811 = vsel %vm1676, %v3760, %v3810
      %v3812 = vsel %vm1678, %v3764, %v3811
      %v3813 = vsel %vm1680, %v3768, %v3812
      %v3814 = vsel %vm1682, %v3772, %v3813
      %v3815 = vsel %vm1684, %v3776, %v3814
      %v3816 = vsel %vm1672, %v3784, %v3780
      %v3817 = vsel %vm1674, %v3788, %v3816
      %v3818 = vsel %vm1676, %v3792, %v3817
      %v3819 = vsel %vm1678, %v3796, %v3818
      %v3820 = vsel %vm1680, %v3800, %v3819
      %v3821 = vsel %vm1682, %v3804, %v3820
      %v3822 = vsel %vm1684, %v3808, %v3821
      %3823 = vrot.lane.b32.xlu0 %v3815, 24
      %v3824 = vpop.permute.xlu0 %3823
      %3825 = vrot.lane.b32.xlu0 %v3822, 24
      %v3826 = vpop.permute.xlu0 %3825
      %v3829 = vlaneseq
      %v3830 = vshrl.u32 %v3829, 7
      %v3831 = vsub.s32 1, %v3830
      %v3832 = vrot.slane %v3501, %v3831
      %v3833 = vlaneseq
      %v3834 = vshrl.u32 %v3833, 7
      %v3835 = vsub.s32 1, %v3834
      %v3836 = vrot.slane %v3509, %v3835
      %v3837 = vlaneseq
      %v3838 = vshrl.u32 %v3837, 7
      %v3839 = vsub.s32 1, %v3838
      %v3840 = vrot.slane %v3508, %v3839
      %v3841 = vlaneseq
      %v3842 = vshrl.u32 %v3841, 7
      %v3843 = vsub.s32 1, %v3842
      %v3844 = vrot.slane %v3510, %v3843
      %v3845 = vlaneseq
      %v3846 = vshrl.u32 %v3845, 7
      %v3847 = vsub.s32 1, %v3846
      %v3848 = vrot.slane %v3525, %v3847
      %v3849 = vlaneseq
      %v3850 = vshrl.u32 %v3849, 7
      %v3851 = vsub.s32 1, %v3850
      %v3852 = vrot.slane %v3533, %v3851
      %v3853 = vlaneseq
      %v3854 = vshrl.u32 %v3853, 7
      %v3855 = vsub.s32 1, %v3854
      %v3856 = vrot.slane %v3532, %v3855
      %v3857 = vlaneseq
      %v3858 = vshrl.u32 %v3857, 7
      %v3859 = vsub.s32 1, %v3858
      %v3860 = vrot.slane %v3534, %v3859
      %v3861 = vlaneseq
      %v3862 = vshrl.u32 %v3861, 7
      %v3863 = vsub.s32 1, %v3862
      %v3864 = vrot.slane %v3549, %v3863
      %v3865 = vlaneseq
      %v3866 = vshrl.u32 %v3865, 7
      %v3867 = vsub.s32 1, %v3866
      %v3868 = vrot.slane %v3557, %v3867
      %v3869 = vlaneseq
      %v3870 = vshrl.u32 %v3869, 7
      %v3871 = vsub.s32 1, %v3870
      %v3872 = vrot.slane %v3556, %v3871
      %v3873 = vlaneseq
      %v3874 = vshrl.u32 %v3873, 7
      %v3875 = vsub.s32 1, %v3874
      %v3876 = vrot.slane %v3558, %v3875
      %v3877 = vlaneseq
      %v3878 = vshrl.u32 %v3877, 7
      %v3879 = vsub.s32 1, %v3878
      %v3880 = vrot.slane %v3573, %v3879
      %v3881 = vlaneseq
      %v3882 = vshrl.u32 %v3881, 7
      %v3883 = vsub.s32 1, %v3882
      %v3884 = vrot.slane %v3581, %v3883
      %v3885 = vlaneseq
      %v3886 = vshrl.u32 %v3885, 7
      %v3887 = vsub.s32 1, %v3886
      %v3888 = vrot.slane %v3580, %v3887
      %v3889 = vlaneseq
      %v3890 = vshrl.u32 %v3889, 7
      %v3891 = vsub.s32 1, %v3890
      %v3892 = vrot.slane %v3582, %v3891
      %v3893 = vsel %vm1672, %v3836, %v3832
      %v3894 = vsel %vm1674, %v3840, %v3893
      %v3895 = vsel %vm1676, %v3844, %v3894
      %v3896 = vsel %vm1678, %v3848, %v3895
      %v3897 = vsel %vm1680, %v3852, %v3896
      %v3898 = vsel %vm1682, %v3856, %v3897
      %v3899 = vsel %vm1684, %v3860, %v3898
      %v3900 = vsel %vm1672, %v3868, %v3864
      %v3901 = vsel %vm1674, %v3872, %v3900
      %v3902 = vsel %vm1676, %v3876, %v3901
      %v3903 = vsel %vm1678, %v3880, %v3902
      %v3904 = vsel %vm1680, %v3884, %v3903
      %v3905 = vsel %vm1682, %v3888, %v3904
      %v3906 = vsel %vm1684, %v3892, %v3905
      %3907 = vrot.lane.b32.xlu0 %v3899, 32
      %v3908 = vpop.permute.xlu0 %3907
      %3909 = vrot.lane.b32.xlu0 %v3906, 32
      %v3910 = vpop.permute.xlu0 %3909
      %v3913 = vlaneseq
      %v3914 = vshrl.u32 %v3913, 7
      %v3915 = vsub.s32 0, %v3914
      %v3916 = vrot.slane %v3517, %v3915
      %v3917 = vlaneseq
      %v3918 = vshrl.u32 %v3917, 7
      %v3919 = vsub.s32 0, %v3918
      %v3920 = vrot.slane %v3541, %v3919
      %v3921 = vlaneseq
      %v3922 = vshrl.u32 %v3921, 7
      %v3923 = vsub.s32 0, %v3922
      %v3924 = vrot.slane %v3565, %v3923
      %v3925 = vlaneseq
      %v3926 = vshrl.u32 %v3925, 7
      %v3927 = vsub.s32 0, %v3926
      %v3928 = vrot.slane %v3589, %v3927
      %v3929 = vsel %vm1672, %v3756, %v3752
      %v3930 = vsel %vm1674, %v3760, %v3929
      %v3931 = vsel %vm1676, %v3916, %v3930
      %v3932 = vsel %vm1678, %v3768, %v3931
      %v3933 = vsel %vm1680, %v3772, %v3932
      %v3934 = vsel %vm1682, %v3776, %v3933
      %v3935 = vsel %vm1684, %v3920, %v3934
      %v3936 = vsel %vm1672, %v3788, %v3784
      %v3937 = vsel %vm1674, %v3792, %v3936
      %v3938 = vsel %vm1676, %v3924, %v3937
      %v3939 = vsel %vm1678, %v3800, %v3938
      %v3940 = vsel %vm1680, %v3804, %v3939
      %v3941 = vsel %vm1682, %v3808, %v3940
      %v3942 = vsel %vm1684, %v3928, %v3941
      %3943 = vrot.lane.b32.xlu0 %v3935, 40
      %v3944 = vpop.permute.xlu0 %3943
      %3945 = vrot.lane.b32.xlu0 %v3942, 40
      %v3946 = vpop.permute.xlu0 %3945
      %v3949 = vlaneseq
      %v3950 = vshrl.u32 %v3949, 7
      %v3951 = vsub.s32 0, %v3950
      %v3952 = vrot.slane %v3469, %v3951
      %v3953 = vlaneseq
      %v3954 = vshrl.u32 %v3953, 7
      %v3955 = vsub.s32 0, %v3954
      %v3956 = vrot.slane %v3477, %v3955
      %v3957 = vlaneseq
      %v3958 = vshrl.u32 %v3957, 7
      %v3959 = vsub.s32 0, %v3958
      %v3960 = vrot.slane %v3476, %v3959
      %v3961 = vlaneseq
      %v3962 = vshrl.u32 %v3961, 7
      %v3963 = vsub.s32 0, %v3962
      %v3964 = vrot.slane %v3478, %v3963
      %v3965 = vsel %vm1672, %v3597, %v3593
      %v3966 = vsel %vm1674, %v3601, %v3965
      %v3967 = vsel %vm1676, %v3605, %v3966
      %v3968 = vsel %vm1678, %v3609, %v3967
      %v3969 = vsel %vm1680, %v3613, %v3968
      %v3970 = vsel %vm1682, %v3617, %v3969
      %v3971 = vsel %vm1684, %v3621, %v3970
      %v3972 = vsel %vm1672, %v3629, %v3625
      %v3973 = vsel %vm1674, %v3633, %v3972
      %v3974 = vsel %vm1676, %v3637, %v3973
      %v3975 = vsel %vm1678, %v3952, %v3974
      %v3976 = vsel %vm1680, %v3956, %v3975
      %v3977 = vsel %vm1682, %v3960, %v3976
      %v3978 = vsel %vm1684, %v3964, %v3977
      %3979 = vrot.lane.b32.xlu0 %v3971, 48
      %v3980 = vpop.permute.xlu0 %3979
      %3981 = vrot.lane.b32.xlu0 %v3978, 48
      %v3982 = vpop.permute.xlu0 %3981
      %v3985 = vlaneseq
      %v3986 = vshrl.u32 %v3985, 7
      %v3987 = vsub.s32 1, %v3986
      %v3988 = vrot.slane %v3469, %v3987
      %v3989 = vlaneseq
      %v3990 = vshrl.u32 %v3989, 7
      %v3991 = vsub.s32 1, %v3990
      %v3992 = vrot.slane %v3477, %v3991
      %v3993 = vlaneseq
      %v3994 = vshrl.u32 %v3993, 7
      %v3995 = vsub.s32 1, %v3994
      %v3996 = vrot.slane %v3476, %v3995
      %v3997 = vlaneseq
      %v3998 = vshrl.u32 %v3997, 7
      %v3999 = vsub.s32 1, %v3998
      %v4000 = vrot.slane %v3478, %v3999
      %v4001 = vsel %vm1672, %v3658, %v3654
      %v4002 = vsel %vm1674, %v3662, %v4001
      %v4003 = vsel %vm1676, %v3666, %v4002
      %v4004 = vsel %vm1678, %v3670, %v4003
      %v4005 = vsel %vm1680, %v3674, %v4004
      %v4006 = vsel %vm1682, %v3678, %v4005
      %v4007 = vsel %vm1684, %v3682, %v4006
      %v4008 = vsel %vm1672, %v3690, %v3686
      %v4009 = vsel %vm1674, %v3694, %v4008
      %v4010 = vsel %vm1676, %v3698, %v4009
      %v4011 = vsel %vm1678, %v3988, %v4010
      %v4012 = vsel %vm1680, %v3992, %v4011
      %v4013 = vsel %vm1682, %v3996, %v4012
      %v4014 = vsel %vm1684, %v4000, %v4013
      %4015 = vrot.lane.b32.xlu0 %v4007, 56
      %v4016 = vpop.permute.xlu0 %4015
      %4017 = vrot.lane.b32.xlu0 %v4014, 56
      %v4018 = vpop.permute.xlu0 %4017
      %v4021 = vlaneseq
      %v4022 = vshrl.u32 %v4021, 7
      %v4023 = vsub.s32 0, %v4022
      %v4024 = vrot.slane %v3485, %v4023
      %v4025 = vsel %vm1672, %v3601, %v3597
      %v4026 = vsel %vm1674, %v3605, %v4025
      %v4027 = vsel %vm1676, %v3719, %v4026
      %v4028 = vsel %vm1678, %v3613, %v4027
      %v4029 = vsel %vm1680, %v3617, %v4028
      %v4030 = vsel %vm1682, %v3621, %v4029
      %v4031 = vsel %vm1684, %v3723, %v4030
      %v4032 = vsel %vm1672, %v3633, %v3629
      %v4033 = vsel %vm1674, %v3637, %v4032
      %v4034 = vsel %vm1676, %v3727, %v4033
      %v4035 = vsel %vm1678, %v3956, %v4034
      %v4036 = vsel %vm1680, %v3960, %v4035
      %v4037 = vsel %vm1682, %v3964, %v4036
      %v4038 = vsel %vm1684, %v4024, %v4037
      %4039 = vrot.lane.b32.xlu0 %v4031, 64
      %v4040 = vpop.permute.xlu0 %4039
      %4041 = vrot.lane.b32.xlu0 %v4038, 64
      %v4042 = vpop.permute.xlu0 %4041
      %v4045 = vsel %vm3125, %v3641, %v3711
      %v4046 = vsel %vm3125, %v3648, %v3713
      %v4047 = vsel %vm3143, %v4045, %v3740
      %v4048 = vsel %vm3143, %v4046, %v3742
      %v4049 = vsel %vm3161, %v4047, %v3824
      %v4050 = vsel %vm3161, %v4048, %v3826
      %v4051 = vsel %vm3179, %v4049, %v3908
      %v4052 = vsel %vm3179, %v4050, %v3910
      %vm4053 = vcmask 326656
      %v4054 = vsel %vm4053, %v4051, %v3944
      %v4055 = vsel %vm4053, %v4052, %v3946
      %vm4056 = vcmask 392192
      %v4057 = vsel %vm4056, %v4054, %v3980
      %v4058 = vsel %vm4056, %v4055, %v3982
      %vm4059 = vcmask 457728
      %v4060 = vsel %vm4059, %v4057, %v4016
      %v4061 = vsel %vm4059, %v4058, %v4018
      %vm4062 = vcmask 523264
      %v4063 = vsel %vm4062, %v4060, %v4040
      %v4064 = vsel %vm4062, %v4061, %v4042
      %v4065 = vld [vmem:[%s3] sm:$0xff]
      %v4066 = vld [vmem:[%s3 + $0x8] sm:$0xff]
      %v4067 = vld [vmem:[%s3 + $0x10] sm:$0xff]
      %v4068 = vld [vmem:[%s3 + $0x18] sm:$0xff]
      %v4069 = vld [vmem:[%s3 + $0x20] sm:$0xff]
      %v4070 = vld [vmem:[%s3 + $0x28] sm:$0xff]
      %v4071 = vld [vmem:[%s3 + $0x30] sm:$0xff]
      %v4072 = vld [vmem:[%s3 + $0x38] sm:$0xff]
      %v4073 = vld [vmem:[%s3 + $0x40] sm:$0xff]
      %v4074 = vld [vmem:[%s4] sm:$0x1]
      %v4076 = vlaneseq
      %v4077 = vshrl.u32 %v4076, 7
      %v4078 = vsub.s32 0, %v4077
      %v4079 = vrot.slane %v4074, %v4078
      %vm4081 = vcmask 588800
      %v4083 = vsel %vm4081, %v4063, 0
      %v4086 = vsel %vm4081, %v4064, 0
      %4088 = vmatprep.subr.mxu0 0.0
      %4089 = vmatpush1.msra.mxu0 0.0
      %4090 = vmatprep.subr.mxu0 0.0
      %4091 = vmatpush1.msra.mxu0 0.0
      %4092 = vmatprep.subr.mxu0 0.0
      %4093 = vmatpush1.msra.mxu0 0.0
      %4094 = vmatprep.subr.mxu0 0.0
      %4095 = vmatpush1.msra.mxu0 0.0
      %4096 = vmatprep.subr.mxu0 0.0
      %4097 = vmatpush1.msra.mxu0 0.0
      %4098 = vmatprep.subr.mxu0 0.0
      %4099 = vmatpush1.msra.mxu0 0.0
      %4100 = vmatprep.subr.mxu0 0.0
      %4101 = vmatpush1.msra.mxu0 0.0
      %4102 = vmatprep.subr.mxu0 0.0
      %4103 = vmatpush1.msra.mxu0 %v4073
      %4104 = vmatprep.subr.mxu0 0.0
      %4105 = vmatpush1.msra.mxu0 %v4072
      %4106 = vmatprep.subr.mxu0 0.0
      %4107 = vmatpush1.msra.mxu0 %v4071
      %4108 = vmatprep.subr.mxu0 0.0
      %4109 = vmatpush1.msra.mxu0 %v4070
      %4110 = vmatprep.subr.mxu0 0.0
      %4111 = vmatpush1.msra.mxu0 %v4069
      %4112 = vmatprep.subr.mxu0 0.0
      %4113 = vmatpush1.msra.mxu0 %v4068
      %4114 = vmatprep.subr.mxu0 0.0
      %4115 = vmatpush1.msra.mxu0 %v4067
      %4116 = vmatprep.subr.mxu0 0.0
      %4117 = vmatpush1.msra.mxu0 %v4066
      %4118 = vmatprep.subr.mxu0 0.0
      %4119 = vmatpush1.msra.mxu0 %v4065
      %4120 = vmatprep.subr.mxu0 0.0
      %4121 = vmatpush2.msra.mxu0 0.0
      %4122 = vmatprep.subr.mxu0 0.0
      %4123 = vmatpush2.msra.mxu0 0.0
      %4124 = vmatprep.subr.mxu0 0.0
      %4125 = vmatpush2.msra.mxu0 0.0
      %4126 = vmatprep.subr.mxu0 0.0
      %4127 = vmatpush2.msra.mxu0 0.0
      %4128 = vmatprep.subr.mxu0 0.0
      %4129 = vmatpush2.msra.mxu0 0.0
      %4130 = vmatprep.subr.mxu0 0.0
      %4131 = vmatpush2.msra.mxu0 0.0
      %4132 = vmatprep.subr.mxu0 0.0
      %4133 = vmatpush2.msra.mxu0 0.0
      %4134 = vmatprep.subr.mxu0 0.0
      %4135 = vmatpush2.msra.mxu0 0.0
      %4136 = vmatprep.subr.mxu0 0.0
      %4137 = vmatpush2.msra.mxu0 0.0
      %4138 = vmatprep.subr.mxu0 0.0
      %4139 = vmatpush2.msra.mxu0 0.0
      %4140 = vmatprep.subr.mxu0 0.0
      %4141 = vmatpush2.msra.mxu0 0.0
      %4142 = vmatprep.subr.mxu0 0.0
      %4143 = vmatpush2.msra.mxu0 0.0
      %4144 = vmatprep.subr.mxu0 0.0
      %4145 = vmatpush2.msra.mxu0 0.0
      %4146 = vmatprep.subr.mxu0 0.0
      %4147 = vmatpush2.msra.mxu0 0.0
      %4148 = vmatprep.subr.mxu0 0.0
      %4149 = vmatpush2.msra.mxu0 0.0
      %4150 = vmatprep.subr.mxu0 0.0
      %4151 = vmatpush2.msra.mxu0 0.0
      %4152 = vmatprep.mubr.f32.mxu0 0.0
      %4153 = vmatmul.mubr.f32.gmra.mxu0 %v4083
      %v4154 = vpop.f32.mrf.mxu0
      %v4155 = vadd.f32 %v4079, %v4154
      %v4156 = vpop.f32.mrf.mxu0
      %4157 = vmatprep.mubr.f32.mxu0 0.0
      %4158 = vmatmul.mubr.f32.gmra.mxu0 %v4086
      %v4159 = vpop.f32.mrf.mxu0
      %v4160 = vadd.f32 %v4079, %v4159
      %v4161 = vpop.f32.mrf.mxu0
      %4162 = vdwg.mxu0
      %v4163 = vmax.f32 %v4155, 0.0
      %v4164 = vmax.f32 %v4160, 0.0
      %v4166 = vrot.slane %v4163, 1
      %4167 = vrot.lane.b32.xlu0 %v4166, 16
      %v4168 = vpop.permute.xlu0 %4167
      %v4170 = vrot.slane %v4163, 2
      %4171 = vrot.lane.b32.xlu0 %v4170, 32
      %v4172 = vpop.permute.xlu0 %4171
      %v4174 = vrot.slane %v4163, 3
      %4175 = vrot.lane.b32.xlu0 %v4174, 48
      %v4176 = vpop.permute.xlu0 %4175
      %v4178 = vrot.slane %v4163, 4
      %4179 = vrot.lane.b32.xlu0 %v4178, 64
      %v4180 = vpop.permute.xlu0 %4179
      %v4182 = vrot.slane %v4163, 5
      %4183 = vrot.lane.b32.xlu0 %v4182, 80
      %v4184 = vpop.permute.xlu0 %4183
      %v4186 = vrot.slane %v4163, 6
      %4187 = vrot.lane.b32.xlu0 %v4186, 96
      %v4188 = vpop.permute.xlu0 %4187
      %v4190 = vrot.slane %v4163, 7
      %4191 = vrot.lane.b32.xlu0 %v4190, 112
      %v4192 = vpop.permute.xlu0 %4191
      %v4195 = vrot.slane %v4164, 1
      %4196 = vrot.lane.b32.xlu0 %v4195, 16
      %v4197 = vpop.permute.xlu0 %4196
      %v4199 = vrot.slane %v4164, 2
      %4200 = vrot.lane.b32.xlu0 %v4199, 32
      %v4201 = vpop.permute.xlu0 %4200
      %v4203 = vrot.slane %v4164, 3
      %4204 = vrot.lane.b32.xlu0 %v4203, 48
      %v4205 = vpop.permute.xlu0 %4204
      %v4207 = vrot.slane %v4164, 4
      %4208 = vrot.lane.b32.xlu0 %v4207, 64
      %v4209 = vpop.permute.xlu0 %4208
      %v4211 = vrot.slane %v4164, 5
      %4212 = vrot.lane.b32.xlu0 %v4211, 80
      %v4213 = vpop.permute.xlu0 %4212
      %v4215 = vrot.slane %v4164, 6
      %4216 = vrot.lane.b32.xlu0 %v4215, 96
      %v4217 = vpop.permute.xlu0 %4216
      %v4219 = vrot.slane %v4164, 7
      %4220 = vrot.lane.b32.xlu0 %v4219, 112
      %v4221 = vpop.permute.xlu0 %4220
      %v4223 = vsel %vm3143, %v4163, %v4168
      %v4224 = vsel %vm3179, %v4223, %v4172
      %v4225 = vsel %vm4056, %v4224, %v4176
      %v4226 = vsel %vm4062, %v4225, %v4180
      %vm4227 = vcmask 654336
      %v4228 = vsel %vm4227, %v4226, %v4184
      %vm4229 = vcmask 785408
      %v4230 = vsel %vm4229, %v4228, %v4188
      %vm4231 = vcmask 916480
      %v4232 = vsel %vm4231, %v4230, %v4192
      %v4233 = vsel %vm3143, %v4164, %v4197
      %v4234 = vsel %vm3179, %v4233, %v4201
      %v4235 = vsel %vm4056, %v4234, %v4205
      %v4236 = vsel %vm4062, %v4235, %v4209
      %v4237 = vsel %vm4227, %v4236, %v4213
      %v4238 = vsel %vm4229, %v4237, %v4217
      %v4239 = vsel %vm4231, %v4238, %v4221
      %v4240 = vld [vmem:[%s5] sm:$0xff]
      %v4241 = vld [vmem:[%s5 + $0x8] sm:$0xff]
      %v4242 = vld [vmem:[%s5 + $0x10] sm:$0xff]
      %v4243 = vld [vmem:[%s5 + $0x18] sm:$0xff]
      %v4244 = vld [vmem:[%s5 + $0x20] sm:$0xff]
      %v4245 = vld [vmem:[%s5 + $0x28] sm:$0xff]
      %v4246 = vld [vmem:[%s5 + $0x30] sm:$0xff]
      %v4247 = vld [vmem:[%s5 + $0x38] sm:$0xff]
      %v4248 = vld [vmem:[%s5 + $0x40] sm:$0xff]
      %v4249 = vld [vmem:[%s5 + $0x48] sm:$0xff]
      %v4250 = vld [vmem:[%s5 + $0x50] sm:$0xff]
      %v4251 = vld [vmem:[%s5 + $0x58] sm:$0xff]
      %v4252 = vld [vmem:[%s5 + $0x60] sm:$0xff]
      %v4253 = vld [vmem:[%s5 + $0x68] sm:$0xff]
      %v4254 = vld [vmem:[%s5 + $0x70] sm:$0xff]
      %v4255 = vld [vmem:[%s5 + $0x78] sm:$0xff]
      %v4256 = vld [vmem:[%s5 + $0x80] sm:$0xff]
      %v4257 = vld [vmem:[%s5 + $0x88] sm:$0xff]
      %v4258 = vld [vmem:[%s5 + $0x90] sm:$0xff]
      %v4259 = vld [vmem:[%s5 + $0x98] sm:$0xff]
      %v4260 = vld [vmem:[%s5 + $0xa0] sm:$0xff]
      %v4261 = vld [vmem:[%s5 + $0xa8] sm:$0xff]
      %v4262 = vld [vmem:[%s5 + $0xb0] sm:$0xff]
      %v4263 = vld [vmem:[%s5 + $0xb8] sm:$0xff]
      %v4264 = vld [vmem:[%s5 + $0xc0] sm:$0xff]
      %v4265 = vld [vmem:[%s5 + $0xc8] sm:$0xff]
      %v4266 = vld [vmem:[%s5 + $0xd0] sm:$0xff]
      %v4267 = vld [vmem:[%s5 + $0xd8] sm:$0xff]
      %v4268 = vld [vmem:[%s5 + $0xe0] sm:$0xff]
      %v4269 = vld [vmem:[%s5 + $0xe8] sm:$0xff]
      %v4270 = vld [vmem:[%s5 + $0xf0] sm:$0xff]
      %v4271 = vld [vmem:[%s5 + $0xf8] sm:$0xff]
      %v4272 = vld [vmem:[%s6] sm:$0x1]
      %4273 = vmatprep.subr.mxu0 0.0
      %4274 = vmatpush1.msra.mxu0 %v4255
      %4275 = vmatprep.subr.mxu0 0.0
      %4276 = vmatpush1.msra.mxu0 %v4254
      %4277 = vmatprep.subr.mxu0 0.0
      %4278 = vmatpush1.msra.mxu0 %v4253
      %4279 = vmatprep.subr.mxu0 0.0
      %4280 = vmatpush1.msra.mxu0 %v4252
      %4281 = vmatprep.subr.mxu0 0.0
      %4282 = vmatpush1.msra.mxu0 %v4251
      %4283 = vmatprep.subr.mxu0 0.0
      %4284 = vmatpush1.msra.mxu0 %v4250
      %4285 = vmatprep.subr.mxu0 0.0
      %4286 = vmatpush1.msra.mxu0 %v4249
      %4287 = vmatprep.subr.mxu0 0.0
      %4288 = vmatpush1.msra.mxu0 %v4248
      %4289 = vmatprep.subr.mxu0 0.0
      %4290 = vmatpush1.msra.mxu0 %v4247
      %4291 = vmatprep.subr.mxu0 0.0
      %4292 = vmatpush1.msra.mxu0 %v4246
      %4293 = vmatprep.subr.mxu0 0.0
      %4294 = vmatpush1.msra.mxu0 %v4245
      %4295 = vmatprep.subr.mxu0 0.0
      %4296 = vmatpush1.msra.mxu0 %v4244
      %4297 = vmatprep.subr.mxu0 0.0
      %4298 = vmatpush1.msra.mxu0 %v4243
      %4299 = vmatprep.subr.mxu0 0.0
      %4300 = vmatpush1.msra.mxu0 %v4242
      %4301 = vmatprep.subr.mxu0 0.0
      %4302 = vmatpush1.msra.mxu0 %v4241
      %4303 = vmatprep.subr.mxu0 0.0
      %4304 = vmatpush1.msra.mxu0 %v4240
      %4305 = vmatprep.subr.mxu0 0.0
      %4306 = vmatpush2.msra.mxu0 %v4271
      %4307 = vmatprep.subr.mxu0 0.0
      %4308 = vmatpush2.msra.mxu0 %v4270
      %4309 = vmatprep.subr.mxu0 0.0
      %4310 = vmatpush2.msra.mxu0 %v4269
      %4311 = vmatprep.subr.mxu0 0.0
      %4312 = vmatpush2.msra.mxu0 %v4268
      %4313 = vmatprep.subr.mxu0 0.0
      %4314 = vmatpush2.msra.mxu0 %v4267
      %4315 = vmatprep.subr.mxu0 0.0
      %4316 = vmatpush2.msra.mxu0 %v4266
      %4317 = vmatprep.subr.mxu0 0.0
      %4318 = vmatpush2.msra.mxu0 %v4265
      %4319 = vmatprep.subr.mxu0 0.0
      %4320 = vmatpush2.msra.mxu0 %v4264
      %4321 = vmatprep.subr.mxu0 0.0
      %4322 = vmatpush2.msra.mxu0 %v4263
      %4323 = vmatprep.subr.mxu0 0.0
      %4324 = vmatpush2.msra.mxu0 %v4262
      %4325 = vmatprep.subr.mxu0 0.0
      %4326 = vmatpush2.msra.mxu0 %v4261
      %4327 = vmatprep.subr.mxu0 0.0
      %4328 = vmatpush2.msra.mxu0 %v4260
      %4329 = vmatprep.subr.mxu0 0.0
      %4330 = vmatpush2.msra.mxu0 %v4259
      %4331 = vmatprep.subr.mxu0 0.0
      %4332 = vmatpush2.msra.mxu0 %v4258
      %4333 = vmatprep.subr.mxu0 0.0
      %4334 = vmatpush2.msra.mxu0 %v4257
      %4335 = vmatprep.subr.mxu0 0.0
      %4336 = vmatpush2.msra.mxu0 %v4256
      %4337 = vmatprep.mubr.f32.mxu0 %v4239
      %4338 = vmatmul.mubr.f32.gmra.mxu0 %v4232
      %v4339 = vpop.f32.mrf.mxu0
      %v4340 = vadd.f32 %v4272, %v4339
      %v4341 = vpop.f32.mrf.mxu0
      %4342 = vdwg.mxu0
      %v4343 = vmax.f32 %v4340, 0.0
      %v4344 = vld [vmem:[%s7] sm:$0xff]
      %v4345 = vld [vmem:[%s7 + $0x8] sm:$0xff]
      %v4346 = vld [vmem:[%s7 + $0x10] sm:$0xff]
      %v4347 = vld [vmem:[%s7 + $0x18] sm:$0xff]
      %v4348 = vld [vmem:[%s7 + $0x20] sm:$0xff]
      %v4349 = vld [vmem:[%s7 + $0x28] sm:$0xff]
      %v4350 = vld [vmem:[%s7 + $0x30] sm:$0xff]
      %v4351 = vld [vmem:[%s7 + $0x38] sm:$0xff]
      %v4352 = vld [vmem:[%s8] sm:$0x1]
      %v4354 = vsel %vm4062, %v4343, 0
      %4356 = vmatprep.subr.mxu0 0.0
      %4357 = vmatpush1.msra.mxu0 0.0
      %4358 = vmatprep.subr.mxu0 0.0
      %4359 = vmatpush1.msra.mxu0 0.0
      %4360 = vmatprep.subr.mxu0 0.0
      %4361 = vmatpush1.msra.mxu0 0.0
      %4362 = vmatprep.subr.mxu0 0.0
      %4363 = vmatpush1.msra.mxu0 0.0
      %4364 = vmatprep.subr.mxu0 0.0
      %4365 = vmatpush1.msra.mxu0 0.0
      %4366 = vmatprep.subr.mxu0 0.0
      %4367 = vmatpush1.msra.mxu0 0.0
      %4368 = vmatprep.subr.mxu0 0.0
      %4369 = vmatpush1.msra.mxu0 0.0
      %4370 = vmatprep.subr.mxu0 0.0
      %4371 = vmatpush1.msra.mxu0 0.0
      %4372 = vmatprep.subr.mxu0 0.0
      %4373 = vmatpush1.msra.mxu0 %v4351
      %4374 = vmatprep.subr.mxu0 0.0
      %4375 = vmatpush1.msra.mxu0 %v4350
      %4376 = vmatprep.subr.mxu0 0.0
      %4377 = vmatpush1.msra.mxu0 %v4349
      %4378 = vmatprep.subr.mxu0 0.0
      %4379 = vmatpush1.msra.mxu0 %v4348
      %4380 = vmatprep.subr.mxu0 0.0
      %4381 = vmatpush1.msra.mxu0 %v4347
      %4382 = vmatprep.subr.mxu0 0.0
      %4383 = vmatpush1.msra.mxu0 %v4346
      %4384 = vmatprep.subr.mxu0 0.0
      %4385 = vmatpush1.msra.mxu0 %v4345
      %4386 = vmatprep.subr.mxu0 0.0
      %4387 = vmatpush1.msra.mxu0 %v4344
      %4388 = vmatprep.subr.mxu0 0.0
      %4389 = vmatpush2.msra.mxu0 0.0
      %4390 = vmatprep.subr.mxu0 0.0
      %4391 = vmatpush2.msra.mxu0 0.0
      %4392 = vmatprep.subr.mxu0 0.0
      %4393 = vmatpush2.msra.mxu0 0.0
      %4394 = vmatprep.subr.mxu0 0.0
      %4395 = vmatpush2.msra.mxu0 0.0
      %4396 = vmatprep.subr.mxu0 0.0
      %4397 = vmatpush2.msra.mxu0 0.0
      %4398 = vmatprep.subr.mxu0 0.0
      %4399 = vmatpush2.msra.mxu0 0.0
      %4400 = vmatprep.subr.mxu0 0.0
      %4401 = vmatpush2.msra.mxu0 0.0
      %4402 = vmatprep.subr.mxu0 0.0
      %4403 = vmatpush2.msra.mxu0 0.0
      %4404 = vmatprep.subr.mxu0 0.0
      %4405 = vmatpush2.msra.mxu0 0.0
      %4406 = vmatprep.subr.mxu0 0.0
      %4407 = vmatpush2.msra.mxu0 0.0
      %4408 = vmatprep.subr.mxu0 0.0
      %4409 = vmatpush2.msra.mxu0 0.0
      %4410 = vmatprep.subr.mxu0 0.0
      %4411 = vmatpush2.msra.mxu0 0.0
      %4412 = vmatprep.subr.mxu0 0.0
      %4413 = vmatpush2.msra.mxu0 0.0
      %4414 = vmatprep.subr.mxu0 0.0
      %4415 = vmatpush2.msra.mxu0 0.0
      %4416 = vmatprep.subr.mxu0 0.0
      %4417 = vmatpush2.msra.mxu0 0.0
      %4418 = vmatprep.subr.mxu0 0.0
      %4419 = vmatpush2.msra.mxu0 0.0
      %4420 = vmatprep.mubr.f32.mxu0 0.0
      %4421 = vmatmul.mubr.f32.gmra.mxu0 %v4354
      %v4422 = vpop.f32.mrf.mxu0
      %v4423 = vadd.f32 %v4352, %v4422
      %v4424 = vpop.f32.mrf.mxu0
      %4425 = vdwg.mxu0
      %v4426 = vmax.f32 %v4423, 0.0
      %v4427 = vld [vmem:[%s9] sm:$0xff]
      %v4428 = vld [vmem:[%s9 + $0x8] sm:$0xff]
      %v4429 = vld [vmem:[%s9 + $0x10] sm:$0xff]
      %v4430 = vld [vmem:[%s9 + $0x18] sm:$0xff]
      %v4431 = vld [vmem:[%s10] sm:$0x1]
      %v4433 = vsel %vm3179, %v4426, 0
      %4435 = vmatprep.subr.mxu0 0.0
      %4436 = vmatpush1.msra.mxu0 0.0
      %4437 = vmatprep.subr.mxu0 0.0
      %4438 = vmatpush1.msra.mxu0 0.0
      %4439 = vmatprep.subr.mxu0 0.0
      %4440 = vmatpush1.msra.mxu0 0.0
      %4441 = vmatprep.subr.mxu0 0.0
      %4442 = vmatpush1.msra.mxu0 0.0
      %4443 = vmatprep.subr.mxu0 0.0
      %4444 = vmatpush1.msra.mxu0 0.0
      %4445 = vmatprep.subr.mxu0 0.0
      %4446 = vmatpush1.msra.mxu0 0.0
      %4447 = vmatprep.subr.mxu0 0.0
      %4448 = vmatpush1.msra.mxu0 0.0
      %4449 = vmatprep.subr.mxu0 0.0
      %4450 = vmatpush1.msra.mxu0 0.0
      %4451 = vmatprep.subr.mxu0 0.0
      %4452 = vmatpush1.msra.mxu0 0.0
      %4453 = vmatprep.subr.mxu0 0.0
      %4454 = vmatpush1.msra.mxu0 0.0
      %4455 = vmatprep.subr.mxu0 0.0
      %4456 = vmatpush1.msra.mxu0 0.0
      %4457 = vmatprep.subr.mxu0 0.0
      %4458 = vmatpush1.msra.mxu0 0.0
      %4459 = vmatprep.subr.mxu0 0.0
      %4460 = vmatpush1.msra.mxu0 %v4430
      %4461 = vmatprep.subr.mxu0 0.0
      %4462 = vmatpush1.msra.mxu0 %v4429
      %4463 = vmatprep.subr.mxu0 0.0
      %4464 = vmatpush1.msra.mxu0 %v4428
      %4465 = vmatprep.subr.mxu0 0.0
      %4466 = vmatpush1.msra.mxu0 %v4427
      %4467 = vmatprep.subr.mxu0 0.0
      %4468 = vmatpush2.msra.mxu0 0.0
      %4469 = vmatprep.subr.mxu0 0.0
      %4470 = vmatpush2.msra.mxu0 0.0
      %4471 = vmatprep.subr.mxu0 0.0
      %4472 = vmatpush2.msra.mxu0 0.0
      %4473 = vmatprep.subr.mxu0 0.0
      %4474 = vmatpush2.msra.mxu0 0.0
      %4475 = vmatprep.subr.mxu0 0.0
      %4476 = vmatpush2.msra.mxu0 0.0
      %4477 = vmatprep.subr.mxu0 0.0
      %4478 = vmatpush2.msra.mxu0 0.0
      %4479 = vmatprep.subr.mxu0 0.0
      %4480 = vmatpush2.msra.mxu0 0.0
      %4481 = vmatprep.subr.mxu0 0.0
      %4482 = vmatpush2.msra.mxu0 0.0
      %4483 = vmatprep.subr.mxu0 0.0
      %4484 = vmatpush2.msra.mxu0 0.0
      %4485 = vmatprep.subr.mxu0 0.0
      %4486 = vmatpush2.msra.mxu0 0.0
      %4487 = vmatprep.subr.mxu0 0.0
      %4488 = vmatpush2.msra.mxu0 0.0
      %4489 = vmatprep.subr.mxu0 0.0
      %4490 = vmatpush2.msra.mxu0 0.0
      %4491 = vmatprep.subr.mxu0 0.0
      %4492 = vmatpush2.msra.mxu0 0.0
      %4493 = vmatprep.subr.mxu0 0.0
      %4494 = vmatpush2.msra.mxu0 0.0
      %4495 = vmatprep.subr.mxu0 0.0
      %4496 = vmatpush2.msra.mxu0 0.0
      %4497 = vmatprep.subr.mxu0 0.0
      %4498 = vmatpush2.msra.mxu0 0.0
      %4499 = vmatprep.mubr.f32.mxu0 0.0
      %4500 = vmatmul.mubr.f32.gmra.mxu0 %v4433
      %v4501 = vpop.f32.mrf.mxu0
      %v4502 = vadd.f32 %v4431, %v4501
      %v4503 = vpop.f32.mrf.mxu0
      %4504 = vdwg.mxu0
      %v4505 = vmax.f32 %v4502, 0.0
      %v4506 = vld [vmem:[%s11] sm:$0xff]
      %v4507 = vld [vmem:[%s11 + $0x8] sm:$0xff]
      %v4508 = vld [vmem:[%s11 + $0x10] sm:$0xff]
      %v4509 = vld [vmem:[%s11 + $0x18] sm:$0xff]
      %v4510 = vld [vmem:[%s11 + $0x20] sm:$0xff]
      %v4511 = vld [vmem:[%s11 + $0x28] sm:$0xff]
      %v4512 = vld [vmem:[%s11 + $0x30] sm:$0xff]
      %v4513 = vld [vmem:[%s11 + $0x38] sm:$0xff]
      %v4514 = vld [vmem:[%s11 + $0x40] sm:$0xff]
      %v4515 = vld [vmem:[%s11 + $0x48] sm:$0xff]
      %v4516 = vld [vmem:[%s11 + $0x50] sm:$0xff]
      %v4517 = vld [vmem:[%s11 + $0x58] sm:$0xff]
      %v4518 = vld [vmem:[%s11 + $0x60] sm:$0xff]
      %v4519 = vld [vmem:[%s11 + $0x68] sm:$0xff]
      %v4520 = vld [vmem:[%s11 + $0x70] sm:$0xff]
      %v4521 = vld [vmem:[%s11 + $0x78] sm:$0xff]
      %v4522 = vld [vmem:[%s12] sm:$0x3]
      %v4524 = vlaneseq
      %v4525 = vshrl.u32 %v4524, 7
      %v4526 = vsub.s32 0, %v4525
      %v4527 = vrot.slane %v4522, %v4526
      %v4528 = vlaneseq
      %v4529 = vshrl.u32 %v4528, 7
      %v4530 = vsub.s32 1, %v4529
      %v4531 = vrot.slane %v4522, %v4530
      %v4535 = vsel %vm4062, %v4505, 0
      %4537 = vmatprep.subr.mxu0 0.0
      %4538 = vmatpush1.msra.mxu0 0.0
      %4539 = vmatprep.subr.mxu0 0.0
      %4540 = vmatpush1.msra.mxu0 0.0
      %4541 = vmatprep.subr.mxu0 0.0
      %4542 = vmatpush1.msra.mxu0 0.0
      %4543 = vmatprep.subr.mxu0 0.0
      %4544 = vmatpush1.msra.mxu0 0.0
      %4545 = vmatprep.subr.mxu0 0.0
      %4546 = vmatpush1.msra.mxu0 0.0
      %4547 = vmatprep.subr.mxu0 0.0
      %4548 = vmatpush1.msra.mxu0 0.0
      %4549 = vmatprep.subr.mxu0 0.0
      %4550 = vmatpush1.msra.mxu0 0.0
      %4551 = vmatprep.subr.mxu0 0.0
      %4552 = vmatpush1.msra.mxu0 0.0
      %4553 = vmatprep.subr.mxu0 %v4521
      %4554 = vmatpush1.msra.mxu0 %v4520
      %4555 = vmatprep.subr.mxu0 %v4519
      %4556 = vmatpush1.msra.mxu0 %v4518
      %4557 = vmatprep.subr.mxu0 %v4517
      %4558 = vmatpush1.msra.mxu0 %v4516
      %4559 = vmatprep.subr.mxu0 %v4515
      %4560 = vmatpush1.msra.mxu0 %v4514
      %4561 = vmatprep.subr.mxu0 %v4513
      %4562 = vmatpush1.msra.mxu0 %v4512
      %4563 = vmatprep.subr.mxu0 %v4511
      %4564 = vmatpush1.msra.mxu0 %v4510
      %4565 = vmatprep.subr.mxu0 %v4509
      %4566 = vmatpush1.msra.mxu0 %v4508
      %4567 = vmatprep.subr.mxu0 %v4507
      %4568 = vmatpush1.msra.mxu0 %v4506
      %4569 = vmatprep.subr.mxu0 0.0
      %4570 = vmatpush2.msra.mxu0 0.0
      %4571 = vmatprep.subr.mxu0 0.0
      %4572 = vmatpush2.msra.mxu0 0.0
      %4573 = vmatprep.subr.mxu0 0.0
      %4574 = vmatpush2.msra.mxu0 0.0
      %4575 = vmatprep.subr.mxu0 0.0
      %4576 = vmatpush2.msra.mxu0 0.0
      %4577 = vmatprep.subr.mxu0 0.0
      %4578 = vmatpush2.msra.mxu0 0.0
      %4579 = vmatprep.subr.mxu0 0.0
      %4580 = vmatpush2.msra.mxu0 0.0
      %4581 = vmatprep.subr.mxu0 0.0
      %4582 = vmatpush2.msra.mxu0 0.0
      %4583 = vmatprep.subr.mxu0 0.0
      %4584 = vmatpush2.msra.mxu0 0.0
      %4585 = vmatprep.subr.mxu0 0.0
      %4586 = vmatpush2.msra.mxu0 0.0
      %4587 = vmatprep.subr.mxu0 0.0
      %4588 = vmatpush2.msra.mxu0 0.0
      %4589 = vmatprep.subr.mxu0 0.0
      %4590 = vmatpush2.msra.mxu0 0.0
      %4591 = vmatprep.subr.mxu0 0.0
      %4592 = vmatpush2.msra.mxu0 0.0
      %4593 = vmatprep.subr.mxu0 0.0
      %4594 = vmatpush2.msra.mxu0 0.0
      %4595 = vmatprep.subr.mxu0 0.0
      %4596 = vmatpush2.msra.mxu0 0.0
      %4597 = vmatprep.subr.mxu0 0.0
      %4598 = vmatpush2.msra.mxu0 0.0
      %4599 = vmatprep.subr.mxu0 0.0
      %4600 = vmatpush2.msra.mxu0 0.0
      %4601 = vmatprep.mubr.f32.mxu0 0.0
      %4602 = vmatmul.mubr.f32.gmra.mxu0 %v4535
      %v4603 = vpop.f32.mrf.mxu0
      %v4604 = vadd.f32 %v4527, %v4603
      %v4605 = vpop.f32.mrf.mxu0
      %v4606 = vadd.f32 %v4531, %v4605
      %4607 = vdwg.mxu0
      %v4608 = vmax.f32 %v4604, 0.0
      %v4609 = vmax.f32 %v4606, 0.0
      %v4611 = vrot.slane %v4608, 7
      %4612 = vrot.lane.b32.xlu0 %v4611, 112
      %v4613 = vpop.permute.xlu0 %4612
      %v4615 = vrot.slane %v4608, 6
      %4616 = vrot.lane.b32.xlu0 %v4615, 96
      %v4617 = vpop.permute.xlu0 %4616
      %v4619 = vrot.slane %v4608, 5
      %4620 = vrot.lane.b32.xlu0 %v4619, 80
      %v4621 = vpop.permute.xlu0 %4620
      %v4623 = vrot.slane %v4608, 4
      %4624 = vrot.lane.b32.xlu0 %v4623, 64
      %v4625 = vpop.permute.xlu0 %4624
      %v4627 = vrot.slane %v4608, 3
      %4628 = vrot.lane.b32.xlu0 %v4627, 48
      %v4629 = vpop.permute.xlu0 %4628
      %v4631 = vrot.slane %v4608, 2
      %4632 = vrot.lane.b32.xlu0 %v4631, 32
      %v4633 = vpop.permute.xlu0 %4632
      %v4635 = vrot.slane %v4608, 1
      %4636 = vrot.lane.b32.xlu0 %v4635, 16
      %v4637 = vpop.permute.xlu0 %4636
      %v4640 = vrot.slane %v4609, 7
      %4641 = vrot.lane.b32.xlu0 %v4640, 112
      %v4642 = vpop.permute.xlu0 %4641
      %v4644 = vrot.slane %v4609, 6
      %4645 = vrot.lane.b32.xlu0 %v4644, 96
      %v4646 = vpop.permute.xlu0 %4645
      %v4648 = vrot.slane %v4609, 5
      %4649 = vrot.lane.b32.xlu0 %v4648, 80
      %v4650 = vpop.permute.xlu0 %4649
      %v4652 = vrot.slane %v4609, 4
      %4653 = vrot.lane.b32.xlu0 %v4652, 64
      %v4654 = vpop.permute.xlu0 %4653
      %v4656 = vrot.slane %v4609, 3
      %4657 = vrot.lane.b32.xlu0 %v4656, 48
      %v4658 = vpop.permute.xlu0 %4657
      %v4660 = vrot.slane %v4609, 2
      %4661 = vrot.lane.b32.xlu0 %v4660, 32
      %v4662 = vpop.permute.xlu0 %4661
      %v4664 = vrot.slane %v4609, 1
      %4665 = vrot.lane.b32.xlu0 %v4664, 16
      %v4666 = vpop.permute.xlu0 %4665
      %v4668 = vsel %vm613, %v4608, %v4613
      %vm4669 = vcmask 1041408
      %v4670 = vsel %vm4669, %v4668, %v4617
      %vm4671 = vcmask 1042432
      %v4672 = vsel %vm4671, %v4670, %v4621
      %v4673 = vsel %vm3225, %v4672, %v4625
      %vm4674 = vcmask 1044480
      %v4675 = vsel %vm4674, %v4673, %v4629
      %vm4676 = vcmask 1045504
      %v4677 = vsel %vm4676, %v4675, %v4633
      %vm4678 = vcmask 1046528
      %v4679 = vsel %vm4678, %v4677, %v4637
      %v4680 = vsel %vm613, %v4609, %v4642
      %v4681 = vsel %vm4669, %v4680, %v4646
      %v4682 = vsel %vm4671, %v4681, %v4650
      %v4683 = vsel %vm3225, %v4682, %v4654
      %v4684 = vsel %vm4674, %v4683, %v4658
      %v4685 = vsel %vm4676, %v4684, %v4662
      %v4686 = vsel %vm4678, %v4685, %v4666
      %v4689 = vcombine.high %v4679, %v4679
      %v4691 = vunpack.c.l.s4 1966171168
      %v4692 = vunpack.c.0.s8 %v4691
      %v4693 = vlaneseq
      %v4694 = vshrl.u32 %v4693, 7
      %v4695 = vsub.s32 %v4692, %v4694
      %v4696 = vrot.slane %v4679, %v4695
      %v4698 = vunpack.c.l.s4 1966171168
      %v4699 = vunpack.c.0.s8 %v4698
      %v4700 = vlaneseq
      %v4701 = vshrl.u32 %v4700, 7
      %v4702 = vsub.s32 %v4699, %v4701
      %v4703 = vrot.slane %v4689, %v4702
      %v4704 = vcombine.high %v4696, %v4696
      %v4705 = vcombine.high %v4703, %v4703
      %v4707 = vunpack.c.l.s4 1966171168
      %v4708 = vunpack.c.0.s8 %v4707
      %v4709 = vlaneseq
      %v4710 = vshrl.u32 %v4709, 7
      %v4711 = vsub.s32 %v4708, %v4710
      %v4712 = vrot.slane %v4696, %v4711
      %v4714 = vunpack.c.l.s4 1966171168
      %v4715 = vunpack.c.0.s8 %v4714
      %v4716 = vlaneseq
      %v4717 = vshrl.u32 %v4716, 7
      %v4718 = vsub.s32 %v4715, %v4717
      %v4719 = vrot.slane %v4703, %v4718
      %v4721 = vunpack.c.l.s4 1966171168
      %v4722 = vunpack.c.0.s8 %v4721
      %v4723 = vlaneseq
      %v4724 = vshrl.u32 %v4723, 7
      %v4725 = vsub.s32 %v4722, %v4724
      %v4726 = vrot.slane %v4704, %v4725
      %v4728 = vunpack.c.l.s4 1966171168
      %v4729 = vunpack.c.0.s8 %v4728
      %v4730 = vlaneseq
      %v4731 = vshrl.u32 %v4730, 7
      %v4732 = vsub.s32 %v4729, %v4731
      %v4733 = vrot.slane %v4705, %v4732
      %v4734 = vcombine.high %v4712, %v4712
      %v4735 = vcombine.high %v4719, %v4719
      %v4736 = vcombine.high %v4726, %v4726
      %v4737 = vcombine.high %v4733, %v4733
      %v4738 = vcombine.high %v4686, %v4686
      %v4740 = vunpack.c.l.s4 1966171168
      %v4741 = vunpack.c.0.s8 %v4740
      %v4742 = vlaneseq
      %v4743 = vshrl.u32 %v4742, 7
      %v4744 = vsub.s32 %v4741, %v4743
      %v4745 = vrot.slane %v4686, %v4744
      %v4747 = vunpack.c.l.s4 1966171168
      %v4748 = vunpack.c.0.s8 %v4747
      %v4749 = vlaneseq
      %v4750 = vshrl.u32 %v4749, 7
      %v4751 = vsub.s32 %v4748, %v4750
      %v4752 = vrot.slane %v4738, %v4751
      %v4753 = vcombine.high %v4745, %v4745
      %v4754 = vcombine.high %v4752, %v4752
      %v4756 = vunpack.c.l.s4 1966171168
      %v4757 = vunpack.c.0.s8 %v4756
      %v4758 = vlaneseq
      %v4759 = vshrl.u32 %v4758, 7
      %v4760 = vsub.s32 %v4757, %v4759
      %v4761 = vrot.slane %v4745, %v4760
      %v4763 = vunpack.c.l.s4 1966171168
      %v4764 = vunpack.c.0.s8 %v4763
      %v4765 = vlaneseq
      %v4766 = vshrl.u32 %v4765, 7
      %v4767 = vsub.s32 %v4764, %v4766
      %v4768 = vrot.slane %v4752, %v4767
      %v4770 = vunpack.c.l.s4 1966171168
      %v4771 = vunpack.c.0.s8 %v4770
      %v4772 = vlaneseq
      %v4773 = vshrl.u32 %v4772, 7
      %v4774 = vsub.s32 %v4771, %v4773
      %v4775 = vrot.slane %v4753, %v4774
      %v4777 = vunpack.c.l.s4 1966171168
      %v4778 = vunpack.c.0.s8 %v4777
      %v4779 = vlaneseq
      %v4780 = vshrl.u32 %v4779, 7
      %v4781 = vsub.s32 %v4778, %v4780
      %v4782 = vrot.slane %v4754, %v4781
      %v4783 = vcombine.high %v4761, %v4761
      %v4784 = vcombine.high %v4768, %v4768
      %v4785 = vcombine.high %v4775, %v4775
      %v4786 = vcombine.high %v4782, %v4782
      %v4803 = vsel %vm613, %v4712, 0.0
      %v4804 = vsel %vm613, %v4726, 0.0
      %v4805 = vsel %vm613, %v4734, 0.0
      %v4806 = vsel %vm613, %v4736, 0.0
      %v4807 = vsel %vm613, %v4719, 0.0
      %v4808 = vsel %vm613, %v4733, 0.0
      %v4809 = vsel %vm613, %v4735, 0.0
      %v4810 = vsel %vm613, %v4737, 0.0
      %v4811 = vsel %vm613, %v4761, 0.0
      %v4812 = vsel %vm613, %v4775, 0.0
      %v4813 = vsel %vm613, %v4783, 0.0
      %v4814 = vsel %vm613, %v4785, 0.0
      %v4815 = vsel %vm613, %v4768, 0.0
      %v4816 = vsel %vm613, %v4782, 0.0
      %v4817 = vsel %vm613, %v4784, 0.0
      %v4818 = vsel %vm613, %v4786, 0.0
      %v4835 = vcombine.low %v4803, %v4804
      %v4836 = vcombine.low %v4805, %v4806
      %v4838 = vunpack.c.l.s4 1983009808
      %v4839 = vunpack.c.0.s8 %v4838
      %v4840 = vlaneseq
      %v4841 = vshrl.u32 %v4840, 7
      %v4842 = vsub.s32 %v4839, %v4841
      %v4843 = vrot.slane %v4835, %v4842
      %v4845 = vunpack.c.l.s4 1983009808
      %v4846 = vunpack.c.0.s8 %v4845
      %v4847 = vlaneseq
      %v4848 = vshrl.u32 %v4847, 7
      %v4849 = vsub.s32 %v4846, %v4848
      %v4850 = vrot.slane %v4836, %v4849
      %v4851 = vcombine.low %v4843, %v4850
      %v4852 = vcombine.low 0.0, 0.0
      %v4854 = vunpack.c.l.s4 1983009808
      %v4855 = vunpack.c.0.s8 %v4854
      %v4856 = vlaneseq
      %v4857 = vshrl.u32 %v4856, 7
      %v4858 = vsub.s32 %v4855, %v4857
      %v4859 = vrot.slane %v4852, %v4858
      %v4860 = vcombine.low %v4859, %v4859
      %v4861 = vcombine.low %v4807, %v4808
      %v4862 = vcombine.low %v4809, %v4810
      %v4864 = vunpack.c.l.s4 1983009808
      %v4865 = vunpack.c.0.s8 %v4864
      %v4866 = vlaneseq
      %v4867 = vshrl.u32 %v4866, 7
      %v4868 = vsub.s32 %v4865, %v4867
      %v4869 = vrot.slane %v4861, %v4868
      %v4871 = vunpack.c.l.s4 1983009808
      %v4872 = vunpack.c.0.s8 %v4871
      %v4873 = vlaneseq
      %v4874 = vshrl.u32 %v4873, 7
      %v4875 = vsub.s32 %v4872, %v4874
      %v4876 = vrot.slane %v4862, %v4875
      %v4877 = vcombine.low %v4869, %v4876
      %v4878 = vcombine.low %v4811, %v4812
      %v4879 = vcombine.low %v4813, %v4814
      %v4881 = vunpack.c.l.s4 1983009808
      %v4882 = vunpack.c.0.s8 %v4881
      %v4883 = vlaneseq
      %v4884 = vshrl.u32 %v4883, 7
      %v4885 = vsub.s32 %v4882, %v4884
      %v4886 = vrot.slane %v4878, %v4885
      %v4888 = vunpack.c.l.s4 1983009808
      %v4889 = vunpack.c.0.s8 %v4888
      %v4890 = vlaneseq
      %v4891 = vshrl.u32 %v4890, 7
      %v4892 = vsub.s32 %v4889, %v4891
      %v4893 = vrot.slane %v4879, %v4892
      %v4894 = vcombine.low %v4886, %v4893
      %v4895 = vcombine.low %v4815, %v4816
      %v4896 = vcombine.low %v4817, %v4818
      %v4898 = vunpack.c.l.s4 1983009808
      %v4899 = vunpack.c.0.s8 %v4898
      %v4900 = vlaneseq
      %v4901 = vshrl.u32 %v4900, 7
      %v4902 = vsub.s32 %v4899, %v4901
      %v4903 = vrot.slane %v4895, %v4902
      %v4905 = vunpack.c.l.s4 1983009808
      %v4906 = vunpack.c.0.s8 %v4905
      %v4907 = vlaneseq
      %v4908 = vshrl.u32 %v4907, 7
      %v4909 = vsub.s32 %v4906, %v4908
      %v4910 = vrot.slane %v4896, %v4909
      %v4911 = vcombine.low %v4903, %v4910
      %v4912 = vrot.slane %v4851, 7
      %v4913 = vrot.slane %v4860, 7
      %v4914 = vrot.slane %v4877, 7
      %v4915 = vrot.slane %v4894, 7
      %v4916 = vrot.slane %v4911, 7
      %v4922 = vsel %vm613, 0.0, %v4912
      %v4923 = vsel %vm613, 0.0, %v4913
      %v4924 = vsel %vm613, 0.0, %v4914
      %v4925 = vsel %vm613, 0.0, %v4915
      %v4926 = vsel %vm613, 0.0, %v4916
      %v4927 = vsel %vm613, %v4912, 0.0
      %v4928 = vsel %vm613, %v4913, 0.0
      %v4929 = vsel %vm613, %v4914, 0.0
      %v4930 = vsel %vm613, %v4915, 0.0
      %v4931 = vsel %vm613, %v4916, 0.0
      %v4942 = vrot.slane 0.0, 1
      %v4943 = vsel %vm4678, %v4942, %v4942
      %v4944 = vrot.slane %v4922, 1
      %v4945 = vrot.slane %v4927, 1
      %v4946 = vsel %vm4678, %v4944, %v4945
      %v4947 = vrot.slane %v4923, 1
      %v4948 = vrot.slane %v4928, 1
      %v4949 = vsel %vm4678, %v4947, %v4948
      %v4950 = vrot.slane %v4924, 1
      %v4951 = vrot.slane %v4929, 1
      %v4952 = vsel %vm4678, %v4950, %v4951
      %v4953 = vrot.slane %v4925, 1
      %v4954 = vrot.slane %v4930, 1
      %v4955 = vsel %vm4678, %v4953, %v4954
      %v4956 = vrot.slane %v4926, 1
      %v4957 = vrot.slane %v4931, 1
      %v4958 = vsel %vm4678, %v4956, %v4957
      %v4959 = vrot.slane 0.0, 2
      %v4960 = vsel %vm4676, %v4959, %v4959
      %v4961 = vrot.slane %v4922, 2
      %v4962 = vrot.slane %v4927, 2
      %v4963 = vsel %vm4676, %v4961, %v4962
      %v4964 = vrot.slane %v4923, 2
      %v4965 = vrot.slane %v4928, 2
      %v4966 = vsel %vm4676, %v4964, %v4965
      %v4967 = vrot.slane %v4924, 2
      %v4968 = vrot.slane %v4929, 2
      %v4969 = vsel %vm4676, %v4967, %v4968
      %v4970 = vrot.slane %v4925, 2
      %v4971 = vrot.slane %v4930, 2
      %v4972 = vsel %vm4676, %v4970, %v4971
      %v4973 = vrot.slane %v4926, 2
      %v4974 = vrot.slane %v4931, 2
      %v4975 = vsel %vm4676, %v4973, %v4974
      %4976 = vrot.lane.b32.xlu0 %v4943, 16
      %v4977 = vpop.permute.xlu0 %4976
      %4978 = vrot.lane.b32.xlu0 %v4946, 16
      %v4979 = vpop.permute.xlu0 %4978
      %4980 = vrot.lane.b32.xlu0 %v4949, 16
      %v4981 = vpop.permute.xlu0 %4980
      %4982 = vrot.lane.b32.xlu0 %v4952, 16
      %v4983 = vpop.permute.xlu0 %4982
      %4984 = vrot.lane.b32.xlu0 %v4955, 16
      %v4985 = vpop.permute.xlu0 %4984
      %4986 = vrot.lane.b32.xlu0 %v4958, 16
      %v4987 = vpop.permute.xlu0 %4986
      %4994 = vrot.lane.b32.xlu0 %v4960, 32
      %v4995 = vpop.permute.xlu0 %4994
      %4996 = vrot.lane.b32.xlu0 %v4963, 32
      %v4997 = vpop.permute.xlu0 %4996
      %4998 = vrot.lane.b32.xlu0 %v4966, 32
      %v4999 = vpop.permute.xlu0 %4998
      %5000 = vrot.lane.b32.xlu0 %v4969, 32
      %v5001 = vpop.permute.xlu0 %5000
      %5002 = vrot.lane.b32.xlu0 %v4972, 32
      %v5003 = vpop.permute.xlu0 %5002
      %5004 = vrot.lane.b32.xlu0 %v4975, 32
      %v5005 = vpop.permute.xlu0 %5004
      %5012 = vrot.lane.b32.xlu0 %v4922, 48
      %v5013 = vpop.permute.xlu0 %5012
      %5014 = vrot.lane.b32.xlu0 %v4923, 48
      %v5015 = vpop.permute.xlu0 %5014
      %5016 = vrot.lane.b32.xlu0 %v4924, 48
      %v5017 = vpop.permute.xlu0 %5016
      %5018 = vrot.lane.b32.xlu0 %v4925, 48
      %v5019 = vpop.permute.xlu0 %5018
      %5020 = vrot.lane.b32.xlu0 %v4926, 48
      %v5021 = vpop.permute.xlu0 %5020
      %5027 = vrot.lane.b32.xlu0 %v4946, 64
      %v5028 = vpop.permute.xlu0 %5027
      %5029 = vrot.lane.b32.xlu0 %v4949, 64
      %v5030 = vpop.permute.xlu0 %5029
      %5031 = vrot.lane.b32.xlu0 %v4952, 64
      %v5032 = vpop.permute.xlu0 %5031
      %5033 = vrot.lane.b32.xlu0 %v4955, 64
      %v5034 = vpop.permute.xlu0 %5033
      %5035 = vrot.lane.b32.xlu0 %v4958, 64
      %v5036 = vpop.permute.xlu0 %5035
      %5042 = vrot.lane.b32.xlu0 %v4963, 80
      %v5043 = vpop.permute.xlu0 %5042
      %5044 = vrot.lane.b32.xlu0 %v4966, 80
      %v5045 = vpop.permute.xlu0 %5044
      %5046 = vrot.lane.b32.xlu0 %v4969, 80
      %v5047 = vpop.permute.xlu0 %5046
      %5048 = vrot.lane.b32.xlu0 %v4972, 80
      %v5049 = vpop.permute.xlu0 %5048
      %5050 = vrot.lane.b32.xlu0 %v4975, 80
      %v5051 = vpop.permute.xlu0 %5050
      %5057 = vrot.lane.b32.xlu0 %v4923, 96
      %v5058 = vpop.permute.xlu0 %5057
      %5059 = vrot.lane.b32.xlu0 %v4924, 96
      %v5060 = vpop.permute.xlu0 %5059
      %5061 = vrot.lane.b32.xlu0 %v4925, 96
      %v5062 = vpop.permute.xlu0 %5061
      %5063 = vrot.lane.b32.xlu0 %v4926, 96
      %v5064 = vpop.permute.xlu0 %5063
      %5065 = vrot.lane.b32.xlu0 0.0, 96
      %v5066 = vpop.permute.xlu0 %5065
      %5072 = vrot.lane.b32.xlu0 %v4949, 112
      %v5073 = vpop.permute.xlu0 %5072
      %5074 = vrot.lane.b32.xlu0 %v4952, 112
      %v5075 = vpop.permute.xlu0 %5074
      %5076 = vrot.lane.b32.xlu0 %v4955, 112
      %v5077 = vpop.permute.xlu0 %5076
      %5078 = vrot.lane.b32.xlu0 %v4958, 112
      %v5079 = vpop.permute.xlu0 %5078
      %5080 = vrot.lane.b32.xlu0 %v4943, 112
      %v5081 = vpop.permute.xlu0 %5080
      %v5087 = vsel %vm3143, 0.0, %v4977
      %v5088 = vsel %vm3143, %v4922, %v4979
      %v5089 = vsel %vm3143, %v4923, %v4981
      %v5090 = vsel %vm3143, %v4924, %v4983
      %v5091 = vsel %vm3143, %v4925, %v4985
      %v5092 = vsel %vm3143, %v4926, %v4987
      %v5093 = vsel %vm3179, %v5087, %v4995
      %v5094 = vsel %vm3179, %v5088, %v4997
      %v5095 = vsel %vm3179, %v5089, %v4999
      %v5096 = vsel %vm3179, %v5090, %v5001
      %v5097 = vsel %vm3179, %v5091, %v5003
      %v5098 = vsel %vm3179, %v5092, %v5005
      %v5099 = vsel %vm4056, %v5093, %v5013
      %v5100 = vsel %vm4056, %v5094, %v5015
      %v5101 = vsel %vm4056, %v5095, %v5017
      %v5102 = vsel %vm4056, %v5096, %v5015
      %v5103 = vsel %vm4056, %v5095, %v5019
      %v5104 = vsel %vm4056, %v5097, %v5015
      %v5105 = vsel %vm4056, %v5095, %v5021
      %v5106 = vsel %vm4056, %v5098, %v5015
      %v5107 = vsel %vm4062, %v5099, %v5028
      %v5108 = vsel %vm4062, %v5100, %v5030
      %v5109 = vsel %vm4062, %v5101, %v5032
      %v5110 = vsel %vm4062, %v5102, %v5030
      %v5111 = vsel %vm4062, %v5103, %v5034
      %v5112 = vsel %vm4062, %v5104, %v5030
      %v5113 = vsel %vm4062, %v5105, %v5036
      %v5114 = vsel %vm4062, %v5106, %v5030
      %v5115 = vsel %vm4227, %v5107, %v5043
      %v5116 = vsel %vm4227, %v5108, %v5045
      %v5117 = vsel %vm4227, %v5109, %v5047
      %v5118 = vsel %vm4227, %v5110, %v5045
      %v5119 = vsel %vm4227, %v5111, %v5049
      %v5120 = vsel %vm4227, %v5112, %v5045
      %v5121 = vsel %vm4227, %v5113, %v5051
      %v5122 = vsel %vm4227, %v5114, %v5045
      %v5123 = vsel %vm4229, %v5115, %v5058
      %v5124 = vsel %vm4229, %v5116, %v5060
      %v5125 = vsel %vm4229, %v5117, %v5058
      %v5126 = vsel %vm4229, %v5118, %v5062
      %v5127 = vsel %vm4229, %v5119, %v5058
      %v5128 = vsel %vm4229, %v5120, %v5064
      %v5129 = vsel %vm4229, %v5121, %v5058
      %v5130 = vsel %vm4229, %v5122, %v5066
      %v5131 = vsel %vm4231, %v5123, %v5073
      %v5132 = vsel %vm4231, %v5124, %v5075
      %v5133 = vsel %vm4231, %v5125, %v5073
      %v5134 = vsel %vm4231, %v5126, %v5077
      %v5135 = vsel %vm4231, %v5127, %v5073
      %v5136 = vsel %vm4231, %v5128, %v5079
      %v5137 = vsel %vm4231, %v5129, %v5073
      %v5138 = vsel %vm4231, %v5130, %v5081
      %v5139 = vld [vmem:[%s13] sm:$0xff]
      %v5140 = vld [vmem:[%s13 + $0x8] sm:$0xff]
      %v5141 = vld [vmem:[%s13 + $0x10] sm:$0xff]
      %v5142 = vld [vmem:[%s13 + $0x18] sm:$0xff]
      %v5143 = vld [vmem:[%s13 + $0x20] sm:$0xff]
      %v5144 = vld [vmem:[%s13 + $0x28] sm:$0xff]
      %v5145 = vld [vmem:[%s13 + $0x30] sm:$0xff]
      %v5146 = vld [vmem:[%s13 + $0x38] sm:$0xff]
      %v5147 = vld [vmem:[%s13 + $0x40] sm:$0xff]
      %v5148 = vld [vmem:[%s13 + $0x48] sm:$0xff]
      %v5149 = vld [vmem:[%s13 + $0x50] sm:$0xff]
      %v5150 = vld [vmem:[%s13 + $0x58] sm:$0xff]
      %v5151 = vld [vmem:[%s13 + $0x60] sm:$0xff]
      %v5152 = vld [vmem:[%s13 + $0x68] sm:$0xff]
      %v5153 = vld [vmem:[%s13 + $0x70] sm:$0xff]
      %v5154 = vld [vmem:[%s13 + $0x78] sm:$0xff]
      %v5155 = vld [vmem:[%s13 + $0x80] sm:$0xff]
      %v5156 = vld [vmem:[%s13 + $0x88] sm:$0xff]
      %v5157 = vld [vmem:[%s14] sm:$0x1]
      %v5159 = vlaneseq
      %v5160 = vshrl.u32 %v5159, 7
      %v5161 = vsub.s32 0, %v5160
      %v5162 = vrot.slane %v5157, %v5161
      %v5164 = vsel %vm3143, %v4966, 0
      %v5166 = vsel %vm3143, %v4969, 0
      %v5168 = vsel %vm3143, %v4972, 0
      %v5170 = vsel %vm3143, %v4975, 0
      %v5172 = vsel %vm3143, %v4960, 0
      %5174 = vmatprep.subr.mxu0 0.0
      %5175 = vmatpush1.msra.mxu0 %v5154
      %5176 = vmatprep.subr.mxu0 0.0
      %5177 = vmatpush1.msra.mxu0 %v5153
      %5178 = vmatprep.subr.mxu0 0.0
      %5179 = vmatpush1.msra.mxu0 %v5152
      %5180 = vmatprep.subr.mxu0 0.0
      %5181 = vmatpush1.msra.mxu0 %v5151
      %5182 = vmatprep.subr.mxu0 0.0
      %5183 = vmatpush1.msra.mxu0 %v5150
      %5184 = vmatprep.subr.mxu0 0.0
      %5185 = vmatpush1.msra.mxu0 %v5149
      %5186 = vmatprep.subr.mxu0 0.0
      %5187 = vmatpush1.msra.mxu0 %v5148
      %5188 = vmatprep.subr.mxu0 0.0
      %5189 = vmatpush1.msra.mxu0 %v5147
      %5190 = vmatprep.subr.mxu0 0.0
      %5191 = vmatpush1.msra.mxu0 %v5146
      %5192 = vmatprep.subr.mxu0 0.0
      %5193 = vmatpush1.msra.mxu0 %v5145
      %5194 = vmatprep.subr.mxu0 0.0
      %5195 = vmatpush1.msra.mxu0 %v5144
      %5196 = vmatprep.subr.mxu0 0.0
      %5197 = vmatpush1.msra.mxu0 %v5143
      %5198 = vmatprep.subr.mxu0 0.0
      %5199 = vmatpush1.msra.mxu0 %v5142
      %5200 = vmatprep.subr.mxu0 0.0
      %5201 = vmatpush1.msra.mxu0 %v5141
      %5202 = vmatprep.subr.mxu0 0.0
      %5203 = vmatpush1.msra.mxu0 %v5140
      %5204 = vmatprep.subr.mxu0 0.0
      %5205 = vmatpush1.msra.mxu0 %v5139
      %5206 = vmatprep.subr.mxu0 0.0
      %5207 = vmatpush2.msra.mxu0 0.0
      %5208 = vmatprep.subr.mxu0 0.0
      %5209 = vmatpush2.msra.mxu0 0.0
      %5210 = vmatprep.subr.mxu0 0.0
      %5211 = vmatpush2.msra.mxu0 0.0
      %5212 = vmatprep.subr.mxu0 0.0
      %5213 = vmatpush2.msra.mxu0 0.0
      %5214 = vmatprep.subr.mxu0 0.0
      %5215 = vmatpush2.msra.mxu0 0.0
      %5216 = vmatprep.subr.mxu0 0.0
      %5217 = vmatpush2.msra.mxu0 0.0
      %5218 = vmatprep.subr.mxu0 0.0
      %5219 = vmatpush2.msra.mxu0 0.0
      %5220 = vmatprep.subr.mxu0 0.0
      %5221 = vmatpush2.msra.mxu0 0.0
      %5222 = vmatprep.subr.mxu0 0.0
      %5223 = vmatpush2.msra.mxu0 0.0
      %5224 = vmatprep.subr.mxu0 0.0
      %5225 = vmatpush2.msra.mxu0 0.0
      %5226 = vmatprep.subr.mxu0 0.0
      %5227 = vmatpush2.msra.mxu0 0.0
      %5228 = vmatprep.subr.mxu0 0.0
      %5229 = vmatpush2.msra.mxu0 0.0
      %5230 = vmatprep.subr.mxu0 0.0
      %5231 = vmatpush2.msra.mxu0 0.0
      %5232 = vmatprep.subr.mxu0 0.0
      %5233 = vmatpush2.msra.mxu0 0.0
      %5234 = vmatprep.subr.mxu0 0.0
      %5235 = vmatpush2.msra.mxu0 %v5156
      %5236 = vmatprep.subr.mxu0 0.0
      %5237 = vmatpush2.msra.mxu0 %v5155
      %5238 = vmatprep.mubr.f32.mxu0 %v5164
      %5239 = vmatmul.mubr.f32.gmra.mxu0 %v5131
      %v5240 = vpop.f32.mrf.mxu0
      %v5241 = vadd.f32 %v5162, %v5240
      %v5242 = vpop.f32.mrf.mxu0
      %5243 = vmatprep.mubr.f32.mxu0 %v5166
      %5244 = vmatmul.mubr.f32.gmra.mxu0 %v5132
      %v5245 = vpop.f32.mrf.mxu0
      %v5246 = vadd.f32 %v5162, %v5245
      %v5247 = vpop.f32.mrf.mxu0
      %5248 = vmatprep.mubr.f32.mxu0 %v5164
      %5249 = vmatmul.mubr.f32.gmra.mxu0 %v5133
      %v5250 = vpop.f32.mrf.mxu0
      %v5251 = vadd.f32 %v5162, %v5250
      %v5252 = vpop.f32.mrf.mxu0
      %5253 = vmatprep.mubr.f32.mxu0 %v5168
      %5254 = vmatmul.mubr.f32.gmra.mxu0 %v5134
      %v5255 = vpop.f32.mrf.mxu0
      %v5256 = vadd.f32 %v5162, %v5255
      %v5257 = vpop.f32.mrf.mxu0
      %5258 = vmatprep.mubr.f32.mxu0 %v5164
      %5259 = vmatmul.mubr.f32.gmra.mxu0 %v5135
      %v5260 = vpop.f32.mrf.mxu0
      %v5261 = vadd.f32 %v5162, %v5260
      %v5262 = vpop.f32.mrf.mxu0
      %5263 = vmatprep.mubr.f32.mxu0 %v5170
      %5264 = vmatmul.mubr.f32.gmra.mxu0 %v5136
      %v5265 = vpop.f32.mrf.mxu0
      %v5266 = vadd.f32 %v5162, %v5265
      %v5267 = vpop.f32.mrf.mxu0
      %5268 = vmatprep.mubr.f32.mxu0 %v5164
      %5269 = vmatmul.mubr.f32.gmra.mxu0 %v5137
      %v5270 = vpop.f32.mrf.mxu0
      %v5271 = vadd.f32 %v5162, %v5270
      %v5272 = vpop.f32.mrf.mxu0
      %5273 = vmatprep.mubr.f32.mxu0 %v5172
      %5274 = vmatmul.mubr.f32.gmra.mxu0 %v5138
      %v5275 = vpop.f32.mrf.mxu0
      %v5276 = vadd.f32 %v5162, %v5275
      %v5277 = vpop.f32.mrf.mxu0
      %5278 = vdwg.mxu0
      %v5279 = vmax.f32 %v5241, 0.0
      %v5280 = vmax.f32 %v5246, 0.0
      %v5281 = vmax.f32 %v5251, 0.0
      %v5282 = vmax.f32 %v5256, 0.0
      %v5283 = vmax.f32 %v5261, 0.0
      %v5284 = vmax.f32 %v5266, 0.0
      %v5285 = vmax.f32 %v5271, 0.0
      %v5286 = vmax.f32 %v5276, 0.0
      %v5295 = vcombine.high %v5279, %v5279
      %v5297 = vunpack.c.l.s4 1966171168
      %v5298 = vunpack.c.0.s8 %v5297
      %v5299 = vlaneseq
      %v5300 = vshrl.u32 %v5299, 7
      %v5301 = vsub.s32 %v5298, %v5300
      %v5302 = vrot.slane %v5279, %v5301
      %v5304 = vunpack.c.l.s4 1966171168
      %v5305 = vunpack.c.0.s8 %v5304
      %v5306 = vlaneseq
      %v5307 = vshrl.u32 %v5306, 7
      %v5308 = vsub.s32 %v5305, %v5307
      %v5309 = vrot.slane %v5295, %v5308
      %v5310 = vcombine.high %v5302, %v5302
      %v5311 = vcombine.high %v5309, %v5309
      %v5313 = vunpack.c.l.s4 1966171168
      %v5314 = vunpack.c.0.s8 %v5313
      %v5315 = vlaneseq
      %v5316 = vshrl.u32 %v5315, 7
      %v5317 = vsub.s32 %v5314, %v5316
      %v5318 = vrot.slane %v5302, %v5317
      %v5320 = vunpack.c.l.s4 1966171168
      %v5321 = vunpack.c.0.s8 %v5320
      %v5322 = vlaneseq
      %v5323 = vshrl.u32 %v5322, 7
      %v5324 = vsub.s32 %v5321, %v5323
      %v5325 = vrot.slane %v5309, %v5324
      %v5327 = vunpack.c.l.s4 1966171168
      %v5328 = vunpack.c.0.s8 %v5327
      %v5329 = vlaneseq
      %v5330 = vshrl.u32 %v5329, 7
      %v5331 = vsub.s32 %v5328, %v5330
      %v5332 = vrot.slane %v5310, %v5331
      %v5334 = vunpack.c.l.s4 1966171168
      %v5335 = vunpack.c.0.s8 %v5334
      %v5336 = vlaneseq
      %v5337 = vshrl.u32 %v5336, 7
      %v5338 = vsub.s32 %v5335, %v5337
      %v5339 = vrot.slane %v5311, %v5338
      %v5340 = vcombine.high %v5318, %v5318
      %v5341 = vcombine.high %v5325, %v5325
      %v5342 = vcombine.high %v5332, %v5332
      %v5343 = vcombine.high %v5339, %v5339
      %v5344 = vcombine.high %v5280, %v5280
      %v5346 = vunpack.c.l.s4 1966171168
      %v5347 = vunpack.c.0.s8 %v5346
      %v5348 = vlaneseq
      %v5349 = vshrl.u32 %v5348, 7
      %v5350 = vsub.s32 %v5347, %v5349
      %v5351 = vrot.slane %v5280, %v5350
      %v5353 = vunpack.c.l.s4 1966171168
      %v5354 = vunpack.c.0.s8 %v5353
      %v5355 = vlaneseq
      %v5356 = vshrl.u32 %v5355, 7
      %v5357 = vsub.s32 %v5354, %v5356
      %v5358 = vrot.slane %v5344, %v5357
      %v5359 = vcombine.high %v5351, %v5351
      %v5360 = vcombine.high %v5358, %v5358
      %v5362 = vunpack.c.l.s4 1966171168
      %v5363 = vunpack.c.0.s8 %v5362
      %v5364 = vlaneseq
      %v5365 = vshrl.u32 %v5364, 7
      %v5366 = vsub.s32 %v5363, %v5365
      %v5367 = vrot.slane %v5351, %v5366
      %v5369 = vunpack.c.l.s4 1966171168
      %v5370 = vunpack.c.0.s8 %v5369
      %v5371 = vlaneseq
      %v5372 = vshrl.u32 %v5371, 7
      %v5373 = vsub.s32 %v5370, %v5372
      %v5374 = vrot.slane %v5358, %v5373
      %v5376 = vunpack.c.l.s4 1966171168
      %v5377 = vunpack.c.0.s8 %v5376
      %v5378 = vlaneseq
      %v5379 = vshrl.u32 %v5378, 7
      %v5380 = vsub.s32 %v5377, %v5379
      %v5381 = vrot.slane %v5359, %v5380
      %v5383 = vunpack.c.l.s4 1966171168
      %v5384 = vunpack.c.0.s8 %v5383
      %v5385 = vlaneseq
      %v5386 = vshrl.u32 %v5385, 7
      %v5387 = vsub.s32 %v5384, %v5386
      %v5388 = vrot.slane %v5360, %v5387
      %v5389 = vcombine.high %v5367, %v5367
      %v5390 = vcombine.high %v5374, %v5374
      %v5391 = vcombine.high %v5381, %v5381
      %v5392 = vcombine.high %v5388, %v5388
      %v5393 = vcombine.high %v5281, %v5281
      %v5395 = vunpack.c.l.s4 1966171168
      %v5396 = vunpack.c.0.s8 %v5395
      %v5397 = vlaneseq
      %v5398 = vshrl.u32 %v5397, 7
      %v5399 = vsub.s32 %v5396, %v5398
      %v5400 = vrot.slane %v5281, %v5399
      %v5402 = vunpack.c.l.s4 1966171168
      %v5403 = vunpack.c.0.s8 %v5402
      %v5404 = vlaneseq
      %v5405 = vshrl.u32 %v5404, 7
      %v5406 = vsub.s32 %v5403, %v5405
      %v5407 = vrot.slane %v5393, %v5406
      %v5408 = vcombine.high %v5400, %v5400
      %v5409 = vcombine.high %v5407, %v5407
      %v5411 = vunpack.c.l.s4 1966171168
      %v5412 = vunpack.c.0.s8 %v5411
      %v5413 = vlaneseq
      %v5414 = vshrl.u32 %v5413, 7
      %v5415 = vsub.s32 %v5412, %v5414
      %v5416 = vrot.slane %v5400, %v5415
      %v5418 = vunpack.c.l.s4 1966171168
      %v5419 = vunpack.c.0.s8 %v5418
      %v5420 = vlaneseq
      %v5421 = vshrl.u32 %v5420, 7
      %v5422 = vsub.s32 %v5419, %v5421
      %v5423 = vrot.slane %v5407, %v5422
      %v5425 = vunpack.c.l.s4 1966171168
      %v5426 = vunpack.c.0.s8 %v5425
      %v5427 = vlaneseq
      %v5428 = vshrl.u32 %v5427, 7
      %v5429 = vsub.s32 %v5426, %v5428
      %v5430 = vrot.slane %v5408, %v5429
      %v5432 = vunpack.c.l.s4 1966171168
      %v5433 = vunpack.c.0.s8 %v5432
      %v5434 = vlaneseq
      %v5435 = vshrl.u32 %v5434, 7
      %v5436 = vsub.s32 %v5433, %v5435
      %v5437 = vrot.slane %v5409, %v5436
      %v5438 = vcombine.high %v5416, %v5416
      %v5439 = vcombine.high %v5423, %v5423
      %v5440 = vcombine.high %v5430, %v5430
      %v5441 = vcombine.high %v5437, %v5437
      %v5442 = vcombine.high %v5282, %v5282
      %v5444 = vunpack.c.l.s4 1966171168
      %v5445 = vunpack.c.0.s8 %v5444
      %v5446 = vlaneseq
      %v5447 = vshrl.u32 %v5446, 7
      %v5448 = vsub.s32 %v5445, %v5447
      %v5449 = vrot.slane %v5282, %v5448
      %v5451 = vunpack.c.l.s4 1966171168
      %v5452 = vunpack.c.0.s8 %v5451
      %v5453 = vlaneseq
      %v5454 = vshrl.u32 %v5453, 7
      %v5455 = vsub.s32 %v5452, %v5454
      %v5456 = vrot.slane %v5442, %v5455
      %v5457 = vcombine.high %v5449, %v5449
      %v5458 = vcombine.high %v5456, %v5456
      %v5460 = vunpack.c.l.s4 1966171168
      %v5461 = vunpack.c.0.s8 %v5460
      %v5462 = vlaneseq
      %v5463 = vshrl.u32 %v5462, 7
      %v5464 = vsub.s32 %v5461, %v5463
      %v5465 = vrot.slane %v5449, %v5464
      %v5467 = vunpack.c.l.s4 1966171168
      %v5468 = vunpack.c.0.s8 %v5467
      %v5469 = vlaneseq
      %v5470 = vshrl.u32 %v5469, 7
      %v5471 = vsub.s32 %v5468, %v5470
      %v5472 = vrot.slane %v5456, %v5471
      %v5474 = vunpack.c.l.s4 1966171168
      %v5475 = vunpack.c.0.s8 %v5474
      %v5476 = vlaneseq
      %v5477 = vshrl.u32 %v5476, 7
      %v5478 = vsub.s32 %v5475, %v5477
      %v5479 = vrot.slane %v5457, %v5478
      %v5481 = vunpack.c.l.s4 1966171168
      %v5482 = vunpack.c.0.s8 %v5481
      %v5483 = vlaneseq
      %v5484 = vshrl.u32 %v5483, 7
      %v5485 = vsub.s32 %v5482, %v5484
      %v5486 = vrot.slane %v5458, %v5485
      %v5487 = vcombine.high %v5465, %v5465
      %v5488 = vcombine.high %v5472, %v5472
      %v5489 = vcombine.high %v5479, %v5479
      %v5490 = vcombine.high %v5486, %v5486
      %v5491 = vcombine.high %v5283, %v5283
      %v5493 = vunpack.c.l.s4 1966171168
      %v5494 = vunpack.c.0.s8 %v5493
      %v5495 = vlaneseq
      %v5496 = vshrl.u32 %v5495, 7
      %v5497 = vsub.s32 %v5494, %v5496
      %v5498 = vrot.slane %v5283, %v5497
      %v5500 = vunpack.c.l.s4 1966171168
      %v5501 = vunpack.c.0.s8 %v5500
      %v5502 = vlaneseq
      %v5503 = vshrl.u32 %v5502, 7
      %v5504 = vsub.s32 %v5501, %v5503
      %v5505 = vrot.slane %v5491, %v5504
      %v5506 = vcombine.high %v5498, %v5498
      %v5507 = vcombine.high %v5505, %v5505
      %v5509 = vunpack.c.l.s4 1966171168
      %v5510 = vunpack.c.0.s8 %v5509
      %v5511 = vlaneseq
      %v5512 = vshrl.u32 %v5511, 7
      %v5513 = vsub.s32 %v5510, %v5512
      %v5514 = vrot.slane %v5498, %v5513
      %v5516 = vunpack.c.l.s4 1966171168
      %v5517 = vunpack.c.0.s8 %v5516
      %v5518 = vlaneseq
      %v5519 = vshrl.u32 %v5518, 7
      %v5520 = vsub.s32 %v5517, %v5519
      %v5521 = vrot.slane %v5505, %v5520
      %v5523 = vunpack.c.l.s4 1966171168
      %v5524 = vunpack.c.0.s8 %v5523
      %v5525 = vlaneseq
      %v5526 = vshrl.u32 %v5525, 7
      %v5527 = vsub.s32 %v5524, %v5526
      %v5528 = vrot.slane %v5506, %v5527
      %v5530 = vunpack.c.l.s4 1966171168
      %v5531 = vunpack.c.0.s8 %v5530
      %v5532 = vlaneseq
      %v5533 = vshrl.u32 %v5532, 7
      %v5534 = vsub.s32 %v5531, %v5533
      %v5535 = vrot.slane %v5507, %v5534
      %v5536 = vcombine.high %v5514, %v5514
      %v5537 = vcombine.high %v5521, %v5521
      %v5538 = vcombine.high %v5528, %v5528
      %v5539 = vcombine.high %v5535, %v5535
      %v5540 = vcombine.high %v5284, %v5284
      %v5542 = vunpack.c.l.s4 1966171168
      %v5543 = vunpack.c.0.s8 %v5542
      %v5544 = vlaneseq
      %v5545 = vshrl.u32 %v5544, 7
      %v5546 = vsub.s32 %v5543, %v5545
      %v5547 = vrot.slane %v5284, %v5546
      %v5549 = vunpack.c.l.s4 1966171168
      %v5550 = vunpack.c.0.s8 %v5549
      %v5551 = vlaneseq
      %v5552 = vshrl.u32 %v5551, 7
      %v5553 = vsub.s32 %v5550, %v5552
      %v5554 = vrot.slane %v5540, %v5553
      %v5555 = vcombine.high %v5547, %v5547
      %v5556 = vcombine.high %v5554, %v5554
      %v5558 = vunpack.c.l.s4 1966171168
      %v5559 = vunpack.c.0.s8 %v5558
      %v5560 = vlaneseq
      %v5561 = vshrl.u32 %v5560, 7
      %v5562 = vsub.s32 %v5559, %v5561
      %v5563 = vrot.slane %v5547, %v5562
      %v5565 = vunpack.c.l.s4 1966171168
      %v5566 = vunpack.c.0.s8 %v5565
      %v5567 = vlaneseq
      %v5568 = vshrl.u32 %v5567, 7
      %v5569 = vsub.s32 %v5566, %v5568
      %v5570 = vrot.slane %v5554, %v5569
      %v5572 = vunpack.c.l.s4 1966171168
      %v5573 = vunpack.c.0.s8 %v5572
      %v5574 = vlaneseq
      %v5575 = vshrl.u32 %v5574, 7
      %v5576 = vsub.s32 %v5573, %v5575
      %v5577 = vrot.slane %v5555, %v5576
      %v5579 = vunpack.c.l.s4 1966171168
      %v5580 = vunpack.c.0.s8 %v5579
      %v5581 = vlaneseq
      %v5582 = vshrl.u32 %v5581, 7
      %v5583 = vsub.s32 %v5580, %v5582
      %v5584 = vrot.slane %v5556, %v5583
      %v5585 = vcombine.high %v5563, %v5563
      %v5586 = vcombine.high %v5570, %v5570
      %v5587 = vcombine.high %v5577, %v5577
      %v5588 = vcombine.high %v5584, %v5584
      %v5589 = vcombine.high %v5285, %v5285
      %v5591 = vunpack.c.l.s4 1966171168
      %v5592 = vunpack.c.0.s8 %v5591
      %v5593 = vlaneseq
      %v5594 = vshrl.u32 %v5593, 7
      %v5595 = vsub.s32 %v5592, %v5594
      %v5596 = vrot.slane %v5285, %v5595
      %v5598 = vunpack.c.l.s4 1966171168
      %v5599 = vunpack.c.0.s8 %v5598
      %v5600 = vlaneseq
      %v5601 = vshrl.u32 %v5600, 7
      %v5602 = vsub.s32 %v5599, %v5601
      %v5603 = vrot.slane %v5589, %v5602
      %v5604 = vcombine.high %v5596, %v5596
      %v5605 = vcombine.high %v5603, %v5603
      %v5607 = vunpack.c.l.s4 1966171168
      %v5608 = vunpack.c.0.s8 %v5607
      %v5609 = vlaneseq
      %v5610 = vshrl.u32 %v5609, 7
      %v5611 = vsub.s32 %v5608, %v5610
      %v5612 = vrot.slane %v5596, %v5611
      %v5614 = vunpack.c.l.s4 1966171168
      %v5615 = vunpack.c.0.s8 %v5614
      %v5616 = vlaneseq
      %v5617 = vshrl.u32 %v5616, 7
      %v5618 = vsub.s32 %v5615, %v5617
      %v5619 = vrot.slane %v5603, %v5618
      %v5621 = vunpack.c.l.s4 1966171168
      %v5622 = vunpack.c.0.s8 %v5621
      %v5623 = vlaneseq
      %v5624 = vshrl.u32 %v5623, 7
      %v5625 = vsub.s32 %v5622, %v5624
      %v5626 = vrot.slane %v5604, %v5625
      %v5628 = vunpack.c.l.s4 1966171168
      %v5629 = vunpack.c.0.s8 %v5628
      %v5630 = vlaneseq
      %v5631 = vshrl.u32 %v5630, 7
      %v5632 = vsub.s32 %v5629, %v5631
      %v5633 = vrot.slane %v5605, %v5632
      %v5634 = vcombine.high %v5612, %v5612
      %v5635 = vcombine.high %v5619, %v5619
      %v5636 = vcombine.high %v5626, %v5626
      %v5637 = vcombine.high %v5633, %v5633
      %v5638 = vcombine.high %v5286, %v5286
      %v5640 = vunpack.c.l.s4 1966171168
      %v5641 = vunpack.c.0.s8 %v5640
      %v5642 = vlaneseq
      %v5643 = vshrl.u32 %v5642, 7
      %v5644 = vsub.s32 %v5641, %v5643
      %v5645 = vrot.slane %v5286, %v5644
      %v5647 = vunpack.c.l.s4 1966171168
      %v5648 = vunpack.c.0.s8 %v5647
      %v5649 = vlaneseq
      %v5650 = vshrl.u32 %v5649, 7
      %v5651 = vsub.s32 %v5648, %v5650
      %v5652 = vrot.slane %v5638, %v5651
      %v5653 = vcombine.high %v5645, %v5645
      %v5654 = vcombine.high %v5652, %v5652
      %v5656 = vunpack.c.l.s4 1966171168
      %v5657 = vunpack.c.0.s8 %v5656
      %v5658 = vlaneseq
      %v5659 = vshrl.u32 %v5658, 7
      %v5660 = vsub.s32 %v5657, %v5659
      %v5661 = vrot.slane %v5645, %v5660
      %v5663 = vunpack.c.l.s4 1966171168
      %v5664 = vunpack.c.0.s8 %v5663
      %v5665 = vlaneseq
      %v5666 = vshrl.u32 %v5665, 7
      %v5667 = vsub.s32 %v5664, %v5666
      %v5668 = vrot.slane %v5652, %v5667
      %v5670 = vunpack.c.l.s4 1966171168
      %v5671 = vunpack.c.0.s8 %v5670
      %v5672 = vlaneseq
      %v5673 = vshrl.u32 %v5672, 7
      %v5674 = vsub.s32 %v5671, %v5673
      %v5675 = vrot.slane %v5653, %v5674
      %v5677 = vunpack.c.l.s4 1966171168
      %v5678 = vunpack.c.0.s8 %v5677
      %v5679 = vlaneseq
      %v5680 = vshrl.u32 %v5679, 7
      %v5681 = vsub.s32 %v5678, %v5680
      %v5682 = vrot.slane %v5654, %v5681
      %v5683 = vcombine.high %v5661, %v5661
      %v5684 = vcombine.high %v5668, %v5668
      %v5685 = vcombine.high %v5675, %v5675
      %v5686 = vcombine.high %v5682, %v5682
      %v5751 = vsel %vm613, %v5318, 0.0
      %v5752 = vsel %vm613, %v5332, 0.0
      %v5753 = vsel %vm613, %v5340, 0.0
      %v5754 = vsel %vm613, %v5342, 0.0
      %v5755 = vsel %vm613, %v5325, 0.0
      %v5756 = vsel %vm613, %v5339, 0.0
      %v5757 = vsel %vm613, %v5341, 0.0
      %v5758 = vsel %vm613, %v5343, 0.0
      %v5759 = vsel %vm613, %v5367, 0.0
      %v5760 = vsel %vm613, %v5381, 0.0
      %v5761 = vsel %vm613, %v5389, 0.0
      %v5762 = vsel %vm613, %v5391, 0.0
      %v5763 = vsel %vm613, %v5374, 0.0
      %v5764 = vsel %vm613, %v5388, 0.0
      %v5765 = vsel %vm613, %v5390, 0.0
      %v5766 = vsel %vm613, %v5392, 0.0
      %v5767 = vsel %vm613, %v5416, 0.0
      %v5768 = vsel %vm613, %v5430, 0.0
      %v5769 = vsel %vm613, %v5438, 0.0
      %v5770 = vsel %vm613, %v5440, 0.0
      %v5771 = vsel %vm613, %v5423, 0.0
      %v5772 = vsel %vm613, %v5437, 0.0
      %v5773 = vsel %vm613, %v5439, 0.0
      %v5774 = vsel %vm613, %v5441, 0.0
      %v5775 = vsel %vm613, %v5465, 0.0
      %v5776 = vsel %vm613, %v5479, 0.0
      %v5777 = vsel %vm613, %v5487, 0.0
      %v5778 = vsel %vm613, %v5489, 0.0
      %v5779 = vsel %vm613, %v5472, 0.0
      %v5780 = vsel %vm613, %v5486, 0.0
      %v5781 = vsel %vm613, %v5488, 0.0
      %v5782 = vsel %vm613, %v5490, 0.0
      %v5783 = vsel %vm613, %v5514, 0.0
      %v5784 = vsel %vm613, %v5528, 0.0
      %v5785 = vsel %vm613, %v5536, 0.0
      %v5786 = vsel %vm613, %v5538, 0.0
      %v5787 = vsel %vm613, %v5521, 0.0
      %v5788 = vsel %vm613, %v5535, 0.0
      %v5789 = vsel %vm613, %v5537, 0.0
      %v5790 = vsel %vm613, %v5539, 0.0
      %v5791 = vsel %vm613, %v5563, 0.0
      %v5792 = vsel %vm613, %v5577, 0.0
      %v5793 = vsel %vm613, %v5585, 0.0
      %v5794 = vsel %vm613, %v5587, 0.0
      %v5795 = vsel %vm613, %v5570, 0.0
      %v5796 = vsel %vm613, %v5584, 0.0
      %v5797 = vsel %vm613, %v5586, 0.0
      %v5798 = vsel %vm613, %v5588, 0.0
      %v5799 = vsel %vm613, %v5612, 0.0
      %v5800 = vsel %vm613, %v5626, 0.0
      %v5801 = vsel %vm613, %v5634, 0.0
      %v5802 = vsel %vm613, %v5636, 0.0
      %v5803 = vsel %vm613, %v5619, 0.0
      %v5804 = vsel %vm613, %v5633, 0.0
      %v5805 = vsel %vm613, %v5635, 0.0
      %v5806 = vsel %vm613, %v5637, 0.0
      %v5807 = vsel %vm613, %v5661, 0.0
      %v5808 = vsel %vm613, %v5675, 0.0
      %v5809 = vsel %vm613, %v5683, 0.0
      %v5810 = vsel %vm613, %v5685, 0.0
      %v5811 = vsel %vm613, %v5668, 0.0
      %v5812 = vsel %vm613, %v5682, 0.0
      %v5813 = vsel %vm613, %v5684, 0.0
      %v5814 = vsel %vm613, %v5686, 0.0
      %v5879 = vcombine.low %v5751, %v5752
      %v5880 = vcombine.low %v5753, %v5754
      %v5882 = vunpack.c.l.s4 1983009808
      %v5883 = vunpack.c.0.s8 %v5882
      %v5884 = vlaneseq
      %v5885 = vshrl.u32 %v5884, 7
      %v5886 = vsub.s32 %v5883, %v5885
      %v5887 = vrot.slane %v5879, %v5886
      %v5889 = vunpack.c.l.s4 1983009808
      %v5890 = vunpack.c.0.s8 %v5889
      %v5891 = vlaneseq
      %v5892 = vshrl.u32 %v5891, 7
      %v5893 = vsub.s32 %v5890, %v5892
      %v5894 = vrot.slane %v5880, %v5893
      %v5895 = vcombine.low %v5887, %v5894
      %v5896 = vcombine.low %v5755, %v5756
      %v5897 = vcombine.low %v5757, %v5758
      %v5899 = vunpack.c.l.s4 1983009808
      %v5900 = vunpack.c.0.s8 %v5899
      %v5901 = vlaneseq
      %v5902 = vshrl.u32 %v5901, 7
      %v5903 = vsub.s32 %v5900, %v5902
      %v5904 = vrot.slane %v5896, %v5903
      %v5906 = vunpack.c.l.s4 1983009808
      %v5907 = vunpack.c.0.s8 %v5906
      %v5908 = vlaneseq
      %v5909 = vshrl.u32 %v5908, 7
      %v5910 = vsub.s32 %v5907, %v5909
      %v5911 = vrot.slane %v5897, %v5910
      %v5912 = vcombine.low %v5904, %v5911
      %v5913 = vcombine.low %v5759, %v5760
      %v5914 = vcombine.low %v5761, %v5762
      %v5916 = vunpack.c.l.s4 1983009808
      %v5917 = vunpack.c.0.s8 %v5916
      %v5918 = vlaneseq
      %v5919 = vshrl.u32 %v5918, 7
      %v5920 = vsub.s32 %v5917, %v5919
      %v5921 = vrot.slane %v5913, %v5920
      %v5923 = vunpack.c.l.s4 1983009808
      %v5924 = vunpack.c.0.s8 %v5923
      %v5925 = vlaneseq
      %v5926 = vshrl.u32 %v5925, 7
      %v5927 = vsub.s32 %v5924, %v5926
      %v5928 = vrot.slane %v5914, %v5927
      %v5929 = vcombine.low %v5921, %v5928
      %v5930 = vcombine.low %v5763, %v5764
      %v5931 = vcombine.low %v5765, %v5766
      %v5933 = vunpack.c.l.s4 1983009808
      %v5934 = vunpack.c.0.s8 %v5933
      %v5935 = vlaneseq
      %v5936 = vshrl.u32 %v5935, 7
      %v5937 = vsub.s32 %v5934, %v5936
      %v5938 = vrot.slane %v5930, %v5937
      %v5940 = vunpack.c.l.s4 1983009808
      %v5941 = vunpack.c.0.s8 %v5940
      %v5942 = vlaneseq
      %v5943 = vshrl.u32 %v5942, 7
      %v5944 = vsub.s32 %v5941, %v5943
      %v5945 = vrot.slane %v5931, %v5944
      %v5946 = vcombine.low %v5938, %v5945
      %v5947 = vcombine.low %v5767, %v5768
      %v5948 = vcombine.low %v5769, %v5770
      %v5950 = vunpack.c.l.s4 1983009808
      %v5951 = vunpack.c.0.s8 %v5950
      %v5952 = vlaneseq
      %v5953 = vshrl.u32 %v5952, 7
      %v5954 = vsub.s32 %v5951, %v5953
      %v5955 = vrot.slane %v5947, %v5954
      %v5957 = vunpack.c.l.s4 1983009808
      %v5958 = vunpack.c.0.s8 %v5957
      %v5959 = vlaneseq
      %v5960 = vshrl.u32 %v5959, 7
      %v5961 = vsub.s32 %v5958, %v5960
      %v5962 = vrot.slane %v5948, %v5961
      %v5963 = vcombine.low %v5955, %v5962
      %v5964 = vcombine.low %v5771, %v5772
      %v5965 = vcombine.low %v5773, %v5774
      %v5967 = vunpack.c.l.s4 1983009808
      %v5968 = vunpack.c.0.s8 %v5967
      %v5969 = vlaneseq
      %v5970 = vshrl.u32 %v5969, 7
      %v5971 = vsub.s32 %v5968, %v5970
      %v5972 = vrot.slane %v5964, %v5971
      %v5974 = vunpack.c.l.s4 1983009808
      %v5975 = vunpack.c.0.s8 %v5974
      %v5976 = vlaneseq
      %v5977 = vshrl.u32 %v5976, 7
      %v5978 = vsub.s32 %v5975, %v5977
      %v5979 = vrot.slane %v5965, %v5978
      %v5980 = vcombine.low %v5972, %v5979
      %v5981 = vcombine.low %v5775, %v5776
      %v5982 = vcombine.low %v5777, %v5778
      %v5984 = vunpack.c.l.s4 1983009808
      %v5985 = vunpack.c.0.s8 %v5984
      %v5986 = vlaneseq
      %v5987 = vshrl.u32 %v5986, 7
      %v5988 = vsub.s32 %v5985, %v5987
      %v5989 = vrot.slane %v5981, %v5988
      %v5991 = vunpack.c.l.s4 1983009808
      %v5992 = vunpack.c.0.s8 %v5991
      %v5993 = vlaneseq
      %v5994 = vshrl.u32 %v5993, 7
      %v5995 = vsub.s32 %v5992, %v5994
      %v5996 = vrot.slane %v5982, %v5995
      %v5997 = vcombine.low %v5989, %v5996
      %v5998 = vcombine.low %v5779, %v5780
      %v5999 = vcombine.low %v5781, %v5782
      %v6001 = vunpack.c.l.s4 1983009808
      %v6002 = vunpack.c.0.s8 %v6001
      %v6003 = vlaneseq
      %v6004 = vshrl.u32 %v6003, 7
      %v6005 = vsub.s32 %v6002, %v6004
      %v6006 = vrot.slane %v5998, %v6005
      %v6008 = vunpack.c.l.s4 1983009808
      %v6009 = vunpack.c.0.s8 %v6008
      %v6010 = vlaneseq
      %v6011 = vshrl.u32 %v6010, 7
      %v6012 = vsub.s32 %v6009, %v6011
      %v6013 = vrot.slane %v5999, %v6012
      %v6014 = vcombine.low %v6006, %v6013
      %v6015 = vcombine.low %v5783, %v5784
      %v6016 = vcombine.low %v5785, %v5786
      %v6018 = vunpack.c.l.s4 1983009808
      %v6019 = vunpack.c.0.s8 %v6018
      %v6020 = vlaneseq
      %v6021 = vshrl.u32 %v6020, 7
      %v6022 = vsub.s32 %v6019, %v6021
      %v6023 = vrot.slane %v6015, %v6022
      %v6025 = vunpack.c.l.s4 1983009808
      %v6026 = vunpack.c.0.s8 %v6025
      %v6027 = vlaneseq
      %v6028 = vshrl.u32 %v6027, 7
      %v6029 = vsub.s32 %v6026, %v6028
      %v6030 = vrot.slane %v6016, %v6029
      %v6031 = vcombine.low %v6023, %v6030
      %v6032 = vcombine.low %v5787, %v5788
      %v6033 = vcombine.low %v5789, %v5790
      %v6035 = vunpack.c.l.s4 1983009808
      %v6036 = vunpack.c.0.s8 %v6035
      %v6037 = vlaneseq
      %v6038 = vshrl.u32 %v6037, 7
      %v6039 = vsub.s32 %v6036, %v6038
      %v6040 = vrot.slane %v6032, %v6039
      %v6042 = vunpack.c.l.s4 1983009808
      %v6043 = vunpack.c.0.s8 %v6042
      %v6044 = vlaneseq
      %v6045 = vshrl.u32 %v6044, 7
      %v6046 = vsub.s32 %v6043, %v6045
      %v6047 = vrot.slane %v6033, %v6046
      %v6048 = vcombine.low %v6040, %v6047
      %v6049 = vcombine.low %v5791, %v5792
      %v6050 = vcombine.low %v5793, %v5794
      %v6052 = vunpack.c.l.s4 1983009808
      %v6053 = vunpack.c.0.s8 %v6052
      %v6054 = vlaneseq
      %v6055 = vshrl.u32 %v6054, 7
      %v6056 = vsub.s32 %v6053, %v6055
      %v6057 = vrot.slane %v6049, %v6056
      %v6059 = vunpack.c.l.s4 1983009808
      %v6060 = vunpack.c.0.s8 %v6059
      %v6061 = vlaneseq
      %v6062 = vshrl.u32 %v6061, 7
      %v6063 = vsub.s32 %v6060, %v6062
      %v6064 = vrot.slane %v6050, %v6063
      %v6065 = vcombine.low %v6057, %v6064
      %v6066 = vcombine.low %v5795, %v5796
      %v6067 = vcombine.low %v5797, %v5798
      %v6069 = vunpack.c.l.s4 1983009808
      %v6070 = vunpack.c.0.s8 %v6069
      %v6071 = vlaneseq
      %v6072 = vshrl.u32 %v6071, 7
      %v6073 = vsub.s32 %v6070, %v6072
      %v6074 = vrot.slane %v6066, %v6073
      %v6076 = vunpack.c.l.s4 1983009808
      %v6077 = vunpack.c.0.s8 %v6076
      %v6078 = vlaneseq
      %v6079 = vshrl.u32 %v6078, 7
      %v6080 = vsub.s32 %v6077, %v6079
      %v6081 = vrot.slane %v6067, %v6080
      %v6082 = vcombine.low %v6074, %v6081
      %v6083 = vcombine.low %v5799, %v5800
      %v6084 = vcombine.low %v5801, %v5802
      %v6086 = vunpack.c.l.s4 1983009808
      %v6087 = vunpack.c.0.s8 %v6086
      %v6088 = vlaneseq
      %v6089 = vshrl.u32 %v6088, 7
      %v6090 = vsub.s32 %v6087, %v6089
      %v6091 = vrot.slane %v6083, %v6090
      %v6093 = vunpack.c.l.s4 1983009808
      %v6094 = vunpack.c.0.s8 %v6093
      %v6095 = vlaneseq
      %v6096 = vshrl.u32 %v6095, 7
      %v6097 = vsub.s32 %v6094, %v6096
      %v6098 = vrot.slane %v6084, %v6097
      %v6099 = vcombine.low %v6091, %v6098
      %v6100 = vcombine.low %v5803, %v5804
      %v6101 = vcombine.low %v5805, %v5806
      %v6103 = vunpack.c.l.s4 1983009808
      %v6104 = vunpack.c.0.s8 %v6103
      %v6105 = vlaneseq
      %v6106 = vshrl.u32 %v6105, 7
      %v6107 = vsub.s32 %v6104, %v6106
      %v6108 = vrot.slane %v6100, %v6107
      %v6110 = vunpack.c.l.s4 1983009808
      %v6111 = vunpack.c.0.s8 %v6110
      %v6112 = vlaneseq
      %v6113 = vshrl.u32 %v6112, 7
      %v6114 = vsub.s32 %v6111, %v6113
      %v6115 = vrot.slane %v6101, %v6114
      %v6116 = vcombine.low %v6108, %v6115
      %v6117 = vcombine.low %v5807, %v5808
      %v6118 = vcombine.low %v5809, %v5810
      %v6120 = vunpack.c.l.s4 1983009808
      %v6121 = vunpack.c.0.s8 %v6120
      %v6122 = vlaneseq
      %v6123 = vshrl.u32 %v6122, 7
      %v6124 = vsub.s32 %v6121, %v6123
      %v6125 = vrot.slane %v6117, %v6124
      %v6127 = vunpack.c.l.s4 1983009808
      %v6128 = vunpack.c.0.s8 %v6127
      %v6129 = vlaneseq
      %v6130 = vshrl.u32 %v6129, 7
      %v6131 = vsub.s32 %v6128, %v6130
      %v6132 = vrot.slane %v6118, %v6131
      %v6133 = vcombine.low %v6125, %v6132
      %v6134 = vcombine.low %v5811, %v5812
      %v6135 = vcombine.low %v5813, %v5814
      %v6137 = vunpack.c.l.s4 1983009808
      %v6138 = vunpack.c.0.s8 %v6137
      %v6139 = vlaneseq
      %v6140 = vshrl.u32 %v6139, 7
      %v6141 = vsub.s32 %v6138, %v6140
      %v6142 = vrot.slane %v6134, %v6141
      %v6144 = vunpack.c.l.s4 1983009808
      %v6145 = vunpack.c.0.s8 %v6144
      %v6146 = vlaneseq
      %v6147 = vshrl.u32 %v6146, 7
      %v6148 = vsub.s32 %v6145, %v6147
      %v6149 = vrot.slane %v6135, %v6148
      %v6150 = vcombine.low %v6142, %v6149
      %v6151 = vrot.slane %v5895, 7
      %v6152 = vrot.slane %v5912, 7
      %v6153 = vsel %vm613, %v6151, %v6152
      %v6154 = vsel %vm613, %v4913, %v4913
      %v6155 = vrot.slane %v5929, 7
      %v6156 = vrot.slane %v5946, 7
      %v6157 = vsel %vm613, %v6155, %v6156
      %v6158 = vrot.slane %v5963, 7
      %v6159 = vrot.slane %v5980, 7
      %v6160 = vsel %vm613, %v6158, %v6159
      %v6161 = vrot.slane %v5997, 7
      %v6162 = vrot.slane %v6014, 7
      %v6163 = vsel %vm613, %v6161, %v6162
      %v6164 = vrot.slane %v6031, 7
      %v6165 = vrot.slane %v6048, 7
      %v6166 = vsel %vm613, %v6164, %v6165
      %v6167 = vrot.slane %v6065, 7
      %v6168 = vrot.slane %v6082, 7
      %v6169 = vsel %vm613, %v6167, %v6168
      %v6170 = vrot.slane %v6099, 7
      %v6171 = vrot.slane %v6116, 7
      %v6172 = vsel %vm613, %v6170, %v6171
      %v6173 = vrot.slane %v6133, 7
      %v6174 = vrot.slane %v6150, 7
      %v6175 = vsel %vm613, %v6173, %v6174
      %v6201 = vsel %vm613, 0.0, %v6151
      %v6202 = vsel %vm613, 0.0, %v6155
      %v6203 = vsel %vm613, 0.0, %v6158
      %v6204 = vsel %vm613, 0.0, %v6161
      %v6205 = vsel %vm613, 0.0, %v6164
      %v6206 = vsel %vm613, 0.0, %v6167
      %v6207 = vsel %vm613, 0.0, %v6170
      %v6208 = vsel %vm613, 0.0, %v6173
      %v6209 = vsel %vm613, %v6152, 0.0
      %v6210 = vsel %vm613, %v6156, 0.0
      %v6211 = vsel %vm613, %v6159, 0.0
      %v6212 = vsel %vm613, %v6162, 0.0
      %v6213 = vsel %vm613, %v6165, 0.0
      %v6214 = vsel %vm613, %v6168, 0.0
      %v6215 = vsel %vm613, %v6171, 0.0
      %v6216 = vsel %vm613, %v6174, 0.0
      %v6233 = vrot.slane %v6201, 1
      %v6234 = vrot.slane %v6153, 1
      %v6235 = vsel %vm4678, %v6233, %v6234
      %v6236 = vrot.slane %v6209, 1
      %v6237 = vsel %vm4678, %v6234, %v6236
      %v6238 = vrot.slane %v6154, 1
      %v6239 = vsel %vm4678, %v4947, %v6238
      %v6240 = vsel %vm4678, %v6238, %v4948
      %v6241 = vrot.slane %v6202, 1
      %v6242 = vrot.slane %v6157, 1
      %v6243 = vsel %vm4678, %v6241, %v6242
      %v6244 = vrot.slane %v6210, 1
      %v6245 = vsel %vm4678, %v6242, %v6244
      %v6246 = vrot.slane %v6203, 1
      %v6247 = vrot.slane %v6160, 1
      %v6248 = vsel %vm4678, %v6246, %v6247
      %v6249 = vrot.slane %v6211, 1
      %v6250 = vsel %vm4678, %v6247, %v6249
      %v6251 = vrot.slane %v6204, 1
      %v6252 = vrot.slane %v6163, 1
      %v6253 = vsel %vm4678, %v6251, %v6252
      %v6254 = vrot.slane %v6212, 1
      %v6255 = vsel %vm4678, %v6252, %v6254
      %v6256 = vrot.slane %v6205, 1
      %v6257 = vrot.slane %v6166, 1
      %v6258 = vsel %vm4678, %v6256, %v6257
      %v6259 = vrot.slane %v6213, 1
      %v6260 = vsel %vm4678, %v6257, %v6259
      %v6261 = vrot.slane %v6206, 1
      %v6262 = vrot.slane %v6169, 1
      %v6263 = vsel %vm4678, %v6261, %v6262
      %v6264 = vrot.slane %v6214, 1
      %v6265 = vsel %vm4678, %v6262, %v6264
      %v6266 = vrot.slane %v6207, 1
      %v6267 = vrot.slane %v6172, 1
      %v6268 = vsel %vm4678, %v6266, %v6267
      %v6269 = vrot.slane %v6215, 1
      %v6270 = vsel %vm4678, %v6267, %v6269
      %v6271 = vrot.slane %v6208, 1
      %v6272 = vrot.slane %v6175, 1
      %v6273 = vsel %vm4678, %v6271, %v6272
      %v6274 = vrot.slane %v6216, 1
      %v6275 = vsel %vm4678, %v6272, %v6274
      %v6276 = vrot.slane %v6201, 2
      %v6277 = vrot.slane %v6153, 2
      %v6278 = vsel %vm4676, %v6276, %v6277
      %v6279 = vrot.slane %v6209, 2
      %v6280 = vsel %vm4676, %v6277, %v6279
      %v6281 = vrot.slane %v6154, 2
      %v6282 = vsel %vm4676, %v4964, %v6281
      %v6283 = vsel %vm4676, %v6281, %v4965
      %v6284 = vrot.slane %v6202, 2
      %v6285 = vrot.slane %v6157, 2
      %v6286 = vsel %vm4676, %v6284, %v6285
      %v6287 = vrot.slane %v6210, 2
      %v6288 = vsel %vm4676, %v6285, %v6287
      %v6289 = vrot.slane %v6203, 2
      %v6290 = vrot.slane %v6160, 2
      %v6291 = vsel %vm4676, %v6289, %v6290
      %v6292 = vrot.slane %v6211, 2
      %v6293 = vsel %vm4676, %v6290, %v6292
      %v6294 = vrot.slane %v6204, 2
      %v6295 = vrot.slane %v6163, 2
      %v6296 = vsel %vm4676, %v6294, %v6295
      %v6297 = vrot.slane %v6212, 2
      %v6298 = vsel %vm4676, %v6295, %v6297
      %v6299 = vrot.slane %v6205, 2
      %v6300 = vrot.slane %v6166, 2
      %v6301 = vsel %vm4676, %v6299, %v6300
      %v6302 = vrot.slane %v6213, 2
      %v6303 = vsel %vm4676, %v6300, %v6302
      %v6304 = vrot.slane %v6206, 2
      %v6305 = vrot.slane %v6169, 2
      %v6306 = vsel %vm4676, %v6304, %v6305
      %v6307 = vrot.slane %v6214, 2
      %v6308 = vsel %vm4676, %v6305, %v6307
      %v6309 = vrot.slane %v6207, 2
      %v6310 = vrot.slane %v6172, 2
      %v6311 = vsel %vm4676, %v6309, %v6310
      %v6312 = vrot.slane %v6215, 2
      %v6313 = vsel %vm4676, %v6310, %v6312
      %v6314 = vrot.slane %v6208, 2
      %v6315 = vrot.slane %v6175, 2
      %v6316 = vsel %vm4676, %v6314, %v6315
      %v6317 = vrot.slane %v6216, 2
      %v6318 = vsel %vm4676, %v6315, %v6317
      %6319 = vrot.lane.b32.xlu0 %v4943, 8
      %v6320 = vpop.permute.xlu0 %6319
      %6321 = vrot.lane.b32.xlu0 %v6235, 8
      %v6322 = vpop.permute.xlu0 %6321
      %6323 = vrot.lane.b32.xlu0 %v6237, 8
      %v6324 = vpop.permute.xlu0 %6323
      %6325 = vrot.lane.b32.xlu0 %v6239, 8
      %v6326 = vpop.permute.xlu0 %6325
      %6327 = vrot.lane.b32.xlu0 %v6240, 8
      %v6328 = vpop.permute.xlu0 %6327
      %6329 = vrot.lane.b32.xlu0 %v6243, 8
      %v6330 = vpop.permute.xlu0 %6329
      %6331 = vrot.lane.b32.xlu0 %v6245, 8
      %v6332 = vpop.permute.xlu0 %6331
      %6333 = vrot.lane.b32.xlu0 %v6248, 8
      %v6334 = vpop.permute.xlu0 %6333
      %6335 = vrot.lane.b32.xlu0 %v6250, 8
      %v6336 = vpop.permute.xlu0 %6335
      %6337 = vrot.lane.b32.xlu0 %v6253, 8
      %v6338 = vpop.permute.xlu0 %6337
      %6339 = vrot.lane.b32.xlu0 %v6255, 8
      %v6340 = vpop.permute.xlu0 %6339
      %6341 = vrot.lane.b32.xlu0 %v6258, 8
      %v6342 = vpop.permute.xlu0 %6341
      %6343 = vrot.lane.b32.xlu0 %v6260, 8
      %v6344 = vpop.permute.xlu0 %6343
      %6345 = vrot.lane.b32.xlu0 %v6263, 8
      %v6346 = vpop.permute.xlu0 %6345
      %6347 = vrot.lane.b32.xlu0 %v6265, 8
      %v6348 = vpop.permute.xlu0 %6347
      %6349 = vrot.lane.b32.xlu0 %v6268, 8
      %v6350 = vpop.permute.xlu0 %6349
      %6351 = vrot.lane.b32.xlu0 %v6270, 8
      %v6352 = vpop.permute.xlu0 %6351
      %6353 = vrot.lane.b32.xlu0 %v6273, 8
      %v6354 = vpop.permute.xlu0 %6353
      %6355 = vrot.lane.b32.xlu0 %v6275, 8
      %v6356 = vpop.permute.xlu0 %6355
      %6376 = vrot.lane.b32.xlu0 %v4960, 16
      %v6377 = vpop.permute.xlu0 %6376
      %6378 = vrot.lane.b32.xlu0 %v6278, 16
      %v6379 = vpop.permute.xlu0 %6378
      %6380 = vrot.lane.b32.xlu0 %v6280, 16
      %v6381 = vpop.permute.xlu0 %6380
      %6382 = vrot.lane.b32.xlu0 %v6282, 16
      %v6383 = vpop.permute.xlu0 %6382
      %6384 = vrot.lane.b32.xlu0 %v6283, 16
      %v6385 = vpop.permute.xlu0 %6384
      %6386 = vrot.lane.b32.xlu0 %v6286, 16
      %v6387 = vpop.permute.xlu0 %6386
      %6388 = vrot.lane.b32.xlu0 %v6288, 16
      %v6389 = vpop.permute.xlu0 %6388
      %6390 = vrot.lane.b32.xlu0 %v6291, 16
      %v6391 = vpop.permute.xlu0 %6390
      %6392 = vrot.lane.b32.xlu0 %v6293, 16
      %v6393 = vpop.permute.xlu0 %6392
      %6394 = vrot.lane.b32.xlu0 %v6296, 16
      %v6395 = vpop.permute.xlu0 %6394
      %6396 = vrot.lane.b32.xlu0 %v6298, 16
      %v6397 = vpop.permute.xlu0 %6396
      %6398 = vrot.lane.b32.xlu0 %v6301, 16
      %v6399 = vpop.permute.xlu0 %6398
      %6400 = vrot.lane.b32.xlu0 %v6303, 16
      %v6401 = vpop.permute.xlu0 %6400
      %6402 = vrot.lane.b32.xlu0 %v6306, 16
      %v6403 = vpop.permute.xlu0 %6402
      %6404 = vrot.lane.b32.xlu0 %v6308, 16
      %v6405 = vpop.permute.xlu0 %6404
      %6406 = vrot.lane.b32.xlu0 %v6311, 16
      %v6407 = vpop.permute.xlu0 %6406
      %6408 = vrot.lane.b32.xlu0 %v6313, 16
      %v6409 = vpop.permute.xlu0 %6408
      %6410 = vrot.lane.b32.xlu0 %v6316, 16
      %v6411 = vpop.permute.xlu0 %6410
      %6412 = vrot.lane.b32.xlu0 %v6318, 16
      %v6413 = vpop.permute.xlu0 %6412
      %6433 = vrot.lane.b32.xlu0 %v6201, 24
      %v6434 = vpop.permute.xlu0 %6433
      %6435 = vrot.lane.b32.xlu0 %v6153, 24
      %v6436 = vpop.permute.xlu0 %6435
      %6437 = vrot.lane.b32.xlu0 %v4923, 24
      %v6438 = vpop.permute.xlu0 %6437
      %6439 = vrot.lane.b32.xlu0 %v6154, 24
      %v6440 = vpop.permute.xlu0 %6439
      %6441 = vrot.lane.b32.xlu0 %v6202, 24
      %v6442 = vpop.permute.xlu0 %6441
      %6443 = vrot.lane.b32.xlu0 %v6157, 24
      %v6444 = vpop.permute.xlu0 %6443
      %6445 = vrot.lane.b32.xlu0 %v6203, 24
      %v6446 = vpop.permute.xlu0 %6445
      %6447 = vrot.lane.b32.xlu0 %v6160, 24
      %v6448 = vpop.permute.xlu0 %6447
      %6449 = vrot.lane.b32.xlu0 %v6204, 24
      %v6450 = vpop.permute.xlu0 %6449
      %6451 = vrot.lane.b32.xlu0 %v6163, 24
      %v6452 = vpop.permute.xlu0 %6451
      %6453 = vrot.lane.b32.xlu0 %v6205, 24
      %v6454 = vpop.permute.xlu0 %6453
      %6455 = vrot.lane.b32.xlu0 %v6166, 24
      %v6456 = vpop.permute.xlu0 %6455
      %6457 = vrot.lane.b32.xlu0 %v6206, 24
      %v6458 = vpop.permute.xlu0 %6457
      %6459 = vrot.lane.b32.xlu0 %v6169, 24
      %v6460 = vpop.permute.xlu0 %6459
      %6461 = vrot.lane.b32.xlu0 %v6207, 24
      %v6462 = vpop.permute.xlu0 %6461
      %6463 = vrot.lane.b32.xlu0 %v6172, 24
      %v6464 = vpop.permute.xlu0 %6463
      %6465 = vrot.lane.b32.xlu0 %v6208, 24
      %v6466 = vpop.permute.xlu0 %6465
      %6467 = vrot.lane.b32.xlu0 %v6175, 24
      %v6468 = vpop.permute.xlu0 %6467
      %6487 = vrot.lane.b32.xlu0 %v6235, 32
      %v6488 = vpop.permute.xlu0 %6487
      %6489 = vrot.lane.b32.xlu0 %v6237, 32
      %v6490 = vpop.permute.xlu0 %6489
      %6491 = vrot.lane.b32.xlu0 %v6239, 32
      %v6492 = vpop.permute.xlu0 %6491
      %6493 = vrot.lane.b32.xlu0 %v6240, 32
      %v6494 = vpop.permute.xlu0 %6493
      %6495 = vrot.lane.b32.xlu0 %v6243, 32
      %v6496 = vpop.permute.xlu0 %6495
      %6497 = vrot.lane.b32.xlu0 %v6245, 32
      %v6498 = vpop.permute.xlu0 %6497
      %6499 = vrot.lane.b32.xlu0 %v6248, 32
      %v6500 = vpop.permute.xlu0 %6499
      %6501 = vrot.lane.b32.xlu0 %v6250, 32
      %v6502 = vpop.permute.xlu0 %6501
      %6503 = vrot.lane.b32.xlu0 %v6253, 32
      %v6504 = vpop.permute.xlu0 %6503
      %6505 = vrot.lane.b32.xlu0 %v6255, 32
      %v6506 = vpop.permute.xlu0 %6505
      %6507 = vrot.lane.b32.xlu0 %v6258, 32
      %v6508 = vpop.permute.xlu0 %6507
      %6509 = vrot.lane.b32.xlu0 %v6260, 32
      %v6510 = vpop.permute.xlu0 %6509
      %6511 = vrot.lane.b32.xlu0 %v6263, 32
      %v6512 = vpop.permute.xlu0 %6511
      %6513 = vrot.lane.b32.xlu0 %v6265, 32
      %v6514 = vpop.permute.xlu0 %6513
      %6515 = vrot.lane.b32.xlu0 %v6268, 32
      %v6516 = vpop.permute.xlu0 %6515
      %6517 = vrot.lane.b32.xlu0 %v6270, 32
      %v6518 = vpop.permute.xlu0 %6517
      %6519 = vrot.lane.b32.xlu0 %v6273, 32
      %v6520 = vpop.permute.xlu0 %6519
      %6521 = vrot.lane.b32.xlu0 %v6275, 32
      %v6522 = vpop.permute.xlu0 %6521
      %6541 = vrot.lane.b32.xlu0 %v6278, 40
      %v6542 = vpop.permute.xlu0 %6541
      %6543 = vrot.lane.b32.xlu0 %v6280, 40
      %v6544 = vpop.permute.xlu0 %6543
      %6545 = vrot.lane.b32.xlu0 %v6282, 40
      %v6546 = vpop.permute.xlu0 %6545
      %6547 = vrot.lane.b32.xlu0 %v6283, 40
      %v6548 = vpop.permute.xlu0 %6547
      %6549 = vrot.lane.b32.xlu0 %v6286, 40
      %v6550 = vpop.permute.xlu0 %6549
      %6551 = vrot.lane.b32.xlu0 %v6288, 40
      %v6552 = vpop.permute.xlu0 %6551
      %6553 = vrot.lane.b32.xlu0 %v6291, 40
      %v6554 = vpop.permute.xlu0 %6553
      %6555 = vrot.lane.b32.xlu0 %v6293, 40
      %v6556 = vpop.permute.xlu0 %6555
      %6557 = vrot.lane.b32.xlu0 %v6296, 40
      %v6558 = vpop.permute.xlu0 %6557
      %6559 = vrot.lane.b32.xlu0 %v6298, 40
      %v6560 = vpop.permute.xlu0 %6559
      %6561 = vrot.lane.b32.xlu0 %v6301, 40
      %v6562 = vpop.permute.xlu0 %6561
      %6563 = vrot.lane.b32.xlu0 %v6303, 40
      %v6564 = vpop.permute.xlu0 %6563
      %6565 = vrot.lane.b32.xlu0 %v6306, 40
      %v6566 = vpop.permute.xlu0 %6565
      %6567 = vrot.lane.b32.xlu0 %v6308, 40
      %v6568 = vpop.permute.xlu0 %6567
      %6569 = vrot.lane.b32.xlu0 %v6311, 40
      %v6570 = vpop.permute.xlu0 %6569
      %6571 = vrot.lane.b32.xlu0 %v6313, 40
      %v6572 = vpop.permute.xlu0 %6571
      %6573 = vrot.lane.b32.xlu0 %v6316, 40
      %v6574 = vpop.permute.xlu0 %6573
      %6575 = vrot.lane.b32.xlu0 %v6318, 40
      %v6576 = vpop.permute.xlu0 %6575
      %6595 = vrot.lane.b32.xlu0 %v6154, 48
      %v6596 = vpop.permute.xlu0 %6595
      %6597 = vrot.lane.b32.xlu0 %v6202, 48
      %v6598 = vpop.permute.xlu0 %6597
      %6599 = vrot.lane.b32.xlu0 %v6157, 48
      %v6600 = vpop.permute.xlu0 %6599
      %6601 = vrot.lane.b32.xlu0 %v6203, 48
      %v6602 = vpop.permute.xlu0 %6601
      %6603 = vrot.lane.b32.xlu0 %v6160, 48
      %v6604 = vpop.permute.xlu0 %6603
      %6605 = vrot.lane.b32.xlu0 %v6204, 48
      %v6606 = vpop.permute.xlu0 %6605
      %6607 = vrot.lane.b32.xlu0 %v6163, 48
      %v6608 = vpop.permute.xlu0 %6607
      %6609 = vrot.lane.b32.xlu0 %v6205, 48
      %v6610 = vpop.permute.xlu0 %6609
      %6611 = vrot.lane.b32.xlu0 %v6166, 48
      %v6612 = vpop.permute.xlu0 %6611
      %6613 = vrot.lane.b32.xlu0 %v6206, 48
      %v6614 = vpop.permute.xlu0 %6613
      %6615 = vrot.lane.b32.xlu0 %v6169, 48
      %v6616 = vpop.permute.xlu0 %6615
      %6617 = vrot.lane.b32.xlu0 %v6207, 48
      %v6618 = vpop.permute.xlu0 %6617
      %6619 = vrot.lane.b32.xlu0 %v6172, 48
      %v6620 = vpop.permute.xlu0 %6619
      %6621 = vrot.lane.b32.xlu0 %v6208, 48
      %v6622 = vpop.permute.xlu0 %6621
      %6623 = vrot.lane.b32.xlu0 %v6175, 48
      %v6624 = vpop.permute.xlu0 %6623
      %6625 = vrot.lane.b32.xlu0 0.0, 48
      %v6626 = vpop.permute.xlu0 %6625
      %6643 = vrot.lane.b32.xlu0 %v6239, 56
      %v6644 = vpop.permute.xlu0 %6643
      %6645 = vrot.lane.b32.xlu0 %v6240, 56
      %v6646 = vpop.permute.xlu0 %6645
      %6647 = vrot.lane.b32.xlu0 %v6243, 56
      %v6648 = vpop.permute.xlu0 %6647
      %6649 = vrot.lane.b32.xlu0 %v6245, 56
      %v6650 = vpop.permute.xlu0 %6649
      %6651 = vrot.lane.b32.xlu0 %v6248, 56
      %v6652 = vpop.permute.xlu0 %6651
      %6653 = vrot.lane.b32.xlu0 %v6250, 56
      %v6654 = vpop.permute.xlu0 %6653
      %6655 = vrot.lane.b32.xlu0 %v6253, 56
      %v6656 = vpop.permute.xlu0 %6655
      %6657 = vrot.lane.b32.xlu0 %v6255, 56
      %v6658 = vpop.permute.xlu0 %6657
      %6659 = vrot.lane.b32.xlu0 %v6258, 56
      %v6660 = vpop.permute.xlu0 %6659
      %6661 = vrot.lane.b32.xlu0 %v6260, 56
      %v6662 = vpop.permute.xlu0 %6661
      %6663 = vrot.lane.b32.xlu0 %v6263, 56
      %v6664 = vpop.permute.xlu0 %6663
      %6665 = vrot.lane.b32.xlu0 %v6265, 56
      %v6666 = vpop.permute.xlu0 %6665
      %6667 = vrot.lane.b32.xlu0 %v6268, 56
      %v6668 = vpop.permute.xlu0 %6667
      %6669 = vrot.lane.b32.xlu0 %v6270, 56
      %v6670 = vpop.permute.xlu0 %6669
      %6671 = vrot.lane.b32.xlu0 %v6273, 56
      %v6672 = vpop.permute.xlu0 %6671
      %6673 = vrot.lane.b32.xlu0 %v6275, 56
      %v6674 = vpop.permute.xlu0 %6673
      %6675 = vrot.lane.b32.xlu0 %v4943, 56
      %v6676 = vpop.permute.xlu0 %6675
      %6694 = vrot.lane.b32.xlu0 %v6282, 64
      %v6695 = vpop.permute.xlu0 %6694
      %6696 = vrot.lane.b32.xlu0 %v6283, 64
      %v6697 = vpop.permute.xlu0 %6696
      %6698 = vrot.lane.b32.xlu0 %v6286, 64
      %v6699 = vpop.permute.xlu0 %6698
      %6700 = vrot.lane.b32.xlu0 %v6288, 64
      %v6701 = vpop.permute.xlu0 %6700
      %6702 = vrot.lane.b32.xlu0 %v6291, 64
      %v6703 = vpop.permute.xlu0 %6702
      %6704 = vrot.lane.b32.xlu0 %v6293, 64
      %v6705 = vpop.permute.xlu0 %6704
      %6706 = vrot.lane.b32.xlu0 %v6296, 64
      %v6707 = vpop.permute.xlu0 %6706
      %6708 = vrot.lane.b32.xlu0 %v6298, 64
      %v6709 = vpop.permute.xlu0 %6708
      %6710 = vrot.lane.b32.xlu0 %v6301, 64
      %v6711 = vpop.permute.xlu0 %6710
      %6712 = vrot.lane.b32.xlu0 %v6303, 64
      %v6713 = vpop.permute.xlu0 %6712
      %6714 = vrot.lane.b32.xlu0 %v6306, 64
      %v6715 = vpop.permute.xlu0 %6714
      %6716 = vrot.lane.b32.xlu0 %v6308, 64
      %v6717 = vpop.permute.xlu0 %6716
      %6718 = vrot.lane.b32.xlu0 %v6311, 64
      %v6719 = vpop.permute.xlu0 %6718
      %6720 = vrot.lane.b32.xlu0 %v6313, 64
      %v6721 = vpop.permute.xlu0 %6720
      %6722 = vrot.lane.b32.xlu0 %v6316, 64
      %v6723 = vpop.permute.xlu0 %6722
      %6724 = vrot.lane.b32.xlu0 %v6318, 64
      %v6725 = vpop.permute.xlu0 %6724
      %6726 = vrot.lane.b32.xlu0 %v4960, 64
      %v6727 = vpop.permute.xlu0 %6726
      %v6745 = vsel %vm3125, 0.0, %v6320
      %v6746 = vsel %vm3125, %v6201, %v6322
      %v6747 = vsel %vm3125, %v6153, %v6324
      %v6748 = vsel %vm3125, %v4923, %v6326
      %v6749 = vsel %vm3125, %v6154, %v6328
      %v6750 = vsel %vm3125, %v6202, %v6330
      %v6751 = vsel %vm3125, %v6157, %v6332
      %v6752 = vsel %vm3125, %v6203, %v6334
      %v6753 = vsel %vm3125, %v6160, %v6336
      %v6754 = vsel %vm3125, %v6204, %v6338
      %v6755 = vsel %vm3125, %v6163, %v6340
      %v6756 = vsel %vm3125, %v6205, %v6342
      %v6757 = vsel %vm3125, %v6166, %v6344
      %v6758 = vsel %vm3125, %v6206, %v6346
      %v6759 = vsel %vm3125, %v6169, %v6348
      %v6760 = vsel %vm3125, %v6207, %v6350
      %v6761 = vsel %vm3125, %v6172, %v6352
      %v6762 = vsel %vm3125, %v6208, %v6354
      %v6763 = vsel %vm3125, %v6175, %v6356
      %v6764 = vsel %vm3143, %v6745, %v6377
      %v6765 = vsel %vm3143, %v6746, %v6379
      %v6766 = vsel %vm3143, %v6747, %v6381
      %v6767 = vsel %vm3143, %v6748, %v6383
      %v6768 = vsel %vm3143, %v6749, %v6385
      %v6769 = vsel %vm3143, %v6750, %v6387
      %v6770 = vsel %vm3143, %v6751, %v6389
      %v6771 = vsel %vm3143, %v6752, %v6391
      %v6772 = vsel %vm3143, %v6753, %v6393
      %v6773 = vsel %vm3143, %v6754, %v6395
      %v6774 = vsel %vm3143, %v6755, %v6397
      %v6775 = vsel %vm3143, %v6756, %v6399
      %v6776 = vsel %vm3143, %v6757, %v6401
      %v6777 = vsel %vm3143, %v6758, %v6403
      %v6778 = vsel %vm3143, %v6759, %v6405
      %v6779 = vsel %vm3143, %v6760, %v6407
      %v6780 = vsel %vm3143, %v6761, %v6409
      %v6781 = vsel %vm3143, %v6762, %v6411
      %v6782 = vsel %vm3143, %v6763, %v6413
      %v6783 = vsel %vm3161, %v6764, %v6434
      %v6784 = vsel %vm3161, %v6764, %v6436
      %v6785 = vsel %vm3161, %v6765, %v6438
      %v6786 = vsel %vm3161, %v6766, %v6440
      %v6787 = vsel %vm3161, %v6767, %v6442
      %v6788 = vsel %vm3161, %v6768, %v6444
      %v6789 = vsel %vm3161, %v6769, %v6438
      %v6790 = vsel %vm3161, %v6770, %v6440
      %v6791 = vsel %vm3161, %v6767, %v6446
      %v6792 = vsel %vm3161, %v6768, %v6448
      %v6793 = vsel %vm3161, %v6771, %v6438
      %v6794 = vsel %vm3161, %v6772, %v6440
      %v6795 = vsel %vm3161, %v6767, %v6450
      %v6796 = vsel %vm3161, %v6768, %v6452
      %v6797 = vsel %vm3161, %v6773, %v6438
      %v6798 = vsel %vm3161, %v6774, %v6440
      %v6799 = vsel %vm3161, %v6767, %v6454
      %v6800 = vsel %vm3161, %v6768, %v6456
      %v6801 = vsel %vm3161, %v6775, %v6438
      %v6802 = vsel %vm3161, %v6776, %v6440
      %v6803 = vsel %vm3161, %v6767, %v6458
      %v6804 = vsel %vm3161, %v6768, %v6460
      %v6805 = vsel %vm3161, %v6777, %v6438
      %v6806 = vsel %vm3161, %v6778, %v6440
      %v6807 = vsel %vm3161, %v6767, %v6462
      %v6808 = vsel %vm3161, %v6768, %v6464
      %v6809 = vsel %vm3161, %v6779, %v6438
      %v6810 = vsel %vm3161, %v6780, %v6440
      %v6811 = vsel %vm3161, %v6767, %v6466
      %v6812 = vsel %vm3161, %v6768, %v6468
      %v6813 = vsel %vm3161, %v6781, %v6438
      %v6814 = vsel %vm3161, %v6782, %v6440
      %v6815 = vsel %vm3179, %v6783, %v6488
      %v6816 = vsel %vm3179, %v6784, %v6490
      %v6817 = vsel %vm3179, %v6785, %v6492
      %v6818 = vsel %vm3179, %v6786, %v6494
      %v6819 = vsel %vm3179, %v6787, %v6496
      %v6820 = vsel %vm3179, %v6788, %v6498
      %v6821 = vsel %vm3179, %v6789, %v6492
      %v6822 = vsel %vm3179, %v6790, %v6494
      %v6823 = vsel %vm3179, %v6791, %v6500
      %v6824 = vsel %vm3179, %v6792, %v6502
      %v6825 = vsel %vm3179, %v6793, %v6492
      %v6826 = vsel %vm3179, %v6794, %v6494
      %v6827 = vsel %vm3179, %v6795, %v6504
      %v6828 = vsel %vm3179, %v6796, %v6506
      %v6829 = vsel %vm3179, %v6797, %v6492
      %v6830 = vsel %vm3179, %v6798, %v6494
      %v6831 = vsel %vm3179, %v6799, %v6508
      %v6832 = vsel %vm3179, %v6800, %v6510
      %v6833 = vsel %vm3179, %v6801, %v6492
      %v6834 = vsel %vm3179, %v6802, %v6494
      %v6835 = vsel %vm3179, %v6803, %v6512
      %v6836 = vsel %vm3179, %v6804, %v6514
      %v6837 = vsel %vm3179, %v6805, %v6492
      %v6838 = vsel %vm3179, %v6806, %v6494
      %v6839 = vsel %vm3179, %v6807, %v6516
      %v6840 = vsel %vm3179, %v6808, %v6518
      %v6841 = vsel %vm3179, %v6809, %v6492
      %v6842 = vsel %vm3179, %v6810, %v6494
      %v6843 = vsel %vm3179, %v6811, %v6520
      %v6844 = vsel %vm3179, %v6812, %v6522
      %v6845 = vsel %vm3179, %v6813, %v6492
      %v6846 = vsel %vm3179, %v6814, %v6494
      %v6847 = vsel %vm4053, %v6815, %v6542
      %v6848 = vsel %vm4053, %v6816, %v6544
      %v6849 = vsel %vm4053, %v6817, %v6546
      %v6850 = vsel %vm4053, %v6818, %v6548
      %v6851 = vsel %vm4053, %v6819, %v6550
      %v6852 = vsel %vm4053, %v6820, %v6552
      %v6853 = vsel %vm4053, %v6821, %v6546
      %v6854 = vsel %vm4053, %v6822, %v6548
      %v6855 = vsel %vm4053, %v6823, %v6554
      %v6856 = vsel %vm4053, %v6824, %v6556
      %v6857 = vsel %vm4053, %v6825, %v6546
      %v6858 = vsel %vm4053, %v6826, %v6548
      %v6859 = vsel %vm4053, %v6827, %v6558
      %v6860 = vsel %vm4053, %v6828, %v6560
      %v6861 = vsel %vm4053, %v6829, %v6546
      %v6862 = vsel %vm4053, %v6830, %v6548
      %v6863 = vsel %vm4053, %v6831, %v6562
      %v6864 = vsel %vm4053, %v6832, %v6564
      %v6865 = vsel %vm4053, %v6833, %v6546
      %v6866 = vsel %vm4053, %v6834, %v6548
      %v6867 = vsel %vm4053, %v6835, %v6566
      %v6868 = vsel %vm4053, %v6836, %v6568
      %v6869 = vsel %vm4053, %v6837, %v6546
      %v6870 = vsel %vm4053, %v6838, %v6548
      %v6871 = vsel %vm4053, %v6839, %v6570
      %v6872 = vsel %vm4053, %v6840, %v6572
      %v6873 = vsel %vm4053, %v6841, %v6546
      %v6874 = vsel %vm4053, %v6842, %v6548
      %v6875 = vsel %vm4053, %v6843, %v6574
      %v6876 = vsel %vm4053, %v6844, %v6576
      %v6877 = vsel %vm4053, %v6845, %v6546
      %v6878 = vsel %vm4053, %v6846, %v6548
      %v6879 = vsel %vm4056, %v6847, %v5015
      %v6880 = vsel %vm4056, %v6848, %v6596
      %v6881 = vsel %vm4056, %v6849, %v6598
      %v6882 = vsel %vm4056, %v6850, %v6600
      %v6883 = vsel %vm4056, %v6851, %v5015
      %v6884 = vsel %vm4056, %v6852, %v6596
      %v6885 = vsel %vm4056, %v6853, %v6602
      %v6886 = vsel %vm4056, %v6854, %v6604
      %v6887 = vsel %vm4056, %v6855, %v5015
      %v6888 = vsel %vm4056, %v6856, %v6596
      %v6889 = vsel %vm4056, %v6857, %v6606
      %v6890 = vsel %vm4056, %v6858, %v6608
      %v6891 = vsel %vm4056, %v6859, %v5015
      %v6892 = vsel %vm4056, %v6860, %v6596
      %v6893 = vsel %vm4056, %v6861, %v6610
      %v6894 = vsel %vm4056, %v6862, %v6612
      %v6895 = vsel %vm4056, %v6863, %v5015
      %v6896 = vsel %vm4056, %v6864, %v6596
      %v6897 = vsel %vm4056, %v6865, %v6614
      %v6898 = vsel %vm4056, %v6866, %v6616
      %v6899 = vsel %vm4056, %v6867, %v5015
      %v6900 = vsel %vm4056, %v6868, %v6596
      %v6901 = vsel %vm4056, %v6869, %v6618
      %v6902 = vsel %vm4056, %v6870, %v6620
      %v6903 = vsel %vm4056, %v6871, %v5015
      %v6904 = vsel %vm4056, %v6872, %v6596
      %v6905 = vsel %vm4056, %v6873, %v6622
      %v6906 = vsel %vm4056, %v6874, %v6624
      %v6907 = vsel %vm4056, %v6875, %v5015
      %v6908 = vsel %vm4056, %v6876, %v6596
      %v6909 = vsel %vm4056, %v6877, %v6626
      %v6910 = vsel %vm4056, %v6878, %v6626
      %v6911 = vsel %vm4059, %v6879, %v6644
      %v6912 = vsel %vm4059, %v6880, %v6646
      %v6913 = vsel %vm4059, %v6881, %v6648
      %v6914 = vsel %vm4059, %v6882, %v6650
      %v6915 = vsel %vm4059, %v6883, %v6644
      %v6916 = vsel %vm4059, %v6884, %v6646
      %v6917 = vsel %vm4059, %v6885, %v6652
      %v6918 = vsel %vm4059, %v6886, %v6654
      %v6919 = vsel %vm4059, %v6887, %v6644
      %v6920 = vsel %vm4059, %v6888, %v6646
      %v6921 = vsel %vm4059, %v6889, %v6656
      %v6922 = vsel %vm4059, %v6890, %v6658
      %v6923 = vsel %vm4059, %v6891, %v6644
      %v6924 = vsel %vm4059, %v6892, %v6646
      %v6925 = vsel %vm4059, %v6893, %v6660
      %v6926 = vsel %vm4059, %v6894, %v6662
      %v6927 = vsel %vm4059, %v6895, %v6644
      %v6928 = vsel %vm4059, %v6896, %v6646
      %v6929 = vsel %vm4059, %v6897, %v6664
      %v6930 = vsel %vm4059, %v6898, %v6666
      %v6931 = vsel %vm4059, %v6899, %v6644
      %v6932 = vsel %vm4059, %v6900, %v6646
      %v6933 = vsel %vm4059, %v6901, %v6668
      %v6934 = vsel %vm4059, %v6902, %v6670
      %v6935 = vsel %vm4059, %v6903, %v6644
      %v6936 = vsel %vm4059, %v6904, %v6646
      %v6937 = vsel %vm4059, %v6905, %v6672
      %v6938 = vsel %vm4059, %v6906, %v6674
      %v6939 = vsel %vm4059, %v6907, %v6644
      %v6940 = vsel %vm4059, %v6908, %v6646
      %v6941 = vsel %vm4059, %v6909, %v6676
      %v6942 = vsel %vm4059, %v6910, %v6676
      %v6943 = vsel %vm4062, %v6911, %v6695
      %v6944 = vsel %vm4062, %v6912, %v6697
      %v6945 = vsel %vm4062, %v6913, %v6699
      %v6946 = vsel %vm4062, %v6914, %v6701
      %v6947 = vsel %vm4062, %v6915, %v6695
      %v6948 = vsel %vm4062, %v6916, %v6697
      %v6949 = vsel %vm4062, %v6917, %v6703
      %v6950 = vsel %vm4062, %v6918, %v6705
      %v6951 = vsel %vm4062, %v6919, %v6695
      %v6952 = vsel %vm4062, %v6920, %v6697
      %v6953 = vsel %vm4062, %v6921, %v6707
      %v6954 = vsel %vm4062, %v6922, %v6709
      %v6955 = vsel %vm4062, %v6923, %v6695
      %v6956 = vsel %vm4062, %v6924, %v6697
      %v6957 = vsel %vm4062, %v6925, %v6711
      %v6958 = vsel %vm4062, %v6926, %v6713
      %v6959 = vsel %vm4062, %v6927, %v6695
      %v6960 = vsel %vm4062, %v6928, %v6697
      %v6961 = vsel %vm4062, %v6929, %v6715
      %v6962 = vsel %vm4062, %v6930, %v6717
      %v6963 = vsel %vm4062, %v6931, %v6695
      %v6964 = vsel %vm4062, %v6932, %v6697
      %v6965 = vsel %vm4062, %v6933, %v6719
      %v6966 = vsel %vm4062, %v6934, %v6721
      %v6967 = vsel %vm4062, %v6935, %v6695
      %v6968 = vsel %vm4062, %v6936, %v6697
      %v6969 = vsel %vm4062, %v6937, %v6723
      %v6970 = vsel %vm4062, %v6938, %v6725
      %v6971 = vsel %vm4062, %v6939, %v6695
      %v6972 = vsel %vm4062, %v6940, %v6697
      %v6973 = vsel %vm4062, %v6941, %v6727
      %v6974 = vsel %vm4062, %v6942, %v6727
      %v6975 = vld [vmem:[%s15] sm:$0xff]
      %v6976 = vld [vmem:[%s15 + $0x8] sm:$0xff]
      %v6977 = vld [vmem:[%s15 + $0x10] sm:$0xff]
      %v6978 = vld [vmem:[%s15 + $0x18] sm:$0xff]
      %v6979 = vld [vmem:[%s15 + $0x20] sm:$0xff]
      %v6980 = vld [vmem:[%s15 + $0x28] sm:$0xff]
      %v6981 = vld [vmem:[%s15 + $0x30] sm:$0xff]
      %v6982 = vld [vmem:[%s15 + $0x38] sm:$0xff]
      %v6983 = vld [vmem:[%s15 + $0x40] sm:$0xff]
      %v6984 = vld [vmem:[%s16] sm:$0x1]
      %v6986 = vlaneseq
      %v6987 = vshrl.u32 %v6986, 7
      %v6988 = vsub.s32 0, %v6987
      %v6989 = vrot.slane %v6984, %v6988
      %v6992 = vsel %vm4081, %v6943, 0
      %v6995 = vsel %vm4081, %v6944, 0
      %v6998 = vsel %vm4081, %v6945, 0
      %v7001 = vsel %vm4081, %v6946, 0
      %v7004 = vsel %vm4081, %v6947, 0
      %v7007 = vsel %vm4081, %v6948, 0
      %v7010 = vsel %vm4081, %v6949, 0
      %v7013 = vsel %vm4081, %v6950, 0
      %v7016 = vsel %vm4081, %v6951, 0
      %v7019 = vsel %vm4081, %v6952, 0
      %v7022 = vsel %vm4081, %v6953, 0
      %v7025 = vsel %vm4081, %v6954, 0
      %v7028 = vsel %vm4081, %v6955, 0
      %v7031 = vsel %vm4081, %v6956, 0
      %v7034 = vsel %vm4081, %v6957, 0
      %v7037 = vsel %vm4081, %v6958, 0
      %v7040 = vsel %vm4081, %v6959, 0
      %v7043 = vsel %vm4081, %v6960, 0
      %v7046 = vsel %vm4081, %v6961, 0
      %v7049 = vsel %vm4081, %v6962, 0
      %v7052 = vsel %vm4081, %v6963, 0
      %v7055 = vsel %vm4081, %v6964, 0
      %v7058 = vsel %vm4081, %v6965, 0
      %v7061 = vsel %vm4081, %v6966, 0
      %v7064 = vsel %vm4081, %v6967, 0
      %v7067 = vsel %vm4081, %v6968, 0
      %v7070 = vsel %vm4081, %v6969, 0
      %v7073 = vsel %vm4081, %v6970, 0
      %v7076 = vsel %vm4081, %v6971, 0
      %v7079 = vsel %vm4081, %v6972, 0
      %v7082 = vsel %vm4081, %v6973, 0
      %v7085 = vsel %vm4081, %v6974, 0
      %7087 = vmatprep.subr.mxu0 0.0
      %7088 = vmatpush1.msra.mxu0 0.0
      %7089 = vmatprep.subr.mxu0 0.0
      %7090 = vmatpush1.msra.mxu0 0.0
      %7091 = vmatprep.subr.mxu0 0.0
      %7092 = vmatpush1.msra.mxu0 0.0
      %7093 = vmatprep.subr.mxu0 0.0
      %7094 = vmatpush1.msra.mxu0 0.0
      %7095 = vmatprep.subr.mxu0 0.0
      %7096 = vmatpush1.msra.mxu0 0.0
      %7097 = vmatprep.subr.mxu0 0.0
      %7098 = vmatpush1.msra.mxu0 0.0
      %7099 = vmatprep.subr.mxu0 0.0
      %7100 = vmatpush1.msra.mxu0 0.0
      %7101 = vmatprep.subr.mxu0 0.0
      %7102 = vmatpush1.msra.mxu0 %v6983
      %7103 = vmatprep.subr.mxu0 0.0
      %7104 = vmatpush1.msra.mxu0 %v6982
      %7105 = vmatprep.subr.mxu0 0.0
      %7106 = vmatpush1.msra.mxu0 %v6981
      %7107 = vmatprep.subr.mxu0 0.0
      %7108 = vmatpush1.msra.mxu0 %v6980
      %7109 = vmatprep.subr.mxu0 0.0
      %7110 = vmatpush1.msra.mxu0 %v6979
      %7111 = vmatprep.subr.mxu0 0.0
      %7112 = vmatpush1.msra.mxu0 %v6978
      %7113 = vmatprep.subr.mxu0 0.0
      %7114 = vmatpush1.msra.mxu0 %v6977
      %7115 = vmatprep.subr.mxu0 0.0
      %7116 = vmatpush1.msra.mxu0 %v6976
      %7117 = vmatprep.subr.mxu0 0.0
      %7118 = vmatpush1.msra.mxu0 %v6975
      %7119 = vmatprep.subr.mxu0 0.0
      %7120 = vmatpush2.msra.mxu0 0.0
      %7121 = vmatprep.subr.mxu0 0.0
      %7122 = vmatpush2.msra.mxu0 0.0
      %7123 = vmatprep.subr.mxu0 0.0
      %7124 = vmatpush2.msra.mxu0 0.0
      %7125 = vmatprep.subr.mxu0 0.0
      %7126 = vmatpush2.msra.mxu0 0.0
      %7127 = vmatprep.subr.mxu0 0.0
      %7128 = vmatpush2.msra.mxu0 0.0
      %7129 = vmatprep.subr.mxu0 0.0
      %7130 = vmatpush2.msra.mxu0 0.0
      %7131 = vmatprep.subr.mxu0 0.0
      %7132 = vmatpush2.msra.mxu0 0.0
      %7133 = vmatprep.subr.mxu0 0.0
      %7134 = vmatpush2.msra.mxu0 0.0
      %7135 = vmatprep.subr.mxu0 0.0
      %7136 = vmatpush2.msra.mxu0 0.0
      %7137 = vmatprep.subr.mxu0 0.0
      %7138 = vmatpush2.msra.mxu0 0.0
      %7139 = vmatprep.subr.mxu0 0.0
      %7140 = vmatpush2.msra.mxu0 0.0
      %7141 = vmatprep.subr.mxu0 0.0
      %7142 = vmatpush2.msra.mxu0 0.0
      %7143 = vmatprep.subr.mxu0 0.0
      %7144 = vmatpush2.msra.mxu0 0.0
      %7145 = vmatprep.subr.mxu0 0.0
      %7146 = vmatpush2.msra.mxu0 0.0
      %7147 = vmatprep.subr.mxu0 0.0
      %7148 = vmatpush2.msra.mxu0 0.0
      %7149 = vmatprep.subr.mxu0 0.0
      %7150 = vmatpush2.msra.mxu0 0.0
      %7151 = vmatprep.mubr.f32.mxu0 0.0
      %7152 = vmatmul.mubr.f32.gmra.mxu0 %v6992
      %v7153 = vpop.f32.mrf.mxu0
      %v7154 = vadd.f32 %v6989, %v7153
      %v7155 = vpop.f32.mrf.mxu0
      %7156 = vmatprep.mubr.f32.mxu0 0.0
      %7157 = vmatmul.mubr.f32.gmra.mxu0 %v6995
      %v7158 = vpop.f32.mrf.mxu0
      %v7159 = vadd.f32 %v6989, %v7158
      %v7160 = vpop.f32.mrf.mxu0
      %7161 = vmatprep.mubr.f32.mxu0 0.0
      %7162 = vmatmul.mubr.f32.gmra.mxu0 %v6998
      %v7163 = vpop.f32.mrf.mxu0
      %v7164 = vadd.f32 %v6989, %v7163
      %v7165 = vpop.f32.mrf.mxu0
      %7166 = vmatprep.mubr.f32.mxu0 0.0
      %7167 = vmatmul.mubr.f32.gmra.mxu0 %v7001
      %v7168 = vpop.f32.mrf.mxu0
      %v7169 = vadd.f32 %v6989, %v7168
      %v7170 = vpop.f32.mrf.mxu0
      %7171 = vmatprep.mubr.f32.mxu0 0.0
      %7172 = vmatmul.mubr.f32.gmra.mxu0 %v7004
      %v7173 = vpop.f32.mrf.mxu0
      %v7174 = vadd.f32 %v6989, %v7173
      %v7175 = vpop.f32.mrf.mxu0
      %7176 = vmatprep.mubr.f32.mxu0 0.0
      %7177 = vmatmul.mubr.f32.gmra.mxu0 %v7007
      %v7178 = vpop.f32.mrf.mxu0
      %v7179 = vadd.f32 %v6989, %v7178
      %v7180 = vpop.f32.mrf.mxu0
      %7181 = vmatprep.mubr.f32.mxu0 0.0
      %7182 = vmatmul.mubr.f32.gmra.mxu0 %v7010
      %v7183 = vpop.f32.mrf.mxu0
      %v7184 = vadd.f32 %v6989, %v7183
      %v7185 = vpop.f32.mrf.mxu0
      %7186 = vmatprep.mubr.f32.mxu0 0.0
      %7187 = vmatmul.mubr.f32.gmra.mxu0 %v7013
      %v7188 = vpop.f32.mrf.mxu0
      %v7189 = vadd.f32 %v6989, %v7188
      %v7190 = vpop.f32.mrf.mxu0
      %7191 = vmatprep.mubr.f32.mxu0 0.0
      %7192 = vmatmul.mubr.f32.gmra.mxu0 %v7016
      %v7193 = vpop.f32.mrf.mxu0
      %v7194 = vadd.f32 %v6989, %v7193
      %v7195 = vpop.f32.mrf.mxu0
      %7196 = vmatprep.mubr.f32.mxu0 0.0
      %7197 = vmatmul.mubr.f32.gmra.mxu0 %v7019
      %v7198 = vpop.f32.mrf.mxu0
      %v7199 = vadd.f32 %v6989, %v7198
      %v7200 = vpop.f32.mrf.mxu0
      %7201 = vmatprep.mubr.f32.mxu0 0.0
      %7202 = vmatmul.mubr.f32.gmra.mxu0 %v7022
      %v7203 = vpop.f32.mrf.mxu0
      %v7204 = vadd.f32 %v6989, %v7203
      %v7205 = vpop.f32.mrf.mxu0
      %7206 = vmatprep.mubr.f32.mxu0 0.0
      %7207 = vmatmul.mubr.f32.gmra.mxu0 %v7025
      %v7208 = vpop.f32.mrf.mxu0
      %v7209 = vadd.f32 %v6989, %v7208
      %v7210 = vpop.f32.mrf.mxu0
      %7211 = vmatprep.mubr.f32.mxu0 0.0
      %7212 = vmatmul.mubr.f32.gmra.mxu0 %v7028
      %v7213 = vpop.f32.mrf.mxu0
      %v7214 = vadd.f32 %v6989, %v7213
      %v7215 = vpop.f32.mrf.mxu0
      %7216 = vmatprep.mubr.f32.mxu0 0.0
      %7217 = vmatmul.mubr.f32.gmra.mxu0 %v7031
      %v7218 = vpop.f32.mrf.mxu0
      %v7219 = vadd.f32 %v6989, %v7218
      %v7220 = vpop.f32.mrf.mxu0
      %7221 = vmatprep.mubr.f32.mxu0 0.0
      %7222 = vmatmul.mubr.f32.gmra.mxu0 %v7034
      %v7223 = vpop.f32.mrf.mxu0
      %v7224 = vadd.f32 %v6989, %v7223
      %v7225 = vpop.f32.mrf.mxu0
      %7226 = vmatprep.mubr.f32.mxu0 0.0
      %7227 = vmatmul.mubr.f32.gmra.mxu0 %v7037
      %v7228 = vpop.f32.mrf.mxu0
      %v7229 = vadd.f32 %v6989, %v7228
      %v7230 = vpop.f32.mrf.mxu0
      %7231 = vmatprep.mubr.f32.mxu0 0.0
      %7232 = vmatmul.mubr.f32.gmra.mxu0 %v7040
      %v7233 = vpop.f32.mrf.mxu0
      %v7234 = vadd.f32 %v6989, %v7233
      %v7235 = vpop.f32.mrf.mxu0
      %7236 = vmatprep.mubr.f32.mxu0 0.0
      %7237 = vmatmul.mubr.f32.gmra.mxu0 %v7043
      %v7238 = vpop.f32.mrf.mxu0
      %v7239 = vadd.f32 %v6989, %v7238
      %v7240 = vpop.f32.mrf.mxu0
      %7241 = vmatprep.mubr.f32.mxu0 0.0
      %7242 = vmatmul.mubr.f32.gmra.mxu0 %v7046
      %v7243 = vpop.f32.mrf.mxu0
      %v7244 = vadd.f32 %v6989, %v7243
      %v7245 = vpop.f32.mrf.mxu0
      %7246 = vmatprep.mubr.f32.mxu0 0.0
      %7247 = vmatmul.mubr.f32.gmra.mxu0 %v7049
      %v7248 = vpop.f32.mrf.mxu0
      %v7249 = vadd.f32 %v6989, %v7248
      %v7250 = vpop.f32.mrf.mxu0
      %7251 = vmatprep.mubr.f32.mxu0 0.0
      %7252 = vmatmul.mubr.f32.gmra.mxu0 %v7052
      %v7253 = vpop.f32.mrf.mxu0
      %v7254 = vadd.f32 %v6989, %v7253
      %v7255 = vpop.f32.mrf.mxu0
      %7256 = vmatprep.mubr.f32.mxu0 0.0
      %7257 = vmatmul.mubr.f32.gmra.mxu0 %v7055
      %v7258 = vpop.f32.mrf.mxu0
      %v7259 = vadd.f32 %v6989, %v7258
      %v7260 = vpop.f32.mrf.mxu0
      %7261 = vmatprep.mubr.f32.mxu0 0.0
      %7262 = vmatmul.mubr.f32.gmra.mxu0 %v7058
      %v7263 = vpop.f32.mrf.mxu0
      %v7264 = vadd.f32 %v6989, %v7263
      %v7265 = vpop.f32.mrf.mxu0
      %7266 = vmatprep.mubr.f32.mxu0 0.0
      %7267 = vmatmul.mubr.f32.gmra.mxu0 %v7061
      %v7268 = vpop.f32.mrf.mxu0
      %v7269 = vadd.f32 %v6989, %v7268
      %v7270 = vpop.f32.mrf.mxu0
      %7271 = vmatprep.mubr.f32.mxu0 0.0
      %7272 = vmatmul.mubr.f32.gmra.mxu0 %v7064
      %v7273 = vpop.f32.mrf.mxu0
      %v7274 = vadd.f32 %v6989, %v7273
      %v7275 = vpop.f32.mrf.mxu0
      %7276 = vmatprep.mubr.f32.mxu0 0.0
      %7277 = vmatmul.mubr.f32.gmra.mxu0 %v7067
      %v7278 = vpop.f32.mrf.mxu0
      %v7279 = vadd.f32 %v6989, %v7278
      %v7280 = vpop.f32.mrf.mxu0
      %7281 = vmatprep.mubr.f32.mxu0 0.0
      %7282 = vmatmul.mubr.f32.gmra.mxu0 %v7070
      %v7283 = vpop.f32.mrf.mxu0
      %v7284 = vadd.f32 %v6989, %v7283
      %v7285 = vpop.f32.mrf.mxu0
      %7286 = vmatprep.mubr.f32.mxu0 0.0
      %7287 = vmatmul.mubr.f32.gmra.mxu0 %v7073
      %v7288 = vpop.f32.mrf.mxu0
      %v7289 = vadd.f32 %v6989, %v7288
      %v7290 = vpop.f32.mrf.mxu0
      %7291 = vmatprep.mubr.f32.mxu0 0.0
      %7292 = vmatmul.mubr.f32.gmra.mxu0 %v7076
      %v7293 = vpop.f32.mrf.mxu0
      %v7294 = vadd.f32 %v6989, %v7293
      %v7295 = vpop.f32.mrf.mxu0
      %7296 = vmatprep.mubr.f32.mxu0 0.0
      %7297 = vmatmul.mubr.f32.gmra.mxu0 %v7079
      %v7298 = vpop.f32.mrf.mxu0
      %v7299 = vadd.f32 %v6989, %v7298
      %v7300 = vpop.f32.mrf.mxu0
      %7301 = vmatprep.mubr.f32.mxu0 0.0
      %7302 = vmatmul.mubr.f32.gmra.mxu0 %v7082
      %v7303 = vpop.f32.mrf.mxu0
      %v7304 = vadd.f32 %v6989, %v7303
      %v7305 = vpop.f32.mrf.mxu0
      %7306 = vmatprep.mubr.f32.mxu0 0.0
      %7307 = vmatmul.mubr.f32.gmra.mxu0 %v7085
      %v7308 = vpop.f32.mrf.mxu0
      %v7309 = vadd.f32 %v6989, %v7308
      %v7310 = vpop.f32.mrf.mxu0
      %7311 = vdwg.mxu0
      %v7312 = vmax.f32 %v7154, 0.0
      %v7313 = vmax.f32 %v7159, 0.0
      %v7314 = vmax.f32 %v7164, 0.0
      %v7315 = vmax.f32 %v7169, 0.0
      %v7316 = vmax.f32 %v7174, 0.0
      %v7317 = vmax.f32 %v7179, 0.0
      %v7318 = vmax.f32 %v7184, 0.0
      %v7319 = vmax.f32 %v7189, 0.0
      %v7320 = vmax.f32 %v7194, 0.0
      %v7321 = vmax.f32 %v7199, 0.0
      %v7322 = vmax.f32 %v7204, 0.0
      %v7323 = vmax.f32 %v7209, 0.0
      %v7324 = vmax.f32 %v7214, 0.0
      %v7325 = vmax.f32 %v7219, 0.0
      %v7326 = vmax.f32 %v7224, 0.0
      %v7327 = vmax.f32 %v7229, 0.0
      %v7328 = vmax.f32 %v7234, 0.0
      %v7329 = vmax.f32 %v7239, 0.0
      %v7330 = vmax.f32 %v7244, 0.0
      %v7331 = vmax.f32 %v7249, 0.0
      %v7332 = vmax.f32 %v7254, 0.0
      %v7333 = vmax.f32 %v7259, 0.0
      %v7334 = vmax.f32 %v7264, 0.0
      %v7335 = vmax.f32 %v7269, 0.0
      %v7336 = vmax.f32 %v7274, 0.0
      %v7337 = vmax.f32 %v7279, 0.0
      %v7338 = vmax.f32 %v7284, 0.0
      %v7339 = vmax.f32 %v7289, 0.0
      %v7340 = vmax.f32 %v7294, 0.0
      %v7341 = vmax.f32 %v7299, 0.0
      %v7342 = vmax.f32 %v7304, 0.0
      %v7343 = vmax.f32 %v7309, 0.0
      %7344 = vst.msk [vmem:[%s548] sm:$0xff] %vm3116, %v7312
      %7345 = vst.msk [vmem:[%s548 + $0x8] sm:$0xff] %vm3116, %v7313
      %7346 = vst.msk [vmem:[%s548 + $0x10] sm:$0xff] %vm3116, %v7314
      %7347 = vst.msk [vmem:[%s548 + $0x18] sm:$0xff] %vm3116, %v7315
      %7348 = vst.msk [vmem:[%s548 + $0x20] sm:$0xff] %vm3116, %v7316
      %7349 = vst.msk [vmem:[%s548 + $0x28] sm:$0xff] %vm3116, %v7317
      %7350 = vst.msk [vmem:[%s548 + $0x30] sm:$0xff] %vm3116, %v7318
      %7351 = vst.msk [vmem:[%s548 + $0x38] sm:$0xff] %vm3116, %v7319
      %7352 = vst.msk [vmem:[%s548 + $0x40] sm:$0xff] %vm3116, %v7320
      %7353 = vst.msk [vmem:[%s548 + $0x48] sm:$0xff] %vm3116, %v7321
      %7354 = vst.msk [vmem:[%s548 + $0x50] sm:$0xff] %vm3116, %v7322
      %7355 = vst.msk [vmem:[%s548 + $0x58] sm:$0xff] %vm3116, %v7323
      %7356 = vst.msk [vmem:[%s548 + $0x60] sm:$0xff] %vm3116, %v7324
      %7357 = vst.msk [vmem:[%s548 + $0x68] sm:$0xff] %vm3116, %v7325
      %7358 = vst.msk [vmem:[%s548 + $0x70] sm:$0xff] %vm3116, %v7326
      %7359 = vst.msk [vmem:[%s548 + $0x78] sm:$0xff] %vm3116, %v7327
      %7360 = vst.msk [vmem:[%s548 + $0x80] sm:$0xff] %vm3116, %v7328
      %7361 = vst.msk [vmem:[%s548 + $0x88] sm:$0xff] %vm3116, %v7329
      %7362 = vst.msk [vmem:[%s548 + $0x90] sm:$0xff] %vm3116, %v7330
      %7363 = vst.msk [vmem:[%s548 + $0x98] sm:$0xff] %vm3116, %v7331
      %7364 = vst.msk [vmem:[%s548 + $0xa0] sm:$0xff] %vm3116, %v7332
      %7365 = vst.msk [vmem:[%s548 + $0xa8] sm:$0xff] %vm3116, %v7333
      %7366 = vst.msk [vmem:[%s548 + $0xb0] sm:$0xff] %vm3116, %v7334
      %7367 = vst.msk [vmem:[%s548 + $0xb8] sm:$0xff] %vm3116, %v7335
      %7368 = vst.msk [vmem:[%s548 + $0xc0] sm:$0xff] %vm3116, %v7336
      %7369 = vst.msk [vmem:[%s548 + $0xc8] sm:$0xff] %vm3116, %v7337
      %7370 = vst.msk [vmem:[%s548 + $0xd0] sm:$0xff] %vm3116, %v7338
      %7371 = vst.msk [vmem:[%s548 + $0xd8] sm:$0xff] %vm3116, %v7339
      %7372 = vst.msk [vmem:[%s548 + $0xe0] sm:$0xff] %vm3116, %v7340
      %7373 = vst.msk [vmem:[%s548 + $0xe8] sm:$0xff] %vm3116, %v7341
      %7374 = vst.msk [vmem:[%s548 + $0xf0] sm:$0xff] %vm3116, %v7342
      %7375 = vst.msk [vmem:[%s548 + $0xf8] sm:$0xff] %vm3116, %v7343
      %p7376 = scmp.lt.s32.totalorder %s28, 1
      %s7377 = scalar_select %p7376, %s28, 1
      %s7378 = smul.addr %s7377, 32
      %s7379 = smul.addr %s7378, 8
      %s7380 = scalar_lea.vmem %s17, %s7379
      // Predicated region
      $region89: #{fwd.1} parent=87 // pred_check
        %p7381 = pneg %p408
      $region90: #{fwd.1} parent=87 // pred_check_branch
        %7383 = sbr.rel (%p7381) target = $region92
      $region91: #{fwd.1} parent=87 // pred_region
        _
      $region92: #{fwd.1} parent=87 // pred_fallthru
        _
    $region88: #{fwd.1} parent=5 // pred_fallthru
      _
    %p7384 = scmp.le.s32.totalorder 2, %s23
    // Predicated region
    $region93: #{fwd.1} parent=5 // pred_check
      %p7385 = pneg %p7384
    $region94: #{fwd.1} parent=5 // pred_check_branch
      %7387 = sbr.rel (%p7385) target = $region96
    $region95: #{fwd.1} parent=5 // pred_region
      %s7388 = ssub.s32 %s23, 2
      // Predicated region
      $region97: #{fwd.1} parent=95 // pred_check
        %p7389 = pneg %p414
      $region98: #{fwd.1} parent=95 // pred_check_branch
        %7391 = sbr.rel (%p7389) target = $region100
      $region99: #{fwd.1} parent=95 // pred_region
        %p7392 = scmp.lt.s32.totalorder %s29, 1
        %s7393 = scalar_select %p7392, %s29, 1
        %s7394 = smul.addr %s7393, 32
        %s7395 = smul.addr %s7394, 8
        %s7396 = scalar_lea.vmem %s17, %s7395
      $region100: #{fwd.1} parent=95 // pred_fallthru
        _
    $region96: #{fwd.1} parent=5 // pred_fallthru
      _
  $region6: #{fwd.1} parent=0 // loop_footer
    %s27 = sadd.s32 1, %s23
  $region7: #{fwd.1} parent=0 // loop_footer_branch
    %22 = sbr.rel target = $region3
  $region8: #{fwd.1} parent=0 // loop_exit
    _

</llo_original>
